<compile_context>
chip_gen: v5e
topology: v5e:2x2
jax: 0.10.0
libtpu: 0.0.40
codegen_flags: <defaults>
</compile_context>

<pallas_src>
import functools

import jax
import jax.numpy as jnp
from jax import lax
from jax.experimental import pallas as pl
from jax.experimental.pallas import tpu as pltpu

# Explicit scoped-VMEM: v5e default is only 16 MiB, v7x physical is 64 MiB.
_VMEM_LIMIT = 48 * 1024 * 1024


def _round_up(x, m):
    return (x + m - 1) // m * m


# ----------------------------------------------------------------------------
# Pallas kernels
# ----------------------------------------------------------------------------
def _conv_mm_kernel(w_ref, cols_ref, b_ref, o_ref):
    """(Cout, K) @ (K, tile_m) + bias, ReLU.  bf16 operands, f32 accumulate,
    bf16 output (feeds the next conv's im2col / the heads directly)."""
    acc = jnp.dot(w_ref[...], cols_ref[...], preferred_element_type=jnp.float32)
    acc = jnp.maximum(acc + b_ref[...], 0.0)       # b: (Cout, 1) broadcasts on lanes
    o_ref[...] = acc.astype(o_ref.dtype)


def _make_heads_kernel(hb):
    """hb bootstrapped heads per grid step, weight-major orientation:
    out^T = w2 @ relu(w1 @ feat^T + b1) + b2, batch on the lane axis."""
    def kernel(featT_ref, w1_ref, b1_ref, w2_ref, b2_ref, o_ref):
        ft = featT_ref[...]                        # (3136, N) bf16, VMEM-resident
        for i in range(hb):                        # static unroll (hb <= 2)
            h = jnp.dot(w1_ref[i], ft, preferred_element_type=jnp.float32)
            h = jnp.maximum(h + b1_ref[i], 0.0)
            out = jnp.dot(w2_ref[i], h.astype(jnp.bfloat16),
                          preferred_element_type=jnp.float32)
            o_ref[i] = (out + b2_ref[i]).astype(o_ref.dtype)
    return kernel


# ----------------------------------------------------------------------------
# Conv-as-matmul (channel-major CHWN, lane-dense M orientation)
# ----------------------------------------------------------------------------
def _pick_tile_m(m, cap=2048):
    """Largest 128-multiple tile <= cap; prefer one that divides the 128-padded
    M so (almost) every output store is lane-dense."""
    m128 = _round_up(m, 128)
    cap = min(cap, m128)
    for t in range(cap, 511, -128):
        if m128 % t == 0:
            return t
    return cap                                   # last tile masked (perf-only)


def _im2col_chwn(x, kh, kw, stride):
    """x: (C, H, W, N) bf16 -> cols: (C*kh*kw, oh*ow*N) bf16.

    K ordering (c, i, j) matches OIHW weight flattening; M ordering (oh, ow, n)
    so the conv output reshapes straight back to CHWN (and conv3's output
    reshapes straight to feat^T with no transpose)."""
    C, H, W, N = x.shape
    oh = (H - kh) // stride + 1
    ow = (W - kw) // stride + 1
    slices = []
    for i in range(kh):
        for j in range(kw):
            slices.append(
                x[:, i:i + stride * oh:stride, j:j + stride * ow:stride, :])
    patches = jnp.stack(slices, axis=1)            # (C, kh*kw, oh, ow, N)
    return patches.reshape(C * kh * kw, oh * ow * N), oh, ow


def conv_relu_chwn(x, w_mat, b_col, *, kh, kw, stride, padding):
    """Conv2d + ReLU.  x: (Cin, H, W, N) bf16; w_mat: (Cout, Cin*kh*kw) bf16
    (PyTorch OIHW flattened at prep time); b_col: (Cout, 1) f32.
    Returns (Cout, oh, ow, N) bf16."""
    if padding:
        x = jnp.pad(x, ((0, 0), (padding, padding), (padding, padding), (0, 0)))
    # TODO(synk): fold im2col into the Pallas kernel (strided gathers from a
    # VMEM-resident CHWN block) to kill this cols HBM round-trip; it is already
    # assembled in bf16 from bf16 activations to halve the traffic.
    cols, oh, ow = _im2col_chwn(x, kh, kw, stride)
    c_out = w_mat.shape[0]
    K, M = cols.shape
    n = x.shape[3]

    tile_m = _pick_tile_m(M)
    grid = (pl.cdiv(M, tile_m),)
    # NOTE: MXU row occupancy (Cout <= 64) is intentionally low — the conv path
    # is HBM-bound, so the lane-dense M orientation stays the priority.

    y = pl.pallas_call(
        _conv_mm_kernel,
        out_shape=jax.ShapeDtypeStruct((c_out, M), jnp.bfloat16),
        grid=grid,
        in_specs=[
            pl.BlockSpec((c_out, K), lambda i: (0, 0)),
            pl.BlockSpec((K, tile_m), lambda i: (0, i)),
            pl.BlockSpec((c_out, 1), lambda i: (0, 0)),
        ],
        out_specs=pl.BlockSpec((c_out, tile_m), lambda i: (0, i)),
        compiler_params=pltpu.CompilerParams(
            dimension_semantics=("parallel",),
            vmem_limit_bytes=_VMEM_LIMIT),
    )(w_mat, cols, b_col)

    return y.reshape(c_out, oh, ow, n)             # stays channel-major (CHWN)


# ----------------------------------------------------------------------------
# Fused bootstrapped heads (single pallas_call, grid over head groups)
# ----------------------------------------------------------------------------
def heads_forward(featT, w1s, b1s, w2s, b2s):
    """All heads at once, weight-major.  featT:(3136,N) bf16;
    w1s:(H,512,3136) bf16; b1s:(H,512,1) f32; w2s:(H,A_pad,512) bf16;
    b2s:(H,A_pad,1) f32.  Returns (H, A_pad, N) f32."""
    nheads, hdim, kdim = w1s.shape
    a_pad = w2s.shape[1]
    n = featT.shape[1]
    # 2 heads per grid step when there are enough heads (halves weight-DMA
    # count); 1/head otherwise so a 2-head config still spans both v7x TCs.
    hb = 2 if (nheads % 2 == 0 and nheads >= 4) else 1
    return pl.pallas_call(
        _make_heads_kernel(hb),
        out_shape=jax.ShapeDtypeStruct((nheads, a_pad, n), jnp.float32),
        grid=(nheads // hb,),
        in_specs=[
            # feat^T: constant block index -> stays VMEM-resident across heads
            pl.BlockSpec((kdim, n), lambda g: (0, 0)),
            pl.BlockSpec((hb, hdim, kdim), lambda g: (g, 0, 0)),
            pl.BlockSpec((hb, hdim, 1), lambda g: (g, 0, 0)),
            pl.BlockSpec((hb, a_pad, hdim), lambda g: (g, 0, 0)),
            pl.BlockSpec((hb, a_pad, 1), lambda g: (g, 0, 0)),
        ],
        out_specs=pl.BlockSpec((hb, a_pad, n), lambda g: (g, 0, 0)),
        compiler_params=pltpu.CompilerParams(
            dimension_semantics=("parallel",),
            vmem_limit_bytes=_VMEM_LIMIT),
    )(featT, w1s, b1s, w2s, b2s)


# ----------------------------------------------------------------------------
# One-time parameter preparation (flatten / stacking / padding / bf16 at init)
# ----------------------------------------------------------------------------
def prepare_params(params, num_actions):
    a_pad = _round_up(max(num_actions, 16), 16)    # sublane-aligned head output
    heads = params["heads"]
    # Weight-major heads: PyTorch (out, in) layout is used as-is (no .T).
    w1s = jnp.stack([w1 for (w1, _, _, _) in heads]).astype(jnp.bfloat16)
    b1s = jnp.stack([b1.reshape(-1, 1) for (_, b1, _, _) in heads]
                    ).astype(jnp.float32)
    w2s = jnp.stack([jnp.pad(w2, ((0, a_pad - num_actions), (0, 0)))
                     for (_, _, w2, _) in heads]).astype(jnp.bfloat16)
    b2s = jnp.stack([jnp.pad(b2, (0, a_pad - num_actions)).reshape(-1, 1)
                     for (_, _, _, b2) in heads]).astype(jnp.float32)

    def conv_prep(w, b):
        c_out = w.shape[0]
        return (w.reshape(c_out, -1).astype(jnp.bfloat16),   # OIHW -> (Cout, K)
                b.reshape(c_out, 1).astype(jnp.float32))

    c1w, c1b = conv_prep(params["conv1_w"], params["conv1_b"])
    c2w, c2b = conv_prep(params["conv2_w"], params["conv2_b"])
    c3w, c3b = conv_prep(params["conv3_w"], params["conv3_b"])
    return {
        "conv1_wm": c1w, "conv1_b": c1b,
        "conv2_wm": c2w, "conv2_b": c2b,
        "conv3_wm": c3w, "conv3_b": c3b,
        "w1s": w1s, "b1s": b1s, "w2s": w2s, "b2s": b2s,
    }


# ----------------------------------------------------------------------------
# Full module forward
# ----------------------------------------------------------------------------
@functools.partial(jax.jit, static_argnames=("num_actions",))
def atari_bootstrapped_dqn_forward(x_nchw, prep, *, num_actions):
    # NCHW -> CHWN once, already in bf16 (halves every later HBM touch);
    # channels leading, batch on the lane axis.
    x = jnp.transpose(x_nchw.astype(jnp.bfloat16), (1, 2, 3, 0))
    x = conv_relu_chwn(x, prep["conv1_wm"], prep["conv1_b"],
                       kh=8, kw=8, stride=4, padding=1)
    x = conv_relu_chwn(x, prep["conv2_wm"], prep["conv2_b"],
                       kh=4, kw=4, stride=2, padding=0)
    x = conv_relu_chwn(x, prep["conv3_wm"], prep["conv3_b"],
                       kh=3, kw=3, stride=1, padding=0)

    # (64, 7, 7, N) -> feat^T (3136, N): a pure reshape whose row order
    # (c, h, w) matches PyTorch's .view(-1, 3136) columns — no transpose,
    # no extra HBM round-trip.
    n = x.shape[3]
    featT = x.reshape(x.shape[0] * x.shape[1] * x.shape[2], n)

    out_all = heads_forward(featT, prep["w1s"], prep["b1s"],
                            prep["w2s"], prep["b2s"])        # (H, A_pad, N)
    outs = jnp.transpose(out_all[:, :num_actions, :], (0, 2, 1))  # (H, N, A)
    nheads = prep["w1s"].shape[0]
    return [outs[h] for h in range(nheads)]


# ----------------------------------------------------------------------------
# Deterministic parameter init (synthetic; shapes match nn.Module __init__,
# stored in PyTorch layout: conv OIHW, Linear (out, in))
# ----------------------------------------------------------------------------
def init_params(key, input_dim, num_actions, nheads):
    keys = jax.random.split(key, 6 + 4 * nheads)

    def w_init(k, shape, fan_in):
        return jax.random.normal(k, shape, jnp.float32) / jnp.sqrt(
            jnp.float32(fan_in))

    params = {
        "conv1_w": w_init(keys[0], (32, input_dim, 8, 8), input_dim * 64),
        "conv1_b": w_init(keys[1], (32,), input_dim * 64),
        "conv2_w": w_init(keys[2], (64, 32, 4, 4), 32 * 16),
        "conv2_b": w_init(keys[3], (64,), 32 * 16),
        "conv3_w": w_init(keys[4], (64, 64, 3, 3), 64 * 9),
        "conv3_b": w_init(keys[5], (64,), 64 * 9),
        "heads": [],
    }
    for h in range(nheads):
        k0, k1, k2, k3 = keys[6 + 4 * h: 10 + 4 * h]
        params["heads"].append((
            w_init(k0, (512, 3136), 3136),
            w_init(k1, (512,), 3136),
            w_init(k2, (num_actions, 512), 512),
            w_init(k3, (num_actions,), 512),
        ))
    return params


# ----------------------------------------------------------------------------
# Pure-JAX f32 reference (for correctness check)
# ----------------------------------------------------------------------------
def reference_forward(x_nchw, params):
    def conv(x, w, b, stride, pad):
        y = lax.conv_general_dilated(
            x, w, (stride, stride), [(pad, pad), (pad, pad)],
            dimension_numbers=("NCHW", "OIHW", "NCHW"))
        return jnp.maximum(y + b.reshape(1, -1, 1, 1), 0.0)

    x = conv(x_nchw, params["conv1_w"], params["conv1_b"], 4, 1)
    x = conv(x, params["conv2_w"], params["conv2_b"], 2, 0)
    x = conv(x, params["conv3_w"], params["conv3_b"], 1, 0)
    feat = x.reshape(x.shape[0], -1)
    outs = []
    for (w1, b1, w2, b2) in params["heads"]:
        h = jnp.maximum(feat @ w1.T + b1, 0.0)
        outs.append(h @ w2.T + b2)
    return outs


if __name__ == "__main__":
    key = jax.random.PRNGKey(0)
    k_x, k_p = jax.random.split(key)

    # 84x84 spatial input is required by the module's hard-coded 3136 flatten
    # (64 * 7 * 7); batch / channels / actions / heads kept small.
    batch, input_dim, num_actions, nheads = 2, 4, 6, 2
    x = jax.random.normal(k_x, (batch, input_dim, 84, 84), jnp.float32)
    params = init_params(k_p, input_dim, num_actions, nheads)
    prep = prepare_params(params, num_actions)     # one-time layout/bf16 prep

    outs = atari_bootstrapped_dqn_forward(x, prep, num_actions=num_actions)
    outs = [jax.block_until_ready(o) for o in outs]

    refs = reference_forward(x, params)
    assert len(outs) == nheads
    for o, r in zip(outs, refs):
        assert o.shape == (batch, num_actions), o.shape
        max_err = float(jnp.max(jnp.abs(o - r)))
        assert jnp.allclose(o, r, rtol=5e-2, atol=5e-2), max_err

    print("KERNEL_OK")
</pallas_src>

<mosaic_0001>
module attributes {stable_mosaic.version = 11 : i64} {
  func.func @_conv_mm_kernel(%arg0: i32, %arg1: memref<32x256xbf16, #tpu.memory_space<vmem>>, %arg2: memref<256x896xbf16, #tpu.memory_space<vmem>>, %arg3: memref<32x1xf32, #tpu.memory_space<vmem>>, %arg4: memref<32x896xbf16, #tpu.memory_space<vmem>>) attributes {dimension_semantics = [#tpu.dimension_semantics<parallel>], iteration_bounds = array<i64: 1>, scalar_prefetch = 0 : i64, scratch_operands = 0 : i64, tpu.core_type = #tpu.core_type<tc>, window_params = [{pipeline_mode = #tpu.pipeline_mode<synchronous>, transform_indices = @transform_0, window_bounds = array<i64: 32, 256>}, {transform_indices = @transform_1, window_bounds = array<i64: 256, 896>}, {pipeline_mode = #tpu.pipeline_mode<synchronous>, transform_indices = @transform_2, window_bounds = array<i64: 32, 1>}, {transform_indices = @transform_3, window_bounds = array<i64: 32, 896>}]} {
    %c0 = arith.constant 0 : index
    %c0_0 = arith.constant 0 : index
    %0 = vector.load %arg1[%c0, %c0_0] : memref<32x256xbf16, #tpu.memory_space<vmem>>, vector<32x256xbf16>
    %c0_1 = arith.constant 0 : index
    %c0_2 = arith.constant 0 : index
    %1 = vector.load %arg2[%c0_1, %c0_2] : memref<256x896xbf16, #tpu.memory_space<vmem>>, vector<256x896xbf16>
    %cst = arith.constant dense<0.000000e+00> : vector<32x896xf32>
    %2 = tpu.matmul %0, %1, %cst {dimension_numbers = #tpu.dot_dimension_numbers<[1], [0], [0], [1], [0, 0, 1, 1], [], []>} : vector<32x256xbf16>, vector<256x896xbf16>, vector<32x896xf32> -> vector<32x896xf32>
    %c0_3 = arith.constant 0 : index
    %c0_4 = arith.constant 0 : index
    %3 = vector.load %arg3[%c0_3, %c0_4] : memref<32x1xf32, #tpu.memory_space<vmem>>, vector<32x1xf32>
    %4 = vector.broadcast %3 : vector<32x1xf32> to vector<32x896xf32>
    %5 = arith.addf %2, %4 : vector<32x896xf32>
    %cst_5 = arith.constant 0.000000e+00 : f32
    %6 = vector.broadcast %cst_5 : f32 to vector<32x896xf32>
    %7 = arith.maximumf %5, %6 : vector<32x896xf32>
    %8 = arith.truncf %7 : vector<32x896xf32> to vector<32x896xbf16>
    %c0_6 = arith.constant 0 : index
    %c0_7 = arith.constant 0 : index
    %9 = vector.load %arg4[%c0_6, %c0_7] : memref<32x896xbf16, #tpu.memory_space<vmem>>, vector<32x896xbf16>
    tpu.vector_store %arg4[%c0_6, %c0_7], %8 {strides = array<i32>} : memref<32x896xbf16, #tpu.memory_space<vmem>>, vector<32x896xbf16>,
    return
  }
  func.func @transform_0(%arg0: i32) -> (i32, i32) {
    %c0_i32 = arith.constant 0 : i32
    %c0_i32_0 = arith.constant 0 : i32
    %c0_i32_1 = arith.constant 0 : i32
    return %c0_i32, %c0_i32_0 : i32, i32
  }
  func.func @transform_1(%arg0: i32) -> (i32, i32) {
    %c0_i32 = arith.constant 0 : i32
    %c0_i32_0 = arith.constant 0 : i32
    return %c0_i32, %arg0 : i32, i32
  }
  func.func @transform_2(%arg0: i32) -> (i32, i32) {
    %c0_i32 = arith.constant 0 : i32
    %c0_i32_0 = arith.constant 0 : i32
    %c0_i32_1 = arith.constant 0 : i32
    return %c0_i32, %c0_i32_0 : i32, i32
  }
  func.func @transform_3(%arg0: i32) -> (i32, i32) {
    %c0_i32 = arith.constant 0 : i32
    %c0_i32_0 = arith.constant 0 : i32
    return %c0_i32, %arg0 : i32, i32
  }
}

module attributes {stable_mosaic.version = 11 : i64} {
  func.func @_conv_mm_kernel(%arg0: i32, %arg1: memref<64x512xbf16, #tpu.memory_space<vmem>>, %arg2: memref<512x256xbf16, #tpu.memory_space<vmem>>, %arg3: memref<64x1xf32, #tpu.memory_space<vmem>>, %arg4: memref<64x256xbf16, #tpu.memory_space<vmem>>) attributes {dimension_semantics = [#tpu.dimension_semantics<parallel>], iteration_bounds = array<i64: 1>, scalar_prefetch = 0 : i64, scratch_operands = 0 : i64, tpu.core_type = #tpu.core_type<tc>, window_params = [{pipeline_mode = #tpu.pipeline_mode<synchronous>, transform_indices = @transform_0, window_bounds = array<i64: 64, 512>}, {transform_indices = @transform_1, window_bounds = array<i64: 512, 256>}, {pipeline_mode = #tpu.pipeline_mode<synchronous>, transform_indices = @transform_2, window_bounds = array<i64: 64, 1>}, {transform_indices = @transform_3, window_bounds = array<i64: 64, 256>}]} {
    %c0 = arith.constant 0 : index
    %c0_0 = arith.constant 0 : index
    %0 = vector.load %arg1[%c0, %c0_0] : memref<64x512xbf16, #tpu.memory_space<vmem>>, vector<64x512xbf16>
    %c0_1 = arith.constant 0 : index
    %c0_2 = arith.constant 0 : index
    %1 = vector.load %arg2[%c0_1, %c0_2] : memref<512x256xbf16, #tpu.memory_space<vmem>>, vector<512x256xbf16>
    %cst = arith.constant dense<0.000000e+00> : vector<64x256xf32>
    %2 = tpu.matmul %0, %1, %cst {dimension_numbers = #tpu.dot_dimension_numbers<[1], [0], [0], [1], [0, 0, 1, 1], [], []>} : vector<64x512xbf16>, vector<512x256xbf16>, vector<64x256xf32> -> vector<64x256xf32>
    %c0_3 = arith.constant 0 : index
    %c0_4 = arith.constant 0 : index
    %3 = vector.load %arg3[%c0_3, %c0_4] : memref<64x1xf32, #tpu.memory_space<vmem>>, vector<64x1xf32>
    %4 = vector.broadcast %3 : vector<64x1xf32> to vector<64x256xf32>
    %5 = arith.addf %2, %4 : vector<64x256xf32>
    %cst_5 = arith.constant 0.000000e+00 : f32
    %6 = vector.broadcast %cst_5 : f32 to vector<64x256xf32>
    %7 = arith.maximumf %5, %6 : vector<64x256xf32>
    %8 = arith.truncf %7 : vector<64x256xf32> to vector<64x256xbf16>
    %c0_6 = arith.constant 0 : index
    %c0_7 = arith.constant 0 : index
    %9 = vector.load %arg4[%c0_6, %c0_7] : memref<64x256xbf16, #tpu.memory_space<vmem>>, vector<64x256xbf16>
    tpu.vector_store %arg4[%c0_6, %c0_7], %8 {strides = array<i32>} : memref<64x256xbf16, #tpu.memory_space<vmem>>, vector<64x256xbf16>,
    return
  }
  func.func @transform_0(%arg0: i32) -> (i32, i32) {
    %c0_i32 = arith.constant 0 : i32
    %c0_i32_0 = arith.constant 0 : i32
    %c0_i32_1 = arith.constant 0 : i32
    return %c0_i32, %c0_i32_0 : i32, i32
  }
  func.func @transform_1(%arg0: i32) -> (i32, i32) {
    %c0_i32 = arith.constant 0 : i32
    %c0_i32_0 = arith.constant 0 : i32
    return %c0_i32, %arg0 : i32, i32
  }
  func.func @transform_2(%arg0: i32) -> (i32, i32) {
    %c0_i32 = arith.constant 0 : i32
    %c0_i32_0 = arith.constant 0 : i32
    %c0_i32_1 = arith.constant 0 : i32
    return %c0_i32, %c0_i32_0 : i32, i32
  }
  func.func @transform_3(%arg0: i32) -> (i32, i32) {
    %c0_i32 = arith.constant 0 : i32
    %c0_i32_0 = arith.constant 0 : i32
    return %c0_i32, %arg0 : i32, i32
  }
}

module attributes {stable_mosaic.version = 11 : i64} {
  func.func @_conv_mm_kernel(%arg0: i32, %arg1: memref<64x576xbf16, #tpu.memory_space<vmem>>, %arg2: memref<576x128xbf16, #tpu.memory_space<vmem>>, %arg3: memref<64x1xf32, #tpu.memory_space<vmem>>, %arg4: memref<64x128xbf16, #tpu.memory_space<vmem>>) attributes {dimension_semantics = [#tpu.dimension_semantics<parallel>], iteration_bounds = array<i64: 1>, scalar_prefetch = 0 : i64, scratch_operands = 0 : i64, tpu.core_type = #tpu.core_type<tc>, window_params = [{pipeline_mode = #tpu.pipeline_mode<synchronous>, transform_indices = @transform_0, window_bounds = array<i64: 64, 576>}, {transform_indices = @transform_1, window_bounds = array<i64: 576, 128>}, {pipeline_mode = #tpu.pipeline_mode<synchronous>, transform_indices = @transform_2, window_bounds = array<i64: 64, 1>}, {transform_indices = @transform_3, window_bounds = array<i64: 64, 128>}]} {
    %c0 = arith.constant 0 : index
    %c0_0 = arith.constant 0 : index
    %0 = vector.load %arg1[%c0, %c0_0] : memref<64x576xbf16, #tpu.memory_space<vmem>>, vector<64x576xbf16>
    %c0_1 = arith.constant 0 : index
    %c0_2 = arith.constant 0 : index
    %1 = vector.load %arg2[%c0_1, %c0_2] : memref<576x128xbf16, #tpu.memory_space<vmem>>, vector<576x128xbf16>
    %cst = arith.constant dense<0.000000e+00> : vector<64x128xf32>
    %2 = tpu.matmul %0, %1, %cst {dimension_numbers = #tpu.dot_dimension_numbers<[1], [0], [0], [1], [0, 0, 1, 1], [], []>} : vector<64x576xbf16>, vector<576x128xbf16>, vector<64x128xf32> -> vector<64x128xf32>
    %c0_3 = arith.constant 0 : index
    %c0_4 = arith.constant 0 : index
    %3 = vector.load %arg3[%c0_3, %c0_4] : memref<64x1xf32, #tpu.memory_space<vmem>>, vector<64x1xf32>
    %4 = vector.broadcast %3 : vector<64x1xf32> to vector<64x128xf32>
    %5 = arith.addf %2, %4 : vector<64x128xf32>
    %cst_5 = arith.constant 0.000000e+00 : f32
    %6 = vector.broadcast %cst_5 : f32 to vector<64x128xf32>
    %7 = arith.maximumf %5, %6 : vector<64x128xf32>
    %8 = arith.truncf %7 : vector<64x128xf32> to vector<64x128xbf16>
    %c0_6 = arith.constant 0 : index
    %c0_7 = arith.constant 0 : index
    %9 = vector.load %arg4[%c0_6, %c0_7] : memref<64x128xbf16, #tpu.memory_space<vmem>>, vector<64x128xbf16>
    tpu.vector_store %arg4[%c0_6, %c0_7], %8 {strides = array<i32>} : memref<64x128xbf16, #tpu.memory_space<vmem>>, vector<64x128xbf16>,
    return
  }
  func.func @transform_0(%arg0: i32) -> (i32, i32) {
    %c0_i32 = arith.constant 0 : i32
    %c0_i32_0 = arith.constant 0 : i32
    %c0_i32_1 = arith.constant 0 : i32
    return %c0_i32, %c0_i32_0 : i32, i32
  }
  func.func @transform_1(%arg0: i32) -> (i32, i32) {
    %c0_i32 = arith.constant 0 : i32
    %c0_i32_0 = arith.constant 0 : i32
    return %c0_i32, %arg0 : i32, i32
  }
  func.func @transform_2(%arg0: i32) -> (i32, i32) {
    %c0_i32 = arith.constant 0 : i32
    %c0_i32_0 = arith.constant 0 : i32
    %c0_i32_1 = arith.constant 0 : i32
    return %c0_i32, %c0_i32_0 : i32, i32
  }
  func.func @transform_3(%arg0: i32) -> (i32, i32) {
    %c0_i32 = arith.constant 0 : i32
    %c0_i32_0 = arith.constant 0 : i32
    return %c0_i32, %arg0 : i32, i32
  }
}

module attributes {stable_mosaic.version = 11 : i64} {
  func.func @kernel(%arg0: i32, %arg1: memref<3136x2xbf16, #tpu.memory_space<vmem>>, %arg2: memref<1x512x3136xbf16, #tpu.memory_space<vmem>>, %arg3: memref<1x512x1xf32, #tpu.memory_space<vmem>>, %arg4: memref<1x16x512xbf16, #tpu.memory_space<vmem>>, %arg5: memref<1x16x1xf32, #tpu.memory_space<vmem>>, %arg6: memref<1x16x2xf32, #tpu.memory_space<vmem>>) attributes {dimension_semantics = [#tpu.dimension_semantics<parallel>], iteration_bounds = array<i64: 2>, scalar_prefetch = 0 : i64, scratch_operands = 0 : i64, tpu.core_type = #tpu.core_type<tc>, window_params = [{pipeline_mode = #tpu.pipeline_mode<synchronous>, transform_indices = @transform_0, window_bounds = array<i64: 3136, 2>}, {transform_indices = @transform_1, window_bounds = array<i64: 1, 512, 3136>}, {transform_indices = @transform_2, window_bounds = array<i64: 1, 512, 1>}, {transform_indices = @transform_3, window_bounds = array<i64: 1, 16, 512>}, {transform_indices = @transform_4, window_bounds = array<i64: 1, 16, 1>}, {transform_indices = @transform_5, window_bounds = array<i64: 1, 16, 2>}]} {
    %c0 = arith.constant 0 : index
    %c0_0 = arith.constant 0 : index
    %0 = vector.load %arg1[%c0, %c0_0] : memref<3136x2xbf16, #tpu.memory_space<vmem>>, vector<3136x2xbf16>
    %c0_1 = arith.constant 0 : index
    %c0_2 = arith.constant 0 : index
    %c0_3 = arith.constant 0 : index
    %1 = vector.load %arg2[%c0_1, %c0_2, %c0_3] : memref<1x512x3136xbf16, #tpu.memory_space<vmem>>, vector<1x512x3136xbf16>
    %2 = vector.shape_cast %1 : vector<1x512x3136xbf16> to vector<512x3136xbf16>
    %cst = arith.constant dense<0.000000e+00> : vector<512x2xf32>
    %3 = tpu.matmul %2, %0, %cst {dimension_numbers = #tpu.dot_dimension_numbers<[1], [0], [0], [1], [0, 0, 1, 1], [], []>} : vector<512x3136xbf16>, vector<3136x2xbf16>, vector<512x2xf32> -> vector<512x2xf32>
    %c0_4 = arith.constant 0 : index
    %c0_5 = arith.constant 0 : index
    %c0_6 = arith.constant 0 : index
    %4 = vector.load %arg3[%c0_4, %c0_5, %c0_6] : memref<1x512x1xf32, #tpu.memory_space<vmem>>, vector<1x512x1xf32>
    %5 = vector.shape_cast %4 : vector<1x512x1xf32> to vector<512x1xf32>
    %6 = vector.broadcast %5 : vector<512x1xf32> to vector<512x2xf32>
    %7 = arith.addf %3, %6 : vector<512x2xf32>
    %cst_7 = arith.constant 0.000000e+00 : f32
    %8 = vector.broadcast %cst_7 : f32 to vector<512x2xf32>
    %9 = arith.maximumf %7, %8 : vector<512x2xf32>
    %c0_8 = arith.constant 0 : index
    %c0_9 = arith.constant 0 : index
    %c0_10 = arith.constant 0 : index
    %10 = vector.load %arg4[%c0_8, %c0_9, %c0_10] : memref<1x16x512xbf16, #tpu.memory_space<vmem>>, vector<1x16x512xbf16>
    %11 = vector.shape_cast %10 : vector<1x16x512xbf16> to vector<16x512xbf16>
    %12 = arith.truncf %9 : vector<512x2xf32> to vector<512x2xbf16>
    %cst_11 = arith.constant dense<0.000000e+00> : vector<16x2xf32>
    %13 = tpu.matmul %11, %12, %cst_11 {dimension_numbers = #tpu.dot_dimension_numbers<[1], [0], [0], [1], [0, 0, 1, 1], [], []>} : vector<16x512xbf16>, vector<512x2xbf16>, vector<16x2xf32> -> vector<16x2xf32>
    %c0_12 = arith.constant 0 : index
    %c0_13 = arith.constant 0 : index
    %c0_14 = arith.constant 0 : index
    %14 = vector.load %arg5[%c0_12, %c0_13, %c0_14] : memref<1x16x1xf32, #tpu.memory_space<vmem>>, vector<1x16x1xf32>
    %15 = vector.shape_cast %14 : vector<1x16x1xf32> to vector<16x1xf32>
    %16 = vector.broadcast %15 : vector<16x1xf32> to vector<16x2xf32>
    %17 = arith.addf %13, %16 : vector<16x2xf32>
    %c0_15 = arith.constant 0 : index
    %c0_16 = arith.constant 0 : index
    %c0_17 = arith.constant 0 : index
    %18 = vector.load %arg6[%c0_15, %c0_16, %c0_17] : memref<1x16x2xf32, #tpu.memory_space<vmem>>, vector<1x16x2xf32>
    %19 = vector.shape_cast %18 : vector<1x16x2xf32> to vector<16x2xf32>
    %20 = vector.shape_cast %17 : vector<16x2xf32> to vector<1x16x2xf32>
    tpu.vector_store %arg6[%c0_15, %c0_16, %c0_17], %20 {strides = array<i32>} : memref<1x16x2xf32, #tpu.memory_space<vmem>>, vector<1x16x2xf32>,
    return
  }
  func.func @transform_0(%arg0: i32) -> (i32, i32) {
    %c0_i32 = arith.constant 0 : i32
    %c0_i32_0 = arith.constant 0 : i32
    %c0_i32_1 = arith.constant 0 : i32
    return %c0_i32, %c0_i32_0 : i32, i32
  }
  func.func @transform_1(%arg0: i32) -> (i32, i32, i32) {
    %c0_i32 = arith.constant 0 : i32
    %c0_i32_0 = arith.constant 0 : i32
    %c0_i32_1 = arith.constant 0 : i32
    return %arg0, %c0_i32, %c0_i32_0 : i32, i32, i32
  }
  func.func @transform_2(%arg0: i32) -> (i32, i32, i32) {
    %c0_i32 = arith.constant 0 : i32
    %c0_i32_0 = arith.constant 0 : i32
    %c0_i32_1 = arith.constant 0 : i32
    return %arg0, %c0_i32, %c0_i32_0 : i32, i32, i32
  }
  func.func @transform_3(%arg0: i32) -> (i32, i32, i32) {
    %c0_i32 = arith.constant 0 : i32
    %c0_i32_0 = arith.constant 0 : i32
    %c0_i32_1 = arith.constant 0 : i32
    return %arg0, %c0_i32, %c0_i32_0 : i32, i32, i32
  }
  func.func @transform_4(%arg0: i32) -> (i32, i32, i32) {
    %c0_i32 = arith.constant 0 : i32
    %c0_i32_0 = arith.constant 0 : i32
    %c0_i32_1 = arith.constant 0 : i32
    return %arg0, %c0_i32, %c0_i32_0 : i32, i32, i32
  }
  func.func @transform_5(%arg0: i32) -> (i32, i32, i32) {
    %c0_i32 = arith.constant 0 : i32
    %c0_i32_0 = arith.constant 0 : i32
    %c0_i32_1 = arith.constant 0 : i32
    return %arg0, %c0_i32, %c0_i32_0 : i32, i32, i32
  }
}

</mosaic_0001>

<llo_original>
// kernel: atari_bootstrapped_dqn_forward.4
$region0: #{atari_bootstrapped_dqn_forward.4}
  #allocation0 [shape = 'u32[]', space=smem, size = 0x4, offset = 0x4, fixed_abs, tag = 'smem constant byte address 0x4 - core index']
  #allocation1 [shape = 'u32[72,128]{1,0:T(1,128)}', space=vmem, size = 0x9000, scoped, tag = 'internal scratch']
  %s0 = inlined_call_operand.vmem [shape: bf16[32,256], index: 0, kind: input, shape index: {}]
  %s1 = inlined_call_operand.vmem [shape: bf16[256,800], index: 1, kind: input, shape index: {}]
  %s2 = inlined_call_operand.vmem [shape: f32[32,1], index: 2, kind: input, shape index: {}]
  %s3 = inlined_call_operand.vmem [shape: bf16[32,800], index: 3, kind: output, shape index: {}]
  %s4 = sld [smem:[#allocation0]]
  $region22: #{atari_bootstrapped_dqn_forward.4} parent=0
    _
  %s6 = ssub.s32 1, %s4
  %s7 = scalar_select 0, %s6, %s4
  // Predicated region
  $region2: #{atari_bootstrapped_dqn_forward.4} parent=0 // pred_check
    _
  $region3: #{atari_bootstrapped_dqn_forward.4} parent=0 // pred_check_branch
    %9 = sbr.rel (0) target = $region5
  $region4: #{atari_bootstrapped_dqn_forward.4} parent=0 // pred_region
    _
  $region5: #{atari_bootstrapped_dqn_forward.4} parent=0 // pred_fallthru
    _
  // Predicated region
  $region6: #{atari_bootstrapped_dqn_forward.4} parent=0 // pred_check
    _
  $region7: #{atari_bootstrapped_dqn_forward.4} parent=0 // pred_check_branch
    %11 = sbr.rel (0) target = $region9
  $region8: #{atari_bootstrapped_dqn_forward.4} parent=0 // pred_region
    _
  $region9: #{atari_bootstrapped_dqn_forward.4} parent=0 // pred_fallthru
    _
  // Predicated region
  $region10: #{atari_bootstrapped_dqn_forward.4} parent=0 // pred_check
    _
  $region11: #{atari_bootstrapped_dqn_forward.4} parent=0 // pred_check_branch
    %13 = sbr.rel (0) target = $region13
  $region12: #{atari_bootstrapped_dqn_forward.4} parent=0 // pred_region
    _
  $region13: #{atari_bootstrapped_dqn_forward.4} parent=0 // pred_fallthru
    _
  %v14 = vld [vmem:[%s0] sm:$0xff]
  %v15 = vld [vmem:[%s0 + $0x8] sm:$0xff]
  %v16 = vld [vmem:[%s0 + $0x10] sm:$0xff]
  %v17 = vld [vmem:[%s0 + $0x18] sm:$0xff]
  %v18 = vld [vmem:[%s1] sm:$0xff]
  %v19 = vld [vmem:[%s1 + $0x8] sm:$0xff]
  %v20 = vld [vmem:[%s1 + $0x10] sm:$0xff]
  %v21 = vld [vmem:[%s1 + $0x18] sm:$0xf]
  %v22 = vld [vmem:[%s1 + $0x1c] sm:$0xff]
  %v23 = vld [vmem:[%s1 + $0x24] sm:$0xff]
  %v24 = vld [vmem:[%s1 + $0x2c] sm:$0xff]
  %v25 = vld [vmem:[%s1 + $0x34] sm:$0xf]
  %v26 = vld [vmem:[%s1 + $0x38] sm:$0xff]
  %v27 = vld [vmem:[%s1 + $0x40] sm:$0xff]
  %v28 = vld [vmem:[%s1 + $0x48] sm:$0xff]
  %v29 = vld [vmem:[%s1 + $0x50] sm:$0xf]
  %v30 = vld [vmem:[%s1 + $0x54] sm:$0xff]
  %v31 = vld [vmem:[%s1 + $0x5c] sm:$0xff]
  %v32 = vld [vmem:[%s1 + $0x64] sm:$0xff]
  %v33 = vld [vmem:[%s1 + $0x6c] sm:$0xf]
  %v34 = vld [vmem:[%s1 + $0x70] sm:$0xff]
  %v35 = vld [vmem:[%s1 + $0x78] sm:$0xff]
  %v36 = vld [vmem:[%s1 + $0x80] sm:$0xff]
  %v37 = vld [vmem:[%s1 + $0x88] sm:$0xf]
  %v38 = vld [vmem:[%s1 + $0x8c] sm:$0xff]
  %v39 = vld [vmem:[%s1 + $0x94] sm:$0xff]
  %v40 = vld [vmem:[%s1 + $0x9c] sm:$0xff]
  %v41 = vld [vmem:[%s1 + $0xa4] sm:$0xf]
  %v42 = vld [vmem:[%s1 + $0xa8] sm:$0xff]
  %v43 = vld [vmem:[%s1 + $0xb0] sm:$0xff]
  %v44 = vld [vmem:[%s1 + $0xb8] sm:$0xff]
  %v45 = vld [vmem:[%s1 + $0xc0] sm:$0xf]
  %v46 = vld [vmem:[%s1 + $0xc4] sm:$0xff]
  %v47 = vld [vmem:[%s1 + $0xcc] sm:$0xff]
  %v48 = vld [vmem:[%s1 + $0xd4] sm:$0xff]
  %v49 = vld [vmem:[%s1 + $0xdc] sm:$0xf]
  %v50 = vld [vmem:[%s1 + $0xe0] sm:$0xff]
  %v51 = vld [vmem:[%s1 + $0xe8] sm:$0xff]
  %v52 = vld [vmem:[%s1 + $0xf0] sm:$0xff]
  %v53 = vld [vmem:[%s1 + $0xf8] sm:$0xf]
  %v54 = vld [vmem:[%s1 + $0xfc] sm:$0xff]
  %v55 = vld [vmem:[%s1 + $0x104] sm:$0xff]
  %v56 = vld [vmem:[%s1 + $0x10c] sm:$0xff]
  %v57 = vld [vmem:[%s1 + $0x114] sm:$0xf]
  %v58 = vld [vmem:[%s1 + $0x118] sm:$0xff]
  %v59 = vld [vmem:[%s1 + $0x120] sm:$0xff]
  %v60 = vld [vmem:[%s1 + $0x128] sm:$0xff]
  %v61 = vld [vmem:[%s1 + $0x130] sm:$0xf]
  %v62 = vld [vmem:[%s1 + $0x134] sm:$0xff]
  %v63 = vld [vmem:[%s1 + $0x13c] sm:$0xff]
  %v64 = vld [vmem:[%s1 + $0x144] sm:$0xff]
  %v65 = vld [vmem:[%s1 + $0x14c] sm:$0xf]
  %v66 = vld [vmem:[%s1 + $0x150] sm:$0xff]
  %v67 = vld [vmem:[%s1 + $0x158] sm:$0xff]
  %v68 = vld [vmem:[%s1 + $0x160] sm:$0xff]
  %v69 = vld [vmem:[%s1 + $0x168] sm:$0xf]
  %v70 = vld [vmem:[%s1 + $0x16c] sm:$0xff]
  %v71 = vld [vmem:[%s1 + $0x174] sm:$0xff]
  %v72 = vld [vmem:[%s1 + $0x17c] sm:$0xff]
  %v73 = vld [vmem:[%s1 + $0x184] sm:$0xf]
  %v74 = vld [vmem:[%s1 + $0x188] sm:$0xff]
  %v75 = vld [vmem:[%s1 + $0x190] sm:$0xff]
  %v76 = vld [vmem:[%s1 + $0x198] sm:$0xff]
  %v77 = vld [vmem:[%s1 + $0x1a0] sm:$0xf]
  %v78 = vld [vmem:[%s1 + $0x1a4] sm:$0xff]
  %v79 = vld [vmem:[%s1 + $0x1ac] sm:$0xff]
  %v80 = vld [vmem:[%s1 + $0x1b4] sm:$0xff]
  %v81 = vld [vmem:[%s1 + $0x1bc] sm:$0xf]
  %v82 = vld [vmem:[%s1 + $0x1c0] sm:$0xff]
  %v83 = vld [vmem:[%s1 + $0x1c8] sm:$0xff]
  %v84 = vld [vmem:[%s1 + $0x1d0] sm:$0xff]
  %v85 = vld [vmem:[%s1 + $0x1d8] sm:$0xf]
  %v86 = vld [vmem:[%s1 + $0x1dc] sm:$0xff]
  %v87 = vld [vmem:[%s1 + $0x1e4] sm:$0xff]
  %v88 = vld [vmem:[%s1 + $0x1ec] sm:$0xff]
  %v89 = vld [vmem:[%s1 + $0x1f4] sm:$0xf]
  %v90 = vld [vmem:[%s1 + $0x1f8] sm:$0xff]
  %v91 = vld [vmem:[%s1 + $0x200] sm:$0xff]
  %v92 = vld [vmem:[%s1 + $0x208] sm:$0xff]
  %v93 = vld [vmem:[%s1 + $0x210] sm:$0xf]
  %v94 = vld [vmem:[%s1 + $0x214] sm:$0xff]
  %v95 = vld [vmem:[%s1 + $0x21c] sm:$0xff]
  %v96 = vld [vmem:[%s1 + $0x224] sm:$0xff]
  %v97 = vld [vmem:[%s1 + $0x22c] sm:$0xf]
  %v98 = vld [vmem:[%s1 + $0x230] sm:$0xff]
  %v99 = vld [vmem:[%s1 + $0x238] sm:$0xff]
  %v100 = vld [vmem:[%s1 + $0x240] sm:$0xff]
  %v101 = vld [vmem:[%s1 + $0x248] sm:$0xf]
  %v102 = vld [vmem:[%s1 + $0x24c] sm:$0xff]
  %v103 = vld [vmem:[%s1 + $0x254] sm:$0xff]
  %v104 = vld [vmem:[%s1 + $0x25c] sm:$0xff]
  %v105 = vld [vmem:[%s1 + $0x264] sm:$0xf]
  %v106 = vld [vmem:[%s1 + $0x268] sm:$0xff]
  %v107 = vld [vmem:[%s1 + $0x270] sm:$0xff]
  %v108 = vld [vmem:[%s1 + $0x278] sm:$0xff]
  %v109 = vld [vmem:[%s1 + $0x280] sm:$0xf]
  %v110 = vld [vmem:[%s1 + $0x284] sm:$0xff]
  %v111 = vld [vmem:[%s1 + $0x28c] sm:$0xff]
  %v112 = vld [vmem:[%s1 + $0x294] sm:$0xff]
  %v113 = vld [vmem:[%s1 + $0x29c] sm:$0xf]
  %v114 = vld [vmem:[%s1 + $0x2a0] sm:$0xff]
  %v115 = vld [vmem:[%s1 + $0x2a8] sm:$0xff]
  %v116 = vld [vmem:[%s1 + $0x2b0] sm:$0xff]
  %v117 = vld [vmem:[%s1 + $0x2b8] sm:$0xf]
  %v118 = vld [vmem:[%s1 + $0x2bc] sm:$0xff]
  %v119 = vld [vmem:[%s1 + $0x2c4] sm:$0xff]
  %v120 = vld [vmem:[%s1 + $0x2cc] sm:$0xff]
  %v121 = vld [vmem:[%s1 + $0x2d4] sm:$0xf]
  %v122 = vld [vmem:[%s1 + $0x2d8] sm:$0xff]
  %v123 = vld [vmem:[%s1 + $0x2e0] sm:$0xff]
  %v124 = vld [vmem:[%s1 + $0x2e8] sm:$0xff]
  %v125 = vld [vmem:[%s1 + $0x2f0] sm:$0xf]
  %v126 = vld [vmem:[%s1 + $0x2f4] sm:$0xff]
  %v127 = vld [vmem:[%s1 + $0x2fc] sm:$0xff]
  %v128 = vld [vmem:[%s1 + $0x304] sm:$0xff]
  %v129 = vld [vmem:[%s1 + $0x30c] sm:$0xf]
  %v130 = vld [vmem:[%s1 + $0x310] sm:$0xff]
  %v131 = vld [vmem:[%s1 + $0x318] sm:$0xff]
  %v132 = vld [vmem:[%s1 + $0x320] sm:$0xff]
  %v133 = vld [vmem:[%s1 + $0x328] sm:$0xf]
  %v134 = vld [vmem:[%s1 + $0x32c] sm:$0xff]
  %v135 = vld [vmem:[%s1 + $0x334] sm:$0xff]
  %v136 = vld [vmem:[%s1 + $0x33c] sm:$0xff]
  %v137 = vld [vmem:[%s1 + $0x344] sm:$0xf]
  %v138 = vld [vmem:[%s1 + $0x348] sm:$0xff]
  %v139 = vld [vmem:[%s1 + $0x350] sm:$0xff]
  %v140 = vld [vmem:[%s1 + $0x358] sm:$0xff]
  %v141 = vld [vmem:[%s1 + $0x360] sm:$0xf]
  %v142 = vld [vmem:[%s1 + $0x364] sm:$0xff]
  %v143 = vld [vmem:[%s1 + $0x36c] sm:$0xff]
  %v144 = vld [vmem:[%s1 + $0x374] sm:$0xff]
  %v145 = vld [vmem:[%s1 + $0x37c] sm:$0xf]
  %v146 = vld [vmem:[%s2] sm:$0xff]
  %v147 = vld [vmem:[%s2 + $0x8] sm:$0xff]
  %v148 = vld [vmem:[%s2 + $0x10] sm:$0xff]
  %v149 = vld [vmem:[%s2 + $0x18] sm:$0xff]
  %151 = vset.pattern.permute.xlu0 0
  %152 = vperm.xlu0 %151, %v146
  %v153 = vpop.permute.xlu0 %152
  %156 = vset.pattern.permute.xlu0 0
  %157 = vperm.xlu0 %156, %v147
  %v158 = vpop.permute.xlu0 %157
  %161 = vset.pattern.permute.xlu0 0
  %162 = vperm.xlu0 %161, %v148
  %v163 = vpop.permute.xlu0 %162
  %166 = vset.pattern.permute.xlu0 0
  %167 = vperm.xlu0 %166, %v149
  %v168 = vpop.permute.xlu0 %167
  %v174 = vunpack.c.l.b16 %v14
  %v175 = vunpack.c.h.b16 %v14
  %v176 = vunpack.c.l.b16 %v15
  %v177 = vunpack.c.h.b16 %v15
  %v178 = vunpack.c.l.b16 %v16
  %v179 = vunpack.c.h.b16 %v16
  %v180 = vunpack.c.l.b16 %v17
  %v181 = vunpack.c.h.b16 %v17
  %v182 = vpack.c.b16 %v176, %v174
  %v183 = vpack.c.b16 %v177, %v175
  %v184 = vpack.c.b16 %v180, %v178
  %v185 = vpack.c.b16 %v181, %v179
  %v318 = vunpack.c.l.b16 %v18
  %v319 = vunpack.c.h.b16 %v18
  %v320 = vunpack.c.l.b16 %v19
  %v321 = vunpack.c.h.b16 %v19
  %v322 = vunpack.c.l.b16 %v20
  %v323 = vunpack.c.h.b16 %v20
  %v324 = vunpack.c.l.b16 %v21
  %v325 = vunpack.c.l.b16 %v22
  %v326 = vunpack.c.h.b16 %v22
  %v327 = vunpack.c.l.b16 %v23
  %v328 = vunpack.c.h.b16 %v23
  %v329 = vunpack.c.l.b16 %v24
  %v330 = vunpack.c.h.b16 %v24
  %v331 = vunpack.c.l.b16 %v25
  %v332 = vunpack.c.l.b16 %v26
  %v333 = vunpack.c.h.b16 %v26
  %v334 = vunpack.c.l.b16 %v27
  %v335 = vunpack.c.h.b16 %v27
  %v336 = vunpack.c.l.b16 %v28
  %v337 = vunpack.c.h.b16 %v28
  %v338 = vunpack.c.l.b16 %v29
  %v339 = vunpack.c.l.b16 %v30
  %v340 = vunpack.c.h.b16 %v30
  %v341 = vunpack.c.l.b16 %v31
  %v342 = vunpack.c.h.b16 %v31
  %v343 = vunpack.c.l.b16 %v32
  %v344 = vunpack.c.h.b16 %v32
  %v345 = vunpack.c.l.b16 %v33
  %v346 = vunpack.c.l.b16 %v34
  %v347 = vunpack.c.h.b16 %v34
  %v348 = vunpack.c.l.b16 %v35
  %v349 = vunpack.c.h.b16 %v35
  %v350 = vunpack.c.l.b16 %v36
  %v351 = vunpack.c.h.b16 %v36
  %v352 = vunpack.c.l.b16 %v37
  %v353 = vunpack.c.l.b16 %v38
  %v354 = vunpack.c.h.b16 %v38
  %v355 = vunpack.c.l.b16 %v39
  %v356 = vunpack.c.h.b16 %v39
  %v357 = vunpack.c.l.b16 %v40
  %v358 = vunpack.c.h.b16 %v40
  %v359 = vunpack.c.l.b16 %v41
  %v360 = vunpack.c.l.b16 %v42
  %v361 = vunpack.c.h.b16 %v42
  %v362 = vunpack.c.l.b16 %v43
  %v363 = vunpack.c.h.b16 %v43
  %v364 = vunpack.c.l.b16 %v44
  %v365 = vunpack.c.h.b16 %v44
  %v366 = vunpack.c.l.b16 %v45
  %v367 = vunpack.c.l.b16 %v46
  %v368 = vunpack.c.h.b16 %v46
  %v369 = vunpack.c.l.b16 %v47
  %v370 = vunpack.c.h.b16 %v47
  %v371 = vunpack.c.l.b16 %v48
  %v372 = vunpack.c.h.b16 %v48
  %v373 = vunpack.c.l.b16 %v49
  %v374 = vunpack.c.l.b16 %v50
  %v375 = vunpack.c.h.b16 %v50
  %v376 = vunpack.c.l.b16 %v51
  %v377 = vunpack.c.h.b16 %v51
  %v378 = vunpack.c.l.b16 %v52
  %v379 = vunpack.c.h.b16 %v52
  %v380 = vunpack.c.l.b16 %v53
  %v381 = vunpack.c.l.b16 %v54
  %v382 = vunpack.c.h.b16 %v54
  %v383 = vunpack.c.l.b16 %v55
  %v384 = vunpack.c.h.b16 %v55
  %v385 = vunpack.c.l.b16 %v56
  %v386 = vunpack.c.h.b16 %v56
  %v387 = vunpack.c.l.b16 %v57
  %v388 = vunpack.c.l.b16 %v58
  %v389 = vunpack.c.h.b16 %v58
  %v390 = vunpack.c.l.b16 %v59
  %v391 = vunpack.c.h.b16 %v59
  %v392 = vunpack.c.l.b16 %v60
  %v393 = vunpack.c.h.b16 %v60
  %v394 = vunpack.c.l.b16 %v61
  %v395 = vunpack.c.l.b16 %v62
  %v396 = vunpack.c.h.b16 %v62
  %v397 = vunpack.c.l.b16 %v63
  %v398 = vunpack.c.h.b16 %v63
  %v399 = vunpack.c.l.b16 %v64
  %v400 = vunpack.c.h.b16 %v64
  %v401 = vunpack.c.l.b16 %v65
  %v402 = vunpack.c.l.b16 %v66
  %v403 = vunpack.c.h.b16 %v66
  %v404 = vunpack.c.l.b16 %v67
  %v405 = vunpack.c.h.b16 %v67
  %v406 = vunpack.c.l.b16 %v68
  %v407 = vunpack.c.h.b16 %v68
  %v408 = vunpack.c.l.b16 %v69
  %v409 = vunpack.c.l.b16 %v70
  %v410 = vunpack.c.h.b16 %v70
  %v411 = vunpack.c.l.b16 %v71
  %v412 = vunpack.c.h.b16 %v71
  %v413 = vunpack.c.l.b16 %v72
  %v414 = vunpack.c.h.b16 %v72
  %v415 = vunpack.c.l.b16 %v73
  %v416 = vunpack.c.l.b16 %v74
  %v417 = vunpack.c.h.b16 %v74
  %v418 = vunpack.c.l.b16 %v75
  %v419 = vunpack.c.h.b16 %v75
  %v420 = vunpack.c.l.b16 %v76
  %v421 = vunpack.c.h.b16 %v76
  %v422 = vunpack.c.l.b16 %v77
  %v423 = vunpack.c.l.b16 %v78
  %v424 = vunpack.c.h.b16 %v78
  %v425 = vunpack.c.l.b16 %v79
  %v426 = vunpack.c.h.b16 %v79
  %v427 = vunpack.c.l.b16 %v80
  %v428 = vunpack.c.h.b16 %v80
  %v429 = vunpack.c.l.b16 %v81
  %v430 = vunpack.c.l.b16 %v82
  %v431 = vunpack.c.h.b16 %v82
  %v432 = vunpack.c.l.b16 %v83
  %v433 = vunpack.c.h.b16 %v83
  %v434 = vunpack.c.l.b16 %v84
  %v435 = vunpack.c.h.b16 %v84
  %v436 = vunpack.c.l.b16 %v85
  %v437 = vunpack.c.l.b16 %v86
  %v438 = vunpack.c.h.b16 %v86
  %v439 = vunpack.c.l.b16 %v87
  %v440 = vunpack.c.h.b16 %v87
  %v441 = vunpack.c.l.b16 %v88
  %v442 = vunpack.c.h.b16 %v88
  %v443 = vunpack.c.l.b16 %v89
  %v444 = vunpack.c.l.b16 %v90
  %v445 = vunpack.c.h.b16 %v90
  %v446 = vunpack.c.l.b16 %v91
  %v447 = vunpack.c.h.b16 %v91
  %v448 = vunpack.c.l.b16 %v92
  %v449 = vunpack.c.h.b16 %v92
  %v450 = vunpack.c.l.b16 %v93
  %v451 = vunpack.c.l.b16 %v94
  %v452 = vunpack.c.h.b16 %v94
  %v453 = vunpack.c.l.b16 %v95
  %v454 = vunpack.c.h.b16 %v95
  %v455 = vunpack.c.l.b16 %v96
  %v456 = vunpack.c.h.b16 %v96
  %v457 = vunpack.c.l.b16 %v97
  %v458 = vunpack.c.l.b16 %v98
  %v459 = vunpack.c.h.b16 %v98
  %v460 = vunpack.c.l.b16 %v99
  %v461 = vunpack.c.h.b16 %v99
  %v462 = vunpack.c.l.b16 %v100
  %v463 = vunpack.c.h.b16 %v100
  %v464 = vunpack.c.l.b16 %v101
  %v465 = vunpack.c.l.b16 %v102
  %v466 = vunpack.c.h.b16 %v102
  %v467 = vunpack.c.l.b16 %v103
  %v468 = vunpack.c.h.b16 %v103
  %v469 = vunpack.c.l.b16 %v104
  %v470 = vunpack.c.h.b16 %v104
  %v471 = vunpack.c.l.b16 %v105
  %v472 = vunpack.c.l.b16 %v106
  %v473 = vunpack.c.h.b16 %v106
  %v474 = vunpack.c.l.b16 %v107
  %v475 = vunpack.c.h.b16 %v107
  %v476 = vunpack.c.l.b16 %v108
  %v477 = vunpack.c.h.b16 %v108
  %v478 = vunpack.c.l.b16 %v109
  %v479 = vunpack.c.l.b16 %v110
  %v480 = vunpack.c.h.b16 %v110
  %v481 = vunpack.c.l.b16 %v111
  %v482 = vunpack.c.h.b16 %v111
  %v483 = vunpack.c.l.b16 %v112
  %v484 = vunpack.c.h.b16 %v112
  %v485 = vunpack.c.l.b16 %v113
  %v486 = vunpack.c.l.b16 %v114
  %v487 = vunpack.c.h.b16 %v114
  %v488 = vunpack.c.l.b16 %v115
  %v489 = vunpack.c.h.b16 %v115
  %v490 = vunpack.c.l.b16 %v116
  %v491 = vunpack.c.h.b16 %v116
  %v492 = vunpack.c.l.b16 %v117
  %v493 = vunpack.c.l.b16 %v118
  %v494 = vunpack.c.h.b16 %v118
  %v495 = vunpack.c.l.b16 %v119
  %v496 = vunpack.c.h.b16 %v119
  %v497 = vunpack.c.l.b16 %v120
  %v498 = vunpack.c.h.b16 %v120
  %v499 = vunpack.c.l.b16 %v121
  %v500 = vunpack.c.l.b16 %v122
  %v501 = vunpack.c.h.b16 %v122
  %v502 = vunpack.c.l.b16 %v123
  %v503 = vunpack.c.h.b16 %v123
  %v504 = vunpack.c.l.b16 %v124
  %v505 = vunpack.c.h.b16 %v124
  %v506 = vunpack.c.l.b16 %v125
  %v507 = vunpack.c.l.b16 %v126
  %v508 = vunpack.c.h.b16 %v126
  %v509 = vunpack.c.l.b16 %v127
  %v510 = vunpack.c.h.b16 %v127
  %v511 = vunpack.c.l.b16 %v128
  %v512 = vunpack.c.h.b16 %v128
  %v513 = vunpack.c.l.b16 %v129
  %v514 = vunpack.c.l.b16 %v130
  %v515 = vunpack.c.h.b16 %v130
  %v516 = vunpack.c.l.b16 %v131
  %v517 = vunpack.c.h.b16 %v131
  %v518 = vunpack.c.l.b16 %v132
  %v519 = vunpack.c.h.b16 %v132
  %v520 = vunpack.c.l.b16 %v133
  %v521 = vunpack.c.l.b16 %v134
  %v522 = vunpack.c.h.b16 %v134
  %v523 = vunpack.c.l.b16 %v135
  %v524 = vunpack.c.h.b16 %v135
  %v525 = vunpack.c.l.b16 %v136
  %v526 = vunpack.c.h.b16 %v136
  %v527 = vunpack.c.l.b16 %v137
  %v528 = vunpack.c.l.b16 %v138
  %v529 = vunpack.c.h.b16 %v138
  %v530 = vunpack.c.l.b16 %v139
  %v531 = vunpack.c.h.b16 %v139
  %v532 = vunpack.c.l.b16 %v140
  %v533 = vunpack.c.h.b16 %v140
  %v534 = vunpack.c.l.b16 %v141
  %v535 = vunpack.c.l.b16 %v142
  %v536 = vunpack.c.h.b16 %v142
  %v537 = vunpack.c.l.b16 %v143
  %v538 = vunpack.c.h.b16 %v143
  %v539 = vunpack.c.l.b16 %v144
  %v540 = vunpack.c.h.b16 %v144
  %v541 = vunpack.c.l.b16 %v145
  %v542 = vpack.c.b16 %v325, %v318
  %v543 = vpack.c.b16 %v326, %v319
  %v544 = vpack.c.b16 %v327, %v320
  %v545 = vpack.c.b16 %v328, %v321
  %v546 = vpack.c.b16 %v329, %v322
  %v547 = vpack.c.b16 %v330, %v323
  %v548 = vpack.c.b16 %v331, %v324
  %v549 = vpack.c.b16 %v339, %v332
  %v550 = vpack.c.b16 %v340, %v333
  %v551 = vpack.c.b16 %v341, %v334
  %v552 = vpack.c.b16 %v342, %v335
  %v553 = vpack.c.b16 %v343, %v336
  %v554 = vpack.c.b16 %v344, %v337
  %v555 = vpack.c.b16 %v345, %v338
  %v556 = vpack.c.b16 %v353, %v346
  %v557 = vpack.c.b16 %v354, %v347
  %v558 = vpack.c.b16 %v355, %v348
  %v559 = vpack.c.b16 %v356, %v349
  %v560 = vpack.c.b16 %v357, %v350
  %v561 = vpack.c.b16 %v358, %v351
  %v562 = vpack.c.b16 %v359, %v352
  %v563 = vpack.c.b16 %v367, %v360
  %v564 = vpack.c.b16 %v368, %v361
  %v565 = vpack.c.b16 %v369, %v362
  %v566 = vpack.c.b16 %v370, %v363
  %v567 = vpack.c.b16 %v371, %v364
  %v568 = vpack.c.b16 %v372, %v365
  %v569 = vpack.c.b16 %v373, %v366
  %v570 = vpack.c.b16 %v381, %v374
  %v571 = vpack.c.b16 %v382, %v375
  %v572 = vpack.c.b16 %v383, %v376
  %v573 = vpack.c.b16 %v384, %v377
  %v574 = vpack.c.b16 %v385, %v378
  %v575 = vpack.c.b16 %v386, %v379
  %v576 = vpack.c.b16 %v387, %v380
  %v577 = vpack.c.b16 %v395, %v388
  %v578 = vpack.c.b16 %v396, %v389
  %v579 = vpack.c.b16 %v397, %v390
  %v580 = vpack.c.b16 %v398, %v391
  %v581 = vpack.c.b16 %v399, %v392
  %v582 = vpack.c.b16 %v400, %v393
  %v583 = vpack.c.b16 %v401, %v394
  %v584 = vpack.c.b16 %v409, %v402
  %v585 = vpack.c.b16 %v410, %v403
  %v586 = vpack.c.b16 %v411, %v404
  %v587 = vpack.c.b16 %v412, %v405
  %v588 = vpack.c.b16 %v413, %v406
  %v589 = vpack.c.b16 %v414, %v407
  %v590 = vpack.c.b16 %v415, %v408
  %v591 = vpack.c.b16 %v423, %v416
  %v592 = vpack.c.b16 %v424, %v417
  %v593 = vpack.c.b16 %v425, %v418
  %v594 = vpack.c.b16 %v426, %v419
  %v595 = vpack.c.b16 %v427, %v420
  %v596 = vpack.c.b16 %v428, %v421
  %v597 = vpack.c.b16 %v429, %v422
  %v598 = vpack.c.b16 %v437, %v430
  %v599 = vpack.c.b16 %v438, %v431
  %v600 = vpack.c.b16 %v439, %v432
  %v601 = vpack.c.b16 %v440, %v433
  %v602 = vpack.c.b16 %v441, %v434
  %v603 = vpack.c.b16 %v442, %v435
  %v604 = vpack.c.b16 %v443, %v436
  %v605 = vpack.c.b16 %v451, %v444
  %v606 = vpack.c.b16 %v452, %v445
  %v607 = vpack.c.b16 %v453, %v446
  %v608 = vpack.c.b16 %v454, %v447
  %v609 = vpack.c.b16 %v455, %v448
  %v610 = vpack.c.b16 %v456, %v449
  %v611 = vpack.c.b16 %v457, %v450
  %v612 = vpack.c.b16 %v465, %v458
  %v613 = vpack.c.b16 %v466, %v459
  %v614 = vpack.c.b16 %v467, %v460
  %v615 = vpack.c.b16 %v468, %v461
  %v616 = vpack.c.b16 %v469, %v462
  %v617 = vpack.c.b16 %v470, %v463
  %v618 = vpack.c.b16 %v471, %v464
  %v619 = vpack.c.b16 %v479, %v472
  %v620 = vpack.c.b16 %v480, %v473
  %v621 = vpack.c.b16 %v481, %v474
  %v622 = vpack.c.b16 %v482, %v475
  %v623 = vpack.c.b16 %v483, %v476
  %v624 = vpack.c.b16 %v484, %v477
  %v625 = vpack.c.b16 %v485, %v478
  %v626 = vpack.c.b16 %v493, %v486
  %v627 = vpack.c.b16 %v494, %v487
  %v628 = vpack.c.b16 %v495, %v488
  %v629 = vpack.c.b16 %v496, %v489
  %v630 = vpack.c.b16 %v497, %v490
  %v631 = vpack.c.b16 %v498, %v491
  %v632 = vpack.c.b16 %v499, %v492
  %v633 = vpack.c.b16 %v507, %v500
  %v634 = vpack.c.b16 %v508, %v501
  %v635 = vpack.c.b16 %v509, %v502
  %v636 = vpack.c.b16 %v510, %v503
  %v637 = vpack.c.b16 %v511, %v504
  %v638 = vpack.c.b16 %v512, %v505
  %v639 = vpack.c.b16 %v513, %v506
  %v640 = vpack.c.b16 %v521, %v514
  %v641 = vpack.c.b16 %v522, %v515
  %v642 = vpack.c.b16 %v523, %v516
  %v643 = vpack.c.b16 %v524, %v517
  %v644 = vpack.c.b16 %v525, %v518
  %v645 = vpack.c.b16 %v526, %v519
  %v646 = vpack.c.b16 %v527, %v520
  %v647 = vpack.c.b16 %v535, %v528
  %v648 = vpack.c.b16 %v536, %v529
  %v649 = vpack.c.b16 %v537, %v530
  %v650 = vpack.c.b16 %v538, %v531
  %v651 = vpack.c.b16 %v539, %v532
  %v652 = vpack.c.b16 %v540, %v533
  %v653 = vpack.c.b16 %v541, %v534
  %766 = vmatpush.bf16.msra.mxu0 %v591
  %767 = vmatpush.bf16.msra.mxu0 %v584
  %768 = vmatpush.bf16.msra.mxu0 %v577
  %769 = vmatpush.bf16.msra.mxu0 %v570
  %770 = vmatpush.bf16.msra.mxu0 %v563
  %771 = vmatpush.bf16.msra.mxu0 %v556
  %772 = vmatpush.bf16.msra.mxu0 %v549
  %773 = vmatpush.bf16.msra.mxu0 %v542
  %774 = vmatmul.bf16.gmra.mxu0 %v182
  %v775 = vpop.f32.mrf.mxu0
  %v776 = vadd.f32 %v153, %v775
  %v777 = vpop.f32.mrf.mxu0
  %v778 = vadd.f32 %v158, %v777
  %779 = vmatmul.bf16.gmra.mxu0 %v184
  %v780 = vpop.f32.mrf.mxu0
  %v781 = vadd.f32 %v163, %v780
  %v782 = vpop.f32.mrf.mxu0
  %v783 = vadd.f32 %v168, %v782
  %784 = vdwg.mxu0
  %785 = vmatpush.bf16.msra.mxu0 %v647
  %786 = vmatpush.bf16.msra.mxu0 %v640
  %787 = vmatpush.bf16.msra.mxu0 %v633
  %788 = vmatpush.bf16.msra.mxu0 %v626
  %789 = vmatpush.bf16.msra.mxu0 %v619
  %790 = vmatpush.bf16.msra.mxu0 %v612
  %791 = vmatpush.bf16.msra.mxu0 %v605
  %792 = vmatpush.bf16.msra.mxu0 %v598
  %793 = vmatmul.bf16.gmra.mxu0 %v183
  %v794 = vpop.f32.mrf.mxu0
  %v795 = vadd.f32 %v776, %v794
  %v796 = vpop.f32.mrf.mxu0
  %v797 = vadd.f32 %v778, %v796
  %798 = vmatmul.bf16.gmra.mxu0 %v185
  %v799 = vpop.f32.mrf.mxu0
  %v800 = vadd.f32 %v781, %v799
  %v801 = vpop.f32.mrf.mxu0
  %v802 = vadd.f32 %v783, %v801
  %803 = vdwg.mxu0
  %804 = vmatpush.bf16.msra.mxu0 %v592
  %805 = vmatpush.bf16.msra.mxu0 %v585
  %806 = vmatpush.bf16.msra.mxu0 %v578
  %807 = vmatpush.bf16.msra.mxu0 %v571
  %808 = vmatpush.bf16.msra.mxu0 %v564
  %809 = vmatpush.bf16.msra.mxu0 %v557
  %810 = vmatpush.bf16.msra.mxu0 %v550
  %811 = vmatpush.bf16.msra.mxu0 %v543
  %812 = vmatmul.bf16.gmra.mxu0 %v182
  %v813 = vpop.f32.mrf.mxu0
  %v814 = vadd.f32 %v153, %v813
  %v815 = vpop.f32.mrf.mxu0
  %v816 = vadd.f32 %v158, %v815
  %817 = vmatmul.bf16.gmra.mxu0 %v184
  %v818 = vpop.f32.mrf.mxu0
  %v819 = vadd.f32 %v163, %v818
  %v820 = vpop.f32.mrf.mxu0
  %v821 = vadd.f32 %v168, %v820
  %822 = vdwg.mxu0
  %823 = vmatpush.bf16.msra.mxu0 %v648
  %824 = vmatpush.bf16.msra.mxu0 %v641
  %825 = vmatpush.bf16.msra.mxu0 %v634
  %826 = vmatpush.bf16.msra.mxu0 %v627
  %827 = vmatpush.bf16.msra.mxu0 %v620
  %828 = vmatpush.bf16.msra.mxu0 %v613
  %829 = vmatpush.bf16.msra.mxu0 %v606
  %830 = vmatpush.bf16.msra.mxu0 %v599
  %831 = vmatmul.bf16.gmra.mxu0 %v183
  %v832 = vpop.f32.mrf.mxu0
  %v833 = vadd.f32 %v814, %v832
  %v834 = vpop.f32.mrf.mxu0
  %v835 = vadd.f32 %v816, %v834
  %836 = vmatmul.bf16.gmra.mxu0 %v185
  %v837 = vpop.f32.mrf.mxu0
  %v838 = vadd.f32 %v819, %v837
  %v839 = vpop.f32.mrf.mxu0
  %v840 = vadd.f32 %v821, %v839
  %841 = vdwg.mxu0
  %842 = vmatpush.bf16.msra.mxu0 %v593
  %843 = vmatpush.bf16.msra.mxu0 %v586
  %844 = vmatpush.bf16.msra.mxu0 %v579
  %845 = vmatpush.bf16.msra.mxu0 %v572
  %846 = vmatpush.bf16.msra.mxu0 %v565
  %847 = vmatpush.bf16.msra.mxu0 %v558
  %848 = vmatpush.bf16.msra.mxu0 %v551
  %849 = vmatpush.bf16.msra.mxu0 %v544
  %850 = vmatmul.bf16.gmra.mxu0 %v182
  %v851 = vpop.f32.mrf.mxu0
  %v852 = vadd.f32 %v153, %v851
  %v853 = vpop.f32.mrf.mxu0
  %v854 = vadd.f32 %v158, %v853
  %855 = vmatmul.bf16.gmra.mxu0 %v184
  %v856 = vpop.f32.mrf.mxu0
  %v857 = vadd.f32 %v163, %v856
  %v858 = vpop.f32.mrf.mxu0
  %v859 = vadd.f32 %v168, %v858
  %860 = vdwg.mxu0
  %861 = vmatpush.bf16.msra.mxu0 %v649
  %862 = vmatpush.bf16.msra.mxu0 %v642
  %863 = vmatpush.bf16.msra.mxu0 %v635
  %864 = vmatpush.bf16.msra.mxu0 %v628
  %865 = vmatpush.bf16.msra.mxu0 %v621
  %866 = vmatpush.bf16.msra.mxu0 %v614
  %867 = vmatpush.bf16.msra.mxu0 %v607
  %868 = vmatpush.bf16.msra.mxu0 %v600
  %869 = vmatmul.bf16.gmra.mxu0 %v183
  %v870 = vpop.f32.mrf.mxu0
  %v871 = vadd.f32 %v852, %v870
  %v872 = vpop.f32.mrf.mxu0
  %v873 = vadd.f32 %v854, %v872
  %874 = vmatmul.bf16.gmra.mxu0 %v185
  %v875 = vpop.f32.mrf.mxu0
  %v876 = vadd.f32 %v857, %v875
  %v877 = vpop.f32.mrf.mxu0
  %v878 = vadd.f32 %v859, %v877
  %879 = vdwg.mxu0
  %880 = vmatpush.bf16.msra.mxu0 %v594
  %881 = vmatpush.bf16.msra.mxu0 %v587
  %882 = vmatpush.bf16.msra.mxu0 %v580
  %883 = vmatpush.bf16.msra.mxu0 %v573
  %884 = vmatpush.bf16.msra.mxu0 %v566
  %885 = vmatpush.bf16.msra.mxu0 %v559
  %886 = vmatpush.bf16.msra.mxu0 %v552
  %887 = vmatpush.bf16.msra.mxu0 %v545
  %888 = vmatmul.bf16.gmra.mxu0 %v182
  %v889 = vpop.f32.mrf.mxu0
  %v890 = vadd.f32 %v153, %v889
  %v891 = vpop.f32.mrf.mxu0
  %v892 = vadd.f32 %v158, %v891
  %893 = vmatmul.bf16.gmra.mxu0 %v184
  %v894 = vpop.f32.mrf.mxu0
  %v895 = vadd.f32 %v163, %v894
  %v896 = vpop.f32.mrf.mxu0
  %v897 = vadd.f32 %v168, %v896
  %898 = vdwg.mxu0
  %899 = vmatpush.bf16.msra.mxu0 %v650
  %900 = vmatpush.bf16.msra.mxu0 %v643
  %901 = vmatpush.bf16.msra.mxu0 %v636
  %902 = vmatpush.bf16.msra.mxu0 %v629
  %903 = vmatpush.bf16.msra.mxu0 %v622
  %904 = vmatpush.bf16.msra.mxu0 %v615
  %905 = vmatpush.bf16.msra.mxu0 %v608
  %906 = vmatpush.bf16.msra.mxu0 %v601
  %907 = vmatmul.bf16.gmra.mxu0 %v183
  %v908 = vpop.f32.mrf.mxu0
  %v909 = vadd.f32 %v890, %v908
  %v910 = vpop.f32.mrf.mxu0
  %v911 = vadd.f32 %v892, %v910
  %912 = vmatmul.bf16.gmra.mxu0 %v185
  %v913 = vpop.f32.mrf.mxu0
  %v914 = vadd.f32 %v895, %v913
  %v915 = vpop.f32.mrf.mxu0
  %v916 = vadd.f32 %v897, %v915
  %917 = vdwg.mxu0
  %918 = vmatpush.bf16.msra.mxu0 %v595
  %919 = vmatpush.bf16.msra.mxu0 %v588
  %920 = vmatpush.bf16.msra.mxu0 %v581
  %921 = vmatpush.bf16.msra.mxu0 %v574
  %922 = vmatpush.bf16.msra.mxu0 %v567
  %923 = vmatpush.bf16.msra.mxu0 %v560
  %924 = vmatpush.bf16.msra.mxu0 %v553
  %925 = vmatpush.bf16.msra.mxu0 %v546
  %926 = vmatmul.bf16.gmra.mxu0 %v182
  %v927 = vpop.f32.mrf.mxu0
  %v928 = vadd.f32 %v153, %v927
  %v929 = vpop.f32.mrf.mxu0
  %v930 = vadd.f32 %v158, %v929
  %931 = vmatmul.bf16.gmra.mxu0 %v184
  %v932 = vpop.f32.mrf.mxu0
  %v933 = vadd.f32 %v163, %v932
  %v934 = vpop.f32.mrf.mxu0
  %v935 = vadd.f32 %v168, %v934
  %936 = vdwg.mxu0
  %937 = vmatpush.bf16.msra.mxu0 %v651
  %938 = vmatpush.bf16.msra.mxu0 %v644
  %939 = vmatpush.bf16.msra.mxu0 %v637
  %940 = vmatpush.bf16.msra.mxu0 %v630
  %941 = vmatpush.bf16.msra.mxu0 %v623
  %942 = vmatpush.bf16.msra.mxu0 %v616
  %943 = vmatpush.bf16.msra.mxu0 %v609
  %944 = vmatpush.bf16.msra.mxu0 %v602
  %945 = vmatmul.bf16.gmra.mxu0 %v183
  %v946 = vpop.f32.mrf.mxu0
  %v947 = vadd.f32 %v928, %v946
  %v948 = vpop.f32.mrf.mxu0
  %v949 = vadd.f32 %v930, %v948
  %950 = vmatmul.bf16.gmra.mxu0 %v185
  %v951 = vpop.f32.mrf.mxu0
  %v952 = vadd.f32 %v933, %v951
  %v953 = vpop.f32.mrf.mxu0
  %v954 = vadd.f32 %v935, %v953
  %955 = vdwg.mxu0
  %956 = vmatpush.bf16.msra.mxu0 %v596
  %957 = vmatpush.bf16.msra.mxu0 %v589
  %958 = vmatpush.bf16.msra.mxu0 %v582
  %959 = vmatpush.bf16.msra.mxu0 %v575
  %960 = vmatpush.bf16.msra.mxu0 %v568
  %961 = vmatpush.bf16.msra.mxu0 %v561
  %962 = vmatpush.bf16.msra.mxu0 %v554
  %963 = vmatpush.bf16.msra.mxu0 %v547
  %964 = vmatmul.bf16.gmra.mxu0 %v182
  %v965 = vpop.f32.mrf.mxu0
  %v966 = vadd.f32 %v153, %v965
  %v967 = vpop.f32.mrf.mxu0
  %v968 = vadd.f32 %v158, %v967
  %969 = vmatmul.bf16.gmra.mxu0 %v184
  %v970 = vpop.f32.mrf.mxu0
  %v971 = vadd.f32 %v163, %v970
  %v972 = vpop.f32.mrf.mxu0
  %v973 = vadd.f32 %v168, %v972
  %974 = vdwg.mxu0
  %975 = vmatpush.bf16.msra.mxu0 %v652
  %976 = vmatpush.bf16.msra.mxu0 %v645
  %977 = vmatpush.bf16.msra.mxu0 %v638
  %978 = vmatpush.bf16.msra.mxu0 %v631
  %979 = vmatpush.bf16.msra.mxu0 %v624
  %980 = vmatpush.bf16.msra.mxu0 %v617
  %981 = vmatpush.bf16.msra.mxu0 %v610
  %982 = vmatpush.bf16.msra.mxu0 %v603
  %983 = vmatmul.bf16.gmra.mxu0 %v183
  %v984 = vpop.f32.mrf.mxu0
  %v985 = vadd.f32 %v966, %v984
  %v986 = vpop.f32.mrf.mxu0
  %v987 = vadd.f32 %v968, %v986
  %988 = vmatmul.bf16.gmra.mxu0 %v185
  %v989 = vpop.f32.mrf.mxu0
  %v990 = vadd.f32 %v971, %v989
  %v991 = vpop.f32.mrf.mxu0
  %v992 = vadd.f32 %v973, %v991
  %993 = vdwg.mxu0
  %994 = vmatpush.bf16.msra.mxu0 %v597
  %995 = vmatpush.bf16.msra.mxu0 %v590
  %996 = vmatpush.bf16.msra.mxu0 %v583
  %997 = vmatpush.bf16.msra.mxu0 %v576
  %998 = vmatpush.bf16.msra.mxu0 %v569
  %999 = vmatpush.bf16.msra.mxu0 %v562
  %1000 = vmatpush.bf16.msra.mxu0 %v555
  %1001 = vmatpush.bf16.msra.mxu0 %v548
  %1002 = vmatmul.bf16.gmra.mxu0 %v182
  %v1003 = vpop.f32.mrf.mxu0
  %v1004 = vadd.f32 %v153, %v1003
  %v1005 = vpop.f32.mrf.mxu0
  %v1006 = vadd.f32 %v158, %v1005
  %1007 = vmatmul.bf16.gmra.mxu0 %v184
  %v1008 = vpop.f32.mrf.mxu0
  %v1009 = vadd.f32 %v163, %v1008
  %v1010 = vpop.f32.mrf.mxu0
  %v1011 = vadd.f32 %v168, %v1010
  %1012 = vdwg.mxu0
  %1013 = vmatpush.bf16.msra.mxu0 %v653
  %1014 = vmatpush.bf16.msra.mxu0 %v646
  %1015 = vmatpush.bf16.msra.mxu0 %v639
  %1016 = vmatpush.bf16.msra.mxu0 %v632
  %1017 = vmatpush.bf16.msra.mxu0 %v625
  %1018 = vmatpush.bf16.msra.mxu0 %v618
  %1019 = vmatpush.bf16.msra.mxu0 %v611
  %1020 = vmatpush.bf16.msra.mxu0 %v604
  %1021 = vmatmul.bf16.gmra.mxu0 %v183
  %v1022 = vpop.f32.mrf.mxu0
  %v1023 = vadd.f32 %v1004, %v1022
  %v1024 = vpop.f32.mrf.mxu0
  %v1025 = vadd.f32 %v1006, %v1024
  %1026 = vmatmul.bf16.gmra.mxu0 %v185
  %v1027 = vpop.f32.mrf.mxu0
  %v1028 = vadd.f32 %v1009, %v1027
  %v1029 = vpop.f32.mrf.mxu0
  %v1030 = vadd.f32 %v1011, %v1029
  %1031 = vdwg.mxu0
  %v1032 = vmax.f32 %v795, 0.0
  %v1033 = vmax.f32 %v833, 0.0
  %v1034 = vmax.f32 %v871, 0.0
  %v1035 = vmax.f32 %v909, 0.0
  %v1036 = vmax.f32 %v947, 0.0
  %v1037 = vmax.f32 %v985, 0.0
  %v1038 = vmax.f32 %v1023, 0.0
  %v1039 = vmax.f32 %v797, 0.0
  %v1040 = vmax.f32 %v835, 0.0
  %v1041 = vmax.f32 %v873, 0.0
  %v1042 = vmax.f32 %v911, 0.0
  %v1043 = vmax.f32 %v949, 0.0
  %v1044 = vmax.f32 %v987, 0.0
  %v1045 = vmax.f32 %v1025, 0.0
  %v1046 = vmax.f32 %v800, 0.0
  %v1047 = vmax.f32 %v838, 0.0
  %v1048 = vmax.f32 %v876, 0.0
  %v1049 = vmax.f32 %v914, 0.0
  %v1050 = vmax.f32 %v952, 0.0
  %v1051 = vmax.f32 %v990, 0.0
  %v1052 = vmax.f32 %v1028, 0.0
  %v1053 = vmax.f32 %v802, 0.0
  %v1054 = vmax.f32 %v840, 0.0
  %v1055 = vmax.f32 %v878, 0.0
  %v1056 = vmax.f32 %v916, 0.0
  %v1057 = vmax.f32 %v954, 0.0
  %v1058 = vmax.f32 %v992, 0.0
  %v1059 = vmax.f32 %v1030, 0.0
  %v1060 = vpack.c.bf16 %v1033, %v1032
  %v1061 = vpack.c.bf16 %v1035, %v1034
  %v1062 = vpack.c.bf16 %v1037, %v1036
  %v1063 = vpack.c.bf16 %v1038, %v1038
  %v1064 = vpack.c.bf16 %v1040, %v1039
  %v1065 = vpack.c.bf16 %v1042, %v1041
  %v1066 = vpack.c.bf16 %v1044, %v1043
  %v1067 = vpack.c.bf16 %v1045, %v1045
  %v1068 = vpack.c.bf16 %v1047, %v1046
  %v1069 = vpack.c.bf16 %v1049, %v1048
  %v1070 = vpack.c.bf16 %v1051, %v1050
  %v1071 = vpack.c.bf16 %v1052, %v1052
  %v1072 = vpack.c.bf16 %v1054, %v1053
  %v1073 = vpack.c.bf16 %v1056, %v1055
  %v1074 = vpack.c.bf16 %v1058, %v1057
  %v1075 = vpack.c.bf16 %v1059, %v1059
  %1076 = vst [vmem:[%s3] sm:$0xff] %v1060
  %1077 = vst [vmem:[%s3 + $0x8] sm:$0xff] %v1061
  %1078 = vst [vmem:[%s3 + $0x10] sm:$0xff] %v1062
  %1079 = vst [vmem:[%s3 + $0x18] sm:$0xf] %v1063
  %1080 = vst [vmem:[%s3 + $0x1c] sm:$0xff] %v1064
  %1081 = vst [vmem:[%s3 + $0x24] sm:$0xff] %v1065
  %1082 = vst [vmem:[%s3 + $0x2c] sm:$0xff] %v1066
  %1083 = vst [vmem:[%s3 + $0x34] sm:$0xf] %v1067
  %1084 = vst [vmem:[%s3 + $0x38] sm:$0xff] %v1068
  %1085 = vst [vmem:[%s3 + $0x40] sm:$0xff] %v1069
  %1086 = vst [vmem:[%s3 + $0x48] sm:$0xff] %v1070
  %1087 = vst [vmem:[%s3 + $0x50] sm:$0xf] %v1071
  %1088 = vst [vmem:[%s3 + $0x54] sm:$0xff] %v1072
  %1089 = vst [vmem:[%s3 + $0x5c] sm:$0xff] %v1073
  %1090 = vst [vmem:[%s3 + $0x64] sm:$0xff] %v1074
  %1091 = vst [vmem:[%s3 + $0x6c] sm:$0xf] %v1075
  // Predicated region
  $region14: #{atari_bootstrapped_dqn_forward.4} parent=0 // pred_check
    _
  $region15: #{atari_bootstrapped_dqn_forward.4} parent=0 // pred_check_branch
    %1093 = sbr.rel (0) target = $region17
  $region16: #{atari_bootstrapped_dqn_forward.4} parent=0 // pred_region
    _
  $region17: #{atari_bootstrapped_dqn_forward.4} parent=0 // pred_fallthru
    _
  // Predicated region
  $region18: #{atari_bootstrapped_dqn_forward.4} parent=0 // pred_check
    _
  $region19: #{atari_bootstrapped_dqn_forward.4} parent=0 // pred_check_branch
    %1095 = sbr.rel (0) target = $region21
  $region20: #{atari_bootstrapped_dqn_forward.4} parent=0 // pred_region
    _
  $region21: #{atari_bootstrapped_dqn_forward.4} parent=0 // pred_fallthru
    _

// kernel: atari_bootstrapped_dqn_forward.5
$region0: #{atari_bootstrapped_dqn_forward.5}
  #allocation0 [shape = 'u32[]', space=smem, size = 0x4, offset = 0x4, fixed_abs, tag = 'smem constant byte address 0x4 - core index']
  #allocation1 [shape = 'u32[72,128]{1,0:T(1,128)}', space=vmem, size = 0x9000, scoped, tag = 'internal scratch']
  %s0 = inlined_call_operand.vmem [shape: bf16[64,512], index: 0, kind: input, shape index: {}]
  %s1 = inlined_call_operand.vmem [shape: bf16[512,162], index: 1, kind: input, shape index: {}]
  %s2 = inlined_call_operand.vmem [shape: f32[64,1], index: 2, kind: input, shape index: {}]
  %s3 = inlined_call_operand.vmem [shape: bf16[64,162], index: 3, kind: output, shape index: {}]
  %s4 = sld [smem:[#allocation0]]
  $region22: #{atari_bootstrapped_dqn_forward.5} parent=0
    _
  %s6 = ssub.s32 1, %s4
  %s7 = scalar_select 0, %s6, %s4
  // Predicated region
  $region2: #{atari_bootstrapped_dqn_forward.5} parent=0 // pred_check
    _
  $region3: #{atari_bootstrapped_dqn_forward.5} parent=0 // pred_check_branch
    %9 = sbr.rel (0) target = $region5
  $region4: #{atari_bootstrapped_dqn_forward.5} parent=0 // pred_region
    _
  $region5: #{atari_bootstrapped_dqn_forward.5} parent=0 // pred_fallthru
    _
  // Predicated region
  $region6: #{atari_bootstrapped_dqn_forward.5} parent=0 // pred_check
    _
  $region7: #{atari_bootstrapped_dqn_forward.5} parent=0 // pred_check_branch
    %11 = sbr.rel (0) target = $region9
  $region8: #{atari_bootstrapped_dqn_forward.5} parent=0 // pred_region
    _
  $region9: #{atari_bootstrapped_dqn_forward.5} parent=0 // pred_fallthru
    _
  // Predicated region
  $region10: #{atari_bootstrapped_dqn_forward.5} parent=0 // pred_check
    _
  $region11: #{atari_bootstrapped_dqn_forward.5} parent=0 // pred_check_branch
    %13 = sbr.rel (0) target = $region13
  $region12: #{atari_bootstrapped_dqn_forward.5} parent=0 // pred_region
    _
  $region13: #{atari_bootstrapped_dqn_forward.5} parent=0 // pred_fallthru
    _
  %v14 = vld [vmem:[%s0] sm:$0xff]
  %v15 = vld [vmem:[%s0 + $0x8] sm:$0xff]
  %v16 = vld [vmem:[%s0 + $0x10] sm:$0xff]
  %v17 = vld [vmem:[%s0 + $0x18] sm:$0xff]
  %v18 = vld [vmem:[%s0 + $0x20] sm:$0xff]
  %v19 = vld [vmem:[%s0 + $0x28] sm:$0xff]
  %v20 = vld [vmem:[%s0 + $0x30] sm:$0xff]
  %v21 = vld [vmem:[%s0 + $0x38] sm:$0xff]
  %v22 = vld [vmem:[%s0 + $0x40] sm:$0xff]
  %v23 = vld [vmem:[%s0 + $0x48] sm:$0xff]
  %v24 = vld [vmem:[%s0 + $0x50] sm:$0xff]
  %v25 = vld [vmem:[%s0 + $0x58] sm:$0xff]
  %v26 = vld [vmem:[%s0 + $0x60] sm:$0xff]
  %v27 = vld [vmem:[%s0 + $0x68] sm:$0xff]
  %v28 = vld [vmem:[%s0 + $0x70] sm:$0xff]
  %v29 = vld [vmem:[%s0 + $0x78] sm:$0xff]
  %v30 = vld [vmem:[%s1] sm:$0xff]
  %v31 = vld [vmem:[%s1 + $0x8] sm:$0xff]
  %v32 = vld [vmem:[%s1 + $0x10] sm:$0xff]
  %v33 = vld [vmem:[%s1 + $0x18] sm:$0xff]
  %v34 = vld [vmem:[%s1 + $0x20] sm:$0xff]
  %v35 = vld [vmem:[%s1 + $0x28] sm:$0xff]
  %v36 = vld [vmem:[%s1 + $0x30] sm:$0xff]
  %v37 = vld [vmem:[%s1 + $0x38] sm:$0xff]
  %v38 = vld [vmem:[%s1 + $0x40] sm:$0xff]
  %v39 = vld [vmem:[%s1 + $0x48] sm:$0xff]
  %v40 = vld [vmem:[%s1 + $0x50] sm:$0xff]
  %v41 = vld [vmem:[%s1 + $0x58] sm:$0xff]
  %v42 = vld [vmem:[%s1 + $0x60] sm:$0xff]
  %v43 = vld [vmem:[%s1 + $0x68] sm:$0xff]
  %v44 = vld [vmem:[%s1 + $0x70] sm:$0xff]
  %v45 = vld [vmem:[%s1 + $0x78] sm:$0xff]
  %v46 = vld [vmem:[%s1 + $0x80] sm:$0xff]
  %v47 = vld [vmem:[%s1 + $0x88] sm:$0xff]
  %v48 = vld [vmem:[%s1 + $0x90] sm:$0xff]
  %v49 = vld [vmem:[%s1 + $0x98] sm:$0xff]
  %v50 = vld [vmem:[%s1 + $0xa0] sm:$0xff]
  %v51 = vld [vmem:[%s1 + $0xa8] sm:$0xff]
  %v52 = vld [vmem:[%s1 + $0xb0] sm:$0xff]
  %v53 = vld [vmem:[%s1 + $0xb8] sm:$0xff]
  %v54 = vld [vmem:[%s1 + $0xc0] sm:$0xff]
  %v55 = vld [vmem:[%s1 + $0xc8] sm:$0xff]
  %v56 = vld [vmem:[%s1 + $0xd0] sm:$0xff]
  %v57 = vld [vmem:[%s1 + $0xd8] sm:$0xff]
  %v58 = vld [vmem:[%s1 + $0xe0] sm:$0xff]
  %v59 = vld [vmem:[%s1 + $0xe8] sm:$0xff]
  %v60 = vld [vmem:[%s1 + $0xf0] sm:$0xff]
  %v61 = vld [vmem:[%s1 + $0xf8] sm:$0xff]
  %v62 = vld [vmem:[%s1 + $0x100] sm:$0xff]
  %v63 = vld [vmem:[%s1 + $0x108] sm:$0xff]
  %v64 = vld [vmem:[%s1 + $0x110] sm:$0xff]
  %v65 = vld [vmem:[%s1 + $0x118] sm:$0xff]
  %v66 = vld [vmem:[%s1 + $0x120] sm:$0xff]
  %v67 = vld [vmem:[%s1 + $0x128] sm:$0xff]
  %v68 = vld [vmem:[%s1 + $0x130] sm:$0xff]
  %v69 = vld [vmem:[%s1 + $0x138] sm:$0xff]
  %v70 = vld [vmem:[%s1 + $0x140] sm:$0xff]
  %v71 = vld [vmem:[%s1 + $0x148] sm:$0xff]
  %v72 = vld [vmem:[%s1 + $0x150] sm:$0xff]
  %v73 = vld [vmem:[%s1 + $0x158] sm:$0xff]
  %v74 = vld [vmem:[%s1 + $0x160] sm:$0xff]
  %v75 = vld [vmem:[%s1 + $0x168] sm:$0xff]
  %v76 = vld [vmem:[%s1 + $0x170] sm:$0xff]
  %v77 = vld [vmem:[%s1 + $0x178] sm:$0xff]
  %v78 = vld [vmem:[%s1 + $0x180] sm:$0xff]
  %v79 = vld [vmem:[%s1 + $0x188] sm:$0xff]
  %v80 = vld [vmem:[%s1 + $0x190] sm:$0xff]
  %v81 = vld [vmem:[%s1 + $0x198] sm:$0xff]
  %v82 = vld [vmem:[%s1 + $0x1a0] sm:$0xff]
  %v83 = vld [vmem:[%s1 + $0x1a8] sm:$0xff]
  %v84 = vld [vmem:[%s1 + $0x1b0] sm:$0xff]
  %v85 = vld [vmem:[%s1 + $0x1b8] sm:$0xff]
  %v86 = vld [vmem:[%s1 + $0x1c0] sm:$0xff]
  %v87 = vld [vmem:[%s1 + $0x1c8] sm:$0xff]
  %v88 = vld [vmem:[%s1 + $0x1d0] sm:$0xff]
  %v89 = vld [vmem:[%s1 + $0x1d8] sm:$0xff]
  %v90 = vld [vmem:[%s1 + $0x1e0] sm:$0xff]
  %v91 = vld [vmem:[%s1 + $0x1e8] sm:$0xff]
  %v92 = vld [vmem:[%s1 + $0x1f0] sm:$0xff]
  %v93 = vld [vmem:[%s1 + $0x1f8] sm:$0xff]
  %v94 = vld [vmem:[%s2] sm:$0xff]
  %v95 = vld [vmem:[%s2 + $0x8] sm:$0xff]
  %v96 = vld [vmem:[%s2 + $0x10] sm:$0xff]
  %v97 = vld [vmem:[%s2 + $0x18] sm:$0xff]
  %v98 = vld [vmem:[%s2 + $0x20] sm:$0xff]
  %v99 = vld [vmem:[%s2 + $0x28] sm:$0xff]
  %v100 = vld [vmem:[%s2 + $0x30] sm:$0xff]
  %v101 = vld [vmem:[%s2 + $0x38] sm:$0xff]
  %103 = vset.pattern.permute.xlu0 0
  %104 = vperm.xlu0 %103, %v94
  %v105 = vpop.permute.xlu0 %104
  %108 = vset.pattern.permute.xlu0 0
  %109 = vperm.xlu0 %108, %v95
  %v110 = vpop.permute.xlu0 %109
  %113 = vset.pattern.permute.xlu0 0
  %114 = vperm.xlu0 %113, %v96
  %v115 = vpop.permute.xlu0 %114
  %118 = vset.pattern.permute.xlu0 0
  %119 = vperm.xlu0 %118, %v97
  %v120 = vpop.permute.xlu0 %119
  %123 = vset.pattern.permute.xlu0 0
  %124 = vperm.xlu0 %123, %v98
  %v125 = vpop.permute.xlu0 %124
  %128 = vset.pattern.permute.xlu0 0
  %129 = vperm.xlu0 %128, %v99
  %v130 = vpop.permute.xlu0 %129
  %133 = vset.pattern.permute.xlu0 0
  %134 = vperm.xlu0 %133, %v100
  %v135 = vpop.permute.xlu0 %134
  %138 = vset.pattern.permute.xlu0 0
  %139 = vperm.xlu0 %138, %v101
  %v140 = vpop.permute.xlu0 %139
  %v158 = vunpack.c.l.b16 %v14
  %v159 = vunpack.c.h.b16 %v14
  %v160 = vunpack.c.l.b16 %v15
  %v161 = vunpack.c.h.b16 %v15
  %v162 = vunpack.c.l.b16 %v16
  %v163 = vunpack.c.h.b16 %v16
  %v164 = vunpack.c.l.b16 %v17
  %v165 = vunpack.c.h.b16 %v17
  %v166 = vunpack.c.l.b16 %v18
  %v167 = vunpack.c.h.b16 %v18
  %v168 = vunpack.c.l.b16 %v19
  %v169 = vunpack.c.h.b16 %v19
  %v170 = vunpack.c.l.b16 %v20
  %v171 = vunpack.c.h.b16 %v20
  %v172 = vunpack.c.l.b16 %v21
  %v173 = vunpack.c.h.b16 %v21
  %v174 = vunpack.c.l.b16 %v22
  %v175 = vunpack.c.h.b16 %v22
  %v176 = vunpack.c.l.b16 %v23
  %v177 = vunpack.c.h.b16 %v23
  %v178 = vunpack.c.l.b16 %v24
  %v179 = vunpack.c.h.b16 %v24
  %v180 = vunpack.c.l.b16 %v25
  %v181 = vunpack.c.h.b16 %v25
  %v182 = vunpack.c.l.b16 %v26
  %v183 = vunpack.c.h.b16 %v26
  %v184 = vunpack.c.l.b16 %v27
  %v185 = vunpack.c.h.b16 %v27
  %v186 = vunpack.c.l.b16 %v28
  %v187 = vunpack.c.h.b16 %v28
  %v188 = vunpack.c.l.b16 %v29
  %v189 = vunpack.c.h.b16 %v29
  %v190 = vpack.c.b16 %v162, %v158
  %v191 = vpack.c.b16 %v163, %v159
  %v192 = vpack.c.b16 %v164, %v160
  %v193 = vpack.c.b16 %v165, %v161
  %v194 = vpack.c.b16 %v170, %v166
  %v195 = vpack.c.b16 %v171, %v167
  %v196 = vpack.c.b16 %v172, %v168
  %v197 = vpack.c.b16 %v173, %v169
  %v198 = vpack.c.b16 %v178, %v174
  %v199 = vpack.c.b16 %v179, %v175
  %v200 = vpack.c.b16 %v180, %v176
  %v201 = vpack.c.b16 %v181, %v177
  %v202 = vpack.c.b16 %v186, %v182
  %v203 = vpack.c.b16 %v187, %v183
  %v204 = vpack.c.b16 %v188, %v184
  %v205 = vpack.c.b16 %v189, %v185
  %v286 = vunpack.c.l.b16 %v30
  %v287 = vunpack.c.h.b16 %v30
  %v288 = vunpack.c.l.b16 %v31
  %v289 = vunpack.c.h.b16 %v31
  %v290 = vunpack.c.l.b16 %v32
  %v291 = vunpack.c.h.b16 %v32
  %v292 = vunpack.c.l.b16 %v33
  %v293 = vunpack.c.h.b16 %v33
  %v294 = vunpack.c.l.b16 %v34
  %v295 = vunpack.c.h.b16 %v34
  %v296 = vunpack.c.l.b16 %v35
  %v297 = vunpack.c.h.b16 %v35
  %v298 = vunpack.c.l.b16 %v36
  %v299 = vunpack.c.h.b16 %v36
  %v300 = vunpack.c.l.b16 %v37
  %v301 = vunpack.c.h.b16 %v37
  %v302 = vunpack.c.l.b16 %v38
  %v303 = vunpack.c.h.b16 %v38
  %v304 = vunpack.c.l.b16 %v39
  %v305 = vunpack.c.h.b16 %v39
  %v306 = vunpack.c.l.b16 %v40
  %v307 = vunpack.c.h.b16 %v40
  %v308 = vunpack.c.l.b16 %v41
  %v309 = vunpack.c.h.b16 %v41
  %v310 = vunpack.c.l.b16 %v42
  %v311 = vunpack.c.h.b16 %v42
  %v312 = vunpack.c.l.b16 %v43
  %v313 = vunpack.c.h.b16 %v43
  %v314 = vunpack.c.l.b16 %v44
  %v315 = vunpack.c.h.b16 %v44
  %v316 = vunpack.c.l.b16 %v45
  %v317 = vunpack.c.h.b16 %v45
  %v318 = vunpack.c.l.b16 %v46
  %v319 = vunpack.c.h.b16 %v46
  %v320 = vunpack.c.l.b16 %v47
  %v321 = vunpack.c.h.b16 %v47
  %v322 = vunpack.c.l.b16 %v48
  %v323 = vunpack.c.h.b16 %v48
  %v324 = vunpack.c.l.b16 %v49
  %v325 = vunpack.c.h.b16 %v49
  %v326 = vunpack.c.l.b16 %v50
  %v327 = vunpack.c.h.b16 %v50
  %v328 = vunpack.c.l.b16 %v51
  %v329 = vunpack.c.h.b16 %v51
  %v330 = vunpack.c.l.b16 %v52
  %v331 = vunpack.c.h.b16 %v52
  %v332 = vunpack.c.l.b16 %v53
  %v333 = vunpack.c.h.b16 %v53
  %v334 = vunpack.c.l.b16 %v54
  %v335 = vunpack.c.h.b16 %v54
  %v336 = vunpack.c.l.b16 %v55
  %v337 = vunpack.c.h.b16 %v55
  %v338 = vunpack.c.l.b16 %v56
  %v339 = vunpack.c.h.b16 %v56
  %v340 = vunpack.c.l.b16 %v57
  %v341 = vunpack.c.h.b16 %v57
  %v342 = vunpack.c.l.b16 %v58
  %v343 = vunpack.c.h.b16 %v58
  %v344 = vunpack.c.l.b16 %v59
  %v345 = vunpack.c.h.b16 %v59
  %v346 = vunpack.c.l.b16 %v60
  %v347 = vunpack.c.h.b16 %v60
  %v348 = vunpack.c.l.b16 %v61
  %v349 = vunpack.c.h.b16 %v61
  %v350 = vunpack.c.l.b16 %v62
  %v351 = vunpack.c.h.b16 %v62
  %v352 = vunpack.c.l.b16 %v63
  %v353 = vunpack.c.h.b16 %v63
  %v354 = vunpack.c.l.b16 %v64
  %v355 = vunpack.c.h.b16 %v64
  %v356 = vunpack.c.l.b16 %v65
  %v357 = vunpack.c.h.b16 %v65
  %v358 = vunpack.c.l.b16 %v66
  %v359 = vunpack.c.h.b16 %v66
  %v360 = vunpack.c.l.b16 %v67
  %v361 = vunpack.c.h.b16 %v67
  %v362 = vunpack.c.l.b16 %v68
  %v363 = vunpack.c.h.b16 %v68
  %v364 = vunpack.c.l.b16 %v69
  %v365 = vunpack.c.h.b16 %v69
  %v366 = vunpack.c.l.b16 %v70
  %v367 = vunpack.c.h.b16 %v70
  %v368 = vunpack.c.l.b16 %v71
  %v369 = vunpack.c.h.b16 %v71
  %v370 = vunpack.c.l.b16 %v72
  %v371 = vunpack.c.h.b16 %v72
  %v372 = vunpack.c.l.b16 %v73
  %v373 = vunpack.c.h.b16 %v73
  %v374 = vunpack.c.l.b16 %v74
  %v375 = vunpack.c.h.b16 %v74
  %v376 = vunpack.c.l.b16 %v75
  %v377 = vunpack.c.h.b16 %v75
  %v378 = vunpack.c.l.b16 %v76
  %v379 = vunpack.c.h.b16 %v76
  %v380 = vunpack.c.l.b16 %v77
  %v381 = vunpack.c.h.b16 %v77
  %v382 = vunpack.c.l.b16 %v78
  %v383 = vunpack.c.h.b16 %v78
  %v384 = vunpack.c.l.b16 %v79
  %v385 = vunpack.c.h.b16 %v79
  %v386 = vunpack.c.l.b16 %v80
  %v387 = vunpack.c.h.b16 %v80
  %v388 = vunpack.c.l.b16 %v81
  %v389 = vunpack.c.h.b16 %v81
  %v390 = vunpack.c.l.b16 %v82
  %v391 = vunpack.c.h.b16 %v82
  %v392 = vunpack.c.l.b16 %v83
  %v393 = vunpack.c.h.b16 %v83
  %v394 = vunpack.c.l.b16 %v84
  %v395 = vunpack.c.h.b16 %v84
  %v396 = vunpack.c.l.b16 %v85
  %v397 = vunpack.c.h.b16 %v85
  %v398 = vunpack.c.l.b16 %v86
  %v399 = vunpack.c.h.b16 %v86
  %v400 = vunpack.c.l.b16 %v87
  %v401 = vunpack.c.h.b16 %v87
  %v402 = vunpack.c.l.b16 %v88
  %v403 = vunpack.c.h.b16 %v88
  %v404 = vunpack.c.l.b16 %v89
  %v405 = vunpack.c.h.b16 %v89
  %v406 = vunpack.c.l.b16 %v90
  %v407 = vunpack.c.h.b16 %v90
  %v408 = vunpack.c.l.b16 %v91
  %v409 = vunpack.c.h.b16 %v91
  %v410 = vunpack.c.l.b16 %v92
  %v411 = vunpack.c.h.b16 %v92
  %v412 = vunpack.c.l.b16 %v93
  %v413 = vunpack.c.h.b16 %v93
  %v414 = vpack.c.b16 %v288, %v286
  %v415 = vpack.c.b16 %v289, %v287
  %v416 = vpack.c.b16 %v292, %v290
  %v417 = vpack.c.b16 %v293, %v291
  %v418 = vpack.c.b16 %v296, %v294
  %v419 = vpack.c.b16 %v297, %v295
  %v420 = vpack.c.b16 %v300, %v298
  %v421 = vpack.c.b16 %v301, %v299
  %v422 = vpack.c.b16 %v304, %v302
  %v423 = vpack.c.b16 %v305, %v303
  %v424 = vpack.c.b16 %v308, %v306
  %v425 = vpack.c.b16 %v309, %v307
  %v426 = vpack.c.b16 %v312, %v310
  %v427 = vpack.c.b16 %v313, %v311
  %v428 = vpack.c.b16 %v316, %v314
  %v429 = vpack.c.b16 %v317, %v315
  %v430 = vpack.c.b16 %v320, %v318
  %v431 = vpack.c.b16 %v321, %v319
  %v432 = vpack.c.b16 %v324, %v322
  %v433 = vpack.c.b16 %v325, %v323
  %v434 = vpack.c.b16 %v328, %v326
  %v435 = vpack.c.b16 %v329, %v327
  %v436 = vpack.c.b16 %v332, %v330
  %v437 = vpack.c.b16 %v333, %v331
  %v438 = vpack.c.b16 %v336, %v334
  %v439 = vpack.c.b16 %v337, %v335
  %v440 = vpack.c.b16 %v340, %v338
  %v441 = vpack.c.b16 %v341, %v339
  %v442 = vpack.c.b16 %v344, %v342
  %v443 = vpack.c.b16 %v345, %v343
  %v444 = vpack.c.b16 %v348, %v346
  %v445 = vpack.c.b16 %v349, %v347
  %v446 = vpack.c.b16 %v352, %v350
  %v447 = vpack.c.b16 %v353, %v351
  %v448 = vpack.c.b16 %v356, %v354
  %v449 = vpack.c.b16 %v357, %v355
  %v450 = vpack.c.b16 %v360, %v358
  %v451 = vpack.c.b16 %v361, %v359
  %v452 = vpack.c.b16 %v364, %v362
  %v453 = vpack.c.b16 %v365, %v363
  %v454 = vpack.c.b16 %v368, %v366
  %v455 = vpack.c.b16 %v369, %v367
  %v456 = vpack.c.b16 %v372, %v370
  %v457 = vpack.c.b16 %v373, %v371
  %v458 = vpack.c.b16 %v376, %v374
  %v459 = vpack.c.b16 %v377, %v375
  %v460 = vpack.c.b16 %v380, %v378
  %v461 = vpack.c.b16 %v381, %v379
  %v462 = vpack.c.b16 %v384, %v382
  %v463 = vpack.c.b16 %v385, %v383
  %v464 = vpack.c.b16 %v388, %v386
  %v465 = vpack.c.b16 %v389, %v387
  %v466 = vpack.c.b16 %v392, %v390
  %v467 = vpack.c.b16 %v393, %v391
  %v468 = vpack.c.b16 %v396, %v394
  %v469 = vpack.c.b16 %v397, %v395
  %v470 = vpack.c.b16 %v400, %v398
  %v471 = vpack.c.b16 %v401, %v399
  %v472 = vpack.c.b16 %v404, %v402
  %v473 = vpack.c.b16 %v405, %v403
  %v474 = vpack.c.b16 %v408, %v406
  %v475 = vpack.c.b16 %v409, %v407
  %v476 = vpack.c.b16 %v412, %v410
  %v477 = vpack.c.b16 %v413, %v411
  %542 = vmatpush.bf16.msra.mxu0 %v428
  %543 = vmatpush.bf16.msra.mxu0 %v426
  %544 = vmatpush.bf16.msra.mxu0 %v424
  %545 = vmatpush.bf16.msra.mxu0 %v422
  %546 = vmatpush.bf16.msra.mxu0 %v420
  %547 = vmatpush.bf16.msra.mxu0 %v418
  %548 = vmatpush.bf16.msra.mxu0 %v416
  %549 = vmatpush.bf16.msra.mxu0 %v414
  %550 = vmatmul.bf16.gmra.mxu0 %v190
  %v551 = vpop.f32.mrf.mxu0
  %v552 = vadd.f32 %v105, %v551
  %v553 = vpop.f32.mrf.mxu0
  %v554 = vadd.f32 %v110, %v553
  %555 = vmatmul.bf16.gmra.mxu0 %v194
  %v556 = vpop.f32.mrf.mxu0
  %v557 = vadd.f32 %v115, %v556
  %v558 = vpop.f32.mrf.mxu0
  %v559 = vadd.f32 %v120, %v558
  %560 = vmatmul.bf16.gmra.mxu0 %v198
  %v561 = vpop.f32.mrf.mxu0
  %v562 = vadd.f32 %v125, %v561
  %v563 = vpop.f32.mrf.mxu0
  %v564 = vadd.f32 %v130, %v563
  %565 = vmatmul.bf16.gmra.mxu0 %v202
  %v566 = vpop.f32.mrf.mxu0
  %v567 = vadd.f32 %v135, %v566
  %v568 = vpop.f32.mrf.mxu0
  %v569 = vadd.f32 %v140, %v568
  %570 = vdwg.mxu0
  %571 = vmatpush.bf16.msra.mxu0 %v444
  %572 = vmatpush.bf16.msra.mxu0 %v442
  %573 = vmatpush.bf16.msra.mxu0 %v440
  %574 = vmatpush.bf16.msra.mxu0 %v438
  %575 = vmatpush.bf16.msra.mxu0 %v436
  %576 = vmatpush.bf16.msra.mxu0 %v434
  %577 = vmatpush.bf16.msra.mxu0 %v432
  %578 = vmatpush.bf16.msra.mxu0 %v430
  %579 = vmatmul.bf16.gmra.mxu0 %v191
  %v580 = vpop.f32.mrf.mxu0
  %v581 = vadd.f32 %v552, %v580
  %v582 = vpop.f32.mrf.mxu0
  %v583 = vadd.f32 %v554, %v582
  %584 = vmatmul.bf16.gmra.mxu0 %v195
  %v585 = vpop.f32.mrf.mxu0
  %v586 = vadd.f32 %v557, %v585
  %v587 = vpop.f32.mrf.mxu0
  %v588 = vadd.f32 %v559, %v587
  %589 = vmatmul.bf16.gmra.mxu0 %v199
  %v590 = vpop.f32.mrf.mxu0
  %v591 = vadd.f32 %v562, %v590
  %v592 = vpop.f32.mrf.mxu0
  %v593 = vadd.f32 %v564, %v592
  %594 = vmatmul.bf16.gmra.mxu0 %v203
  %v595 = vpop.f32.mrf.mxu0
  %v596 = vadd.f32 %v567, %v595
  %v597 = vpop.f32.mrf.mxu0
  %v598 = vadd.f32 %v569, %v597
  %599 = vdwg.mxu0
  %600 = vmatpush.bf16.msra.mxu0 %v460
  %601 = vmatpush.bf16.msra.mxu0 %v458
  %602 = vmatpush.bf16.msra.mxu0 %v456
  %603 = vmatpush.bf16.msra.mxu0 %v454
  %604 = vmatpush.bf16.msra.mxu0 %v452
  %605 = vmatpush.bf16.msra.mxu0 %v450
  %606 = vmatpush.bf16.msra.mxu0 %v448
  %607 = vmatpush.bf16.msra.mxu0 %v446
  %608 = vmatmul.bf16.gmra.mxu0 %v192
  %v609 = vpop.f32.mrf.mxu0
  %v610 = vadd.f32 %v581, %v609
  %v611 = vpop.f32.mrf.mxu0
  %v612 = vadd.f32 %v583, %v611
  %613 = vmatmul.bf16.gmra.mxu0 %v196
  %v614 = vpop.f32.mrf.mxu0
  %v615 = vadd.f32 %v586, %v614
  %v616 = vpop.f32.mrf.mxu0
  %v617 = vadd.f32 %v588, %v616
  %618 = vmatmul.bf16.gmra.mxu0 %v200
  %v619 = vpop.f32.mrf.mxu0
  %v620 = vadd.f32 %v591, %v619
  %v621 = vpop.f32.mrf.mxu0
  %v622 = vadd.f32 %v593, %v621
  %623 = vmatmul.bf16.gmra.mxu0 %v204
  %v624 = vpop.f32.mrf.mxu0
  %v625 = vadd.f32 %v596, %v624
  %v626 = vpop.f32.mrf.mxu0
  %v627 = vadd.f32 %v598, %v626
  %628 = vdwg.mxu0
  %629 = vmatpush.bf16.msra.mxu0 %v476
  %630 = vmatpush.bf16.msra.mxu0 %v474
  %631 = vmatpush.bf16.msra.mxu0 %v472
  %632 = vmatpush.bf16.msra.mxu0 %v470
  %633 = vmatpush.bf16.msra.mxu0 %v468
  %634 = vmatpush.bf16.msra.mxu0 %v466
  %635 = vmatpush.bf16.msra.mxu0 %v464
  %636 = vmatpush.bf16.msra.mxu0 %v462
  %637 = vmatmul.bf16.gmra.mxu0 %v193
  %v638 = vpop.f32.mrf.mxu0
  %v639 = vadd.f32 %v610, %v638
  %v640 = vpop.f32.mrf.mxu0
  %v641 = vadd.f32 %v612, %v640
  %642 = vmatmul.bf16.gmra.mxu0 %v197
  %v643 = vpop.f32.mrf.mxu0
  %v644 = vadd.f32 %v615, %v643
  %v645 = vpop.f32.mrf.mxu0
  %v646 = vadd.f32 %v617, %v645
  %647 = vmatmul.bf16.gmra.mxu0 %v201
  %v648 = vpop.f32.mrf.mxu0
  %v649 = vadd.f32 %v620, %v648
  %v650 = vpop.f32.mrf.mxu0
  %v651 = vadd.f32 %v622, %v650
  %652 = vmatmul.bf16.gmra.mxu0 %v205
  %v653 = vpop.f32.mrf.mxu0
  %v654 = vadd.f32 %v625, %v653
  %v655 = vpop.f32.mrf.mxu0
  %v656 = vadd.f32 %v627, %v655
  %657 = vdwg.mxu0
  %658 = vmatpush.bf16.msra.mxu0 %v429
  %659 = vmatpush.bf16.msra.mxu0 %v427
  %660 = vmatpush.bf16.msra.mxu0 %v425
  %661 = vmatpush.bf16.msra.mxu0 %v423
  %662 = vmatpush.bf16.msra.mxu0 %v421
  %663 = vmatpush.bf16.msra.mxu0 %v419
  %664 = vmatpush.bf16.msra.mxu0 %v417
  %665 = vmatpush.bf16.msra.mxu0 %v415
  %666 = vmatmul.bf16.gmra.mxu0 %v190
  %v667 = vpop.f32.mrf.mxu0
  %v668 = vadd.f32 %v105, %v667
  %v669 = vpop.f32.mrf.mxu0
  %v670 = vadd.f32 %v110, %v669
  %671 = vmatmul.bf16.gmra.mxu0 %v194
  %v672 = vpop.f32.mrf.mxu0
  %v673 = vadd.f32 %v115, %v672
  %v674 = vpop.f32.mrf.mxu0
  %v675 = vadd.f32 %v120, %v674
  %676 = vmatmul.bf16.gmra.mxu0 %v198
  %v677 = vpop.f32.mrf.mxu0
  %v678 = vadd.f32 %v125, %v677
  %v679 = vpop.f32.mrf.mxu0
  %v680 = vadd.f32 %v130, %v679
  %681 = vmatmul.bf16.gmra.mxu0 %v202
  %v682 = vpop.f32.mrf.mxu0
  %v683 = vadd.f32 %v135, %v682
  %v684 = vpop.f32.mrf.mxu0
  %v685 = vadd.f32 %v140, %v684
  %686 = vdwg.mxu0
  %687 = vmatpush.bf16.msra.mxu0 %v445
  %688 = vmatpush.bf16.msra.mxu0 %v443
  %689 = vmatpush.bf16.msra.mxu0 %v441
  %690 = vmatpush.bf16.msra.mxu0 %v439
  %691 = vmatpush.bf16.msra.mxu0 %v437
  %692 = vmatpush.bf16.msra.mxu0 %v435
  %693 = vmatpush.bf16.msra.mxu0 %v433
  %694 = vmatpush.bf16.msra.mxu0 %v431
  %695 = vmatmul.bf16.gmra.mxu0 %v191
  %v696 = vpop.f32.mrf.mxu0
  %v697 = vadd.f32 %v668, %v696
  %v698 = vpop.f32.mrf.mxu0
  %v699 = vadd.f32 %v670, %v698
  %700 = vmatmul.bf16.gmra.mxu0 %v195
  %v701 = vpop.f32.mrf.mxu0
  %v702 = vadd.f32 %v673, %v701
  %v703 = vpop.f32.mrf.mxu0
  %v704 = vadd.f32 %v675, %v703
  %705 = vmatmul.bf16.gmra.mxu0 %v199
  %v706 = vpop.f32.mrf.mxu0
  %v707 = vadd.f32 %v678, %v706
  %v708 = vpop.f32.mrf.mxu0
  %v709 = vadd.f32 %v680, %v708
  %710 = vmatmul.bf16.gmra.mxu0 %v203
  %v711 = vpop.f32.mrf.mxu0
  %v712 = vadd.f32 %v683, %v711
  %v713 = vpop.f32.mrf.mxu0
  %v714 = vadd.f32 %v685, %v713
  %715 = vdwg.mxu0
  %716 = vmatpush.bf16.msra.mxu0 %v461
  %717 = vmatpush.bf16.msra.mxu0 %v459
  %718 = vmatpush.bf16.msra.mxu0 %v457
  %719 = vmatpush.bf16.msra.mxu0 %v455
  %720 = vmatpush.bf16.msra.mxu0 %v453
  %721 = vmatpush.bf16.msra.mxu0 %v451
  %722 = vmatpush.bf16.msra.mxu0 %v449
  %723 = vmatpush.bf16.msra.mxu0 %v447
  %724 = vmatmul.bf16.gmra.mxu0 %v192
  %v725 = vpop.f32.mrf.mxu0
  %v726 = vadd.f32 %v697, %v725
  %v727 = vpop.f32.mrf.mxu0
  %v728 = vadd.f32 %v699, %v727
  %729 = vmatmul.bf16.gmra.mxu0 %v196
  %v730 = vpop.f32.mrf.mxu0
  %v731 = vadd.f32 %v702, %v730
  %v732 = vpop.f32.mrf.mxu0
  %v733 = vadd.f32 %v704, %v732
  %734 = vmatmul.bf16.gmra.mxu0 %v200
  %v735 = vpop.f32.mrf.mxu0
  %v736 = vadd.f32 %v707, %v735
  %v737 = vpop.f32.mrf.mxu0
  %v738 = vadd.f32 %v709, %v737
  %739 = vmatmul.bf16.gmra.mxu0 %v204
  %v740 = vpop.f32.mrf.mxu0
  %v741 = vadd.f32 %v712, %v740
  %v742 = vpop.f32.mrf.mxu0
  %v743 = vadd.f32 %v714, %v742
  %744 = vdwg.mxu0
  %745 = vmatpush.bf16.msra.mxu0 %v477
  %746 = vmatpush.bf16.msra.mxu0 %v475
  %747 = vmatpush.bf16.msra.mxu0 %v473
  %748 = vmatpush.bf16.msra.mxu0 %v471
  %749 = vmatpush.bf16.msra.mxu0 %v469
  %750 = vmatpush.bf16.msra.mxu0 %v467
  %751 = vmatpush.bf16.msra.mxu0 %v465
  %752 = vmatpush.bf16.msra.mxu0 %v463
  %753 = vmatmul.bf16.gmra.mxu0 %v193
  %v754 = vpop.f32.mrf.mxu0
  %v755 = vadd.f32 %v726, %v754
  %v756 = vpop.f32.mrf.mxu0
  %v757 = vadd.f32 %v728, %v756
  %758 = vmatmul.bf16.gmra.mxu0 %v197
  %v759 = vpop.f32.mrf.mxu0
  %v760 = vadd.f32 %v731, %v759
  %v761 = vpop.f32.mrf.mxu0
  %v762 = vadd.f32 %v733, %v761
  %763 = vmatmul.bf16.gmra.mxu0 %v201
  %v764 = vpop.f32.mrf.mxu0
  %v765 = vadd.f32 %v736, %v764
  %v766 = vpop.f32.mrf.mxu0
  %v767 = vadd.f32 %v738, %v766
  %768 = vmatmul.bf16.gmra.mxu0 %v205
  %v769 = vpop.f32.mrf.mxu0
  %v770 = vadd.f32 %v741, %v769
  %v771 = vpop.f32.mrf.mxu0
  %v772 = vadd.f32 %v743, %v771
  %773 = vdwg.mxu0
  %v774 = vmax.f32 %v639, 0.0
  %v775 = vmax.f32 %v755, 0.0
  %v776 = vmax.f32 %v641, 0.0
  %v777 = vmax.f32 %v757, 0.0
  %v778 = vmax.f32 %v644, 0.0
  %v779 = vmax.f32 %v760, 0.0
  %v780 = vmax.f32 %v646, 0.0
  %v781 = vmax.f32 %v762, 0.0
  %v782 = vmax.f32 %v649, 0.0
  %v783 = vmax.f32 %v765, 0.0
  %v784 = vmax.f32 %v651, 0.0
  %v785 = vmax.f32 %v767, 0.0
  %v786 = vmax.f32 %v654, 0.0
  %v787 = vmax.f32 %v770, 0.0
  %v788 = vmax.f32 %v656, 0.0
  %v789 = vmax.f32 %v772, 0.0
  %v790 = vpack.c.bf16 %v775, %v774
  %v791 = vpack.c.bf16 %v777, %v776
  %v792 = vpack.c.bf16 %v779, %v778
  %v793 = vpack.c.bf16 %v781, %v780
  %v794 = vpack.c.bf16 %v783, %v782
  %v795 = vpack.c.bf16 %v785, %v784
  %v796 = vpack.c.bf16 %v787, %v786
  %v797 = vpack.c.bf16 %v789, %v788
  %798 = vst [vmem:[%s3] sm:$0xff] %v790
  %799 = vst [vmem:[%s3 + $0x8] sm:$0xff] %v791
  %800 = vst [vmem:[%s3 + $0x10] sm:$0xff] %v792
  %801 = vst [vmem:[%s3 + $0x18] sm:$0xff] %v793
  %802 = vst [vmem:[%s3 + $0x20] sm:$0xff] %v794
  %803 = vst [vmem:[%s3 + $0x28] sm:$0xff] %v795
  %804 = vst [vmem:[%s3 + $0x30] sm:$0xff] %v796
  %805 = vst [vmem:[%s3 + $0x38] sm:$0xff] %v797
  // Predicated region
  $region14: #{atari_bootstrapped_dqn_forward.5} parent=0 // pred_check
    _
  $region15: #{atari_bootstrapped_dqn_forward.5} parent=0 // pred_check_branch
    %807 = sbr.rel (0) target = $region17
  $region16: #{atari_bootstrapped_dqn_forward.5} parent=0 // pred_region
    _
  $region17: #{atari_bootstrapped_dqn_forward.5} parent=0 // pred_fallthru
    _
  // Predicated region
  $region18: #{atari_bootstrapped_dqn_forward.5} parent=0 // pred_check
    _
  $region19: #{atari_bootstrapped_dqn_forward.5} parent=0 // pred_check_branch
    %809 = sbr.rel (0) target = $region21
  $region20: #{atari_bootstrapped_dqn_forward.5} parent=0 // pred_region
    _
  $region21: #{atari_bootstrapped_dqn_forward.5} parent=0 // pred_fallthru
    _

// kernel: atari_bootstrapped_dqn_forward.6
$region0: #{atari_bootstrapped_dqn_forward.6}
  #allocation0 [shape = 'u32[]', space=smem, size = 0x4, offset = 0x4, fixed_abs, tag = 'smem constant byte address 0x4 - core index']
  #allocation1 [shape = 'u32[72,128]{1,0:T(1,128)}', space=vmem, size = 0x9000, scoped, tag = 'internal scratch']
  %s0 = inlined_call_operand.vmem [shape: bf16[64,576], index: 0, kind: input, shape index: {}]
  %s1 = inlined_call_operand.vmem [shape: bf16[576,98], index: 1, kind: input, shape index: {}]
  %s2 = inlined_call_operand.vmem [shape: f32[64,1], index: 2, kind: input, shape index: {}]
  %s3 = inlined_call_operand.vmem [shape: bf16[64,98], index: 3, kind: output, shape index: {}]
  %s4 = sld [smem:[#allocation0]]
  $region22: #{atari_bootstrapped_dqn_forward.6} parent=0
    _
  %s6 = ssub.s32 1, %s4
  %s7 = scalar_select 0, %s6, %s4
  // Predicated region
  $region2: #{atari_bootstrapped_dqn_forward.6} parent=0 // pred_check
    _
  $region3: #{atari_bootstrapped_dqn_forward.6} parent=0 // pred_check_branch
    %9 = sbr.rel (0) target = $region5
  $region4: #{atari_bootstrapped_dqn_forward.6} parent=0 // pred_region
    _
  $region5: #{atari_bootstrapped_dqn_forward.6} parent=0 // pred_fallthru
    _
  // Predicated region
  $region6: #{atari_bootstrapped_dqn_forward.6} parent=0 // pred_check
    _
  $region7: #{atari_bootstrapped_dqn_forward.6} parent=0 // pred_check_branch
    %11 = sbr.rel (0) target = $region9
  $region8: #{atari_bootstrapped_dqn_forward.6} parent=0 // pred_region
    _
  $region9: #{atari_bootstrapped_dqn_forward.6} parent=0 // pred_fallthru
    _
  // Predicated region
  $region10: #{atari_bootstrapped_dqn_forward.6} parent=0 // pred_check
    _
  $region11: #{atari_bootstrapped_dqn_forward.6} parent=0 // pred_check_branch
    %13 = sbr.rel (0) target = $region13
  $region12: #{atari_bootstrapped_dqn_forward.6} parent=0 // pred_region
    _
  $region13: #{atari_bootstrapped_dqn_forward.6} parent=0 // pred_fallthru
    _
  %v15 = vld [vmem:[%s0] sm:$0xff]
  %v16 = vld [vmem:[%s0 + $0x8] sm:$0xff]
  %v17 = vld [vmem:[%s0 + $0x10] sm:$0xf]
  %v18 = vld [vmem:[%s0 + $0x14] sm:$0xff]
  %v19 = vld [vmem:[%s0 + $0x1c] sm:$0xff]
  %v20 = vld [vmem:[%s0 + $0x24] sm:$0xf]
  %v21 = vld [vmem:[%s0 + $0x28] sm:$0xff]
  %v22 = vld [vmem:[%s0 + $0x30] sm:$0xff]
  %v23 = vld [vmem:[%s0 + $0x38] sm:$0xf]
  %v24 = vld [vmem:[%s0 + $0x3c] sm:$0xff]
  %v25 = vld [vmem:[%s0 + $0x44] sm:$0xff]
  %v26 = vld [vmem:[%s0 + $0x4c] sm:$0xf]
  %v27 = vld [vmem:[%s0 + $0x50] sm:$0xff]
  %v28 = vld [vmem:[%s0 + $0x58] sm:$0xff]
  %v29 = vld [vmem:[%s0 + $0x60] sm:$0xf]
  %v30 = vld [vmem:[%s0 + $0x64] sm:$0xff]
  %v31 = vld [vmem:[%s0 + $0x6c] sm:$0xff]
  %v32 = vld [vmem:[%s0 + $0x74] sm:$0xf]
  %v33 = vld [vmem:[%s0 + $0x78] sm:$0xff]
  %v34 = vld [vmem:[%s0 + $0x80] sm:$0xff]
  %v35 = vld [vmem:[%s0 + $0x88] sm:$0xf]
  %v36 = vld [vmem:[%s0 + $0x8c] sm:$0xff]
  %v37 = vld [vmem:[%s0 + $0x94] sm:$0xff]
  %v38 = vld [vmem:[%s0 + $0x9c] sm:$0xf]
  %v39 = vld [vmem:[%s1] sm:$0xf]
  %v40 = vld [vmem:[%s1 + $0x4] sm:$0xf]
  %v41 = vld [vmem:[%s1 + $0x8] sm:$0xf]
  %v42 = vld [vmem:[%s1 + $0xc] sm:$0xf]
  %v43 = vld [vmem:[%s1 + $0x10] sm:$0xf]
  %v44 = vld [vmem:[%s1 + $0x14] sm:$0xf]
  %v45 = vld [vmem:[%s1 + $0x18] sm:$0xf]
  %v46 = vld [vmem:[%s1 + $0x1c] sm:$0xf]
  %v47 = vld [vmem:[%s1 + $0x20] sm:$0xf]
  %v48 = vld [vmem:[%s1 + $0x24] sm:$0xf]
  %v49 = vld [vmem:[%s1 + $0x28] sm:$0xf]
  %v50 = vld [vmem:[%s1 + $0x2c] sm:$0xf]
  %v51 = vld [vmem:[%s1 + $0x30] sm:$0xf]
  %v52 = vld [vmem:[%s1 + $0x34] sm:$0xf]
  %v53 = vld [vmem:[%s1 + $0x38] sm:$0xf]
  %v54 = vld [vmem:[%s1 + $0x3c] sm:$0xf]
  %v55 = vld [vmem:[%s1 + $0x40] sm:$0xf]
  %v56 = vld [vmem:[%s1 + $0x44] sm:$0xf]
  %v57 = vld [vmem:[%s1 + $0x48] sm:$0xf]
  %v58 = vld [vmem:[%s1 + $0x4c] sm:$0xf]
  %v59 = vld [vmem:[%s1 + $0x50] sm:$0xf]
  %v60 = vld [vmem:[%s1 + $0x54] sm:$0xf]
  %v61 = vld [vmem:[%s1 + $0x58] sm:$0xf]
  %v62 = vld [vmem:[%s1 + $0x5c] sm:$0xf]
  %v63 = vld [vmem:[%s1 + $0x60] sm:$0xf]
  %v64 = vld [vmem:[%s1 + $0x64] sm:$0xf]
  %v65 = vld [vmem:[%s1 + $0x68] sm:$0xf]
  %v66 = vld [vmem:[%s1 + $0x6c] sm:$0xf]
  %v67 = vld [vmem:[%s1 + $0x70] sm:$0xf]
  %v68 = vld [vmem:[%s1 + $0x74] sm:$0xf]
  %v69 = vld [vmem:[%s1 + $0x78] sm:$0xf]
  %v70 = vld [vmem:[%s1 + $0x7c] sm:$0xf]
  %v71 = vld [vmem:[%s1 + $0x80] sm:$0xf]
  %v72 = vld [vmem:[%s1 + $0x84] sm:$0xf]
  %v73 = vld [vmem:[%s1 + $0x88] sm:$0xf]
  %v74 = vld [vmem:[%s1 + $0x8c] sm:$0xf]
  %v75 = vld [vmem:[%s1 + $0x90] sm:$0xf]
  %v76 = vld [vmem:[%s1 + $0x94] sm:$0xf]
  %v77 = vld [vmem:[%s1 + $0x98] sm:$0xf]
  %v78 = vld [vmem:[%s1 + $0x9c] sm:$0xf]
  %v79 = vld [vmem:[%s1 + $0xa0] sm:$0xf]
  %v80 = vld [vmem:[%s1 + $0xa4] sm:$0xf]
  %v81 = vld [vmem:[%s1 + $0xa8] sm:$0xf]
  %v82 = vld [vmem:[%s1 + $0xac] sm:$0xf]
  %v83 = vld [vmem:[%s1 + $0xb0] sm:$0xf]
  %v84 = vld [vmem:[%s1 + $0xb4] sm:$0xf]
  %v85 = vld [vmem:[%s1 + $0xb8] sm:$0xf]
  %v86 = vld [vmem:[%s1 + $0xbc] sm:$0xf]
  %v87 = vld [vmem:[%s1 + $0xc0] sm:$0xf]
  %v88 = vld [vmem:[%s1 + $0xc4] sm:$0xf]
  %v89 = vld [vmem:[%s1 + $0xc8] sm:$0xf]
  %v90 = vld [vmem:[%s1 + $0xcc] sm:$0xf]
  %v91 = vld [vmem:[%s1 + $0xd0] sm:$0xf]
  %v92 = vld [vmem:[%s1 + $0xd4] sm:$0xf]
  %v93 = vld [vmem:[%s1 + $0xd8] sm:$0xf]
  %v94 = vld [vmem:[%s1 + $0xdc] sm:$0xf]
  %v95 = vld [vmem:[%s1 + $0xe0] sm:$0xf]
  %v96 = vld [vmem:[%s1 + $0xe4] sm:$0xf]
  %v97 = vld [vmem:[%s1 + $0xe8] sm:$0xf]
  %v98 = vld [vmem:[%s1 + $0xec] sm:$0xf]
  %v99 = vld [vmem:[%s1 + $0xf0] sm:$0xf]
  %v100 = vld [vmem:[%s1 + $0xf4] sm:$0xf]
  %v101 = vld [vmem:[%s1 + $0xf8] sm:$0xf]
  %v102 = vld [vmem:[%s1 + $0xfc] sm:$0xf]
  %v103 = vld [vmem:[%s1 + $0x100] sm:$0xf]
  %v104 = vld [vmem:[%s1 + $0x104] sm:$0xf]
  %v105 = vld [vmem:[%s1 + $0x108] sm:$0xf]
  %v106 = vld [vmem:[%s1 + $0x10c] sm:$0xf]
  %v107 = vld [vmem:[%s1 + $0x110] sm:$0xf]
  %v108 = vld [vmem:[%s1 + $0x114] sm:$0xf]
  %v109 = vld [vmem:[%s1 + $0x118] sm:$0xf]
  %v110 = vld [vmem:[%s1 + $0x11c] sm:$0xf]
  %v111 = vld [vmem:[%s2] sm:$0xff]
  %v112 = vld [vmem:[%s2 + $0x8] sm:$0xff]
  %v113 = vld [vmem:[%s2 + $0x10] sm:$0xff]
  %v114 = vld [vmem:[%s2 + $0x18] sm:$0xff]
  %v115 = vld [vmem:[%s2 + $0x20] sm:$0xff]
  %v116 = vld [vmem:[%s2 + $0x28] sm:$0xff]
  %v117 = vld [vmem:[%s2 + $0x30] sm:$0xff]
  %v118 = vld [vmem:[%s2 + $0x38] sm:$0xff]
  %120 = vset.pattern.permute.xlu0 0
  %121 = vperm.xlu0 %120, %v111
  %v122 = vpop.permute.xlu0 %121
  %125 = vset.pattern.permute.xlu0 0
  %126 = vperm.xlu0 %125, %v112
  %v127 = vpop.permute.xlu0 %126
  %130 = vset.pattern.permute.xlu0 0
  %131 = vperm.xlu0 %130, %v113
  %v132 = vpop.permute.xlu0 %131
  %135 = vset.pattern.permute.xlu0 0
  %136 = vperm.xlu0 %135, %v114
  %v137 = vpop.permute.xlu0 %136
  %140 = vset.pattern.permute.xlu0 0
  %141 = vperm.xlu0 %140, %v115
  %v142 = vpop.permute.xlu0 %141
  %145 = vset.pattern.permute.xlu0 0
  %146 = vperm.xlu0 %145, %v116
  %v147 = vpop.permute.xlu0 %146
  %150 = vset.pattern.permute.xlu0 0
  %151 = vperm.xlu0 %150, %v117
  %v152 = vpop.permute.xlu0 %151
  %155 = vset.pattern.permute.xlu0 0
  %156 = vperm.xlu0 %155, %v118
  %v157 = vpop.permute.xlu0 %156
  %v183 = vunpack.c.l.b16 %v15
  %v184 = vunpack.c.h.b16 %v15
  %v185 = vunpack.c.l.b16 %v16
  %v186 = vunpack.c.h.b16 %v16
  %v187 = vunpack.c.l.b16 %v17
  %v188 = vunpack.c.l.b16 %v18
  %v189 = vunpack.c.h.b16 %v18
  %v190 = vunpack.c.l.b16 %v19
  %v191 = vunpack.c.h.b16 %v19
  %v192 = vunpack.c.l.b16 %v20
  %v193 = vunpack.c.l.b16 %v21
  %v194 = vunpack.c.h.b16 %v21
  %v195 = vunpack.c.l.b16 %v22
  %v196 = vunpack.c.h.b16 %v22
  %v197 = vunpack.c.l.b16 %v23
  %v198 = vunpack.c.l.b16 %v24
  %v199 = vunpack.c.h.b16 %v24
  %v200 = vunpack.c.l.b16 %v25
  %v201 = vunpack.c.h.b16 %v25
  %v202 = vunpack.c.l.b16 %v26
  %v203 = vunpack.c.l.b16 %v27
  %v204 = vunpack.c.h.b16 %v27
  %v205 = vunpack.c.l.b16 %v28
  %v206 = vunpack.c.h.b16 %v28
  %v207 = vunpack.c.l.b16 %v29
  %v208 = vunpack.c.l.b16 %v30
  %v209 = vunpack.c.h.b16 %v30
  %v210 = vunpack.c.l.b16 %v31
  %v211 = vunpack.c.h.b16 %v31
  %v212 = vunpack.c.l.b16 %v32
  %v213 = vunpack.c.l.b16 %v33
  %v214 = vunpack.c.h.b16 %v33
  %v215 = vunpack.c.l.b16 %v34
  %v216 = vunpack.c.h.b16 %v34
  %v217 = vunpack.c.l.b16 %v35
  %v218 = vunpack.c.l.b16 %v36
  %v219 = vunpack.c.h.b16 %v36
  %v220 = vunpack.c.l.b16 %v37
  %v221 = vunpack.c.h.b16 %v37
  %v222 = vunpack.c.l.b16 %v38
  %v223 = vpack.c.b16 %v188, %v183
  %v224 = vpack.c.b16 %v189, %v184
  %v225 = vpack.c.b16 %v190, %v185
  %v226 = vpack.c.b16 %v191, %v186
  %v227 = vpack.c.b16 %v192, %v187
  %v228 = vpack.c.b16 %v198, %v193
  %v229 = vpack.c.b16 %v199, %v194
  %v230 = vpack.c.b16 %v200, %v195
  %v231 = vpack.c.b16 %v201, %v196
  %v232 = vpack.c.b16 %v202, %v197
  %v233 = vpack.c.b16 %v208, %v203
  %v234 = vpack.c.b16 %v209, %v204
  %v235 = vpack.c.b16 %v210, %v205
  %v236 = vpack.c.b16 %v211, %v206
  %v237 = vpack.c.b16 %v212, %v207
  %v238 = vpack.c.b16 %v218, %v213
  %v239 = vpack.c.b16 %v219, %v214
  %v240 = vpack.c.b16 %v220, %v215
  %v241 = vpack.c.b16 %v221, %v216
  %v242 = vpack.c.b16 %v222, %v217
  %v331 = vunpack.c.l.b16 %v39
  %v332 = vunpack.c.l.b16 %v40
  %v333 = vunpack.c.l.b16 %v41
  %v334 = vunpack.c.l.b16 %v42
  %v335 = vunpack.c.l.b16 %v43
  %v336 = vunpack.c.l.b16 %v44
  %v337 = vunpack.c.l.b16 %v45
  %v338 = vunpack.c.l.b16 %v46
  %v339 = vunpack.c.l.b16 %v47
  %v340 = vunpack.c.l.b16 %v48
  %v341 = vunpack.c.l.b16 %v49
  %v342 = vunpack.c.l.b16 %v50
  %v343 = vunpack.c.l.b16 %v51
  %v344 = vunpack.c.l.b16 %v52
  %v345 = vunpack.c.l.b16 %v53
  %v346 = vunpack.c.l.b16 %v54
  %v347 = vunpack.c.l.b16 %v55
  %v348 = vunpack.c.l.b16 %v56
  %v349 = vunpack.c.l.b16 %v57
  %v350 = vunpack.c.l.b16 %v58
  %v351 = vunpack.c.l.b16 %v59
  %v352 = vunpack.c.l.b16 %v60
  %v353 = vunpack.c.l.b16 %v61
  %v354 = vunpack.c.l.b16 %v62
  %v355 = vunpack.c.l.b16 %v63
  %v356 = vunpack.c.l.b16 %v64
  %v357 = vunpack.c.l.b16 %v65
  %v358 = vunpack.c.l.b16 %v66
  %v359 = vunpack.c.l.b16 %v67
  %v360 = vunpack.c.l.b16 %v68
  %v361 = vunpack.c.l.b16 %v69
  %v362 = vunpack.c.l.b16 %v70
  %v363 = vunpack.c.l.b16 %v71
  %v364 = vunpack.c.l.b16 %v72
  %v365 = vunpack.c.l.b16 %v73
  %v366 = vunpack.c.l.b16 %v74
  %v367 = vunpack.c.l.b16 %v75
  %v368 = vunpack.c.l.b16 %v76
  %v369 = vunpack.c.l.b16 %v77
  %v370 = vunpack.c.l.b16 %v78
  %v371 = vunpack.c.l.b16 %v79
  %v372 = vunpack.c.l.b16 %v80
  %v373 = vunpack.c.l.b16 %v81
  %v374 = vunpack.c.l.b16 %v82
  %v375 = vunpack.c.l.b16 %v83
  %v376 = vunpack.c.l.b16 %v84
  %v377 = vunpack.c.l.b16 %v85
  %v378 = vunpack.c.l.b16 %v86
  %v379 = vunpack.c.l.b16 %v87
  %v380 = vunpack.c.l.b16 %v88
  %v381 = vunpack.c.l.b16 %v89
  %v382 = vunpack.c.l.b16 %v90
  %v383 = vunpack.c.l.b16 %v91
  %v384 = vunpack.c.l.b16 %v92
  %v385 = vunpack.c.l.b16 %v93
  %v386 = vunpack.c.l.b16 %v94
  %v387 = vunpack.c.l.b16 %v95
  %v388 = vunpack.c.l.b16 %v96
  %v389 = vunpack.c.l.b16 %v97
  %v390 = vunpack.c.l.b16 %v98
  %v391 = vunpack.c.l.b16 %v99
  %v392 = vunpack.c.l.b16 %v100
  %v393 = vunpack.c.l.b16 %v101
  %v394 = vunpack.c.l.b16 %v102
  %v395 = vunpack.c.l.b16 %v103
  %v396 = vunpack.c.l.b16 %v104
  %v397 = vunpack.c.l.b16 %v105
  %v398 = vunpack.c.l.b16 %v106
  %v399 = vunpack.c.l.b16 %v107
  %v400 = vunpack.c.l.b16 %v108
  %v401 = vunpack.c.l.b16 %v109
  %v402 = vunpack.c.l.b16 %v110
  %v403 = vpack.c.b16 %v332, %v331
  %v404 = vpack.c.b16 %v334, %v333
  %v405 = vpack.c.b16 %v336, %v335
  %v406 = vpack.c.b16 %v338, %v337
  %v407 = vpack.c.b16 %v340, %v339
  %v408 = vpack.c.b16 %v342, %v341
  %v409 = vpack.c.b16 %v344, %v343
  %v410 = vpack.c.b16 %v346, %v345
  %v411 = vpack.c.b16 %v348, %v347
  %v412 = vpack.c.b16 %v350, %v349
  %v413 = vpack.c.b16 %v352, %v351
  %v414 = vpack.c.b16 %v354, %v353
  %v415 = vpack.c.b16 %v356, %v355
  %v416 = vpack.c.b16 %v358, %v357
  %v417 = vpack.c.b16 %v360, %v359
  %v418 = vpack.c.b16 %v362, %v361
  %v419 = vpack.c.b16 %v364, %v363
  %v420 = vpack.c.b16 %v366, %v365
  %v421 = vpack.c.b16 %v368, %v367
  %v422 = vpack.c.b16 %v370, %v369
  %v423 = vpack.c.b16 %v372, %v371
  %v424 = vpack.c.b16 %v374, %v373
  %v425 = vpack.c.b16 %v376, %v375
  %v426 = vpack.c.b16 %v378, %v377
  %v427 = vpack.c.b16 %v380, %v379
  %v428 = vpack.c.b16 %v382, %v381
  %v429 = vpack.c.b16 %v384, %v383
  %v430 = vpack.c.b16 %v386, %v385
  %v431 = vpack.c.b16 %v388, %v387
  %v432 = vpack.c.b16 %v390, %v389
  %v433 = vpack.c.b16 %v392, %v391
  %v434 = vpack.c.b16 %v394, %v393
  %v435 = vpack.c.b16 %v396, %v395
  %v436 = vpack.c.b16 %v398, %v397
  %v437 = vpack.c.b16 %v400, %v399
  %v438 = vpack.c.b16 %v402, %v401
  %vm475 = vcmask 523264
  %v477 = vsel %vm475, %v227, 0
  %v480 = vsel %vm475, %v232, 0
  %v483 = vsel %vm475, %v237, 0
  %v486 = vsel %vm475, %v242, 0
  %488 = vmatpush.bf16.msra.mxu0 %v410
  %489 = vmatpush.bf16.msra.mxu0 %v409
  %490 = vmatpush.bf16.msra.mxu0 %v408
  %491 = vmatpush.bf16.msra.mxu0 %v407
  %492 = vmatpush.bf16.msra.mxu0 %v406
  %493 = vmatpush.bf16.msra.mxu0 %v405
  %494 = vmatpush.bf16.msra.mxu0 %v404
  %495 = vmatpush.bf16.msra.mxu0 %v403
  %496 = vmatmul.bf16.gmra.mxu0 %v223
  %v497 = vpop.f32.mrf.mxu0
  %v498 = vadd.f32 %v122, %v497
  %v499 = vpop.f32.mrf.mxu0
  %v500 = vadd.f32 %v127, %v499
  %501 = vmatmul.bf16.gmra.mxu0 %v228
  %v502 = vpop.f32.mrf.mxu0
  %v503 = vadd.f32 %v132, %v502
  %v504 = vpop.f32.mrf.mxu0
  %v505 = vadd.f32 %v137, %v504
  %506 = vmatmul.bf16.gmra.mxu0 %v233
  %v507 = vpop.f32.mrf.mxu0
  %v508 = vadd.f32 %v142, %v507
  %v509 = vpop.f32.mrf.mxu0
  %v510 = vadd.f32 %v147, %v509
  %511 = vmatmul.bf16.gmra.mxu0 %v238
  %v512 = vpop.f32.mrf.mxu0
  %v513 = vadd.f32 %v152, %v512
  %v514 = vpop.f32.mrf.mxu0
  %v515 = vadd.f32 %v157, %v514
  %516 = vdwg.mxu0
  %517 = vmatpush.bf16.msra.mxu0 %v418
  %518 = vmatpush.bf16.msra.mxu0 %v417
  %519 = vmatpush.bf16.msra.mxu0 %v416
  %520 = vmatpush.bf16.msra.mxu0 %v415
  %521 = vmatpush.bf16.msra.mxu0 %v414
  %522 = vmatpush.bf16.msra.mxu0 %v413
  %523 = vmatpush.bf16.msra.mxu0 %v412
  %524 = vmatpush.bf16.msra.mxu0 %v411
  %525 = vmatmul.bf16.gmra.mxu0 %v224
  %v526 = vpop.f32.mrf.mxu0
  %v527 = vadd.f32 %v498, %v526
  %v528 = vpop.f32.mrf.mxu0
  %v529 = vadd.f32 %v500, %v528
  %530 = vmatmul.bf16.gmra.mxu0 %v229
  %v531 = vpop.f32.mrf.mxu0
  %v532 = vadd.f32 %v503, %v531
  %v533 = vpop.f32.mrf.mxu0
  %v534 = vadd.f32 %v505, %v533
  %535 = vmatmul.bf16.gmra.mxu0 %v234
  %v536 = vpop.f32.mrf.mxu0
  %v537 = vadd.f32 %v508, %v536
  %v538 = vpop.f32.mrf.mxu0
  %v539 = vadd.f32 %v510, %v538
  %540 = vmatmul.bf16.gmra.mxu0 %v239
  %v541 = vpop.f32.mrf.mxu0
  %v542 = vadd.f32 %v513, %v541
  %v543 = vpop.f32.mrf.mxu0
  %v544 = vadd.f32 %v515, %v543
  %545 = vdwg.mxu0
  %546 = vmatpush.bf16.msra.mxu0 %v426
  %547 = vmatpush.bf16.msra.mxu0 %v425
  %548 = vmatpush.bf16.msra.mxu0 %v424
  %549 = vmatpush.bf16.msra.mxu0 %v423
  %550 = vmatpush.bf16.msra.mxu0 %v422
  %551 = vmatpush.bf16.msra.mxu0 %v421
  %552 = vmatpush.bf16.msra.mxu0 %v420
  %553 = vmatpush.bf16.msra.mxu0 %v419
  %554 = vmatmul.bf16.gmra.mxu0 %v225
  %v555 = vpop.f32.mrf.mxu0
  %v556 = vadd.f32 %v527, %v555
  %v557 = vpop.f32.mrf.mxu0
  %v558 = vadd.f32 %v529, %v557
  %559 = vmatmul.bf16.gmra.mxu0 %v230
  %v560 = vpop.f32.mrf.mxu0
  %v561 = vadd.f32 %v532, %v560
  %v562 = vpop.f32.mrf.mxu0
  %v563 = vadd.f32 %v534, %v562
  %564 = vmatmul.bf16.gmra.mxu0 %v235
  %v565 = vpop.f32.mrf.mxu0
  %v566 = vadd.f32 %v537, %v565
  %v567 = vpop.f32.mrf.mxu0
  %v568 = vadd.f32 %v539, %v567
  %569 = vmatmul.bf16.gmra.mxu0 %v240
  %v570 = vpop.f32.mrf.mxu0
  %v571 = vadd.f32 %v542, %v570
  %v572 = vpop.f32.mrf.mxu0
  %v573 = vadd.f32 %v544, %v572
  %574 = vdwg.mxu0
  %575 = vmatpush.bf16.msra.mxu0 %v434
  %576 = vmatpush.bf16.msra.mxu0 %v433
  %577 = vmatpush.bf16.msra.mxu0 %v432
  %578 = vmatpush.bf16.msra.mxu0 %v431
  %579 = vmatpush.bf16.msra.mxu0 %v430
  %580 = vmatpush.bf16.msra.mxu0 %v429
  %581 = vmatpush.bf16.msra.mxu0 %v428
  %582 = vmatpush.bf16.msra.mxu0 %v427
  %583 = vmatmul.bf16.gmra.mxu0 %v226
  %v584 = vpop.f32.mrf.mxu0
  %v585 = vadd.f32 %v556, %v584
  %v586 = vpop.f32.mrf.mxu0
  %v587 = vadd.f32 %v558, %v586
  %588 = vmatmul.bf16.gmra.mxu0 %v231
  %v589 = vpop.f32.mrf.mxu0
  %v590 = vadd.f32 %v561, %v589
  %v591 = vpop.f32.mrf.mxu0
  %v592 = vadd.f32 %v563, %v591
  %593 = vmatmul.bf16.gmra.mxu0 %v236
  %v594 = vpop.f32.mrf.mxu0
  %v595 = vadd.f32 %v566, %v594
  %v596 = vpop.f32.mrf.mxu0
  %v597 = vadd.f32 %v568, %v596
  %598 = vmatmul.bf16.gmra.mxu0 %v241
  %v599 = vpop.f32.mrf.mxu0
  %v600 = vadd.f32 %v571, %v599
  %v601 = vpop.f32.mrf.mxu0
  %v602 = vadd.f32 %v573, %v601
  %603 = vdwg.mxu0
  %604 = vmatpush.bf16.msra.mxu0 0
  %605 = vmatpush.bf16.msra.mxu0 0
  %606 = vmatpush.bf16.msra.mxu0 0
  %607 = vmatpush.bf16.msra.mxu0 0
  %608 = vmatpush.bf16.msra.mxu0 %v438
  %609 = vmatpush.bf16.msra.mxu0 %v437
  %610 = vmatpush.bf16.msra.mxu0 %v436
  %611 = vmatpush.bf16.msra.mxu0 %v435
  %612 = vmatmul.bf16.gmra.mxu0 %v477
  %v613 = vpop.f32.mrf.mxu0
  %v614 = vadd.f32 %v585, %v613
  %v615 = vpop.f32.mrf.mxu0
  %v616 = vadd.f32 %v587, %v615
  %617 = vmatmul.bf16.gmra.mxu0 %v480
  %v618 = vpop.f32.mrf.mxu0
  %v619 = vadd.f32 %v590, %v618
  %v620 = vpop.f32.mrf.mxu0
  %v621 = vadd.f32 %v592, %v620
  %622 = vmatmul.bf16.gmra.mxu0 %v483
  %v623 = vpop.f32.mrf.mxu0
  %v624 = vadd.f32 %v595, %v623
  %v625 = vpop.f32.mrf.mxu0
  %v626 = vadd.f32 %v597, %v625
  %627 = vmatmul.bf16.gmra.mxu0 %v486
  %v628 = vpop.f32.mrf.mxu0
  %v629 = vadd.f32 %v600, %v628
  %v630 = vpop.f32.mrf.mxu0
  %v631 = vadd.f32 %v602, %v630
  %632 = vdwg.mxu0
  %v633 = vmax.f32 %v614, 0.0
  %v634 = vmax.f32 %v616, 0.0
  %v635 = vmax.f32 %v619, 0.0
  %v636 = vmax.f32 %v621, 0.0
  %v637 = vmax.f32 %v624, 0.0
  %v638 = vmax.f32 %v626, 0.0
  %v639 = vmax.f32 %v629, 0.0
  %v640 = vmax.f32 %v631, 0.0
  %v641 = vpack.c.bf16 %v633, %v633
  %v642 = vpack.c.bf16 %v634, %v634
  %v643 = vpack.c.bf16 %v635, %v635
  %v644 = vpack.c.bf16 %v636, %v636
  %v645 = vpack.c.bf16 %v637, %v637
  %v646 = vpack.c.bf16 %v638, %v638
  %v647 = vpack.c.bf16 %v639, %v639
  %v648 = vpack.c.bf16 %v640, %v640
  %649 = vst [vmem:[%s3] sm:$0xf] %v641
  %650 = vst [vmem:[%s3 + $0x4] sm:$0xf] %v642
  %651 = vst [vmem:[%s3 + $0x8] sm:$0xf] %v643
  %652 = vst [vmem:[%s3 + $0xc] sm:$0xf] %v644
  %653 = vst [vmem:[%s3 + $0x10] sm:$0xf] %v645
  %654 = vst [vmem:[%s3 + $0x14] sm:$0xf] %v646
  %655 = vst [vmem:[%s3 + $0x18] sm:$0xf] %v647
  %656 = vst [vmem:[%s3 + $0x1c] sm:$0xf] %v648
  // Predicated region
  $region14: #{atari_bootstrapped_dqn_forward.6} parent=0 // pred_check
    _
  $region15: #{atari_bootstrapped_dqn_forward.6} parent=0 // pred_check_branch
    %658 = sbr.rel (0) target = $region17
  $region16: #{atari_bootstrapped_dqn_forward.6} parent=0 // pred_region
    _
  $region17: #{atari_bootstrapped_dqn_forward.6} parent=0 // pred_fallthru
    _
  // Predicated region
  $region18: #{atari_bootstrapped_dqn_forward.6} parent=0 // pred_check
    _
  $region19: #{atari_bootstrapped_dqn_forward.6} parent=0 // pred_check_branch
    %660 = sbr.rel (0) target = $region21
  $region20: #{atari_bootstrapped_dqn_forward.6} parent=0 // pred_region
    _
  $region21: #{atari_bootstrapped_dqn_forward.6} parent=0 // pred_fallthru
    _

// kernel: atari_bootstrapped_dqn_forward.7
$region0: #{atari_bootstrapped_dqn_forward.7}
  #allocation0 [shape = 'u32[]', space=smem, size = 0x4, offset = 0x4, fixed_abs, tag = 'smem constant byte address 0x4 - core index']
  #allocation1 [shape = 'u32[72,128]{1,0:T(1,128)}', space=vmem, size = 0x9000, scoped, tag = 'internal scratch']
  %s0 = inlined_call_operand.vmem [shape: bf16[3136,2], index: 0, kind: input, shape index: {}]
  %s1 = inlined_call_operand.vmem [shape: bf16[2,512,3136], index: 1, kind: input, shape index: {}]
  %s2 = inlined_call_operand.vmem [shape: f32[2,512,1], index: 2, kind: input, shape index: {}]
  %s3 = inlined_call_operand.vmem [shape: bf16[2,16,512], index: 3, kind: input, shape index: {}]
  %s4 = inlined_call_operand.vmem [shape: f32[2,16,1], index: 4, kind: input, shape index: {}]
  %s5 = inlined_call_operand.vmem [shape: f32[2,16,2], index: 5, kind: output, shape index: {}]
  %s6 = sld [smem:[#allocation0]]
  $region53: #{atari_bootstrapped_dqn_forward.7} parent=0
    _
  %s8 = ssub.s32 1, %s6
  %s9 = scalar_select 0, %s8, %s6
  loop: start=0, step=1, limit=4
  $region2: #{atari_bootstrapped_dqn_forward.7} parent=0 // loop_pre_header
    _
  $region3: #{atari_bootstrapped_dqn_forward.7} parent=0 // loop_header
    %s11 = sphi 0, %s15
    %p12 = scmp.ge.s32.totalorder %s11, 4
    %s19 = sphi 0, %s19
    %s21 = sphi 0, %s19
    %s22 = sphi 0, %s21
    %s36 = sphi 0, %s22
    %s42 = sphi 0, %s44
    %s45 = sphi 0, %s42
    %s46 = sphi 0, %s45
    %s62 = sphi 0, %s46
    %s68 = sphi 0, %s70
    %s71 = sphi 0, %s68
    %s72 = sphi 0, %s71
    %s88 = sphi 0, %s72
    %s94 = sphi 0, %s96
    %s97 = sphi 0, %s94
    %s98 = sphi 0, %s97
    %s114 = sphi 0, %s98
    %s120 = sphi 0, %s122
    %s123 = sphi 0, %s120
    %s124 = sphi 0, %s123
    %s140 = sphi 0, %s124
    %s146 = sphi 0, %s148
    %s149 = sphi 0, %s146
    %s150 = sphi 0, %s149
    %s166 = sphi 0, %s150
  $region4: #{atari_bootstrapped_dqn_forward.7} parent=0 // loop_header_branch
    %14 = sbr.rel (%p12) target = $region8
  $region5: #{atari_bootstrapped_dqn_forward.7} parent=0 // loop_body
    %s16 = ssub.s32 %s11, 1
    %s17 = ssub.s32 %s11, 2
    %s18 = sadd.s32 %s11, 1
    %s20 = sadd.s32 %s19, 1
    %p23 = scmp.eq.s32.totalorder %s11, 1
    %p24 = scmp.ne.s32.totalorder %s19, %s21
    %p25 = scmp.eq.s32.totalorder %s11, 0
    %p26 = por %p24, %p25
    %p27 = scmp.ne.s32.totalorder %s19, %s21
    %p28 = scmp.eq.s32.totalorder %s16, 1
    %p29 = por %p27, %p28
    %p30 = scmp.ne.s32.totalorder %s21, %s22
    %p31 = scmp.eq.s32.totalorder %s16, 0
    %p32 = por %p30, %p31
    %p33 = scmp.ne.s32.totalorder %s21, %s22
    %p34 = scmp.eq.s32.totalorder %s17, 1
    %p35 = por %p33, %p34
    %p37 = scmp.ne.s32.totalorder %s22, %s36
    %p38 = scmp.eq.s32.totalorder %s17, 0
    %p39 = por %p37, %p38
    %s40 = ssub.s32 %s11, %s18
    %p41 = scmp.eq.s32.totalorder %s40, 0
    %s43 = sadd.s32 %s42, 1
    %s44 = scalar_select %p41, %s42, %s43
    %p47 = pneg %p41
    %p48 = scmp.eq.s32.totalorder %s11, 1
    %p49 = por %p47, %p48
    %p50 = scmp.ne.s32.totalorder %s42, %s45
    %p51 = scmp.eq.s32.totalorder %s11, 0
    %p52 = por %p50, %p51
    %p53 = scmp.ne.s32.totalorder %s42, %s45
    %p54 = scmp.eq.s32.totalorder %s16, 1
    %p55 = por %p53, %p54
    %p56 = scmp.ne.s32.totalorder %s45, %s46
    %p57 = scmp.eq.s32.totalorder %s16, 0
    %p58 = por %p56, %p57
    %p59 = scmp.ne.s32.totalorder %s45, %s46
    %p60 = scmp.eq.s32.totalorder %s17, 1
    %p61 = por %p59, %p60
    %p63 = scmp.ne.s32.totalorder %s46, %s62
    %p64 = scmp.eq.s32.totalorder %s17, 0
    %p65 = por %p63, %p64
    %s66 = ssub.s32 %s11, %s18
    %p67 = scmp.eq.s32.totalorder %s66, 0
    %s69 = sadd.s32 %s68, 1
    %s70 = scalar_select %p67, %s68, %s69
    %p73 = pneg %p67
    %p74 = scmp.eq.s32.totalorder %s11, 1
    %p75 = por %p73, %p74
    %p76 = scmp.ne.s32.totalorder %s68, %s71
    %p77 = scmp.eq.s32.totalorder %s11, 0
    %p78 = por %p76, %p77
    %p79 = scmp.ne.s32.totalorder %s68, %s71
    %p80 = scmp.eq.s32.totalorder %s16, 1
    %p81 = por %p79, %p80
    %p82 = scmp.ne.s32.totalorder %s71, %s72
    %p83 = scmp.eq.s32.totalorder %s16, 0
    %p84 = por %p82, %p83
    %p85 = scmp.ne.s32.totalorder %s71, %s72
    %p86 = scmp.eq.s32.totalorder %s17, 1
    %p87 = por %p85, %p86
    %p89 = scmp.ne.s32.totalorder %s72, %s88
    %p90 = scmp.eq.s32.totalorder %s17, 0
    %p91 = por %p89, %p90
    %s92 = ssub.s32 %s11, %s18
    %p93 = scmp.eq.s32.totalorder %s92, 0
    %s95 = sadd.s32 %s94, 1
    %s96 = scalar_select %p93, %s94, %s95
    %p99 = pneg %p93
    %p100 = scmp.eq.s32.totalorder %s11, 1
    %p101 = por %p99, %p100
    %p102 = scmp.ne.s32.totalorder %s94, %s97
    %p103 = scmp.eq.s32.totalorder %s11, 0
    %p104 = por %p102, %p103
    %p105 = scmp.ne.s32.totalorder %s94, %s97
    %p106 = scmp.eq.s32.totalorder %s16, 1
    %p107 = por %p105, %p106
    %p108 = scmp.ne.s32.totalorder %s97, %s98
    %p109 = scmp.eq.s32.totalorder %s16, 0
    %p110 = por %p108, %p109
    %p111 = scmp.ne.s32.totalorder %s97, %s98
    %p112 = scmp.eq.s32.totalorder %s17, 1
    %p113 = por %p111, %p112
    %p115 = scmp.ne.s32.totalorder %s98, %s114
    %p116 = scmp.eq.s32.totalorder %s17, 0
    %p117 = por %p115, %p116
    %s118 = ssub.s32 %s11, %s18
    %p119 = scmp.eq.s32.totalorder %s118, 0
    %s121 = sadd.s32 %s120, 1
    %s122 = scalar_select %p119, %s120, %s121
    %p125 = pneg %p119
    %p126 = scmp.eq.s32.totalorder %s11, 1
    %p127 = por %p125, %p126
    %p128 = scmp.ne.s32.totalorder %s120, %s123
    %p129 = scmp.eq.s32.totalorder %s11, 0
    %p130 = por %p128, %p129
    %p131 = scmp.ne.s32.totalorder %s120, %s123
    %p132 = scmp.eq.s32.totalorder %s16, 1
    %p133 = por %p131, %p132
    %p134 = scmp.ne.s32.totalorder %s123, %s124
    %p135 = scmp.eq.s32.totalorder %s16, 0
    %p136 = por %p134, %p135
    %p137 = scmp.ne.s32.totalorder %s123, %s124
    %p138 = scmp.eq.s32.totalorder %s17, 1
    %p139 = por %p137, %p138
    %p141 = scmp.ne.s32.totalorder %s124, %s140
    %p142 = scmp.eq.s32.totalorder %s17, 0
    %p143 = por %p141, %p142
    %s144 = ssub.s32 %s11, %s18
    %p145 = scmp.eq.s32.totalorder %s144, 0
    %s147 = sadd.s32 %s146, 1
    %s148 = scalar_select %p145, %s146, %s147
    %p151 = pneg %p145
    %p152 = scmp.eq.s32.totalorder %s11, 1
    %p153 = por %p151, %p152
    %p154 = scmp.ne.s32.totalorder %s146, %s149
    %p155 = scmp.eq.s32.totalorder %s11, 0
    %p156 = por %p154, %p155
    %p157 = scmp.ne.s32.totalorder %s146, %s149
    %p158 = scmp.eq.s32.totalorder %s16, 1
    %p159 = por %p157, %p158
    %p160 = scmp.ne.s32.totalorder %s149, %s150
    %p161 = scmp.eq.s32.totalorder %s16, 0
    %p162 = por %p160, %p161
    %p163 = scmp.ne.s32.totalorder %s149, %s150
    %p164 = scmp.eq.s32.totalorder %s17, 1
    %p165 = por %p163, %p164
    %p167 = scmp.ne.s32.totalorder %s150, %s166
    %p168 = scmp.eq.s32.totalorder %s17, 0
    %p169 = por %p167, %p168
    %p170 = scmp.le.s32.totalorder 1, %s11
    %p171 = scmp.lt.s32.totalorder %s11, 3
    %p172 = pnand %p170, %p171
    %p173 = pneg %p172
    // Predicated region
    $region9: #{atari_bootstrapped_dqn_forward.7} parent=5 // pred_check
      _
    $region10: #{atari_bootstrapped_dqn_forward.7} parent=5 // pred_check_branch
      %175 = sbr.rel (%p172) target = $region12
    $region11: #{atari_bootstrapped_dqn_forward.7} parent=5 // pred_region
      %s176 = ssub.s32 %s11, 1
      // Predicated region
      $region13: #{atari_bootstrapped_dqn_forward.7} parent=11 // pred_check
        %p177 = pneg %p32
      $region14: #{atari_bootstrapped_dqn_forward.7} parent=11 // pred_check_branch
        %179 = sbr.rel (%p177) target = $region16
      $region15: #{atari_bootstrapped_dqn_forward.7} parent=11 // pred_region
        _
      $region16: #{atari_bootstrapped_dqn_forward.7} parent=11 // pred_fallthru
        _
    $region12: #{atari_bootstrapped_dqn_forward.7} parent=5 // pred_fallthru
      _
    %p180 = scmp.lt.s32.totalorder %s11, 2
    // Predicated region
    $region17: #{atari_bootstrapped_dqn_forward.7} parent=5 // pred_check
      %p181 = pneg %p180
    $region18: #{atari_bootstrapped_dqn_forward.7} parent=5 // pred_check_branch
      %183 = sbr.rel (%p181) target = $region20
    $region19: #{atari_bootstrapped_dqn_forward.7} parent=5 // pred_region
      // Predicated region
      $region21: #{atari_bootstrapped_dqn_forward.7} parent=19 // pred_check
        %p184 = pneg %p52
      $region22: #{atari_bootstrapped_dqn_forward.7} parent=19 // pred_check_branch
        %186 = sbr.rel (%p184) target = $region24
      $region23: #{atari_bootstrapped_dqn_forward.7} parent=19 // pred_region
        %p187 = scmp.lt.s32.totalorder %s11, 1
        %s188 = scalar_select %p187, %s11, 1
        %s189 = smul.addr %s188, 1600
        %s190 = smul.addr %s189, 4
        %s191 = scalar_lea.vmem %s1, %s190
      $region24: #{atari_bootstrapped_dqn_forward.7} parent=19 // pred_fallthru
        _
      // Predicated region
      $region25: #{atari_bootstrapped_dqn_forward.7} parent=19 // pred_check
        %p192 = pneg %p78
      $region26: #{atari_bootstrapped_dqn_forward.7} parent=19 // pred_check_branch
        %194 = sbr.rel (%p192) target = $region28
      $region27: #{atari_bootstrapped_dqn_forward.7} parent=19 // pred_region
        %p195 = scmp.lt.s32.totalorder %s11, 1
        %s196 = scalar_select %p195, %s11, 1
        %s197 = smul.addr %s196, 64
        %s198 = smul.addr %s197, 8
        %s199 = scalar_lea.vmem %s2, %s198
      $region28: #{atari_bootstrapped_dqn_forward.7} parent=19 // pred_fallthru
        _
      // Predicated region
      $region29: #{atari_bootstrapped_dqn_forward.7} parent=19 // pred_check
        %p200 = pneg %p104
      $region30: #{atari_bootstrapped_dqn_forward.7} parent=19 // pred_check_branch
        %202 = sbr.rel (%p200) target = $region32
      $region31: #{atari_bootstrapped_dqn_forward.7} parent=19 // pred_region
        %p203 = scmp.lt.s32.totalorder %s11, 1
        %s204 = scalar_select %p203, %s11, 1
        %s205 = smul.addr %s204, 8
        %s206 = smul.addr %s205, 4
        %s207 = scalar_lea.vmem %s3, %s206
      $region32: #{atari_bootstrapped_dqn_forward.7} parent=19 // pred_fallthru
        _
      // Predicated region
      $region33: #{atari_bootstrapped_dqn_forward.7} parent=19 // pred_check
        %p208 = pneg %p130
      $region34: #{atari_bootstrapped_dqn_forward.7} parent=19 // pred_check_branch
        %210 = sbr.rel (%p208) target = $region36
      $region35: #{atari_bootstrapped_dqn_forward.7} parent=19 // pred_region
        %p211 = scmp.lt.s32.totalorder %s11, 1
        %s212 = scalar_select %p211, %s11, 1
        %s213 = smul.addr %s212, 2
        %s214 = smul.addr %s213, 8
        %s215 = scalar_lea.vmem %s4, %s214
      $region36: #{atari_bootstrapped_dqn_forward.7} parent=19 // pred_fallthru
        _
    $region20: #{atari_bootstrapped_dqn_forward.7} parent=5 // pred_fallthru
      _
    %p216 = scmp.le.s32.totalorder 1, %s11
    %p217 = scmp.lt.s32.totalorder %s11, 3
    %p218 = pnand %p216, %p217
    %p219 = pneg %p218
    // Predicated region
    $region37: #{atari_bootstrapped_dqn_forward.7} parent=5 // pred_check
      _
    $region38: #{atari_bootstrapped_dqn_forward.7} parent=5 // pred_check_branch
      %221 = sbr.rel (%p218) target = $region40
    $region39: #{atari_bootstrapped_dqn_forward.7} parent=5 // pred_region
      %s222 = ssub.s32 %s11, 1
      %p223 = pneg %p32
      %p224 = pneg %p29
      %p225 = scmp.lt.s32.totalorder %s16, 1
      %s226 = scalar_select %p225, %s16, 1
      %s227 = smul.addr %s226, 1600
      %s228 = smul.addr %s227, 4
      %s229 = scalar_lea.vmem %s1, %s228
      %p230 = pneg %p58
      %p231 = pneg %p55
      %p232 = scmp.lt.s32.totalorder %s16, 1
      %s233 = scalar_select %p232, %s16, 1
      %s234 = smul.addr %s233, 64
      %s235 = smul.addr %s234, 8
      %s236 = scalar_lea.vmem %s2, %s235
      %p237 = pneg %p84
      %p238 = pneg %p81
      %p239 = scmp.lt.s32.totalorder %s16, 1
      %s240 = scalar_select %p239, %s16, 1
      %s241 = smul.addr %s240, 8
      %s242 = smul.addr %s241, 4
      %s243 = scalar_lea.vmem %s3, %s242
      %p244 = pneg %p110
      %p245 = pneg %p107
      %p246 = scmp.lt.s32.totalorder %s16, 1
      %s247 = scalar_select %p246, %s16, 1
      %s248 = smul.addr %s247, 2
      %s249 = smul.addr %s248, 8
      %s250 = scalar_lea.vmem %s4, %s249
      %p251 = pneg %p136
      %p252 = pneg %p133
      %p253 = pneg %p162
      %p254 = pneg %p159
      %p255 = scmp.lt.s32.totalorder %s16, 1
      %s256 = scalar_select %p255, %s16, 1
      %s257 = smul.addr %s256, 2
      %s258 = smul.addr %s257, 8
      %s259 = scalar_lea.vmem %s5, %s258
      %p260 = scmp.lt.s32.totalorder %s16, 1
      %s261 = scalar_select %p260, %s16, 1
      %s262 = smul.addr %s261, 1600
      %s263 = smul.addr %s262, 4
      %s264 = scalar_lea.vmem %s1, %s263
      %p265 = scmp.lt.s32.totalorder %s16, 1
      %s266 = scalar_select %p265, %s16, 1
      %s267 = smul.addr %s266, 64
      %s268 = smul.addr %s267, 8
      %s269 = scalar_lea.vmem %s2, %s268
      %p270 = scmp.lt.s32.totalorder %s16, 1
      %s271 = scalar_select %p270, %s16, 1
      %s272 = smul.addr %s271, 8
      %s273 = smul.addr %s272, 4
      %s274 = scalar_lea.vmem %s3, %s273
      %p275 = scmp.lt.s32.totalorder %s16, 1
      %s276 = scalar_select %p275, %s16, 1
      %s277 = smul.addr %s276, 2
      %s278 = smul.addr %s277, 8
      %s279 = scalar_lea.vmem %s4, %s278
      %p280 = scmp.lt.s32.totalorder %s16, 1
      %s281 = scalar_select %p280, %s16, 1
      %s282 = smul.addr %s281, 2
      %s283 = smul.addr %s282, 8
      %s284 = scalar_lea.vmem %s5, %s283
      %v286 = vld [vmem:[%s0] sm:$0xf]
      %v287 = vld [vmem:[%s0 + $0x4] sm:$0xf]
      %v288 = vld [vmem:[%s0 + $0x8] sm:$0xf]
      %v289 = vld [vmem:[%s0 + $0xc] sm:$0xf]
      %v290 = vld [vmem:[%s0 + $0x10] sm:$0xf]
      %v291 = vld [vmem:[%s0 + $0x14] sm:$0xf]
      %v292 = vld [vmem:[%s0 + $0x18] sm:$0xf]
      %v293 = vld [vmem:[%s0 + $0x1c] sm:$0xf]
      %v294 = vld [vmem:[%s0 + $0x20] sm:$0xf]
      %v295 = vld [vmem:[%s0 + $0x24] sm:$0xf]
      %v296 = vld [vmem:[%s0 + $0x28] sm:$0xf]
      %v297 = vld [vmem:[%s0 + $0x2c] sm:$0xf]
      %v298 = vld [vmem:[%s0 + $0x30] sm:$0xf]
      %v299 = vld [vmem:[%s0 + $0x34] sm:$0xf]
      %v300 = vld [vmem:[%s0 + $0x38] sm:$0xf]
      %v301 = vld [vmem:[%s0 + $0x3c] sm:$0xf]
      %v302 = vld [vmem:[%s0 + $0x40] sm:$0xf]
      %v303 = vld [vmem:[%s0 + $0x44] sm:$0xf]
      %v304 = vld [vmem:[%s0 + $0x48] sm:$0xf]
      %v305 = vld [vmem:[%s0 + $0x4c] sm:$0xf]
      %v306 = vld [vmem:[%s0 + $0x50] sm:$0xf]
      %v307 = vld [vmem:[%s0 + $0x54] sm:$0xf]
      %v308 = vld [vmem:[%s0 + $0x58] sm:$0xf]
      %v309 = vld [vmem:[%s0 + $0x5c] sm:$0xf]
      %v310 = vld [vmem:[%s0 + $0x60] sm:$0xf]
      %v311 = vld [vmem:[%s0 + $0x64] sm:$0xf]
      %v312 = vld [vmem:[%s0 + $0x68] sm:$0xf]
      %v313 = vld [vmem:[%s0 + $0x6c] sm:$0xf]
      %v314 = vld [vmem:[%s0 + $0x70] sm:$0xf]
      %v315 = vld [vmem:[%s0 + $0x74] sm:$0xf]
      %v316 = vld [vmem:[%s0 + $0x78] sm:$0xf]
      %v317 = vld [vmem:[%s0 + $0x7c] sm:$0xf]
      %v318 = vld [vmem:[%s0 + $0x80] sm:$0xf]
      %v319 = vld [vmem:[%s0 + $0x84] sm:$0xf]
      %v320 = vld [vmem:[%s0 + $0x88] sm:$0xf]
      %v321 = vld [vmem:[%s0 + $0x8c] sm:$0xf]
      %v322 = vld [vmem:[%s0 + $0x90] sm:$0xf]
      %v323 = vld [vmem:[%s0 + $0x94] sm:$0xf]
      %v324 = vld [vmem:[%s0 + $0x98] sm:$0xf]
      %v325 = vld [vmem:[%s0 + $0x9c] sm:$0xf]
      %v326 = vld [vmem:[%s0 + $0xa0] sm:$0xf]
      %v327 = vld [vmem:[%s0 + $0xa4] sm:$0xf]
      %v328 = vld [vmem:[%s0 + $0xa8] sm:$0xf]
      %v329 = vld [vmem:[%s0 + $0xac] sm:$0xf]
      %v330 = vld [vmem:[%s0 + $0xb0] sm:$0xf]
      %v331 = vld [vmem:[%s0 + $0xb4] sm:$0xf]
      %v332 = vld [vmem:[%s0 + $0xb8] sm:$0xf]
      %v333 = vld [vmem:[%s0 + $0xbc] sm:$0xf]
      %v334 = vld [vmem:[%s0 + $0xc0] sm:$0xf]
      %v335 = vld [vmem:[%s0 + $0xc4] sm:$0xf]
      %v336 = vld [vmem:[%s0 + $0xc8] sm:$0xf]
      %v337 = vld [vmem:[%s0 + $0xcc] sm:$0xf]
      %v338 = vld [vmem:[%s0 + $0xd0] sm:$0xf]
      %v339 = vld [vmem:[%s0 + $0xd4] sm:$0xf]
      %v340 = vld [vmem:[%s0 + $0xd8] sm:$0xf]
      %v341 = vld [vmem:[%s0 + $0xdc] sm:$0xf]
      %v342 = vld [vmem:[%s0 + $0xe0] sm:$0xf]
      %v343 = vld [vmem:[%s0 + $0xe4] sm:$0xf]
      %v344 = vld [vmem:[%s0 + $0xe8] sm:$0xf]
      %v345 = vld [vmem:[%s0 + $0xec] sm:$0xf]
      %v346 = vld [vmem:[%s0 + $0xf0] sm:$0xf]
      %v347 = vld [vmem:[%s0 + $0xf4] sm:$0xf]
      %v348 = vld [vmem:[%s0 + $0xf8] sm:$0xf]
      %v349 = vld [vmem:[%s0 + $0xfc] sm:$0xf]
      %v350 = vld [vmem:[%s0 + $0x100] sm:$0xf]
      %v351 = vld [vmem:[%s0 + $0x104] sm:$0xf]
      %v352 = vld [vmem:[%s0 + $0x108] sm:$0xf]
      %v353 = vld [vmem:[%s0 + $0x10c] sm:$0xf]
      %v354 = vld [vmem:[%s0 + $0x110] sm:$0xf]
      %v355 = vld [vmem:[%s0 + $0x114] sm:$0xf]
      %v356 = vld [vmem:[%s0 + $0x118] sm:$0xf]
      %v357 = vld [vmem:[%s0 + $0x11c] sm:$0xf]
      %v358 = vld [vmem:[%s0 + $0x120] sm:$0xf]
      %v359 = vld [vmem:[%s0 + $0x124] sm:$0xf]
      %v360 = vld [vmem:[%s0 + $0x128] sm:$0xf]
      %v361 = vld [vmem:[%s0 + $0x12c] sm:$0xf]
      %v362 = vld [vmem:[%s0 + $0x130] sm:$0xf]
      %v363 = vld [vmem:[%s0 + $0x134] sm:$0xf]
      %v364 = vld [vmem:[%s0 + $0x138] sm:$0xf]
      %v365 = vld [vmem:[%s0 + $0x13c] sm:$0xf]
      %v366 = vld [vmem:[%s0 + $0x140] sm:$0xf]
      %v367 = vld [vmem:[%s0 + $0x144] sm:$0xf]
      %v368 = vld [vmem:[%s0 + $0x148] sm:$0xf]
      %v369 = vld [vmem:[%s0 + $0x14c] sm:$0xf]
      %v370 = vld [vmem:[%s0 + $0x150] sm:$0xf]
      %v371 = vld [vmem:[%s0 + $0x154] sm:$0xf]
      %v372 = vld [vmem:[%s0 + $0x158] sm:$0xf]
      %v373 = vld [vmem:[%s0 + $0x15c] sm:$0xf]
      %v374 = vld [vmem:[%s0 + $0x160] sm:$0xf]
      %v375 = vld [vmem:[%s0 + $0x164] sm:$0xf]
      %v376 = vld [vmem:[%s0 + $0x168] sm:$0xf]
      %v377 = vld [vmem:[%s0 + $0x16c] sm:$0xf]
      %v378 = vld [vmem:[%s0 + $0x170] sm:$0xf]
      %v379 = vld [vmem:[%s0 + $0x174] sm:$0xf]
      %v380 = vld [vmem:[%s0 + $0x178] sm:$0xf]
      %v381 = vld [vmem:[%s0 + $0x17c] sm:$0xf]
      %v382 = vld [vmem:[%s0 + $0x180] sm:$0xf]
      %v383 = vld [vmem:[%s0 + $0x184] sm:$0xf]
      %v384 = vld [vmem:[%s0 + $0x188] sm:$0xf]
      %v385 = vld [vmem:[%s0 + $0x18c] sm:$0xf]
      %v386 = vld [vmem:[%s0 + $0x190] sm:$0xf]
      %v387 = vld [vmem:[%s0 + $0x194] sm:$0xf]
      %v388 = vld [vmem:[%s0 + $0x198] sm:$0xf]
      %v389 = vld [vmem:[%s0 + $0x19c] sm:$0xf]
      %v390 = vld [vmem:[%s0 + $0x1a0] sm:$0xf]
      %v391 = vld [vmem:[%s0 + $0x1a4] sm:$0xf]
      %v392 = vld [vmem:[%s0 + $0x1a8] sm:$0xf]
      %v393 = vld [vmem:[%s0 + $0x1ac] sm:$0xf]
      %v394 = vld [vmem:[%s0 + $0x1b0] sm:$0xf]
      %v395 = vld [vmem:[%s0 + $0x1b4] sm:$0xf]
      %v396 = vld [vmem:[%s0 + $0x1b8] sm:$0xf]
      %v397 = vld [vmem:[%s0 + $0x1bc] sm:$0xf]
      %v398 = vld [vmem:[%s0 + $0x1c0] sm:$0xf]
      %v399 = vld [vmem:[%s0 + $0x1c4] sm:$0xf]
      %v400 = vld [vmem:[%s0 + $0x1c8] sm:$0xf]
      %v401 = vld [vmem:[%s0 + $0x1cc] sm:$0xf]
      %v402 = vld [vmem:[%s0 + $0x1d0] sm:$0xf]
      %v403 = vld [vmem:[%s0 + $0x1d4] sm:$0xf]
      %v404 = vld [vmem:[%s0 + $0x1d8] sm:$0xf]
      %v405 = vld [vmem:[%s0 + $0x1dc] sm:$0xf]
      %v406 = vld [vmem:[%s0 + $0x1e0] sm:$0xf]
      %v407 = vld [vmem:[%s0 + $0x1e4] sm:$0xf]
      %v408 = vld [vmem:[%s0 + $0x1e8] sm:$0xf]
      %v409 = vld [vmem:[%s0 + $0x1ec] sm:$0xf]
      %v410 = vld [vmem:[%s0 + $0x1f0] sm:$0xf]
      %v411 = vld [vmem:[%s0 + $0x1f4] sm:$0xf]
      %v412 = vld [vmem:[%s0 + $0x1f8] sm:$0xf]
      %v413 = vld [vmem:[%s0 + $0x1fc] sm:$0xf]
      %v414 = vld [vmem:[%s0 + $0x200] sm:$0xf]
      %v415 = vld [vmem:[%s0 + $0x204] sm:$0xf]
      %v416 = vld [vmem:[%s0 + $0x208] sm:$0xf]
      %v417 = vld [vmem:[%s0 + $0x20c] sm:$0xf]
      %v418 = vld [vmem:[%s0 + $0x210] sm:$0xf]
      %v419 = vld [vmem:[%s0 + $0x214] sm:$0xf]
      %v420 = vld [vmem:[%s0 + $0x218] sm:$0xf]
      %v421 = vld [vmem:[%s0 + $0x21c] sm:$0xf]
      %v422 = vld [vmem:[%s0 + $0x220] sm:$0xf]
      %v423 = vld [vmem:[%s0 + $0x224] sm:$0xf]
      %v424 = vld [vmem:[%s0 + $0x228] sm:$0xf]
      %v425 = vld [vmem:[%s0 + $0x22c] sm:$0xf]
      %v426 = vld [vmem:[%s0 + $0x230] sm:$0xf]
      %v427 = vld [vmem:[%s0 + $0x234] sm:$0xf]
      %v428 = vld [vmem:[%s0 + $0x238] sm:$0xf]
      %v429 = vld [vmem:[%s0 + $0x23c] sm:$0xf]
      %v430 = vld [vmem:[%s0 + $0x240] sm:$0xf]
      %v431 = vld [vmem:[%s0 + $0x244] sm:$0xf]
      %v432 = vld [vmem:[%s0 + $0x248] sm:$0xf]
      %v433 = vld [vmem:[%s0 + $0x24c] sm:$0xf]
      %v434 = vld [vmem:[%s0 + $0x250] sm:$0xf]
      %v435 = vld [vmem:[%s0 + $0x254] sm:$0xf]
      %v436 = vld [vmem:[%s0 + $0x258] sm:$0xf]
      %v437 = vld [vmem:[%s0 + $0x25c] sm:$0xf]
      %v438 = vld [vmem:[%s0 + $0x260] sm:$0xf]
      %v439 = vld [vmem:[%s0 + $0x264] sm:$0xf]
      %v440 = vld [vmem:[%s0 + $0x268] sm:$0xf]
      %v441 = vld [vmem:[%s0 + $0x26c] sm:$0xf]
      %v442 = vld [vmem:[%s0 + $0x270] sm:$0xf]
      %v443 = vld [vmem:[%s0 + $0x274] sm:$0xf]
      %v444 = vld [vmem:[%s0 + $0x278] sm:$0xf]
      %v445 = vld [vmem:[%s0 + $0x27c] sm:$0xf]
      %v446 = vld [vmem:[%s0 + $0x280] sm:$0xf]
      %v447 = vld [vmem:[%s0 + $0x284] sm:$0xf]
      %v448 = vld [vmem:[%s0 + $0x288] sm:$0xf]
      %v449 = vld [vmem:[%s0 + $0x28c] sm:$0xf]
      %v450 = vld [vmem:[%s0 + $0x290] sm:$0xf]
      %v451 = vld [vmem:[%s0 + $0x294] sm:$0xf]
      %v452 = vld [vmem:[%s0 + $0x298] sm:$0xf]
      %v453 = vld [vmem:[%s0 + $0x29c] sm:$0xf]
      %v454 = vld [vmem:[%s0 + $0x2a0] sm:$0xf]
      %v455 = vld [vmem:[%s0 + $0x2a4] sm:$0xf]
      %v456 = vld [vmem:[%s0 + $0x2a8] sm:$0xf]
      %v457 = vld [vmem:[%s0 + $0x2ac] sm:$0xf]
      %v458 = vld [vmem:[%s0 + $0x2b0] sm:$0xf]
      %v459 = vld [vmem:[%s0 + $0x2b4] sm:$0xf]
      %v460 = vld [vmem:[%s0 + $0x2b8] sm:$0xf]
      %v461 = vld [vmem:[%s0 + $0x2bc] sm:$0xf]
      %v462 = vld [vmem:[%s0 + $0x2c0] sm:$0xf]
      %v463 = vld [vmem:[%s0 + $0x2c4] sm:$0xf]
      %v464 = vld [vmem:[%s0 + $0x2c8] sm:$0xf]
      %v465 = vld [vmem:[%s0 + $0x2cc] sm:$0xf]
      %v466 = vld [vmem:[%s0 + $0x2d0] sm:$0xf]
      %v467 = vld [vmem:[%s0 + $0x2d4] sm:$0xf]
      %v468 = vld [vmem:[%s0 + $0x2d8] sm:$0xf]
      %v469 = vld [vmem:[%s0 + $0x2dc] sm:$0xf]
      %v470 = vld [vmem:[%s0 + $0x2e0] sm:$0xf]
      %v471 = vld [vmem:[%s0 + $0x2e4] sm:$0xf]
      %v472 = vld [vmem:[%s0 + $0x2e8] sm:$0xf]
      %v473 = vld [vmem:[%s0 + $0x2ec] sm:$0xf]
      %v474 = vld [vmem:[%s0 + $0x2f0] sm:$0xf]
      %v475 = vld [vmem:[%s0 + $0x2f4] sm:$0xf]
      %v476 = vld [vmem:[%s0 + $0x2f8] sm:$0xf]
      %v477 = vld [vmem:[%s0 + $0x2fc] sm:$0xf]
      %v478 = vld [vmem:[%s0 + $0x300] sm:$0xf]
      %v479 = vld [vmem:[%s0 + $0x304] sm:$0xf]
      %v480 = vld [vmem:[%s0 + $0x308] sm:$0xf]
      %v481 = vld [vmem:[%s0 + $0x30c] sm:$0xf]
      %v482 = vld [vmem:[%s0 + $0x310] sm:$0xf]
      %v483 = vld [vmem:[%s0 + $0x314] sm:$0xf]
      %v484 = vld [vmem:[%s0 + $0x318] sm:$0xf]
      %v485 = vld [vmem:[%s0 + $0x31c] sm:$0xf]
      %v486 = vld [vmem:[%s0 + $0x320] sm:$0xf]
      %v487 = vld [vmem:[%s0 + $0x324] sm:$0xf]
      %v488 = vld [vmem:[%s0 + $0x328] sm:$0xf]
      %v489 = vld [vmem:[%s0 + $0x32c] sm:$0xf]
      %v490 = vld [vmem:[%s0 + $0x330] sm:$0xf]
      %v491 = vld [vmem:[%s0 + $0x334] sm:$0xf]
      %v492 = vld [vmem:[%s0 + $0x338] sm:$0xf]
      %v493 = vld [vmem:[%s0 + $0x33c] sm:$0xf]
      %v494 = vld [vmem:[%s0 + $0x340] sm:$0xf]
      %v495 = vld [vmem:[%s0 + $0x344] sm:$0xf]
      %v496 = vld [vmem:[%s0 + $0x348] sm:$0xf]
      %v497 = vld [vmem:[%s0 + $0x34c] sm:$0xf]
      %v498 = vld [vmem:[%s0 + $0x350] sm:$0xf]
      %v499 = vld [vmem:[%s0 + $0x354] sm:$0xf]
      %v500 = vld [vmem:[%s0 + $0x358] sm:$0xf]
      %v501 = vld [vmem:[%s0 + $0x35c] sm:$0xf]
      %v502 = vld [vmem:[%s0 + $0x360] sm:$0xf]
      %v503 = vld [vmem:[%s0 + $0x364] sm:$0xf]
      %v504 = vld [vmem:[%s0 + $0x368] sm:$0xf]
      %v505 = vld [vmem:[%s0 + $0x36c] sm:$0xf]
      %v506 = vld [vmem:[%s0 + $0x370] sm:$0xf]
      %v507 = vld [vmem:[%s0 + $0x374] sm:$0xf]
      %v508 = vld [vmem:[%s0 + $0x378] sm:$0xf]
      %v509 = vld [vmem:[%s0 + $0x37c] sm:$0xf]
      %v510 = vld [vmem:[%s0 + $0x380] sm:$0xf]
      %v511 = vld [vmem:[%s0 + $0x384] sm:$0xf]
      %v512 = vld [vmem:[%s0 + $0x388] sm:$0xf]
      %v513 = vld [vmem:[%s0 + $0x38c] sm:$0xf]
      %v514 = vld [vmem:[%s0 + $0x390] sm:$0xf]
      %v515 = vld [vmem:[%s0 + $0x394] sm:$0xf]
      %v516 = vld [vmem:[%s0 + $0x398] sm:$0xf]
      %v517 = vld [vmem:[%s0 + $0x39c] sm:$0xf]
      %v518 = vld [vmem:[%s0 + $0x3a0] sm:$0xf]
      %v519 = vld [vmem:[%s0 + $0x3a4] sm:$0xf]
      %v520 = vld [vmem:[%s0 + $0x3a8] sm:$0xf]
      %v521 = vld [vmem:[%s0 + $0x3ac] sm:$0xf]
      %v522 = vld [vmem:[%s0 + $0x3b0] sm:$0xf]
      %v523 = vld [vmem:[%s0 + $0x3b4] sm:$0xf]
      %v524 = vld [vmem:[%s0 + $0x3b8] sm:$0xf]
      %v525 = vld [vmem:[%s0 + $0x3bc] sm:$0xf]
      %v526 = vld [vmem:[%s0 + $0x3c0] sm:$0xf]
      %v527 = vld [vmem:[%s0 + $0x3c4] sm:$0xf]
      %v528 = vld [vmem:[%s0 + $0x3c8] sm:$0xf]
      %v529 = vld [vmem:[%s0 + $0x3cc] sm:$0xf]
      %v530 = vld [vmem:[%s0 + $0x3d0] sm:$0xf]
      %v531 = vld [vmem:[%s0 + $0x3d4] sm:$0xf]
      %v532 = vld [vmem:[%s0 + $0x3d8] sm:$0xf]
      %v533 = vld [vmem:[%s0 + $0x3dc] sm:$0xf]
      %v534 = vld [vmem:[%s0 + $0x3e0] sm:$0xf]
      %v535 = vld [vmem:[%s0 + $0x3e4] sm:$0xf]
      %v536 = vld [vmem:[%s0 + $0x3e8] sm:$0xf]
      %v537 = vld [vmem:[%s0 + $0x3ec] sm:$0xf]
      %v538 = vld [vmem:[%s0 + $0x3f0] sm:$0xf]
      %v539 = vld [vmem:[%s0 + $0x3f4] sm:$0xf]
      %v540 = vld [vmem:[%s0 + $0x3f8] sm:$0xf]
      %v541 = vld [vmem:[%s0 + $0x3fc] sm:$0xf]
      %v542 = vld [vmem:[%s0 + $0x400] sm:$0xf]
      %v543 = vld [vmem:[%s0 + $0x404] sm:$0xf]
      %v544 = vld [vmem:[%s0 + $0x408] sm:$0xf]
      %v545 = vld [vmem:[%s0 + $0x40c] sm:$0xf]
      %v546 = vld [vmem:[%s0 + $0x410] sm:$0xf]
      %v547 = vld [vmem:[%s0 + $0x414] sm:$0xf]
      %v548 = vld [vmem:[%s0 + $0x418] sm:$0xf]
      %v549 = vld [vmem:[%s0 + $0x41c] sm:$0xf]
      %v550 = vld [vmem:[%s0 + $0x420] sm:$0xf]
      %v551 = vld [vmem:[%s0 + $0x424] sm:$0xf]
      %v552 = vld [vmem:[%s0 + $0x428] sm:$0xf]
      %v553 = vld [vmem:[%s0 + $0x42c] sm:$0xf]
      %v554 = vld [vmem:[%s0 + $0x430] sm:$0xf]
      %v555 = vld [vmem:[%s0 + $0x434] sm:$0xf]
      %v556 = vld [vmem:[%s0 + $0x438] sm:$0xf]
      %v557 = vld [vmem:[%s0 + $0x43c] sm:$0xf]
      %v558 = vld [vmem:[%s0 + $0x440] sm:$0xf]
      %v559 = vld [vmem:[%s0 + $0x444] sm:$0xf]
      %v560 = vld [vmem:[%s0 + $0x448] sm:$0xf]
      %v561 = vld [vmem:[%s0 + $0x44c] sm:$0xf]
      %v562 = vld [vmem:[%s0 + $0x450] sm:$0xf]
      %v563 = vld [vmem:[%s0 + $0x454] sm:$0xf]
      %v564 = vld [vmem:[%s0 + $0x458] sm:$0xf]
      %v565 = vld [vmem:[%s0 + $0x45c] sm:$0xf]
      %v566 = vld [vmem:[%s0 + $0x460] sm:$0xf]
      %v567 = vld [vmem:[%s0 + $0x464] sm:$0xf]
      %v568 = vld [vmem:[%s0 + $0x468] sm:$0xf]
      %v569 = vld [vmem:[%s0 + $0x46c] sm:$0xf]
      %v570 = vld [vmem:[%s0 + $0x470] sm:$0xf]
      %v571 = vld [vmem:[%s0 + $0x474] sm:$0xf]
      %v572 = vld [vmem:[%s0 + $0x478] sm:$0xf]
      %v573 = vld [vmem:[%s0 + $0x47c] sm:$0xf]
      %v574 = vld [vmem:[%s0 + $0x480] sm:$0xf]
      %v575 = vld [vmem:[%s0 + $0x484] sm:$0xf]
      %v576 = vld [vmem:[%s0 + $0x488] sm:$0xf]
      %v577 = vld [vmem:[%s0 + $0x48c] sm:$0xf]
      %v578 = vld [vmem:[%s0 + $0x490] sm:$0xf]
      %v579 = vld [vmem:[%s0 + $0x494] sm:$0xf]
      %v580 = vld [vmem:[%s0 + $0x498] sm:$0xf]
      %v581 = vld [vmem:[%s0 + $0x49c] sm:$0xf]
      %v582 = vld [vmem:[%s0 + $0x4a0] sm:$0xf]
      %v583 = vld [vmem:[%s0 + $0x4a4] sm:$0xf]
      %v584 = vld [vmem:[%s0 + $0x4a8] sm:$0xf]
      %v585 = vld [vmem:[%s0 + $0x4ac] sm:$0xf]
      %v586 = vld [vmem:[%s0 + $0x4b0] sm:$0xf]
      %v587 = vld [vmem:[%s0 + $0x4b4] sm:$0xf]
      %v588 = vld [vmem:[%s0 + $0x4b8] sm:$0xf]
      %v589 = vld [vmem:[%s0 + $0x4bc] sm:$0xf]
      %v590 = vld [vmem:[%s0 + $0x4c0] sm:$0xf]
      %v591 = vld [vmem:[%s0 + $0x4c4] sm:$0xf]
      %v592 = vld [vmem:[%s0 + $0x4c8] sm:$0xf]
      %v593 = vld [vmem:[%s0 + $0x4cc] sm:$0xf]
      %v594 = vld [vmem:[%s0 + $0x4d0] sm:$0xf]
      %v595 = vld [vmem:[%s0 + $0x4d4] sm:$0xf]
      %v596 = vld [vmem:[%s0 + $0x4d8] sm:$0xf]
      %v597 = vld [vmem:[%s0 + $0x4dc] sm:$0xf]
      %v598 = vld [vmem:[%s0 + $0x4e0] sm:$0xf]
      %v599 = vld [vmem:[%s0 + $0x4e4] sm:$0xf]
      %v600 = vld [vmem:[%s0 + $0x4e8] sm:$0xf]
      %v601 = vld [vmem:[%s0 + $0x4ec] sm:$0xf]
      %v602 = vld [vmem:[%s0 + $0x4f0] sm:$0xf]
      %v603 = vld [vmem:[%s0 + $0x4f4] sm:$0xf]
      %v604 = vld [vmem:[%s0 + $0x4f8] sm:$0xf]
      %v605 = vld [vmem:[%s0 + $0x4fc] sm:$0xf]
      %v606 = vld [vmem:[%s0 + $0x500] sm:$0xf]
      %v607 = vld [vmem:[%s0 + $0x504] sm:$0xf]
      %v608 = vld [vmem:[%s0 + $0x508] sm:$0xf]
      %v609 = vld [vmem:[%s0 + $0x50c] sm:$0xf]
      %v610 = vld [vmem:[%s0 + $0x510] sm:$0xf]
      %v611 = vld [vmem:[%s0 + $0x514] sm:$0xf]
      %v612 = vld [vmem:[%s0 + $0x518] sm:$0xf]
      %v613 = vld [vmem:[%s0 + $0x51c] sm:$0xf]
      %v614 = vld [vmem:[%s0 + $0x520] sm:$0xf]
      %v615 = vld [vmem:[%s0 + $0x524] sm:$0xf]
      %v616 = vld [vmem:[%s0 + $0x528] sm:$0xf]
      %v617 = vld [vmem:[%s0 + $0x52c] sm:$0xf]
      %v618 = vld [vmem:[%s0 + $0x530] sm:$0xf]
      %v619 = vld [vmem:[%s0 + $0x534] sm:$0xf]
      %v620 = vld [vmem:[%s0 + $0x538] sm:$0xf]
      %v621 = vld [vmem:[%s0 + $0x53c] sm:$0xf]
      %v622 = vld [vmem:[%s0 + $0x540] sm:$0xf]
      %v623 = vld [vmem:[%s0 + $0x544] sm:$0xf]
      %v624 = vld [vmem:[%s0 + $0x548] sm:$0xf]
      %v625 = vld [vmem:[%s0 + $0x54c] sm:$0xf]
      %v626 = vld [vmem:[%s0 + $0x550] sm:$0xf]
      %v627 = vld [vmem:[%s0 + $0x554] sm:$0xf]
      %v628 = vld [vmem:[%s0 + $0x558] sm:$0xf]
      %v629 = vld [vmem:[%s0 + $0x55c] sm:$0xf]
      %v630 = vld [vmem:[%s0 + $0x560] sm:$0xf]
      %v631 = vld [vmem:[%s0 + $0x564] sm:$0xf]
      %v632 = vld [vmem:[%s0 + $0x568] sm:$0xf]
      %v633 = vld [vmem:[%s0 + $0x56c] sm:$0xf]
      %v634 = vld [vmem:[%s0 + $0x570] sm:$0xf]
      %v635 = vld [vmem:[%s0 + $0x574] sm:$0xf]
      %v636 = vld [vmem:[%s0 + $0x578] sm:$0xf]
      %v637 = vld [vmem:[%s0 + $0x57c] sm:$0xf]
      %v638 = vld [vmem:[%s0 + $0x580] sm:$0xf]
      %v639 = vld [vmem:[%s0 + $0x584] sm:$0xf]
      %v640 = vld [vmem:[%s0 + $0x588] sm:$0xf]
      %v641 = vld [vmem:[%s0 + $0x58c] sm:$0xf]
      %v642 = vld [vmem:[%s0 + $0x590] sm:$0xf]
      %v643 = vld [vmem:[%s0 + $0x594] sm:$0xf]
      %v644 = vld [vmem:[%s0 + $0x598] sm:$0xf]
      %v645 = vld [vmem:[%s0 + $0x59c] sm:$0xf]
      %v646 = vld [vmem:[%s0 + $0x5a0] sm:$0xf]
      %v647 = vld [vmem:[%s0 + $0x5a4] sm:$0xf]
      %v648 = vld [vmem:[%s0 + $0x5a8] sm:$0xf]
      %v649 = vld [vmem:[%s0 + $0x5ac] sm:$0xf]
      %v650 = vld [vmem:[%s0 + $0x5b0] sm:$0xf]
      %v651 = vld [vmem:[%s0 + $0x5b4] sm:$0xf]
      %v652 = vld [vmem:[%s0 + $0x5b8] sm:$0xf]
      %v653 = vld [vmem:[%s0 + $0x5bc] sm:$0xf]
      %v654 = vld [vmem:[%s0 + $0x5c0] sm:$0xf]
      %v655 = vld [vmem:[%s0 + $0x5c4] sm:$0xf]
      %v656 = vld [vmem:[%s0 + $0x5c8] sm:$0xf]
      %v657 = vld [vmem:[%s0 + $0x5cc] sm:$0xf]
      %v658 = vld [vmem:[%s0 + $0x5d0] sm:$0xf]
      %v659 = vld [vmem:[%s0 + $0x5d4] sm:$0xf]
      %v660 = vld [vmem:[%s0 + $0x5d8] sm:$0xf]
      %v661 = vld [vmem:[%s0 + $0x5dc] sm:$0xf]
      %v662 = vld [vmem:[%s0 + $0x5e0] sm:$0xf]
      %v663 = vld [vmem:[%s0 + $0x5e4] sm:$0xf]
      %v664 = vld [vmem:[%s0 + $0x5e8] sm:$0xf]
      %v665 = vld [vmem:[%s0 + $0x5ec] sm:$0xf]
      %v666 = vld [vmem:[%s0 + $0x5f0] sm:$0xf]
      %v667 = vld [vmem:[%s0 + $0x5f4] sm:$0xf]
      %v668 = vld [vmem:[%s0 + $0x5f8] sm:$0xf]
      %v669 = vld [vmem:[%s0 + $0x5fc] sm:$0xf]
      %v670 = vld [vmem:[%s0 + $0x600] sm:$0xf]
      %v671 = vld [vmem:[%s0 + $0x604] sm:$0xf]
      %v672 = vld [vmem:[%s0 + $0x608] sm:$0xf]
      %v673 = vld [vmem:[%s0 + $0x60c] sm:$0xf]
      %v674 = vld [vmem:[%s0 + $0x610] sm:$0xf]
      %v675 = vld [vmem:[%s0 + $0x614] sm:$0xf]
      %v676 = vld [vmem:[%s0 + $0x618] sm:$0xf]
      %v677 = vld [vmem:[%s0 + $0x61c] sm:$0xf]
      %v678 = vld [vmem:[%s264] sm:$0xff]
      %v679 = vld [vmem:[%s264 + $0x8] sm:$0xff]
      %v680 = vld [vmem:[%s264 + $0x10] sm:$0xff]
      %v681 = vld [vmem:[%s264 + $0x18] sm:$0xff]
      %v682 = vld [vmem:[%s264 + $0x20] sm:$0xff]
      %v683 = vld [vmem:[%s264 + $0x28] sm:$0xff]
      %v684 = vld [vmem:[%s264 + $0x30] sm:$0xff]
      %v685 = vld [vmem:[%s264 + $0x38] sm:$0xff]
      %v686 = vld [vmem:[%s264 + $0x40] sm:$0xff]
      %v687 = vld [vmem:[%s264 + $0x48] sm:$0xff]
      %v688 = vld [vmem:[%s264 + $0x50] sm:$0xff]
      %v689 = vld [vmem:[%s264 + $0x58] sm:$0xff]
      %v690 = vld [vmem:[%s264 + $0x60] sm:$0xf]
      %v691 = vld [vmem:[%s264 + $0x64] sm:$0xff]
      %v692 = vld [vmem:[%s264 + $0x6c] sm:$0xff]
      %v693 = vld [vmem:[%s264 + $0x74] sm:$0xff]
      %v694 = vld [vmem:[%s264 + $0x7c] sm:$0xff]
      %v695 = vld [vmem:[%s264 + $0x84] sm:$0xff]
      %v696 = vld [vmem:[%s264 + $0x8c] sm:$0xff]
      %v697 = vld [vmem:[%s264 + $0x94] sm:$0xff]
      %v698 = vld [vmem:[%s264 + $0x9c] sm:$0xff]
      %v699 = vld [vmem:[%s264 + $0xa4] sm:$0xff]
      %v700 = vld [vmem:[%s264 + $0xac] sm:$0xff]
      %v701 = vld [vmem:[%s264 + $0xb4] sm:$0xff]
      %v702 = vld [vmem:[%s264 + $0xbc] sm:$0xff]
      %v703 = vld [vmem:[%s264 + $0xc4] sm:$0xf]
      %v704 = vld [vmem:[%s264 + $0xc8] sm:$0xff]
      %v705 = vld [vmem:[%s264 + $0xd0] sm:$0xff]
      %v706 = vld [vmem:[%s264 + $0xd8] sm:$0xff]
      %v707 = vld [vmem:[%s264 + $0xe0] sm:$0xff]
      %v708 = vld [vmem:[%s264 + $0xe8] sm:$0xff]
      %v709 = vld [vmem:[%s264 + $0xf0] sm:$0xff]
      %v710 = vld [vmem:[%s264 + $0xf8] sm:$0xff]
      %v711 = vld [vmem:[%s264 + $0x100] sm:$0xff]
      %v712 = vld [vmem:[%s264 + $0x108] sm:$0xff]
      %v713 = vld [vmem:[%s264 + $0x110] sm:$0xff]
      %v714 = vld [vmem:[%s264 + $0x118] sm:$0xff]
      %v715 = vld [vmem:[%s264 + $0x120] sm:$0xff]
      %v716 = vld [vmem:[%s264 + $0x128] sm:$0xf]
      %v717 = vld [vmem:[%s264 + $0x12c] sm:$0xff]
      %v718 = vld [vmem:[%s264 + $0x134] sm:$0xff]
      %v719 = vld [vmem:[%s264 + $0x13c] sm:$0xff]
      %v720 = vld [vmem:[%s264 + $0x144] sm:$0xff]
      %v721 = vld [vmem:[%s264 + $0x14c] sm:$0xff]
      %v722 = vld [vmem:[%s264 + $0x154] sm:$0xff]
      %v723 = vld [vmem:[%s264 + $0x15c] sm:$0xff]
      %v724 = vld [vmem:[%s264 + $0x164] sm:$0xff]
      %v725 = vld [vmem:[%s264 + $0x16c] sm:$0xff]
      %v726 = vld [vmem:[%s264 + $0x174] sm:$0xff]
      %v727 = vld [vmem:[%s264 + $0x17c] sm:$0xff]
      %v728 = vld [vmem:[%s264 + $0x184] sm:$0xff]
      %v729 = vld [vmem:[%s264 + $0x18c] sm:$0xf]
      %v730 = vld [vmem:[%s264 + $0x190] sm:$0xff]
      %v731 = vld [vmem:[%s264 + $0x198] sm:$0xff]
      %v732 = vld [vmem:[%s264 + $0x1a0] sm:$0xff]
      %v733 = vld [vmem:[%s264 + $0x1a8] sm:$0xff]
      %v734 = vld [vmem:[%s264 + $0x1b0] sm:$0xff]
      %v735 = vld [vmem:[%s264 + $0x1b8] sm:$0xff]
      %v736 = vld [vmem:[%s264 + $0x1c0] sm:$0xff]
      %v737 = vld [vmem:[%s264 + $0x1c8] sm:$0xff]
      %v738 = vld [vmem:[%s264 + $0x1d0] sm:$0xff]
      %v739 = vld [vmem:[%s264 + $0x1d8] sm:$0xff]
      %v740 = vld [vmem:[%s264 + $0x1e0] sm:$0xff]
      %v741 = vld [vmem:[%s264 + $0x1e8] sm:$0xff]
      %v742 = vld [vmem:[%s264 + $0x1f0] sm:$0xf]
      %v743 = vld [vmem:[%s264 + $0x1f4] sm:$0xff]
      %v744 = vld [vmem:[%s264 + $0x1fc] sm:$0xff]
      %v745 = vld [vmem:[%s264 + $0x204] sm:$0xff]
      %v746 = vld [vmem:[%s264 + $0x20c] sm:$0xff]
      %v747 = vld [vmem:[%s264 + $0x214] sm:$0xff]
      %v748 = vld [vmem:[%s264 + $0x21c] sm:$0xff]
      %v749 = vld [vmem:[%s264 + $0x224] sm:$0xff]
      %v750 = vld [vmem:[%s264 + $0x22c] sm:$0xff]
      %v751 = vld [vmem:[%s264 + $0x234] sm:$0xff]
      %v752 = vld [vmem:[%s264 + $0x23c] sm:$0xff]
      %v753 = vld [vmem:[%s264 + $0x244] sm:$0xff]
      %v754 = vld [vmem:[%s264 + $0x24c] sm:$0xff]
      %v755 = vld [vmem:[%s264 + $0x254] sm:$0xf]
      %v756 = vld [vmem:[%s264 + $0x258] sm:$0xff]
      %v757 = vld [vmem:[%s264 + $0x260] sm:$0xff]
      %v758 = vld [vmem:[%s264 + $0x268] sm:$0xff]
      %v759 = vld [vmem:[%s264 + $0x270] sm:$0xff]
      %v760 = vld [vmem:[%s264 + $0x278] sm:$0xff]
      %v761 = vld [vmem:[%s264 + $0x280] sm:$0xff]
      %v762 = vld [vmem:[%s264 + $0x288] sm:$0xff]
      %v763 = vld [vmem:[%s264 + $0x290] sm:$0xff]
      %v764 = vld [vmem:[%s264 + $0x298] sm:$0xff]
      %v765 = vld [vmem:[%s264 + $0x2a0] sm:$0xff]
      %v766 = vld [vmem:[%s264 + $0x2a8] sm:$0xff]
      %v767 = vld [vmem:[%s264 + $0x2b0] sm:$0xff]
      %v768 = vld [vmem:[%s264 + $0x2b8] sm:$0xf]
      %v769 = vld [vmem:[%s264 + $0x2bc] sm:$0xff]
      %v770 = vld [vmem:[%s264 + $0x2c4] sm:$0xff]
      %v771 = vld [vmem:[%s264 + $0x2cc] sm:$0xff]
      %v772 = vld [vmem:[%s264 + $0x2d4] sm:$0xff]
      %v773 = vld [vmem:[%s264 + $0x2dc] sm:$0xff]
      %v774 = vld [vmem:[%s264 + $0x2e4] sm:$0xff]
      %v775 = vld [vmem:[%s264 + $0x2ec] sm:$0xff]
      %v776 = vld [vmem:[%s264 + $0x2f4] sm:$0xff]
      %v777 = vld [vmem:[%s264 + $0x2fc] sm:$0xff]
      %v778 = vld [vmem:[%s264 + $0x304] sm:$0xff]
      %v779 = vld [vmem:[%s264 + $0x30c] sm:$0xff]
      %v780 = vld [vmem:[%s264 + $0x314] sm:$0xff]
      %v781 = vld [vmem:[%s264 + $0x31c] sm:$0xf]
      %v782 = vld [vmem:[%s264 + $0x320] sm:$0xff]
      %v783 = vld [vmem:[%s264 + $0x328] sm:$0xff]
      %v784 = vld [vmem:[%s264 + $0x330] sm:$0xff]
      %v785 = vld [vmem:[%s264 + $0x338] sm:$0xff]
      %v786 = vld [vmem:[%s264 + $0x340] sm:$0xff]
      %v787 = vld [vmem:[%s264 + $0x348] sm:$0xff]
      %v788 = vld [vmem:[%s264 + $0x350] sm:$0xff]
      %v789 = vld [vmem:[%s264 + $0x358] sm:$0xff]
      %v790 = vld [vmem:[%s264 + $0x360] sm:$0xff]
      %v791 = vld [vmem:[%s264 + $0x368] sm:$0xff]
      %v792 = vld [vmem:[%s264 + $0x370] sm:$0xff]
      %v793 = vld [vmem:[%s264 + $0x378] sm:$0xff]
      %v794 = vld [vmem:[%s264 + $0x380] sm:$0xf]
      %v795 = vld [vmem:[%s264 + $0x384] sm:$0xff]
      %v796 = vld [vmem:[%s264 + $0x38c] sm:$0xff]
      %v797 = vld [vmem:[%s264 + $0x394] sm:$0xff]
      %v798 = vld [vmem:[%s264 + $0x39c] sm:$0xff]
      %v799 = vld [vmem:[%s264 + $0x3a4] sm:$0xff]
      %v800 = vld [vmem:[%s264 + $0x3ac] sm:$0xff]
      %v801 = vld [vmem:[%s264 + $0x3b4] sm:$0xff]
      %v802 = vld [vmem:[%s264 + $0x3bc] sm:$0xff]
      %v803 = vld [vmem:[%s264 + $0x3c4] sm:$0xff]
      %v804 = vld [vmem:[%s264 + $0x3cc] sm:$0xff]
      %v805 = vld [vmem:[%s264 + $0x3d4] sm:$0xff]
      %v806 = vld [vmem:[%s264 + $0x3dc] sm:$0xff]
      %v807 = vld [vmem:[%s264 + $0x3e4] sm:$0xf]
      %v808 = vld [vmem:[%s264 + $0x3e8] sm:$0xff]
      %v809 = vld [vmem:[%s264 + $0x3f0] sm:$0xff]
      %v810 = vld [vmem:[%s264 + $0x3f8] sm:$0xff]
      %v811 = vld [vmem:[%s264 + $0x400] sm:$0xff]
      %v812 = vld [vmem:[%s264 + $0x408] sm:$0xff]
      %v813 = vld [vmem:[%s264 + $0x410] sm:$0xff]
      %v814 = vld [vmem:[%s264 + $0x418] sm:$0xff]
      %v815 = vld [vmem:[%s264 + $0x420] sm:$0xff]
      %v816 = vld [vmem:[%s264 + $0x428] sm:$0xff]
      %v817 = vld [vmem:[%s264 + $0x430] sm:$0xff]
      %v818 = vld [vmem:[%s264 + $0x438] sm:$0xff]
      %v819 = vld [vmem:[%s264 + $0x440] sm:$0xff]
      %v820 = vld [vmem:[%s264 + $0x448] sm:$0xf]
      %v821 = vld [vmem:[%s264 + $0x44c] sm:$0xff]
      %v822 = vld [vmem:[%s264 + $0x454] sm:$0xff]
      %v823 = vld [vmem:[%s264 + $0x45c] sm:$0xff]
      %v824 = vld [vmem:[%s264 + $0x464] sm:$0xff]
      %v825 = vld [vmem:[%s264 + $0x46c] sm:$0xff]
      %v826 = vld [vmem:[%s264 + $0x474] sm:$0xff]
      %v827 = vld [vmem:[%s264 + $0x47c] sm:$0xff]
      %v828 = vld [vmem:[%s264 + $0x484] sm:$0xff]
      %v829 = vld [vmem:[%s264 + $0x48c] sm:$0xff]
      %v830 = vld [vmem:[%s264 + $0x494] sm:$0xff]
      %v831 = vld [vmem:[%s264 + $0x49c] sm:$0xff]
      %v832 = vld [vmem:[%s264 + $0x4a4] sm:$0xff]
      %v833 = vld [vmem:[%s264 + $0x4ac] sm:$0xf]
      %v834 = vld [vmem:[%s264 + $0x4b0] sm:$0xff]
      %v835 = vld [vmem:[%s264 + $0x4b8] sm:$0xff]
      %v836 = vld [vmem:[%s264 + $0x4c0] sm:$0xff]
      %v837 = vld [vmem:[%s264 + $0x4c8] sm:$0xff]
      %v838 = vld [vmem:[%s264 + $0x4d0] sm:$0xff]
      %v839 = vld [vmem:[%s264 + $0x4d8] sm:$0xff]
      %v840 = vld [vmem:[%s264 + $0x4e0] sm:$0xff]
      %v841 = vld [vmem:[%s264 + $0x4e8] sm:$0xff]
      %v842 = vld [vmem:[%s264 + $0x4f0] sm:$0xff]
      %v843 = vld [vmem:[%s264 + $0x4f8] sm:$0xff]
      %v844 = vld [vmem:[%s264 + $0x500] sm:$0xff]
      %v845 = vld [vmem:[%s264 + $0x508] sm:$0xff]
      %v846 = vld [vmem:[%s264 + $0x510] sm:$0xf]
      %v847 = vld [vmem:[%s264 + $0x514] sm:$0xff]
      %v848 = vld [vmem:[%s264 + $0x51c] sm:$0xff]
      %v849 = vld [vmem:[%s264 + $0x524] sm:$0xff]
      %v850 = vld [vmem:[%s264 + $0x52c] sm:$0xff]
      %v851 = vld [vmem:[%s264 + $0x534] sm:$0xff]
      %v852 = vld [vmem:[%s264 + $0x53c] sm:$0xff]
      %v853 = vld [vmem:[%s264 + $0x544] sm:$0xff]
      %v854 = vld [vmem:[%s264 + $0x54c] sm:$0xff]
      %v855 = vld [vmem:[%s264 + $0x554] sm:$0xff]
      %v856 = vld [vmem:[%s264 + $0x55c] sm:$0xff]
      %v857 = vld [vmem:[%s264 + $0x564] sm:$0xff]
      %v858 = vld [vmem:[%s264 + $0x56c] sm:$0xff]
      %v859 = vld [vmem:[%s264 + $0x574] sm:$0xf]
      %v860 = vld [vmem:[%s264 + $0x578] sm:$0xff]
      %v861 = vld [vmem:[%s264 + $0x580] sm:$0xff]
      %v862 = vld [vmem:[%s264 + $0x588] sm:$0xff]
      %v863 = vld [vmem:[%s264 + $0x590] sm:$0xff]
      %v864 = vld [vmem:[%s264 + $0x598] sm:$0xff]
      %v865 = vld [vmem:[%s264 + $0x5a0] sm:$0xff]
      %v866 = vld [vmem:[%s264 + $0x5a8] sm:$0xff]
      %v867 = vld [vmem:[%s264 + $0x5b0] sm:$0xff]
      %v868 = vld [vmem:[%s264 + $0x5b8] sm:$0xff]
      %v869 = vld [vmem:[%s264 + $0x5c0] sm:$0xff]
      %v870 = vld [vmem:[%s264 + $0x5c8] sm:$0xff]
      %v871 = vld [vmem:[%s264 + $0x5d0] sm:$0xff]
      %v872 = vld [vmem:[%s264 + $0x5d8] sm:$0xf]
      %v873 = vld [vmem:[%s264 + $0x5dc] sm:$0xff]
      %v874 = vld [vmem:[%s264 + $0x5e4] sm:$0xff]
      %v875 = vld [vmem:[%s264 + $0x5ec] sm:$0xff]
      %v876 = vld [vmem:[%s264 + $0x5f4] sm:$0xff]
      %v877 = vld [vmem:[%s264 + $0x5fc] sm:$0xff]
      %v878 = vld [vmem:[%s264 + $0x604] sm:$0xff]
      %v879 = vld [vmem:[%s264 + $0x60c] sm:$0xff]
      %v880 = vld [vmem:[%s264 + $0x614] sm:$0xff]
      %v881 = vld [vmem:[%s264 + $0x61c] sm:$0xff]
      %v882 = vld [vmem:[%s264 + $0x624] sm:$0xff]
      %v883 = vld [vmem:[%s264 + $0x62c] sm:$0xff]
      %v884 = vld [vmem:[%s264 + $0x634] sm:$0xff]
      %v885 = vld [vmem:[%s264 + $0x63c] sm:$0xf]
      %v886 = vld [vmem:[%s264 + $0x640] sm:$0xff]
      %v887 = vld [vmem:[%s264 + $0x648] sm:$0xff]
      %v888 = vld [vmem:[%s264 + $0x650] sm:$0xff]
      %v889 = vld [vmem:[%s264 + $0x658] sm:$0xff]
      %v890 = vld [vmem:[%s264 + $0x660] sm:$0xff]
      %v891 = vld [vmem:[%s264 + $0x668] sm:$0xff]
      %v892 = vld [vmem:[%s264 + $0x670] sm:$0xff]
      %v893 = vld [vmem:[%s264 + $0x678] sm:$0xff]
      %v894 = vld [vmem:[%s264 + $0x680] sm:$0xff]
      %v895 = vld [vmem:[%s264 + $0x688] sm:$0xff]
      %v896 = vld [vmem:[%s264 + $0x690] sm:$0xff]
      %v897 = vld [vmem:[%s264 + $0x698] sm:$0xff]
      %v898 = vld [vmem:[%s264 + $0x6a0] sm:$0xf]
      %v899 = vld [vmem:[%s264 + $0x6a4] sm:$0xff]
      %v900 = vld [vmem:[%s264 + $0x6ac] sm:$0xff]
      %v901 = vld [vmem:[%s264 + $0x6b4] sm:$0xff]
      %v902 = vld [vmem:[%s264 + $0x6bc] sm:$0xff]
      %v903 = vld [vmem:[%s264 + $0x6c4] sm:$0xff]
      %v904 = vld [vmem:[%s264 + $0x6cc] sm:$0xff]
      %v905 = vld [vmem:[%s264 + $0x6d4] sm:$0xff]
      %v906 = vld [vmem:[%s264 + $0x6dc] sm:$0xff]
      %v907 = vld [vmem:[%s264 + $0x6e4] sm:$0xff]
      %v908 = vld [vmem:[%s264 + $0x6ec] sm:$0xff]
      %v909 = vld [vmem:[%s264 + $0x6f4] sm:$0xff]
      %v910 = vld [vmem:[%s264 + $0x6fc] sm:$0xff]
      %v911 = vld [vmem:[%s264 + $0x704] sm:$0xf]
      %v912 = vld [vmem:[%s264 + $0x708] sm:$0xff]
      %v913 = vld [vmem:[%s264 + $0x710] sm:$0xff]
      %v914 = vld [vmem:[%s264 + $0x718] sm:$0xff]
      %v915 = vld [vmem:[%s264 + $0x720] sm:$0xff]
      %v916 = vld [vmem:[%s264 + $0x728] sm:$0xff]
      %v917 = vld [vmem:[%s264 + $0x730] sm:$0xff]
      %v918 = vld [vmem:[%s264 + $0x738] sm:$0xff]
      %v919 = vld [vmem:[%s264 + $0x740] sm:$0xff]
      %v920 = vld [vmem:[%s264 + $0x748] sm:$0xff]
      %v921 = vld [vmem:[%s264 + $0x750] sm:$0xff]
      %v922 = vld [vmem:[%s264 + $0x758] sm:$0xff]
      %v923 = vld [vmem:[%s264 + $0x760] sm:$0xff]
      %v924 = vld [vmem:[%s264 + $0x768] sm:$0xf]
      %v925 = vld [vmem:[%s264 + $0x76c] sm:$0xff]
      %v926 = vld [vmem:[%s264 + $0x774] sm:$0xff]
      %v927 = vld [vmem:[%s264 + $0x77c] sm:$0xff]
      %v928 = vld [vmem:[%s264 + $0x784] sm:$0xff]
      %v929 = vld [vmem:[%s264 + $0x78c] sm:$0xff]
      %v930 = vld [vmem:[%s264 + $0x794] sm:$0xff]
      %v931 = vld [vmem:[%s264 + $0x79c] sm:$0xff]
      %v932 = vld [vmem:[%s264 + $0x7a4] sm:$0xff]
      %v933 = vld [vmem:[%s264 + $0x7ac] sm:$0xff]
      %v934 = vld [vmem:[%s264 + $0x7b4] sm:$0xff]
      %v935 = vld [vmem:[%s264 + $0x7bc] sm:$0xff]
      %v936 = vld [vmem:[%s264 + $0x7c4] sm:$0xff]
      %v937 = vld [vmem:[%s264 + $0x7cc] sm:$0xf]
      %v938 = vld [vmem:[%s264 + $0x7d0] sm:$0xff]
      %v939 = vld [vmem:[%s264 + $0x7d8] sm:$0xff]
      %v940 = vld [vmem:[%s264 + $0x7e0] sm:$0xff]
      %v941 = vld [vmem:[%s264 + $0x7e8] sm:$0xff]
      %v942 = vld [vmem:[%s264 + $0x7f0] sm:$0xff]
      %v943 = vld [vmem:[%s264 + $0x7f8] sm:$0xff]
      %v944 = vld [vmem:[%s264 + $0x800] sm:$0xff]
      %v945 = vld [vmem:[%s264 + $0x808] sm:$0xff]
      %v946 = vld [vmem:[%s264 + $0x810] sm:$0xff]
      %v947 = vld [vmem:[%s264 + $0x818] sm:$0xff]
      %v948 = vld [vmem:[%s264 + $0x820] sm:$0xff]
      %v949 = vld [vmem:[%s264 + $0x828] sm:$0xff]
      %v950 = vld [vmem:[%s264 + $0x830] sm:$0xf]
      %v951 = vld [vmem:[%s264 + $0x834] sm:$0xff]
      %v952 = vld [vmem:[%s264 + $0x83c] sm:$0xff]
      %v953 = vld [vmem:[%s264 + $0x844] sm:$0xff]
      %v954 = vld [vmem:[%s264 + $0x84c] sm:$0xff]
      %v955 = vld [vmem:[%s264 + $0x854] sm:$0xff]
      %v956 = vld [vmem:[%s264 + $0x85c] sm:$0xff]
      %v957 = vld [vmem:[%s264 + $0x864] sm:$0xff]
      %v958 = vld [vmem:[%s264 + $0x86c] sm:$0xff]
      %v959 = vld [vmem:[%s264 + $0x874] sm:$0xff]
      %v960 = vld [vmem:[%s264 + $0x87c] sm:$0xff]
      %v961 = vld [vmem:[%s264 + $0x884] sm:$0xff]
      %v962 = vld [vmem:[%s264 + $0x88c] sm:$0xff]
      %v963 = vld [vmem:[%s264 + $0x894] sm:$0xf]
      %v964 = vld [vmem:[%s264 + $0x898] sm:$0xff]
      %v965 = vld [vmem:[%s264 + $0x8a0] sm:$0xff]
      %v966 = vld [vmem:[%s264 + $0x8a8] sm:$0xff]
      %v967 = vld [vmem:[%s264 + $0x8b0] sm:$0xff]
      %v968 = vld [vmem:[%s264 + $0x8b8] sm:$0xff]
      %v969 = vld [vmem:[%s264 + $0x8c0] sm:$0xff]
      %v970 = vld [vmem:[%s264 + $0x8c8] sm:$0xff]
      %v971 = vld [vmem:[%s264 + $0x8d0] sm:$0xff]
      %v972 = vld [vmem:[%s264 + $0x8d8] sm:$0xff]
      %v973 = vld [vmem:[%s264 + $0x8e0] sm:$0xff]
      %v974 = vld [vmem:[%s264 + $0x8e8] sm:$0xff]
      %v975 = vld [vmem:[%s264 + $0x8f0] sm:$0xff]
      %v976 = vld [vmem:[%s264 + $0x8f8] sm:$0xf]
      %v977 = vld [vmem:[%s264 + $0x8fc] sm:$0xff]
      %v978 = vld [vmem:[%s264 + $0x904] sm:$0xff]
      %v979 = vld [vmem:[%s264 + $0x90c] sm:$0xff]
      %v980 = vld [vmem:[%s264 + $0x914] sm:$0xff]
      %v981 = vld [vmem:[%s264 + $0x91c] sm:$0xff]
      %v982 = vld [vmem:[%s264 + $0x924] sm:$0xff]
      %v983 = vld [vmem:[%s264 + $0x92c] sm:$0xff]
      %v984 = vld [vmem:[%s264 + $0x934] sm:$0xff]
      %v985 = vld [vmem:[%s264 + $0x93c] sm:$0xff]
      %v986 = vld [vmem:[%s264 + $0x944] sm:$0xff]
      %v987 = vld [vmem:[%s264 + $0x94c] sm:$0xff]
      %v988 = vld [vmem:[%s264 + $0x954] sm:$0xff]
      %v989 = vld [vmem:[%s264 + $0x95c] sm:$0xf]
      %v990 = vld [vmem:[%s264 + $0x960] sm:$0xff]
      %v991 = vld [vmem:[%s264 + $0x968] sm:$0xff]
      %v992 = vld [vmem:[%s264 + $0x970] sm:$0xff]
      %v993 = vld [vmem:[%s264 + $0x978] sm:$0xff]
      %v994 = vld [vmem:[%s264 + $0x980] sm:$0xff]
      %v995 = vld [vmem:[%s264 + $0x988] sm:$0xff]
      %v996 = vld [vmem:[%s264 + $0x990] sm:$0xff]
      %v997 = vld [vmem:[%s264 + $0x998] sm:$0xff]
      %v998 = vld [vmem:[%s264 + $0x9a0] sm:$0xff]
      %v999 = vld [vmem:[%s264 + $0x9a8] sm:$0xff]
      %v1000 = vld [vmem:[%s264 + $0x9b0] sm:$0xff]
      %v1001 = vld [vmem:[%s264 + $0x9b8] sm:$0xff]
      %v1002 = vld [vmem:[%s264 + $0x9c0] sm:$0xf]
      %v1003 = vld [vmem:[%s264 + $0x9c4] sm:$0xff]
      %v1004 = vld [vmem:[%s264 + $0x9cc] sm:$0xff]
      %v1005 = vld [vmem:[%s264 + $0x9d4] sm:$0xff]
      %v1006 = vld [vmem:[%s264 + $0x9dc] sm:$0xff]
      %v1007 = vld [vmem:[%s264 + $0x9e4] sm:$0xff]
      %v1008 = vld [vmem:[%s264 + $0x9ec] sm:$0xff]
      %v1009 = vld [vmem:[%s264 + $0x9f4] sm:$0xff]
      %v1010 = vld [vmem:[%s264 + $0x9fc] sm:$0xff]
      %v1011 = vld [vmem:[%s264 + $0xa04] sm:$0xff]
      %v1012 = vld [vmem:[%s264 + $0xa0c] sm:$0xff]
      %v1013 = vld [vmem:[%s264 + $0xa14] sm:$0xff]
      %v1014 = vld [vmem:[%s264 + $0xa1c] sm:$0xff]
      %v1015 = vld [vmem:[%s264 + $0xa24] sm:$0xf]
      %v1016 = vld [vmem:[%s264 + $0xa28] sm:$0xff]
      %v1017 = vld [vmem:[%s264 + $0xa30] sm:$0xff]
      %v1018 = vld [vmem:[%s264 + $0xa38] sm:$0xff]
      %v1019 = vld [vmem:[%s264 + $0xa40] sm:$0xff]
      %v1020 = vld [vmem:[%s264 + $0xa48] sm:$0xff]
      %v1021 = vld [vmem:[%s264 + $0xa50] sm:$0xff]
      %v1022 = vld [vmem:[%s264 + $0xa58] sm:$0xff]
      %v1023 = vld [vmem:[%s264 + $0xa60] sm:$0xff]
      %v1024 = vld [vmem:[%s264 + $0xa68] sm:$0xff]
      %v1025 = vld [vmem:[%s264 + $0xa70] sm:$0xff]
      %v1026 = vld [vmem:[%s264 + $0xa78] sm:$0xff]
      %v1027 = vld [vmem:[%s264 + $0xa80] sm:$0xff]
      %v1028 = vld [vmem:[%s264 + $0xa88] sm:$0xf]
      %v1029 = vld [vmem:[%s264 + $0xa8c] sm:$0xff]
      %v1030 = vld [vmem:[%s264 + $0xa94] sm:$0xff]
      %v1031 = vld [vmem:[%s264 + $0xa9c] sm:$0xff]
      %v1032 = vld [vmem:[%s264 + $0xaa4] sm:$0xff]
      %v1033 = vld [vmem:[%s264 + $0xaac] sm:$0xff]
      %v1034 = vld [vmem:[%s264 + $0xab4] sm:$0xff]
      %v1035 = vld [vmem:[%s264 + $0xabc] sm:$0xff]
      %v1036 = vld [vmem:[%s264 + $0xac4] sm:$0xff]
      %v1037 = vld [vmem:[%s264 + $0xacc] sm:$0xff]
      %v1038 = vld [vmem:[%s264 + $0xad4] sm:$0xff]
      %v1039 = vld [vmem:[%s264 + $0xadc] sm:$0xff]
      %v1040 = vld [vmem:[%s264 + $0xae4] sm:$0xff]
      %v1041 = vld [vmem:[%s264 + $0xaec] sm:$0xf]
      %v1042 = vld [vmem:[%s264 + $0xaf0] sm:$0xff]
      %v1043 = vld [vmem:[%s264 + $0xaf8] sm:$0xff]
      %v1044 = vld [vmem:[%s264 + $0xb00] sm:$0xff]
      %v1045 = vld [vmem:[%s264 + $0xb08] sm:$0xff]
      %v1046 = vld [vmem:[%s264 + $0xb10] sm:$0xff]
      %v1047 = vld [vmem:[%s264 + $0xb18] sm:$0xff]
      %v1048 = vld [vmem:[%s264 + $0xb20] sm:$0xff]
      %v1049 = vld [vmem:[%s264 + $0xb28] sm:$0xff]
      %v1050 = vld [vmem:[%s264 + $0xb30] sm:$0xff]
      %v1051 = vld [vmem:[%s264 + $0xb38] sm:$0xff]
      %v1052 = vld [vmem:[%s264 + $0xb40] sm:$0xff]
      %v1053 = vld [vmem:[%s264 + $0xb48] sm:$0xff]
      %v1054 = vld [vmem:[%s264 + $0xb50] sm:$0xf]
      %v1055 = vld [vmem:[%s264 + $0xb54] sm:$0xff]
      %v1056 = vld [vmem:[%s264 + $0xb5c] sm:$0xff]
      %v1057 = vld [vmem:[%s264 + $0xb64] sm:$0xff]
      %v1058 = vld [vmem:[%s264 + $0xb6c] sm:$0xff]
      %v1059 = vld [vmem:[%s264 + $0xb74] sm:$0xff]
      %v1060 = vld [vmem:[%s264 + $0xb7c] sm:$0xff]
      %v1061 = vld [vmem:[%s264 + $0xb84] sm:$0xff]
      %v1062 = vld [vmem:[%s264 + $0xb8c] sm:$0xff]
      %v1063 = vld [vmem:[%s264 + $0xb94] sm:$0xff]
      %v1064 = vld [vmem:[%s264 + $0xb9c] sm:$0xff]
      %v1065 = vld [vmem:[%s264 + $0xba4] sm:$0xff]
      %v1066 = vld [vmem:[%s264 + $0xbac] sm:$0xff]
      %v1067 = vld [vmem:[%s264 + $0xbb4] sm:$0xf]
      %v1068 = vld [vmem:[%s264 + $0xbb8] sm:$0xff]
      %v1069 = vld [vmem:[%s264 + $0xbc0] sm:$0xff]
      %v1070 = vld [vmem:[%s264 + $0xbc8] sm:$0xff]
      %v1071 = vld [vmem:[%s264 + $0xbd0] sm:$0xff]
      %v1072 = vld [vmem:[%s264 + $0xbd8] sm:$0xff]
      %v1073 = vld [vmem:[%s264 + $0xbe0] sm:$0xff]
      %v1074 = vld [vmem:[%s264 + $0xbe8] sm:$0xff]
      %v1075 = vld [vmem:[%s264 + $0xbf0] sm:$0xff]
      %v1076 = vld [vmem:[%s264 + $0xbf8] sm:$0xff]
      %v1077 = vld [vmem:[%s264 + $0xc00] sm:$0xff]
      %v1078 = vld [vmem:[%s264 + $0xc08] sm:$0xff]
      %v1079 = vld [vmem:[%s264 + $0xc10] sm:$0xff]
      %v1080 = vld [vmem:[%s264 + $0xc18] sm:$0xf]
      %v1081 = vld [vmem:[%s264 + $0xc1c] sm:$0xff]
      %v1082 = vld [vmem:[%s264 + $0xc24] sm:$0xff]
      %v1083 = vld [vmem:[%s264 + $0xc2c] sm:$0xff]
      %v1084 = vld [vmem:[%s264 + $0xc34] sm:$0xff]
      %v1085 = vld [vmem:[%s264 + $0xc3c] sm:$0xff]
      %v1086 = vld [vmem:[%s264 + $0xc44] sm:$0xff]
      %v1087 = vld [vmem:[%s264 + $0xc4c] sm:$0xff]
      %v1088 = vld [vmem:[%s264 + $0xc54] sm:$0xff]
      %v1089 = vld [vmem:[%s264 + $0xc5c] sm:$0xff]
      %v1090 = vld [vmem:[%s264 + $0xc64] sm:$0xff]
      %v1091 = vld [vmem:[%s264 + $0xc6c] sm:$0xff]
      %v1092 = vld [vmem:[%s264 + $0xc74] sm:$0xff]
      %v1093 = vld [vmem:[%s264 + $0xc7c] sm:$0xf]
      %v1094 = vld [vmem:[%s264 + $0xc80] sm:$0xff]
      %v1095 = vld [vmem:[%s264 + $0xc88] sm:$0xff]
      %v1096 = vld [vmem:[%s264 + $0xc90] sm:$0xff]
      %v1097 = vld [vmem:[%s264 + $0xc98] sm:$0xff]
      %v1098 = vld [vmem:[%s264 + $0xca0] sm:$0xff]
      %v1099 = vld [vmem:[%s264 + $0xca8] sm:$0xff]
      %v1100 = vld [vmem:[%s264 + $0xcb0] sm:$0xff]
      %v1101 = vld [vmem:[%s264 + $0xcb8] sm:$0xff]
      %v1102 = vld [vmem:[%s264 + $0xcc0] sm:$0xff]
      %v1103 = vld [vmem:[%s264 + $0xcc8] sm:$0xff]
      %v1104 = vld [vmem:[%s264 + $0xcd0] sm:$0xff]
      %v1105 = vld [vmem:[%s264 + $0xcd8] sm:$0xff]
      %v1106 = vld [vmem:[%s264 + $0xce0] sm:$0xf]
      %v1107 = vld [vmem:[%s264 + $0xce4] sm:$0xff]
      %v1108 = vld [vmem:[%s264 + $0xcec] sm:$0xff]
      %v1109 = vld [vmem:[%s264 + $0xcf4] sm:$0xff]
      %v1110 = vld [vmem:[%s264 + $0xcfc] sm:$0xff]
      %v1111 = vld [vmem:[%s264 + $0xd04] sm:$0xff]
      %v1112 = vld [vmem:[%s264 + $0xd0c] sm:$0xff]
      %v1113 = vld [vmem:[%s264 + $0xd14] sm:$0xff]
      %v1114 = vld [vmem:[%s264 + $0xd1c] sm:$0xff]
      %v1115 = vld [vmem:[%s264 + $0xd24] sm:$0xff]
      %v1116 = vld [vmem:[%s264 + $0xd2c] sm:$0xff]
      %v1117 = vld [vmem:[%s264 + $0xd34] sm:$0xff]
      %v1118 = vld [vmem:[%s264 + $0xd3c] sm:$0xff]
      %v1119 = vld [vmem:[%s264 + $0xd44] sm:$0xf]
      %v1120 = vld [vmem:[%s264 + $0xd48] sm:$0xff]
      %v1121 = vld [vmem:[%s264 + $0xd50] sm:$0xff]
      %v1122 = vld [vmem:[%s264 + $0xd58] sm:$0xff]
      %v1123 = vld [vmem:[%s264 + $0xd60] sm:$0xff]
      %v1124 = vld [vmem:[%s264 + $0xd68] sm:$0xff]
      %v1125 = vld [vmem:[%s264 + $0xd70] sm:$0xff]
      %v1126 = vld [vmem:[%s264 + $0xd78] sm:$0xff]
      %v1127 = vld [vmem:[%s264 + $0xd80] sm:$0xff]
      %v1128 = vld [vmem:[%s264 + $0xd88] sm:$0xff]
      %v1129 = vld [vmem:[%s264 + $0xd90] sm:$0xff]
      %v1130 = vld [vmem:[%s264 + $0xd98] sm:$0xff]
      %v1131 = vld [vmem:[%s264 + $0xda0] sm:$0xff]
      %v1132 = vld [vmem:[%s264 + $0xda8] sm:$0xf]
      %v1133 = vld [vmem:[%s264 + $0xdac] sm:$0xff]
      %v1134 = vld [vmem:[%s264 + $0xdb4] sm:$0xff]
      %v1135 = vld [vmem:[%s264 + $0xdbc] sm:$0xff]
      %v1136 = vld [vmem:[%s264 + $0xdc4] sm:$0xff]
      %v1137 = vld [vmem:[%s264 + $0xdcc] sm:$0xff]
      %v1138 = vld [vmem:[%s264 + $0xdd4] sm:$0xff]
      %v1139 = vld [vmem:[%s264 + $0xddc] sm:$0xff]
      %v1140 = vld [vmem:[%s264 + $0xde4] sm:$0xff]
      %v1141 = vld [vmem:[%s264 + $0xdec] sm:$0xff]
      %v1142 = vld [vmem:[%s264 + $0xdf4] sm:$0xff]
      %v1143 = vld [vmem:[%s264 + $0xdfc] sm:$0xff]
      %v1144 = vld [vmem:[%s264 + $0xe04] sm:$0xff]
      %v1145 = vld [vmem:[%s264 + $0xe0c] sm:$0xf]
      %v1146 = vld [vmem:[%s264 + $0xe10] sm:$0xff]
      %v1147 = vld [vmem:[%s264 + $0xe18] sm:$0xff]
      %v1148 = vld [vmem:[%s264 + $0xe20] sm:$0xff]
      %v1149 = vld [vmem:[%s264 + $0xe28] sm:$0xff]
      %v1150 = vld [vmem:[%s264 + $0xe30] sm:$0xff]
      %v1151 = vld [vmem:[%s264 + $0xe38] sm:$0xff]
      %v1152 = vld [vmem:[%s264 + $0xe40] sm:$0xff]
      %v1153 = vld [vmem:[%s264 + $0xe48] sm:$0xff]
      %v1154 = vld [vmem:[%s264 + $0xe50] sm:$0xff]
      %v1155 = vld [vmem:[%s264 + $0xe58] sm:$0xff]
      %v1156 = vld [vmem:[%s264 + $0xe60] sm:$0xff]
      %v1157 = vld [vmem:[%s264 + $0xe68] sm:$0xff]
      %v1158 = vld [vmem:[%s264 + $0xe70] sm:$0xf]
      %v1159 = vld [vmem:[%s264 + $0xe74] sm:$0xff]
      %v1160 = vld [vmem:[%s264 + $0xe7c] sm:$0xff]
      %v1161 = vld [vmem:[%s264 + $0xe84] sm:$0xff]
      %v1162 = vld [vmem:[%s264 + $0xe8c] sm:$0xff]
      %v1163 = vld [vmem:[%s264 + $0xe94] sm:$0xff]
      %v1164 = vld [vmem:[%s264 + $0xe9c] sm:$0xff]
      %v1165 = vld [vmem:[%s264 + $0xea4] sm:$0xff]
      %v1166 = vld [vmem:[%s264 + $0xeac] sm:$0xff]
      %v1167 = vld [vmem:[%s264 + $0xeb4] sm:$0xff]
      %v1168 = vld [vmem:[%s264 + $0xebc] sm:$0xff]
      %v1169 = vld [vmem:[%s264 + $0xec4] sm:$0xff]
      %v1170 = vld [vmem:[%s264 + $0xecc] sm:$0xff]
      %v1171 = vld [vmem:[%s264 + $0xed4] sm:$0xf]
      %v1172 = vld [vmem:[%s264 + $0xed8] sm:$0xff]
      %v1173 = vld [vmem:[%s264 + $0xee0] sm:$0xff]
      %v1174 = vld [vmem:[%s264 + $0xee8] sm:$0xff]
      %v1175 = vld [vmem:[%s264 + $0xef0] sm:$0xff]
      %v1176 = vld [vmem:[%s264 + $0xef8] sm:$0xff]
      %v1177 = vld [vmem:[%s264 + $0xf00] sm:$0xff]
      %v1178 = vld [vmem:[%s264 + $0xf08] sm:$0xff]
      %v1179 = vld [vmem:[%s264 + $0xf10] sm:$0xff]
      %v1180 = vld [vmem:[%s264 + $0xf18] sm:$0xff]
      %v1181 = vld [vmem:[%s264 + $0xf20] sm:$0xff]
      %v1182 = vld [vmem:[%s264 + $0xf28] sm:$0xff]
      %v1183 = vld [vmem:[%s264 + $0xf30] sm:$0xff]
      %v1184 = vld [vmem:[%s264 + $0xf38] sm:$0xf]
      %v1185 = vld [vmem:[%s264 + $0xf3c] sm:$0xff]
      %v1186 = vld [vmem:[%s264 + $0xf44] sm:$0xff]
      %v1187 = vld [vmem:[%s264 + $0xf4c] sm:$0xff]
      %v1188 = vld [vmem:[%s264 + $0xf54] sm:$0xff]
      %v1189 = vld [vmem:[%s264 + $0xf5c] sm:$0xff]
      %v1190 = vld [vmem:[%s264 + $0xf64] sm:$0xff]
      %v1191 = vld [vmem:[%s264 + $0xf6c] sm:$0xff]
      %v1192 = vld [vmem:[%s264 + $0xf74] sm:$0xff]
      %v1193 = vld [vmem:[%s264 + $0xf7c] sm:$0xff]
      %v1194 = vld [vmem:[%s264 + $0xf84] sm:$0xff]
      %v1195 = vld [vmem:[%s264 + $0xf8c] sm:$0xff]
      %v1196 = vld [vmem:[%s264 + $0xf94] sm:$0xff]
      %v1197 = vld [vmem:[%s264 + $0xf9c] sm:$0xf]
      %v1198 = vld [vmem:[%s264 + $0xfa0] sm:$0xff]
      %v1199 = vld [vmem:[%s264 + $0xfa8] sm:$0xff]
      %v1200 = vld [vmem:[%s264 + $0xfb0] sm:$0xff]
      %v1201 = vld [vmem:[%s264 + $0xfb8] sm:$0xff]
      %v1202 = vld [vmem:[%s264 + $0xfc0] sm:$0xff]
      %v1203 = vld [vmem:[%s264 + $0xfc8] sm:$0xff]
      %v1204 = vld [vmem:[%s264 + $0xfd0] sm:$0xff]
      %v1205 = vld [vmem:[%s264 + $0xfd8] sm:$0xff]
      %v1206 = vld [vmem:[%s264 + $0xfe0] sm:$0xff]
      %v1207 = vld [vmem:[%s264 + $0xfe8] sm:$0xff]
      %v1208 = vld [vmem:[%s264 + $0xff0] sm:$0xff]
      %v1209 = vld [vmem:[%s264 + $0xff8] sm:$0xff]
      %v1210 = vld [vmem:[%s264 + $0x1000] sm:$0xf]
      %v1211 = vld [vmem:[%s264 + $0x1004] sm:$0xff]
      %v1212 = vld [vmem:[%s264 + $0x100c] sm:$0xff]
      %v1213 = vld [vmem:[%s264 + $0x1014] sm:$0xff]
      %v1214 = vld [vmem:[%s264 + $0x101c] sm:$0xff]
      %v1215 = vld [vmem:[%s264 + $0x1024] sm:$0xff]
      %v1216 = vld [vmem:[%s264 + $0x102c] sm:$0xff]
      %v1217 = vld [vmem:[%s264 + $0x1034] sm:$0xff]
      %v1218 = vld [vmem:[%s264 + $0x103c] sm:$0xff]
      %v1219 = vld [vmem:[%s264 + $0x1044] sm:$0xff]
      %v1220 = vld [vmem:[%s264 + $0x104c] sm:$0xff]
      %v1221 = vld [vmem:[%s264 + $0x1054] sm:$0xff]
      %v1222 = vld [vmem:[%s264 + $0x105c] sm:$0xff]
      %v1223 = vld [vmem:[%s264 + $0x1064] sm:$0xf]
      %v1224 = vld [vmem:[%s264 + $0x1068] sm:$0xff]
      %v1225 = vld [vmem:[%s264 + $0x1070] sm:$0xff]
      %v1226 = vld [vmem:[%s264 + $0x1078] sm:$0xff]
      %v1227 = vld [vmem:[%s264 + $0x1080] sm:$0xff]
      %v1228 = vld [vmem:[%s264 + $0x1088] sm:$0xff]
      %v1229 = vld [vmem:[%s264 + $0x1090] sm:$0xff]
      %v1230 = vld [vmem:[%s264 + $0x1098] sm:$0xff]
      %v1231 = vld [vmem:[%s264 + $0x10a0] sm:$0xff]
      %v1232 = vld [vmem:[%s264 + $0x10a8] sm:$0xff]
      %v1233 = vld [vmem:[%s264 + $0x10b0] sm:$0xff]
      %v1234 = vld [vmem:[%s264 + $0x10b8] sm:$0xff]
      %v1235 = vld [vmem:[%s264 + $0x10c0] sm:$0xff]
      %v1236 = vld [vmem:[%s264 + $0x10c8] sm:$0xf]
      %v1237 = vld [vmem:[%s264 + $0x10cc] sm:$0xff]
      %v1238 = vld [vmem:[%s264 + $0x10d4] sm:$0xff]
      %v1239 = vld [vmem:[%s264 + $0x10dc] sm:$0xff]
      %v1240 = vld [vmem:[%s264 + $0x10e4] sm:$0xff]
      %v1241 = vld [vmem:[%s264 + $0x10ec] sm:$0xff]
      %v1242 = vld [vmem:[%s264 + $0x10f4] sm:$0xff]
      %v1243 = vld [vmem:[%s264 + $0x10fc] sm:$0xff]
      %v1244 = vld [vmem:[%s264 + $0x1104] sm:$0xff]
      %v1245 = vld [vmem:[%s264 + $0x110c] sm:$0xff]
      %v1246 = vld [vmem:[%s264 + $0x1114] sm:$0xff]
      %v1247 = vld [vmem:[%s264 + $0x111c] sm:$0xff]
      %v1248 = vld [vmem:[%s264 + $0x1124] sm:$0xff]
      %v1249 = vld [vmem:[%s264 + $0x112c] sm:$0xf]
      %v1250 = vld [vmem:[%s264 + $0x1130] sm:$0xff]
      %v1251 = vld [vmem:[%s264 + $0x1138] sm:$0xff]
      %v1252 = vld [vmem:[%s264 + $0x1140] sm:$0xff]
      %v1253 = vld [vmem:[%s264 + $0x1148] sm:$0xff]
      %v1254 = vld [vmem:[%s264 + $0x1150] sm:$0xff]
      %v1255 = vld [vmem:[%s264 + $0x1158] sm:$0xff]
      %v1256 = vld [vmem:[%s264 + $0x1160] sm:$0xff]
      %v1257 = vld [vmem:[%s264 + $0x1168] sm:$0xff]
      %v1258 = vld [vmem:[%s264 + $0x1170] sm:$0xff]
      %v1259 = vld [vmem:[%s264 + $0x1178] sm:$0xff]
      %v1260 = vld [vmem:[%s264 + $0x1180] sm:$0xff]
      %v1261 = vld [vmem:[%s264 + $0x1188] sm:$0xff]
      %v1262 = vld [vmem:[%s264 + $0x1190] sm:$0xf]
      %v1263 = vld [vmem:[%s264 + $0x1194] sm:$0xff]
      %v1264 = vld [vmem:[%s264 + $0x119c] sm:$0xff]
      %v1265 = vld [vmem:[%s264 + $0x11a4] sm:$0xff]
      %v1266 = vld [vmem:[%s264 + $0x11ac] sm:$0xff]
      %v1267 = vld [vmem:[%s264 + $0x11b4] sm:$0xff]
      %v1268 = vld [vmem:[%s264 + $0x11bc] sm:$0xff]
      %v1269 = vld [vmem:[%s264 + $0x11c4] sm:$0xff]
      %v1270 = vld [vmem:[%s264 + $0x11cc] sm:$0xff]
      %v1271 = vld [vmem:[%s264 + $0x11d4] sm:$0xff]
      %v1272 = vld [vmem:[%s264 + $0x11dc] sm:$0xff]
      %v1273 = vld [vmem:[%s264 + $0x11e4] sm:$0xff]
      %v1274 = vld [vmem:[%s264 + $0x11ec] sm:$0xff]
      %v1275 = vld [vmem:[%s264 + $0x11f4] sm:$0xf]
      %v1276 = vld [vmem:[%s264 + $0x11f8] sm:$0xff]
      %v1277 = vld [vmem:[%s264 + $0x1200] sm:$0xff]
      %v1278 = vld [vmem:[%s264 + $0x1208] sm:$0xff]
      %v1279 = vld [vmem:[%s264 + $0x1210] sm:$0xff]
      %v1280 = vld [vmem:[%s264 + $0x1218] sm:$0xff]
      %v1281 = vld [vmem:[%s264 + $0x1220] sm:$0xff]
      %v1282 = vld [vmem:[%s264 + $0x1228] sm:$0xff]
      %v1283 = vld [vmem:[%s264 + $0x1230] sm:$0xff]
      %v1284 = vld [vmem:[%s264 + $0x1238] sm:$0xff]
      %v1285 = vld [vmem:[%s264 + $0x1240] sm:$0xff]
      %v1286 = vld [vmem:[%s264 + $0x1248] sm:$0xff]
      %v1287 = vld [vmem:[%s264 + $0x1250] sm:$0xff]
      %v1288 = vld [vmem:[%s264 + $0x1258] sm:$0xf]
      %v1289 = vld [vmem:[%s264 + $0x125c] sm:$0xff]
      %v1290 = vld [vmem:[%s264 + $0x1264] sm:$0xff]
      %v1291 = vld [vmem:[%s264 + $0x126c] sm:$0xff]
      %v1292 = vld [vmem:[%s264 + $0x1274] sm:$0xff]
      %v1293 = vld [vmem:[%s264 + $0x127c] sm:$0xff]
      %v1294 = vld [vmem:[%s264 + $0x1284] sm:$0xff]
      %v1295 = vld [vmem:[%s264 + $0x128c] sm:$0xff]
      %v1296 = vld [vmem:[%s264 + $0x1294] sm:$0xff]
      %v1297 = vld [vmem:[%s264 + $0x129c] sm:$0xff]
      %v1298 = vld [vmem:[%s264 + $0x12a4] sm:$0xff]
      %v1299 = vld [vmem:[%s264 + $0x12ac] sm:$0xff]
      %v1300 = vld [vmem:[%s264 + $0x12b4] sm:$0xff]
      %v1301 = vld [vmem:[%s264 + $0x12bc] sm:$0xf]
      %v1302 = vld [vmem:[%s264 + $0x12c0] sm:$0xff]
      %v1303 = vld [vmem:[%s264 + $0x12c8] sm:$0xff]
      %v1304 = vld [vmem:[%s264 + $0x12d0] sm:$0xff]
      %v1305 = vld [vmem:[%s264 + $0x12d8] sm:$0xff]
      %v1306 = vld [vmem:[%s264 + $0x12e0] sm:$0xff]
      %v1307 = vld [vmem:[%s264 + $0x12e8] sm:$0xff]
      %v1308 = vld [vmem:[%s264 + $0x12f0] sm:$0xff]
      %v1309 = vld [vmem:[%s264 + $0x12f8] sm:$0xff]
      %v1310 = vld [vmem:[%s264 + $0x1300] sm:$0xff]
      %v1311 = vld [vmem:[%s264 + $0x1308] sm:$0xff]
      %v1312 = vld [vmem:[%s264 + $0x1310] sm:$0xff]
      %v1313 = vld [vmem:[%s264 + $0x1318] sm:$0xff]
      %v1314 = vld [vmem:[%s264 + $0x1320] sm:$0xf]
      %v1315 = vld [vmem:[%s264 + $0x1324] sm:$0xff]
      %v1316 = vld [vmem:[%s264 + $0x132c] sm:$0xff]
      %v1317 = vld [vmem:[%s264 + $0x1334] sm:$0xff]
      %v1318 = vld [vmem:[%s264 + $0x133c] sm:$0xff]
      %v1319 = vld [vmem:[%s264 + $0x1344] sm:$0xff]
      %v1320 = vld [vmem:[%s264 + $0x134c] sm:$0xff]
      %v1321 = vld [vmem:[%s264 + $0x1354] sm:$0xff]
      %v1322 = vld [vmem:[%s264 + $0x135c] sm:$0xff]
      %v1323 = vld [vmem:[%s264 + $0x1364] sm:$0xff]
      %v1324 = vld [vmem:[%s264 + $0x136c] sm:$0xff]
      %v1325 = vld [vmem:[%s264 + $0x1374] sm:$0xff]
      %v1326 = vld [vmem:[%s264 + $0x137c] sm:$0xff]
      %v1327 = vld [vmem:[%s264 + $0x1384] sm:$0xf]
      %v1328 = vld [vmem:[%s264 + $0x1388] sm:$0xff]
      %v1329 = vld [vmem:[%s264 + $0x1390] sm:$0xff]
      %v1330 = vld [vmem:[%s264 + $0x1398] sm:$0xff]
      %v1331 = vld [vmem:[%s264 + $0x13a0] sm:$0xff]
      %v1332 = vld [vmem:[%s264 + $0x13a8] sm:$0xff]
      %v1333 = vld [vmem:[%s264 + $0x13b0] sm:$0xff]
      %v1334 = vld [vmem:[%s264 + $0x13b8] sm:$0xff]
      %v1335 = vld [vmem:[%s264 + $0x13c0] sm:$0xff]
      %v1336 = vld [vmem:[%s264 + $0x13c8] sm:$0xff]
      %v1337 = vld [vmem:[%s264 + $0x13d0] sm:$0xff]
      %v1338 = vld [vmem:[%s264 + $0x13d8] sm:$0xff]
      %v1339 = vld [vmem:[%s264 + $0x13e0] sm:$0xff]
      %v1340 = vld [vmem:[%s264 + $0x13e8] sm:$0xf]
      %v1341 = vld [vmem:[%s264 + $0x13ec] sm:$0xff]
      %v1342 = vld [vmem:[%s264 + $0x13f4] sm:$0xff]
      %v1343 = vld [vmem:[%s264 + $0x13fc] sm:$0xff]
      %v1344 = vld [vmem:[%s264 + $0x1404] sm:$0xff]
      %v1345 = vld [vmem:[%s264 + $0x140c] sm:$0xff]
      %v1346 = vld [vmem:[%s264 + $0x1414] sm:$0xff]
      %v1347 = vld [vmem:[%s264 + $0x141c] sm:$0xff]
      %v1348 = vld [vmem:[%s264 + $0x1424] sm:$0xff]
      %v1349 = vld [vmem:[%s264 + $0x142c] sm:$0xff]
      %v1350 = vld [vmem:[%s264 + $0x1434] sm:$0xff]
      %v1351 = vld [vmem:[%s264 + $0x143c] sm:$0xff]
      %v1352 = vld [vmem:[%s264 + $0x1444] sm:$0xff]
      %v1353 = vld [vmem:[%s264 + $0x144c] sm:$0xf]
      %v1354 = vld [vmem:[%s264 + $0x1450] sm:$0xff]
      %v1355 = vld [vmem:[%s264 + $0x1458] sm:$0xff]
      %v1356 = vld [vmem:[%s264 + $0x1460] sm:$0xff]
      %v1357 = vld [vmem:[%s264 + $0x1468] sm:$0xff]
      %v1358 = vld [vmem:[%s264 + $0x1470] sm:$0xff]
      %v1359 = vld [vmem:[%s264 + $0x1478] sm:$0xff]
      %v1360 = vld [vmem:[%s264 + $0x1480] sm:$0xff]
      %v1361 = vld [vmem:[%s264 + $0x1488] sm:$0xff]
      %v1362 = vld [vmem:[%s264 + $0x1490] sm:$0xff]
      %v1363 = vld [vmem:[%s264 + $0x1498] sm:$0xff]
      %v1364 = vld [vmem:[%s264 + $0x14a0] sm:$0xff]
      %v1365 = vld [vmem:[%s264 + $0x14a8] sm:$0xff]
      %v1366 = vld [vmem:[%s264 + $0x14b0] sm:$0xf]
      %v1367 = vld [vmem:[%s264 + $0x14b4] sm:$0xff]
      %v1368 = vld [vmem:[%s264 + $0x14bc] sm:$0xff]
      %v1369 = vld [vmem:[%s264 + $0x14c4] sm:$0xff]
      %v1370 = vld [vmem:[%s264 + $0x14cc] sm:$0xff]
      %v1371 = vld [vmem:[%s264 + $0x14d4] sm:$0xff]
      %v1372 = vld [vmem:[%s264 + $0x14dc] sm:$0xff]
      %v1373 = vld [vmem:[%s264 + $0x14e4] sm:$0xff]
      %v1374 = vld [vmem:[%s264 + $0x14ec] sm:$0xff]
      %v1375 = vld [vmem:[%s264 + $0x14f4] sm:$0xff]
      %v1376 = vld [vmem:[%s264 + $0x14fc] sm:$0xff]
      %v1377 = vld [vmem:[%s264 + $0x1504] sm:$0xff]
      %v1378 = vld [vmem:[%s264 + $0x150c] sm:$0xff]
      %v1379 = vld [vmem:[%s264 + $0x1514] sm:$0xf]
      %v1380 = vld [vmem:[%s264 + $0x1518] sm:$0xff]
      %v1381 = vld [vmem:[%s264 + $0x1520] sm:$0xff]
      %v1382 = vld [vmem:[%s264 + $0x1528] sm:$0xff]
      %v1383 = vld [vmem:[%s264 + $0x1530] sm:$0xff]
      %v1384 = vld [vmem:[%s264 + $0x1538] sm:$0xff]
      %v1385 = vld [vmem:[%s264 + $0x1540] sm:$0xff]
      %v1386 = vld [vmem:[%s264 + $0x1548] sm:$0xff]
      %v1387 = vld [vmem:[%s264 + $0x1550] sm:$0xff]
      %v1388 = vld [vmem:[%s264 + $0x1558] sm:$0xff]
      %v1389 = vld [vmem:[%s264 + $0x1560] sm:$0xff]
      %v1390 = vld [vmem:[%s264 + $0x1568] sm:$0xff]
      %v1391 = vld [vmem:[%s264 + $0x1570] sm:$0xff]
      %v1392 = vld [vmem:[%s264 + $0x1578] sm:$0xf]
      %v1393 = vld [vmem:[%s264 + $0x157c] sm:$0xff]
      %v1394 = vld [vmem:[%s264 + $0x1584] sm:$0xff]
      %v1395 = vld [vmem:[%s264 + $0x158c] sm:$0xff]
      %v1396 = vld [vmem:[%s264 + $0x1594] sm:$0xff]
      %v1397 = vld [vmem:[%s264 + $0x159c] sm:$0xff]
      %v1398 = vld [vmem:[%s264 + $0x15a4] sm:$0xff]
      %v1399 = vld [vmem:[%s264 + $0x15ac] sm:$0xff]
      %v1400 = vld [vmem:[%s264 + $0x15b4] sm:$0xff]
      %v1401 = vld [vmem:[%s264 + $0x15bc] sm:$0xff]
      %v1402 = vld [vmem:[%s264 + $0x15c4] sm:$0xff]
      %v1403 = vld [vmem:[%s264 + $0x15cc] sm:$0xff]
      %v1404 = vld [vmem:[%s264 + $0x15d4] sm:$0xff]
      %v1405 = vld [vmem:[%s264 + $0x15dc] sm:$0xf]
      %v1406 = vld [vmem:[%s264 + $0x15e0] sm:$0xff]
      %v1407 = vld [vmem:[%s264 + $0x15e8] sm:$0xff]
      %v1408 = vld [vmem:[%s264 + $0x15f0] sm:$0xff]
      %v1409 = vld [vmem:[%s264 + $0x15f8] sm:$0xff]
      %v1410 = vld [vmem:[%s264 + $0x1600] sm:$0xff]
      %v1411 = vld [vmem:[%s264 + $0x1608] sm:$0xff]
      %v1412 = vld [vmem:[%s264 + $0x1610] sm:$0xff]
      %v1413 = vld [vmem:[%s264 + $0x1618] sm:$0xff]
      %v1414 = vld [vmem:[%s264 + $0x1620] sm:$0xff]
      %v1415 = vld [vmem:[%s264 + $0x1628] sm:$0xff]
      %v1416 = vld [vmem:[%s264 + $0x1630] sm:$0xff]
      %v1417 = vld [vmem:[%s264 + $0x1638] sm:$0xff]
      %v1418 = vld [vmem:[%s264 + $0x1640] sm:$0xf]
      %v1419 = vld [vmem:[%s264 + $0x1644] sm:$0xff]
      %v1420 = vld [vmem:[%s264 + $0x164c] sm:$0xff]
      %v1421 = vld [vmem:[%s264 + $0x1654] sm:$0xff]
      %v1422 = vld [vmem:[%s264 + $0x165c] sm:$0xff]
      %v1423 = vld [vmem:[%s264 + $0x1664] sm:$0xff]
      %v1424 = vld [vmem:[%s264 + $0x166c] sm:$0xff]
      %v1425 = vld [vmem:[%s264 + $0x1674] sm:$0xff]
      %v1426 = vld [vmem:[%s264 + $0x167c] sm:$0xff]
      %v1427 = vld [vmem:[%s264 + $0x1684] sm:$0xff]
      %v1428 = vld [vmem:[%s264 + $0x168c] sm:$0xff]
      %v1429 = vld [vmem:[%s264 + $0x1694] sm:$0xff]
      %v1430 = vld [vmem:[%s264 + $0x169c] sm:$0xff]
      %v1431 = vld [vmem:[%s264 + $0x16a4] sm:$0xf]
      %v1432 = vld [vmem:[%s264 + $0x16a8] sm:$0xff]
      %v1433 = vld [vmem:[%s264 + $0x16b0] sm:$0xff]
      %v1434 = vld [vmem:[%s264 + $0x16b8] sm:$0xff]
      %v1435 = vld [vmem:[%s264 + $0x16c0] sm:$0xff]
      %v1436 = vld [vmem:[%s264 + $0x16c8] sm:$0xff]
      %v1437 = vld [vmem:[%s264 + $0x16d0] sm:$0xff]
      %v1438 = vld [vmem:[%s264 + $0x16d8] sm:$0xff]
      %v1439 = vld [vmem:[%s264 + $0x16e0] sm:$0xff]
      %v1440 = vld [vmem:[%s264 + $0x16e8] sm:$0xff]
      %v1441 = vld [vmem:[%s264 + $0x16f0] sm:$0xff]
      %v1442 = vld [vmem:[%s264 + $0x16f8] sm:$0xff]
      %v1443 = vld [vmem:[%s264 + $0x1700] sm:$0xff]
      %v1444 = vld [vmem:[%s264 + $0x1708] sm:$0xf]
      %v1445 = vld [vmem:[%s264 + $0x170c] sm:$0xff]
      %v1446 = vld [vmem:[%s264 + $0x1714] sm:$0xff]
      %v1447 = vld [vmem:[%s264 + $0x171c] sm:$0xff]
      %v1448 = vld [vmem:[%s264 + $0x1724] sm:$0xff]
      %v1449 = vld [vmem:[%s264 + $0x172c] sm:$0xff]
      %v1450 = vld [vmem:[%s264 + $0x1734] sm:$0xff]
      %v1451 = vld [vmem:[%s264 + $0x173c] sm:$0xff]
      %v1452 = vld [vmem:[%s264 + $0x1744] sm:$0xff]
      %v1453 = vld [vmem:[%s264 + $0x174c] sm:$0xff]
      %v1454 = vld [vmem:[%s264 + $0x1754] sm:$0xff]
      %v1455 = vld [vmem:[%s264 + $0x175c] sm:$0xff]
      %v1456 = vld [vmem:[%s264 + $0x1764] sm:$0xff]
      %v1457 = vld [vmem:[%s264 + $0x176c] sm:$0xf]
      %v1458 = vld [vmem:[%s264 + $0x1770] sm:$0xff]
      %v1459 = vld [vmem:[%s264 + $0x1778] sm:$0xff]
      %v1460 = vld [vmem:[%s264 + $0x1780] sm:$0xff]
      %v1461 = vld [vmem:[%s264 + $0x1788] sm:$0xff]
      %v1462 = vld [vmem:[%s264 + $0x1790] sm:$0xff]
      %v1463 = vld [vmem:[%s264 + $0x1798] sm:$0xff]
      %v1464 = vld [vmem:[%s264 + $0x17a0] sm:$0xff]
      %v1465 = vld [vmem:[%s264 + $0x17a8] sm:$0xff]
      %v1466 = vld [vmem:[%s264 + $0x17b0] sm:$0xff]
      %v1467 = vld [vmem:[%s264 + $0x17b8] sm:$0xff]
      %v1468 = vld [vmem:[%s264 + $0x17c0] sm:$0xff]
      %v1469 = vld [vmem:[%s264 + $0x17c8] sm:$0xff]
      %v1470 = vld [vmem:[%s264 + $0x17d0] sm:$0xf]
      %v1471 = vld [vmem:[%s264 + $0x17d4] sm:$0xff]
      %v1472 = vld [vmem:[%s264 + $0x17dc] sm:$0xff]
      %v1473 = vld [vmem:[%s264 + $0x17e4] sm:$0xff]
      %v1474 = vld [vmem:[%s264 + $0x17ec] sm:$0xff]
      %v1475 = vld [vmem:[%s264 + $0x17f4] sm:$0xff]
      %v1476 = vld [vmem:[%s264 + $0x17fc] sm:$0xff]
      %v1477 = vld [vmem:[%s264 + $0x1804] sm:$0xff]
      %v1478 = vld [vmem:[%s264 + $0x180c] sm:$0xff]
      %v1479 = vld [vmem:[%s264 + $0x1814] sm:$0xff]
      %v1480 = vld [vmem:[%s264 + $0x181c] sm:$0xff]
      %v1481 = vld [vmem:[%s264 + $0x1824] sm:$0xff]
      %v1482 = vld [vmem:[%s264 + $0x182c] sm:$0xff]
      %v1483 = vld [vmem:[%s264 + $0x1834] sm:$0xf]
      %v1484 = vld [vmem:[%s264 + $0x1838] sm:$0xff]
      %v1485 = vld [vmem:[%s264 + $0x1840] sm:$0xff]
      %v1486 = vld [vmem:[%s264 + $0x1848] sm:$0xff]
      %v1487 = vld [vmem:[%s264 + $0x1850] sm:$0xff]
      %v1488 = vld [vmem:[%s264 + $0x1858] sm:$0xff]
      %v1489 = vld [vmem:[%s264 + $0x1860] sm:$0xff]
      %v1490 = vld [vmem:[%s264 + $0x1868] sm:$0xff]
      %v1491 = vld [vmem:[%s264 + $0x1870] sm:$0xff]
      %v1492 = vld [vmem:[%s264 + $0x1878] sm:$0xff]
      %v1493 = vld [vmem:[%s264 + $0x1880] sm:$0xff]
      %v1494 = vld [vmem:[%s264 + $0x1888] sm:$0xff]
      %v1495 = vld [vmem:[%s264 + $0x1890] sm:$0xff]
      %v1496 = vld [vmem:[%s264 + $0x1898] sm:$0xf]
      %v1497 = vld [vmem:[%s264 + $0x189c] sm:$0xff]
      %v1498 = vld [vmem:[%s264 + $0x18a4] sm:$0xff]
      %v1499 = vld [vmem:[%s264 + $0x18ac] sm:$0xff]
      %v1500 = vld [vmem:[%s264 + $0x18b4] sm:$0xff]
      %v1501 = vld [vmem:[%s264 + $0x18bc] sm:$0xff]
      %v1502 = vld [vmem:[%s264 + $0x18c4] sm:$0xff]
      %v1503 = vld [vmem:[%s264 + $0x18cc] sm:$0xff]
      %v1504 = vld [vmem:[%s264 + $0x18d4] sm:$0xff]
      %v1505 = vld [vmem:[%s264 + $0x18dc] sm:$0xff]
      %v1506 = vld [vmem:[%s264 + $0x18e4] sm:$0xff]
      %v1507 = vld [vmem:[%s264 + $0x18ec] sm:$0xff]
      %v1508 = vld [vmem:[%s264 + $0x18f4] sm:$0xff]
      %v1509 = vld [vmem:[%s264 + $0x18fc] sm:$0xf]
      %v1510 = vld [vmem:[%s269] sm:$0xff]
      %v1511 = vld [vmem:[%s269 + $0x8] sm:$0xff]
      %v1512 = vld [vmem:[%s269 + $0x10] sm:$0xff]
      %v1513 = vld [vmem:[%s269 + $0x18] sm:$0xff]
      %v1514 = vld [vmem:[%s269 + $0x20] sm:$0xff]
      %v1515 = vld [vmem:[%s269 + $0x28] sm:$0xff]
      %v1516 = vld [vmem:[%s269 + $0x30] sm:$0xff]
      %v1517 = vld [vmem:[%s269 + $0x38] sm:$0xff]
      %v1518 = vld [vmem:[%s269 + $0x40] sm:$0xff]
      %v1519 = vld [vmem:[%s269 + $0x48] sm:$0xff]
      %v1520 = vld [vmem:[%s269 + $0x50] sm:$0xff]
      %v1521 = vld [vmem:[%s269 + $0x58] sm:$0xff]
      %v1522 = vld [vmem:[%s269 + $0x60] sm:$0xff]
      %v1523 = vld [vmem:[%s269 + $0x68] sm:$0xff]
      %v1524 = vld [vmem:[%s269 + $0x70] sm:$0xff]
      %v1525 = vld [vmem:[%s269 + $0x78] sm:$0xff]
      %v1526 = vld [vmem:[%s269 + $0x80] sm:$0xff]
      %v1527 = vld [vmem:[%s269 + $0x88] sm:$0xff]
      %v1528 = vld [vmem:[%s269 + $0x90] sm:$0xff]
      %v1529 = vld [vmem:[%s269 + $0x98] sm:$0xff]
      %v1530 = vld [vmem:[%s269 + $0xa0] sm:$0xff]
      %v1531 = vld [vmem:[%s269 + $0xa8] sm:$0xff]
      %v1532 = vld [vmem:[%s269 + $0xb0] sm:$0xff]
      %v1533 = vld [vmem:[%s269 + $0xb8] sm:$0xff]
      %v1534 = vld [vmem:[%s269 + $0xc0] sm:$0xff]
      %v1535 = vld [vmem:[%s269 + $0xc8] sm:$0xff]
      %v1536 = vld [vmem:[%s269 + $0xd0] sm:$0xff]
      %v1537 = vld [vmem:[%s269 + $0xd8] sm:$0xff]
      %v1538 = vld [vmem:[%s269 + $0xe0] sm:$0xff]
      %v1539 = vld [vmem:[%s269 + $0xe8] sm:$0xff]
      %v1540 = vld [vmem:[%s269 + $0xf0] sm:$0xff]
      %v1541 = vld [vmem:[%s269 + $0xf8] sm:$0xff]
      %v1542 = vld [vmem:[%s269 + $0x100] sm:$0xff]
      %v1543 = vld [vmem:[%s269 + $0x108] sm:$0xff]
      %v1544 = vld [vmem:[%s269 + $0x110] sm:$0xff]
      %v1545 = vld [vmem:[%s269 + $0x118] sm:$0xff]
      %v1546 = vld [vmem:[%s269 + $0x120] sm:$0xff]
      %v1547 = vld [vmem:[%s269 + $0x128] sm:$0xff]
      %v1548 = vld [vmem:[%s269 + $0x130] sm:$0xff]
      %v1549 = vld [vmem:[%s269 + $0x138] sm:$0xff]
      %v1550 = vld [vmem:[%s269 + $0x140] sm:$0xff]
      %v1551 = vld [vmem:[%s269 + $0x148] sm:$0xff]
      %v1552 = vld [vmem:[%s269 + $0x150] sm:$0xff]
      %v1553 = vld [vmem:[%s269 + $0x158] sm:$0xff]
      %v1554 = vld [vmem:[%s269 + $0x160] sm:$0xff]
      %v1555 = vld [vmem:[%s269 + $0x168] sm:$0xff]
      %v1556 = vld [vmem:[%s269 + $0x170] sm:$0xff]
      %v1557 = vld [vmem:[%s269 + $0x178] sm:$0xff]
      %v1558 = vld [vmem:[%s269 + $0x180] sm:$0xff]
      %v1559 = vld [vmem:[%s269 + $0x188] sm:$0xff]
      %v1560 = vld [vmem:[%s269 + $0x190] sm:$0xff]
      %v1561 = vld [vmem:[%s269 + $0x198] sm:$0xff]
      %v1562 = vld [vmem:[%s269 + $0x1a0] sm:$0xff]
      %v1563 = vld [vmem:[%s269 + $0x1a8] sm:$0xff]
      %v1564 = vld [vmem:[%s269 + $0x1b0] sm:$0xff]
      %v1565 = vld [vmem:[%s269 + $0x1b8] sm:$0xff]
      %v1566 = vld [vmem:[%s269 + $0x1c0] sm:$0xff]
      %v1567 = vld [vmem:[%s269 + $0x1c8] sm:$0xff]
      %v1568 = vld [vmem:[%s269 + $0x1d0] sm:$0xff]
      %v1569 = vld [vmem:[%s269 + $0x1d8] sm:$0xff]
      %v1570 = vld [vmem:[%s269 + $0x1e0] sm:$0xff]
      %v1571 = vld [vmem:[%s269 + $0x1e8] sm:$0xff]
      %v1572 = vld [vmem:[%s269 + $0x1f0] sm:$0xff]
      %v1573 = vld [vmem:[%s269 + $0x1f8] sm:$0xff]
      %1575 = vset.pattern.permute.xlu0 0
      %1576 = vperm.xlu0 %1575, %v1510
      %v1577 = vpop.permute.xlu0 %1576
      %1580 = vset.pattern.permute.xlu0 0
      %1581 = vperm.xlu0 %1580, %v1511
      %v1582 = vpop.permute.xlu0 %1581
      %1585 = vset.pattern.permute.xlu0 0
      %1586 = vperm.xlu0 %1585, %v1512
      %v1587 = vpop.permute.xlu0 %1586
      %1590 = vset.pattern.permute.xlu0 0
      %1591 = vperm.xlu0 %1590, %v1513
      %v1592 = vpop.permute.xlu0 %1591
      %1595 = vset.pattern.permute.xlu0 0
      %1596 = vperm.xlu0 %1595, %v1514
      %v1597 = vpop.permute.xlu0 %1596
      %1600 = vset.pattern.permute.xlu0 0
      %1601 = vperm.xlu0 %1600, %v1515
      %v1602 = vpop.permute.xlu0 %1601
      %1605 = vset.pattern.permute.xlu0 0
      %1606 = vperm.xlu0 %1605, %v1516
      %v1607 = vpop.permute.xlu0 %1606
      %1610 = vset.pattern.permute.xlu0 0
      %1611 = vperm.xlu0 %1610, %v1517
      %v1612 = vpop.permute.xlu0 %1611
      %1615 = vset.pattern.permute.xlu0 0
      %1616 = vperm.xlu0 %1615, %v1518
      %v1617 = vpop.permute.xlu0 %1616
      %1620 = vset.pattern.permute.xlu0 0
      %1621 = vperm.xlu0 %1620, %v1519
      %v1622 = vpop.permute.xlu0 %1621
      %1625 = vset.pattern.permute.xlu0 0
      %1626 = vperm.xlu0 %1625, %v1520
      %v1627 = vpop.permute.xlu0 %1626
      %1630 = vset.pattern.permute.xlu0 0
      %1631 = vperm.xlu0 %1630, %v1521
      %v1632 = vpop.permute.xlu0 %1631
      %1635 = vset.pattern.permute.xlu0 0
      %1636 = vperm.xlu0 %1635, %v1522
      %v1637 = vpop.permute.xlu0 %1636
      %1640 = vset.pattern.permute.xlu0 0
      %1641 = vperm.xlu0 %1640, %v1523
      %v1642 = vpop.permute.xlu0 %1641
      %1645 = vset.pattern.permute.xlu0 0
      %1646 = vperm.xlu0 %1645, %v1524
      %v1647 = vpop.permute.xlu0 %1646
      %1650 = vset.pattern.permute.xlu0 0
      %1651 = vperm.xlu0 %1650, %v1525
      %v1652 = vpop.permute.xlu0 %1651
      %1655 = vset.pattern.permute.xlu0 0
      %1656 = vperm.xlu0 %1655, %v1526
      %v1657 = vpop.permute.xlu0 %1656
      %1660 = vset.pattern.permute.xlu0 0
      %1661 = vperm.xlu0 %1660, %v1527
      %v1662 = vpop.permute.xlu0 %1661
      %1665 = vset.pattern.permute.xlu0 0
      %1666 = vperm.xlu0 %1665, %v1528
      %v1667 = vpop.permute.xlu0 %1666
      %1670 = vset.pattern.permute.xlu0 0
      %1671 = vperm.xlu0 %1670, %v1529
      %v1672 = vpop.permute.xlu0 %1671
      %1675 = vset.pattern.permute.xlu0 0
      %1676 = vperm.xlu0 %1675, %v1530
      %v1677 = vpop.permute.xlu0 %1676
      %1680 = vset.pattern.permute.xlu0 0
      %1681 = vperm.xlu0 %1680, %v1531
      %v1682 = vpop.permute.xlu0 %1681
      %1685 = vset.pattern.permute.xlu0 0
      %1686 = vperm.xlu0 %1685, %v1532
      %v1687 = vpop.permute.xlu0 %1686
      %1690 = vset.pattern.permute.xlu0 0
      %1691 = vperm.xlu0 %1690, %v1533
      %v1692 = vpop.permute.xlu0 %1691
      %1695 = vset.pattern.permute.xlu0 0
      %1696 = vperm.xlu0 %1695, %v1534
      %v1697 = vpop.permute.xlu0 %1696
      %1700 = vset.pattern.permute.xlu0 0
      %1701 = vperm.xlu0 %1700, %v1535
      %v1702 = vpop.permute.xlu0 %1701
      %1705 = vset.pattern.permute.xlu0 0
      %1706 = vperm.xlu0 %1705, %v1536
      %v1707 = vpop.permute.xlu0 %1706
      %1710 = vset.pattern.permute.xlu0 0
      %1711 = vperm.xlu0 %1710, %v1537
      %v1712 = vpop.permute.xlu0 %1711
      %1715 = vset.pattern.permute.xlu0 0
      %1716 = vperm.xlu0 %1715, %v1538
      %v1717 = vpop.permute.xlu0 %1716
      %1720 = vset.pattern.permute.xlu0 0
      %1721 = vperm.xlu0 %1720, %v1539
      %v1722 = vpop.permute.xlu0 %1721
      %1725 = vset.pattern.permute.xlu0 0
      %1726 = vperm.xlu0 %1725, %v1540
      %v1727 = vpop.permute.xlu0 %1726
      %1730 = vset.pattern.permute.xlu0 0
      %1731 = vperm.xlu0 %1730, %v1541
      %v1732 = vpop.permute.xlu0 %1731
      %1735 = vset.pattern.permute.xlu0 0
      %1736 = vperm.xlu0 %1735, %v1542
      %v1737 = vpop.permute.xlu0 %1736
      %1740 = vset.pattern.permute.xlu0 0
      %1741 = vperm.xlu0 %1740, %v1543
      %v1742 = vpop.permute.xlu0 %1741
      %1745 = vset.pattern.permute.xlu0 0
      %1746 = vperm.xlu0 %1745, %v1544
      %v1747 = vpop.permute.xlu0 %1746
      %1750 = vset.pattern.permute.xlu0 0
      %1751 = vperm.xlu0 %1750, %v1545
      %v1752 = vpop.permute.xlu0 %1751
      %1755 = vset.pattern.permute.xlu0 0
      %1756 = vperm.xlu0 %1755, %v1546
      %v1757 = vpop.permute.xlu0 %1756
      %1760 = vset.pattern.permute.xlu0 0
      %1761 = vperm.xlu0 %1760, %v1547
      %v1762 = vpop.permute.xlu0 %1761
      %1765 = vset.pattern.permute.xlu0 0
      %1766 = vperm.xlu0 %1765, %v1548
      %v1767 = vpop.permute.xlu0 %1766
      %1770 = vset.pattern.permute.xlu0 0
      %1771 = vperm.xlu0 %1770, %v1549
      %v1772 = vpop.permute.xlu0 %1771
      %1775 = vset.pattern.permute.xlu0 0
      %1776 = vperm.xlu0 %1775, %v1550
      %v1777 = vpop.permute.xlu0 %1776
      %1780 = vset.pattern.permute.xlu0 0
      %1781 = vperm.xlu0 %1780, %v1551
      %v1782 = vpop.permute.xlu0 %1781
      %1785 = vset.pattern.permute.xlu0 0
      %1786 = vperm.xlu0 %1785, %v1552
      %v1787 = vpop.permute.xlu0 %1786
      %1790 = vset.pattern.permute.xlu0 0
      %1791 = vperm.xlu0 %1790, %v1553
      %v1792 = vpop.permute.xlu0 %1791
      %1795 = vset.pattern.permute.xlu0 0
      %1796 = vperm.xlu0 %1795, %v1554
      %v1797 = vpop.permute.xlu0 %1796
      %1800 = vset.pattern.permute.xlu0 0
      %1801 = vperm.xlu0 %1800, %v1555
      %v1802 = vpop.permute.xlu0 %1801
      %1805 = vset.pattern.permute.xlu0 0
      %1806 = vperm.xlu0 %1805, %v1556
      %v1807 = vpop.permute.xlu0 %1806
      %1810 = vset.pattern.permute.xlu0 0
      %1811 = vperm.xlu0 %1810, %v1557
      %v1812 = vpop.permute.xlu0 %1811
      %1815 = vset.pattern.permute.xlu0 0
      %1816 = vperm.xlu0 %1815, %v1558
      %v1817 = vpop.permute.xlu0 %1816
      %1820 = vset.pattern.permute.xlu0 0
      %1821 = vperm.xlu0 %1820, %v1559
      %v1822 = vpop.permute.xlu0 %1821
      %1825 = vset.pattern.permute.xlu0 0
      %1826 = vperm.xlu0 %1825, %v1560
      %v1827 = vpop.permute.xlu0 %1826
      %1830 = vset.pattern.permute.xlu0 0
      %1831 = vperm.xlu0 %1830, %v1561
      %v1832 = vpop.permute.xlu0 %1831
      %1835 = vset.pattern.permute.xlu0 0
      %1836 = vperm.xlu0 %1835, %v1562
      %v1837 = vpop.permute.xlu0 %1836
      %1840 = vset.pattern.permute.xlu0 0
      %1841 = vperm.xlu0 %1840, %v1563
      %v1842 = vpop.permute.xlu0 %1841
      %1845 = vset.pattern.permute.xlu0 0
      %1846 = vperm.xlu0 %1845, %v1564
      %v1847 = vpop.permute.xlu0 %1846
      %1850 = vset.pattern.permute.xlu0 0
      %1851 = vperm.xlu0 %1850, %v1565
      %v1852 = vpop.permute.xlu0 %1851
      %1855 = vset.pattern.permute.xlu0 0
      %1856 = vperm.xlu0 %1855, %v1566
      %v1857 = vpop.permute.xlu0 %1856
      %1860 = vset.pattern.permute.xlu0 0
      %1861 = vperm.xlu0 %1860, %v1567
      %v1862 = vpop.permute.xlu0 %1861
      %1865 = vset.pattern.permute.xlu0 0
      %1866 = vperm.xlu0 %1865, %v1568
      %v1867 = vpop.permute.xlu0 %1866
      %1870 = vset.pattern.permute.xlu0 0
      %1871 = vperm.xlu0 %1870, %v1569
      %v1872 = vpop.permute.xlu0 %1871
      %1875 = vset.pattern.permute.xlu0 0
      %1876 = vperm.xlu0 %1875, %v1570
      %v1877 = vpop.permute.xlu0 %1876
      %1880 = vset.pattern.permute.xlu0 0
      %1881 = vperm.xlu0 %1880, %v1571
      %v1882 = vpop.permute.xlu0 %1881
      %1885 = vset.pattern.permute.xlu0 0
      %1886 = vperm.xlu0 %1885, %v1572
      %v1887 = vpop.permute.xlu0 %1886
      %1890 = vset.pattern.permute.xlu0 0
      %1891 = vperm.xlu0 %1890, %v1573
      %v1892 = vpop.permute.xlu0 %1891
      %v2726 = vunpack.c.l.b16 %v678
      %v2727 = vunpack.c.h.b16 %v678
      %v2728 = vunpack.c.l.b16 %v679
      %v2729 = vunpack.c.h.b16 %v679
      %v2730 = vunpack.c.l.b16 %v680
      %v2731 = vunpack.c.h.b16 %v680
      %v2732 = vunpack.c.l.b16 %v681
      %v2733 = vunpack.c.h.b16 %v681
      %v2734 = vunpack.c.l.b16 %v682
      %v2735 = vunpack.c.h.b16 %v682
      %v2736 = vunpack.c.l.b16 %v683
      %v2737 = vunpack.c.h.b16 %v683
      %v2738 = vunpack.c.l.b16 %v684
      %v2739 = vunpack.c.h.b16 %v684
      %v2740 = vunpack.c.l.b16 %v685
      %v2741 = vunpack.c.h.b16 %v685
      %v2742 = vunpack.c.l.b16 %v686
      %v2743 = vunpack.c.h.b16 %v686
      %v2744 = vunpack.c.l.b16 %v687
      %v2745 = vunpack.c.h.b16 %v687
      %v2746 = vunpack.c.l.b16 %v688
      %v2747 = vunpack.c.h.b16 %v688
      %v2748 = vunpack.c.l.b16 %v689
      %v2749 = vunpack.c.h.b16 %v689
      %v2750 = vunpack.c.l.b16 %v690
      %v2751 = vunpack.c.l.b16 %v691
      %v2752 = vunpack.c.h.b16 %v691
      %v2753 = vunpack.c.l.b16 %v692
      %v2754 = vunpack.c.h.b16 %v692
      %v2755 = vunpack.c.l.b16 %v693
      %v2756 = vunpack.c.h.b16 %v693
      %v2757 = vunpack.c.l.b16 %v694
      %v2758 = vunpack.c.h.b16 %v694
      %v2759 = vunpack.c.l.b16 %v695
      %v2760 = vunpack.c.h.b16 %v695
      %v2761 = vunpack.c.l.b16 %v696
      %v2762 = vunpack.c.h.b16 %v696
      %v2763 = vunpack.c.l.b16 %v697
      %v2764 = vunpack.c.h.b16 %v697
      %v2765 = vunpack.c.l.b16 %v698
      %v2766 = vunpack.c.h.b16 %v698
      %v2767 = vunpack.c.l.b16 %v699
      %v2768 = vunpack.c.h.b16 %v699
      %v2769 = vunpack.c.l.b16 %v700
      %v2770 = vunpack.c.h.b16 %v700
      %v2771 = vunpack.c.l.b16 %v701
      %v2772 = vunpack.c.h.b16 %v701
      %v2773 = vunpack.c.l.b16 %v702
      %v2774 = vunpack.c.h.b16 %v702
      %v2775 = vunpack.c.l.b16 %v703
      %v2776 = vunpack.c.l.b16 %v704
      %v2777 = vunpack.c.h.b16 %v704
      %v2778 = vunpack.c.l.b16 %v705
      %v2779 = vunpack.c.h.b16 %v705
      %v2780 = vunpack.c.l.b16 %v706
      %v2781 = vunpack.c.h.b16 %v706
      %v2782 = vunpack.c.l.b16 %v707
      %v2783 = vunpack.c.h.b16 %v707
      %v2784 = vunpack.c.l.b16 %v708
      %v2785 = vunpack.c.h.b16 %v708
      %v2786 = vunpack.c.l.b16 %v709
      %v2787 = vunpack.c.h.b16 %v709
      %v2788 = vunpack.c.l.b16 %v710
      %v2789 = vunpack.c.h.b16 %v710
      %v2790 = vunpack.c.l.b16 %v711
      %v2791 = vunpack.c.h.b16 %v711
      %v2792 = vunpack.c.l.b16 %v712
      %v2793 = vunpack.c.h.b16 %v712
      %v2794 = vunpack.c.l.b16 %v713
      %v2795 = vunpack.c.h.b16 %v713
      %v2796 = vunpack.c.l.b16 %v714
      %v2797 = vunpack.c.h.b16 %v714
      %v2798 = vunpack.c.l.b16 %v715
      %v2799 = vunpack.c.h.b16 %v715
      %v2800 = vunpack.c.l.b16 %v716
      %v2801 = vunpack.c.l.b16 %v717
      %v2802 = vunpack.c.h.b16 %v717
      %v2803 = vunpack.c.l.b16 %v718
      %v2804 = vunpack.c.h.b16 %v718
      %v2805 = vunpack.c.l.b16 %v719
      %v2806 = vunpack.c.h.b16 %v719
      %v2807 = vunpack.c.l.b16 %v720
      %v2808 = vunpack.c.h.b16 %v720
      %v2809 = vunpack.c.l.b16 %v721
      %v2810 = vunpack.c.h.b16 %v721
      %v2811 = vunpack.c.l.b16 %v722
      %v2812 = vunpack.c.h.b16 %v722
      %v2813 = vunpack.c.l.b16 %v723
      %v2814 = vunpack.c.h.b16 %v723
      %v2815 = vunpack.c.l.b16 %v724
      %v2816 = vunpack.c.h.b16 %v724
      %v2817 = vunpack.c.l.b16 %v725
      %v2818 = vunpack.c.h.b16 %v725
      %v2819 = vunpack.c.l.b16 %v726
      %v2820 = vunpack.c.h.b16 %v726
      %v2821 = vunpack.c.l.b16 %v727
      %v2822 = vunpack.c.h.b16 %v727
      %v2823 = vunpack.c.l.b16 %v728
      %v2824 = vunpack.c.h.b16 %v728
      %v2825 = vunpack.c.l.b16 %v729
      %v2826 = vunpack.c.l.b16 %v730
      %v2827 = vunpack.c.h.b16 %v730
      %v2828 = vunpack.c.l.b16 %v731
      %v2829 = vunpack.c.h.b16 %v731
      %v2830 = vunpack.c.l.b16 %v732
      %v2831 = vunpack.c.h.b16 %v732
      %v2832 = vunpack.c.l.b16 %v733
      %v2833 = vunpack.c.h.b16 %v733
      %v2834 = vunpack.c.l.b16 %v734
      %v2835 = vunpack.c.h.b16 %v734
      %v2836 = vunpack.c.l.b16 %v735
      %v2837 = vunpack.c.h.b16 %v735
      %v2838 = vunpack.c.l.b16 %v736
      %v2839 = vunpack.c.h.b16 %v736
      %v2840 = vunpack.c.l.b16 %v737
      %v2841 = vunpack.c.h.b16 %v737
      %v2842 = vunpack.c.l.b16 %v738
      %v2843 = vunpack.c.h.b16 %v738
      %v2844 = vunpack.c.l.b16 %v739
      %v2845 = vunpack.c.h.b16 %v739
      %v2846 = vunpack.c.l.b16 %v740
      %v2847 = vunpack.c.h.b16 %v740
      %v2848 = vunpack.c.l.b16 %v741
      %v2849 = vunpack.c.h.b16 %v741
      %v2850 = vunpack.c.l.b16 %v742
      %v2851 = vunpack.c.l.b16 %v743
      %v2852 = vunpack.c.h.b16 %v743
      %v2853 = vunpack.c.l.b16 %v744
      %v2854 = vunpack.c.h.b16 %v744
      %v2855 = vunpack.c.l.b16 %v745
      %v2856 = vunpack.c.h.b16 %v745
      %v2857 = vunpack.c.l.b16 %v746
      %v2858 = vunpack.c.h.b16 %v746
      %v2859 = vunpack.c.l.b16 %v747
      %v2860 = vunpack.c.h.b16 %v747
      %v2861 = vunpack.c.l.b16 %v748
      %v2862 = vunpack.c.h.b16 %v748
      %v2863 = vunpack.c.l.b16 %v749
      %v2864 = vunpack.c.h.b16 %v749
      %v2865 = vunpack.c.l.b16 %v750
      %v2866 = vunpack.c.h.b16 %v750
      %v2867 = vunpack.c.l.b16 %v751
      %v2868 = vunpack.c.h.b16 %v751
      %v2869 = vunpack.c.l.b16 %v752
      %v2870 = vunpack.c.h.b16 %v752
      %v2871 = vunpack.c.l.b16 %v753
      %v2872 = vunpack.c.h.b16 %v753
      %v2873 = vunpack.c.l.b16 %v754
      %v2874 = vunpack.c.h.b16 %v754
      %v2875 = vunpack.c.l.b16 %v755
      %v2876 = vunpack.c.l.b16 %v756
      %v2877 = vunpack.c.h.b16 %v756
      %v2878 = vunpack.c.l.b16 %v757
      %v2879 = vunpack.c.h.b16 %v757
      %v2880 = vunpack.c.l.b16 %v758
      %v2881 = vunpack.c.h.b16 %v758
      %v2882 = vunpack.c.l.b16 %v759
      %v2883 = vunpack.c.h.b16 %v759
      %v2884 = vunpack.c.l.b16 %v760
      %v2885 = vunpack.c.h.b16 %v760
      %v2886 = vunpack.c.l.b16 %v761
      %v2887 = vunpack.c.h.b16 %v761
      %v2888 = vunpack.c.l.b16 %v762
      %v2889 = vunpack.c.h.b16 %v762
      %v2890 = vunpack.c.l.b16 %v763
      %v2891 = vunpack.c.h.b16 %v763
      %v2892 = vunpack.c.l.b16 %v764
      %v2893 = vunpack.c.h.b16 %v764
      %v2894 = vunpack.c.l.b16 %v765
      %v2895 = vunpack.c.h.b16 %v765
      %v2896 = vunpack.c.l.b16 %v766
      %v2897 = vunpack.c.h.b16 %v766
      %v2898 = vunpack.c.l.b16 %v767
      %v2899 = vunpack.c.h.b16 %v767
      %v2900 = vunpack.c.l.b16 %v768
      %v2901 = vunpack.c.l.b16 %v769
      %v2902 = vunpack.c.h.b16 %v769
      %v2903 = vunpack.c.l.b16 %v770
      %v2904 = vunpack.c.h.b16 %v770
      %v2905 = vunpack.c.l.b16 %v771
      %v2906 = vunpack.c.h.b16 %v771
      %v2907 = vunpack.c.l.b16 %v772
      %v2908 = vunpack.c.h.b16 %v772
      %v2909 = vunpack.c.l.b16 %v773
      %v2910 = vunpack.c.h.b16 %v773
      %v2911 = vunpack.c.l.b16 %v774
      %v2912 = vunpack.c.h.b16 %v774
      %v2913 = vunpack.c.l.b16 %v775
      %v2914 = vunpack.c.h.b16 %v775
      %v2915 = vunpack.c.l.b16 %v776
      %v2916 = vunpack.c.h.b16 %v776
      %v2917 = vunpack.c.l.b16 %v777
      %v2918 = vunpack.c.h.b16 %v777
      %v2919 = vunpack.c.l.b16 %v778
      %v2920 = vunpack.c.h.b16 %v778
      %v2921 = vunpack.c.l.b16 %v779
      %v2922 = vunpack.c.h.b16 %v779
      %v2923 = vunpack.c.l.b16 %v780
      %v2924 = vunpack.c.h.b16 %v780
      %v2925 = vunpack.c.l.b16 %v781
      %v2926 = vunpack.c.l.b16 %v782
      %v2927 = vunpack.c.h.b16 %v782
      %v2928 = vunpack.c.l.b16 %v783
      %v2929 = vunpack.c.h.b16 %v783
      %v2930 = vunpack.c.l.b16 %v784
      %v2931 = vunpack.c.h.b16 %v784
      %v2932 = vunpack.c.l.b16 %v785
      %v2933 = vunpack.c.h.b16 %v785
      %v2934 = vunpack.c.l.b16 %v786
      %v2935 = vunpack.c.h.b16 %v786
      %v2936 = vunpack.c.l.b16 %v787
      %v2937 = vunpack.c.h.b16 %v787
      %v2938 = vunpack.c.l.b16 %v788
      %v2939 = vunpack.c.h.b16 %v788
      %v2940 = vunpack.c.l.b16 %v789
      %v2941 = vunpack.c.h.b16 %v789
      %v2942 = vunpack.c.l.b16 %v790
      %v2943 = vunpack.c.h.b16 %v790
      %v2944 = vunpack.c.l.b16 %v791
      %v2945 = vunpack.c.h.b16 %v791
      %v2946 = vunpack.c.l.b16 %v792
      %v2947 = vunpack.c.h.b16 %v792
      %v2948 = vunpack.c.l.b16 %v793
      %v2949 = vunpack.c.h.b16 %v793
      %v2950 = vunpack.c.l.b16 %v794
      %v2951 = vunpack.c.l.b16 %v795
      %v2952 = vunpack.c.h.b16 %v795
      %v2953 = vunpack.c.l.b16 %v796
      %v2954 = vunpack.c.h.b16 %v796
      %v2955 = vunpack.c.l.b16 %v797
      %v2956 = vunpack.c.h.b16 %v797
      %v2957 = vunpack.c.l.b16 %v798
      %v2958 = vunpack.c.h.b16 %v798
      %v2959 = vunpack.c.l.b16 %v799
      %v2960 = vunpack.c.h.b16 %v799
      %v2961 = vunpack.c.l.b16 %v800
      %v2962 = vunpack.c.h.b16 %v800
      %v2963 = vunpack.c.l.b16 %v801
      %v2964 = vunpack.c.h.b16 %v801
      %v2965 = vunpack.c.l.b16 %v802
      %v2966 = vunpack.c.h.b16 %v802
      %v2967 = vunpack.c.l.b16 %v803
      %v2968 = vunpack.c.h.b16 %v803
      %v2969 = vunpack.c.l.b16 %v804
      %v2970 = vunpack.c.h.b16 %v804
      %v2971 = vunpack.c.l.b16 %v805
      %v2972 = vunpack.c.h.b16 %v805
      %v2973 = vunpack.c.l.b16 %v806
      %v2974 = vunpack.c.h.b16 %v806
      %v2975 = vunpack.c.l.b16 %v807
      %v2976 = vunpack.c.l.b16 %v808
      %v2977 = vunpack.c.h.b16 %v808
      %v2978 = vunpack.c.l.b16 %v809
      %v2979 = vunpack.c.h.b16 %v809
      %v2980 = vunpack.c.l.b16 %v810
      %v2981 = vunpack.c.h.b16 %v810
      %v2982 = vunpack.c.l.b16 %v811
      %v2983 = vunpack.c.h.b16 %v811
      %v2984 = vunpack.c.l.b16 %v812
      %v2985 = vunpack.c.h.b16 %v812
      %v2986 = vunpack.c.l.b16 %v813
      %v2987 = vunpack.c.h.b16 %v813
      %v2988 = vunpack.c.l.b16 %v814
      %v2989 = vunpack.c.h.b16 %v814
      %v2990 = vunpack.c.l.b16 %v815
      %v2991 = vunpack.c.h.b16 %v815
      %v2992 = vunpack.c.l.b16 %v816
      %v2993 = vunpack.c.h.b16 %v816
      %v2994 = vunpack.c.l.b16 %v817
      %v2995 = vunpack.c.h.b16 %v817
      %v2996 = vunpack.c.l.b16 %v818
      %v2997 = vunpack.c.h.b16 %v818
      %v2998 = vunpack.c.l.b16 %v819
      %v2999 = vunpack.c.h.b16 %v819
      %v3000 = vunpack.c.l.b16 %v820
      %v3001 = vunpack.c.l.b16 %v821
      %v3002 = vunpack.c.h.b16 %v821
      %v3003 = vunpack.c.l.b16 %v822
      %v3004 = vunpack.c.h.b16 %v822
      %v3005 = vunpack.c.l.b16 %v823
      %v3006 = vunpack.c.h.b16 %v823
      %v3007 = vunpack.c.l.b16 %v824
      %v3008 = vunpack.c.h.b16 %v824
      %v3009 = vunpack.c.l.b16 %v825
      %v3010 = vunpack.c.h.b16 %v825
      %v3011 = vunpack.c.l.b16 %v826
      %v3012 = vunpack.c.h.b16 %v826
      %v3013 = vunpack.c.l.b16 %v827
      %v3014 = vunpack.c.h.b16 %v827
      %v3015 = vunpack.c.l.b16 %v828
      %v3016 = vunpack.c.h.b16 %v828
      %v3017 = vunpack.c.l.b16 %v829
      %v3018 = vunpack.c.h.b16 %v829
      %v3019 = vunpack.c.l.b16 %v830
      %v3020 = vunpack.c.h.b16 %v830
      %v3021 = vunpack.c.l.b16 %v831
      %v3022 = vunpack.c.h.b16 %v831
      %v3023 = vunpack.c.l.b16 %v832
      %v3024 = vunpack.c.h.b16 %v832
      %v3025 = vunpack.c.l.b16 %v833
      %v3026 = vunpack.c.l.b16 %v834
      %v3027 = vunpack.c.h.b16 %v834
      %v3028 = vunpack.c.l.b16 %v835
      %v3029 = vunpack.c.h.b16 %v835
      %v3030 = vunpack.c.l.b16 %v836
      %v3031 = vunpack.c.h.b16 %v836
      %v3032 = vunpack.c.l.b16 %v837
      %v3033 = vunpack.c.h.b16 %v837
      %v3034 = vunpack.c.l.b16 %v838
      %v3035 = vunpack.c.h.b16 %v838
      %v3036 = vunpack.c.l.b16 %v839
      %v3037 = vunpack.c.h.b16 %v839
      %v3038 = vunpack.c.l.b16 %v840
      %v3039 = vunpack.c.h.b16 %v840
      %v3040 = vunpack.c.l.b16 %v841
      %v3041 = vunpack.c.h.b16 %v841
      %v3042 = vunpack.c.l.b16 %v842
      %v3043 = vunpack.c.h.b16 %v842
      %v3044 = vunpack.c.l.b16 %v843
      %v3045 = vunpack.c.h.b16 %v843
      %v3046 = vunpack.c.l.b16 %v844
      %v3047 = vunpack.c.h.b16 %v844
      %v3048 = vunpack.c.l.b16 %v845
      %v3049 = vunpack.c.h.b16 %v845
      %v3050 = vunpack.c.l.b16 %v846
      %v3051 = vunpack.c.l.b16 %v847
      %v3052 = vunpack.c.h.b16 %v847
      %v3053 = vunpack.c.l.b16 %v848
      %v3054 = vunpack.c.h.b16 %v848
      %v3055 = vunpack.c.l.b16 %v849
      %v3056 = vunpack.c.h.b16 %v849
      %v3057 = vunpack.c.l.b16 %v850
      %v3058 = vunpack.c.h.b16 %v850
      %v3059 = vunpack.c.l.b16 %v851
      %v3060 = vunpack.c.h.b16 %v851
      %v3061 = vunpack.c.l.b16 %v852
      %v3062 = vunpack.c.h.b16 %v852
      %v3063 = vunpack.c.l.b16 %v853
      %v3064 = vunpack.c.h.b16 %v853
      %v3065 = vunpack.c.l.b16 %v854
      %v3066 = vunpack.c.h.b16 %v854
      %v3067 = vunpack.c.l.b16 %v855
      %v3068 = vunpack.c.h.b16 %v855
      %v3069 = vunpack.c.l.b16 %v856
      %v3070 = vunpack.c.h.b16 %v856
      %v3071 = vunpack.c.l.b16 %v857
      %v3072 = vunpack.c.h.b16 %v857
      %v3073 = vunpack.c.l.b16 %v858
      %v3074 = vunpack.c.h.b16 %v858
      %v3075 = vunpack.c.l.b16 %v859
      %v3076 = vunpack.c.l.b16 %v860
      %v3077 = vunpack.c.h.b16 %v860
      %v3078 = vunpack.c.l.b16 %v861
      %v3079 = vunpack.c.h.b16 %v861
      %v3080 = vunpack.c.l.b16 %v862
      %v3081 = vunpack.c.h.b16 %v862
      %v3082 = vunpack.c.l.b16 %v863
      %v3083 = vunpack.c.h.b16 %v863
      %v3084 = vunpack.c.l.b16 %v864
      %v3085 = vunpack.c.h.b16 %v864
      %v3086 = vunpack.c.l.b16 %v865
      %v3087 = vunpack.c.h.b16 %v865
      %v3088 = vunpack.c.l.b16 %v866
      %v3089 = vunpack.c.h.b16 %v866
      %v3090 = vunpack.c.l.b16 %v867
      %v3091 = vunpack.c.h.b16 %v867
      %v3092 = vunpack.c.l.b16 %v868
      %v3093 = vunpack.c.h.b16 %v868
      %v3094 = vunpack.c.l.b16 %v869
      %v3095 = vunpack.c.h.b16 %v869
      %v3096 = vunpack.c.l.b16 %v870
      %v3097 = vunpack.c.h.b16 %v870
      %v3098 = vunpack.c.l.b16 %v871
      %v3099 = vunpack.c.h.b16 %v871
      %v3100 = vunpack.c.l.b16 %v872
      %v3101 = vunpack.c.l.b16 %v873
      %v3102 = vunpack.c.h.b16 %v873
      %v3103 = vunpack.c.l.b16 %v874
      %v3104 = vunpack.c.h.b16 %v874
      %v3105 = vunpack.c.l.b16 %v875
      %v3106 = vunpack.c.h.b16 %v875
      %v3107 = vunpack.c.l.b16 %v876
      %v3108 = vunpack.c.h.b16 %v876
      %v3109 = vunpack.c.l.b16 %v877
      %v3110 = vunpack.c.h.b16 %v877
      %v3111 = vunpack.c.l.b16 %v878
      %v3112 = vunpack.c.h.b16 %v878
      %v3113 = vunpack.c.l.b16 %v879
      %v3114 = vunpack.c.h.b16 %v879
      %v3115 = vunpack.c.l.b16 %v880
      %v3116 = vunpack.c.h.b16 %v880
      %v3117 = vunpack.c.l.b16 %v881
      %v3118 = vunpack.c.h.b16 %v881
      %v3119 = vunpack.c.l.b16 %v882
      %v3120 = vunpack.c.h.b16 %v882
      %v3121 = vunpack.c.l.b16 %v883
      %v3122 = vunpack.c.h.b16 %v883
      %v3123 = vunpack.c.l.b16 %v884
      %v3124 = vunpack.c.h.b16 %v884
      %v3125 = vunpack.c.l.b16 %v885
      %v3126 = vunpack.c.l.b16 %v886
      %v3127 = vunpack.c.h.b16 %v886
      %v3128 = vunpack.c.l.b16 %v887
      %v3129 = vunpack.c.h.b16 %v887
      %v3130 = vunpack.c.l.b16 %v888
      %v3131 = vunpack.c.h.b16 %v888
      %v3132 = vunpack.c.l.b16 %v889
      %v3133 = vunpack.c.h.b16 %v889
      %v3134 = vunpack.c.l.b16 %v890
      %v3135 = vunpack.c.h.b16 %v890
      %v3136 = vunpack.c.l.b16 %v891
      %v3137 = vunpack.c.h.b16 %v891
      %v3138 = vunpack.c.l.b16 %v892
      %v3139 = vunpack.c.h.b16 %v892
      %v3140 = vunpack.c.l.b16 %v893
      %v3141 = vunpack.c.h.b16 %v893
      %v3142 = vunpack.c.l.b16 %v894
      %v3143 = vunpack.c.h.b16 %v894
      %v3144 = vunpack.c.l.b16 %v895
      %v3145 = vunpack.c.h.b16 %v895
      %v3146 = vunpack.c.l.b16 %v896
      %v3147 = vunpack.c.h.b16 %v896
      %v3148 = vunpack.c.l.b16 %v897
      %v3149 = vunpack.c.h.b16 %v897
      %v3150 = vunpack.c.l.b16 %v898
      %v3151 = vunpack.c.l.b16 %v899
      %v3152 = vunpack.c.h.b16 %v899
      %v3153 = vunpack.c.l.b16 %v900
      %v3154 = vunpack.c.h.b16 %v900
      %v3155 = vunpack.c.l.b16 %v901
      %v3156 = vunpack.c.h.b16 %v901
      %v3157 = vunpack.c.l.b16 %v902
      %v3158 = vunpack.c.h.b16 %v902
      %v3159 = vunpack.c.l.b16 %v903
      %v3160 = vunpack.c.h.b16 %v903
      %v3161 = vunpack.c.l.b16 %v904
      %v3162 = vunpack.c.h.b16 %v904
      %v3163 = vunpack.c.l.b16 %v905
      %v3164 = vunpack.c.h.b16 %v905
      %v3165 = vunpack.c.l.b16 %v906
      %v3166 = vunpack.c.h.b16 %v906
      %v3167 = vunpack.c.l.b16 %v907
      %v3168 = vunpack.c.h.b16 %v907
      %v3169 = vunpack.c.l.b16 %v908
      %v3170 = vunpack.c.h.b16 %v908
      %v3171 = vunpack.c.l.b16 %v909
      %v3172 = vunpack.c.h.b16 %v909
      %v3173 = vunpack.c.l.b16 %v910
      %v3174 = vunpack.c.h.b16 %v910
      %v3175 = vunpack.c.l.b16 %v911
      %v3176 = vunpack.c.l.b16 %v912
      %v3177 = vunpack.c.h.b16 %v912
      %v3178 = vunpack.c.l.b16 %v913
      %v3179 = vunpack.c.h.b16 %v913
      %v3180 = vunpack.c.l.b16 %v914
      %v3181 = vunpack.c.h.b16 %v914
      %v3182 = vunpack.c.l.b16 %v915
      %v3183 = vunpack.c.h.b16 %v915
      %v3184 = vunpack.c.l.b16 %v916
      %v3185 = vunpack.c.h.b16 %v916
      %v3186 = vunpack.c.l.b16 %v917
      %v3187 = vunpack.c.h.b16 %v917
      %v3188 = vunpack.c.l.b16 %v918
      %v3189 = vunpack.c.h.b16 %v918
      %v3190 = vunpack.c.l.b16 %v919
      %v3191 = vunpack.c.h.b16 %v919
      %v3192 = vunpack.c.l.b16 %v920
      %v3193 = vunpack.c.h.b16 %v920
      %v3194 = vunpack.c.l.b16 %v921
      %v3195 = vunpack.c.h.b16 %v921
      %v3196 = vunpack.c.l.b16 %v922
      %v3197 = vunpack.c.h.b16 %v922
      %v3198 = vunpack.c.l.b16 %v923
      %v3199 = vunpack.c.h.b16 %v923
      %v3200 = vunpack.c.l.b16 %v924
      %v3201 = vunpack.c.l.b16 %v925
      %v3202 = vunpack.c.h.b16 %v925
      %v3203 = vunpack.c.l.b16 %v926
      %v3204 = vunpack.c.h.b16 %v926
      %v3205 = vunpack.c.l.b16 %v927
      %v3206 = vunpack.c.h.b16 %v927
      %v3207 = vunpack.c.l.b16 %v928
      %v3208 = vunpack.c.h.b16 %v928
      %v3209 = vunpack.c.l.b16 %v929
      %v3210 = vunpack.c.h.b16 %v929
      %v3211 = vunpack.c.l.b16 %v930
      %v3212 = vunpack.c.h.b16 %v930
      %v3213 = vunpack.c.l.b16 %v931
      %v3214 = vunpack.c.h.b16 %v931
      %v3215 = vunpack.c.l.b16 %v932
      %v3216 = vunpack.c.h.b16 %v932
      %v3217 = vunpack.c.l.b16 %v933
      %v3218 = vunpack.c.h.b16 %v933
      %v3219 = vunpack.c.l.b16 %v934
      %v3220 = vunpack.c.h.b16 %v934
      %v3221 = vunpack.c.l.b16 %v935
      %v3222 = vunpack.c.h.b16 %v935
      %v3223 = vunpack.c.l.b16 %v936
      %v3224 = vunpack.c.h.b16 %v936
      %v3225 = vunpack.c.l.b16 %v937
      %v3226 = vunpack.c.l.b16 %v938
      %v3227 = vunpack.c.h.b16 %v938
      %v3228 = vunpack.c.l.b16 %v939
      %v3229 = vunpack.c.h.b16 %v939
      %v3230 = vunpack.c.l.b16 %v940
      %v3231 = vunpack.c.h.b16 %v940
      %v3232 = vunpack.c.l.b16 %v941
      %v3233 = vunpack.c.h.b16 %v941
      %v3234 = vunpack.c.l.b16 %v942
      %v3235 = vunpack.c.h.b16 %v942
      %v3236 = vunpack.c.l.b16 %v943
      %v3237 = vunpack.c.h.b16 %v943
      %v3238 = vunpack.c.l.b16 %v944
      %v3239 = vunpack.c.h.b16 %v944
      %v3240 = vunpack.c.l.b16 %v945
      %v3241 = vunpack.c.h.b16 %v945
      %v3242 = vunpack.c.l.b16 %v946
      %v3243 = vunpack.c.h.b16 %v946
      %v3244 = vunpack.c.l.b16 %v947
      %v3245 = vunpack.c.h.b16 %v947
      %v3246 = vunpack.c.l.b16 %v948
      %v3247 = vunpack.c.h.b16 %v948
      %v3248 = vunpack.c.l.b16 %v949
      %v3249 = vunpack.c.h.b16 %v949
      %v3250 = vunpack.c.l.b16 %v950
      %v3251 = vunpack.c.l.b16 %v951
      %v3252 = vunpack.c.h.b16 %v951
      %v3253 = vunpack.c.l.b16 %v952
      %v3254 = vunpack.c.h.b16 %v952
      %v3255 = vunpack.c.l.b16 %v953
      %v3256 = vunpack.c.h.b16 %v953
      %v3257 = vunpack.c.l.b16 %v954
      %v3258 = vunpack.c.h.b16 %v954
      %v3259 = vunpack.c.l.b16 %v955
      %v3260 = vunpack.c.h.b16 %v955
      %v3261 = vunpack.c.l.b16 %v956
      %v3262 = vunpack.c.h.b16 %v956
      %v3263 = vunpack.c.l.b16 %v957
      %v3264 = vunpack.c.h.b16 %v957
      %v3265 = vunpack.c.l.b16 %v958
      %v3266 = vunpack.c.h.b16 %v958
      %v3267 = vunpack.c.l.b16 %v959
      %v3268 = vunpack.c.h.b16 %v959
      %v3269 = vunpack.c.l.b16 %v960
      %v3270 = vunpack.c.h.b16 %v960
      %v3271 = vunpack.c.l.b16 %v961
      %v3272 = vunpack.c.h.b16 %v961
      %v3273 = vunpack.c.l.b16 %v962
      %v3274 = vunpack.c.h.b16 %v962
      %v3275 = vunpack.c.l.b16 %v963
      %v3276 = vunpack.c.l.b16 %v964
      %v3277 = vunpack.c.h.b16 %v964
      %v3278 = vunpack.c.l.b16 %v965
      %v3279 = vunpack.c.h.b16 %v965
      %v3280 = vunpack.c.l.b16 %v966
      %v3281 = vunpack.c.h.b16 %v966
      %v3282 = vunpack.c.l.b16 %v967
      %v3283 = vunpack.c.h.b16 %v967
      %v3284 = vunpack.c.l.b16 %v968
      %v3285 = vunpack.c.h.b16 %v968
      %v3286 = vunpack.c.l.b16 %v969
      %v3287 = vunpack.c.h.b16 %v969
      %v3288 = vunpack.c.l.b16 %v970
      %v3289 = vunpack.c.h.b16 %v970
      %v3290 = vunpack.c.l.b16 %v971
      %v3291 = vunpack.c.h.b16 %v971
      %v3292 = vunpack.c.l.b16 %v972
      %v3293 = vunpack.c.h.b16 %v972
      %v3294 = vunpack.c.l.b16 %v973
      %v3295 = vunpack.c.h.b16 %v973
      %v3296 = vunpack.c.l.b16 %v974
      %v3297 = vunpack.c.h.b16 %v974
      %v3298 = vunpack.c.l.b16 %v975
      %v3299 = vunpack.c.h.b16 %v975
      %v3300 = vunpack.c.l.b16 %v976
      %v3301 = vunpack.c.l.b16 %v977
      %v3302 = vunpack.c.h.b16 %v977
      %v3303 = vunpack.c.l.b16 %v978
      %v3304 = vunpack.c.h.b16 %v978
      %v3305 = vunpack.c.l.b16 %v979
      %v3306 = vunpack.c.h.b16 %v979
      %v3307 = vunpack.c.l.b16 %v980
      %v3308 = vunpack.c.h.b16 %v980
      %v3309 = vunpack.c.l.b16 %v981
      %v3310 = vunpack.c.h.b16 %v981
      %v3311 = vunpack.c.l.b16 %v982
      %v3312 = vunpack.c.h.b16 %v982
      %v3313 = vunpack.c.l.b16 %v983
      %v3314 = vunpack.c.h.b16 %v983
      %v3315 = vunpack.c.l.b16 %v984
      %v3316 = vunpack.c.h.b16 %v984
      %v3317 = vunpack.c.l.b16 %v985
      %v3318 = vunpack.c.h.b16 %v985
      %v3319 = vunpack.c.l.b16 %v986
      %v3320 = vunpack.c.h.b16 %v986
      %v3321 = vunpack.c.l.b16 %v987
      %v3322 = vunpack.c.h.b16 %v987
      %v3323 = vunpack.c.l.b16 %v988
      %v3324 = vunpack.c.h.b16 %v988
      %v3325 = vunpack.c.l.b16 %v989
      %v3326 = vunpack.c.l.b16 %v990
      %v3327 = vunpack.c.h.b16 %v990
      %v3328 = vunpack.c.l.b16 %v991
      %v3329 = vunpack.c.h.b16 %v991
      %v3330 = vunpack.c.l.b16 %v992
      %v3331 = vunpack.c.h.b16 %v992
      %v3332 = vunpack.c.l.b16 %v993
      %v3333 = vunpack.c.h.b16 %v993
      %v3334 = vunpack.c.l.b16 %v994
      %v3335 = vunpack.c.h.b16 %v994
      %v3336 = vunpack.c.l.b16 %v995
      %v3337 = vunpack.c.h.b16 %v995
      %v3338 = vunpack.c.l.b16 %v996
      %v3339 = vunpack.c.h.b16 %v996
      %v3340 = vunpack.c.l.b16 %v997
      %v3341 = vunpack.c.h.b16 %v997
      %v3342 = vunpack.c.l.b16 %v998
      %v3343 = vunpack.c.h.b16 %v998
      %v3344 = vunpack.c.l.b16 %v999
      %v3345 = vunpack.c.h.b16 %v999
      %v3346 = vunpack.c.l.b16 %v1000
      %v3347 = vunpack.c.h.b16 %v1000
      %v3348 = vunpack.c.l.b16 %v1001
      %v3349 = vunpack.c.h.b16 %v1001
      %v3350 = vunpack.c.l.b16 %v1002
      %v3351 = vunpack.c.l.b16 %v1003
      %v3352 = vunpack.c.h.b16 %v1003
      %v3353 = vunpack.c.l.b16 %v1004
      %v3354 = vunpack.c.h.b16 %v1004
      %v3355 = vunpack.c.l.b16 %v1005
      %v3356 = vunpack.c.h.b16 %v1005
      %v3357 = vunpack.c.l.b16 %v1006
      %v3358 = vunpack.c.h.b16 %v1006
      %v3359 = vunpack.c.l.b16 %v1007
      %v3360 = vunpack.c.h.b16 %v1007
      %v3361 = vunpack.c.l.b16 %v1008
      %v3362 = vunpack.c.h.b16 %v1008
      %v3363 = vunpack.c.l.b16 %v1009
      %v3364 = vunpack.c.h.b16 %v1009
      %v3365 = vunpack.c.l.b16 %v1010
      %v3366 = vunpack.c.h.b16 %v1010
      %v3367 = vunpack.c.l.b16 %v1011
      %v3368 = vunpack.c.h.b16 %v1011
      %v3369 = vunpack.c.l.b16 %v1012
      %v3370 = vunpack.c.h.b16 %v1012
      %v3371 = vunpack.c.l.b16 %v1013
      %v3372 = vunpack.c.h.b16 %v1013
      %v3373 = vunpack.c.l.b16 %v1014
      %v3374 = vunpack.c.h.b16 %v1014
      %v3375 = vunpack.c.l.b16 %v1015
      %v3376 = vunpack.c.l.b16 %v1016
      %v3377 = vunpack.c.h.b16 %v1016
      %v3378 = vunpack.c.l.b16 %v1017
      %v3379 = vunpack.c.h.b16 %v1017
      %v3380 = vunpack.c.l.b16 %v1018
      %v3381 = vunpack.c.h.b16 %v1018
      %v3382 = vunpack.c.l.b16 %v1019
      %v3383 = vunpack.c.h.b16 %v1019
      %v3384 = vunpack.c.l.b16 %v1020
      %v3385 = vunpack.c.h.b16 %v1020
      %v3386 = vunpack.c.l.b16 %v1021
      %v3387 = vunpack.c.h.b16 %v1021
      %v3388 = vunpack.c.l.b16 %v1022
      %v3389 = vunpack.c.h.b16 %v1022
      %v3390 = vunpack.c.l.b16 %v1023
      %v3391 = vunpack.c.h.b16 %v1023
      %v3392 = vunpack.c.l.b16 %v1024
      %v3393 = vunpack.c.h.b16 %v1024
      %v3394 = vunpack.c.l.b16 %v1025
      %v3395 = vunpack.c.h.b16 %v1025
      %v3396 = vunpack.c.l.b16 %v1026
      %v3397 = vunpack.c.h.b16 %v1026
      %v3398 = vunpack.c.l.b16 %v1027
      %v3399 = vunpack.c.h.b16 %v1027
      %v3400 = vunpack.c.l.b16 %v1028
      %v3401 = vunpack.c.l.b16 %v1029
      %v3402 = vunpack.c.h.b16 %v1029
      %v3403 = vunpack.c.l.b16 %v1030
      %v3404 = vunpack.c.h.b16 %v1030
      %v3405 = vunpack.c.l.b16 %v1031
      %v3406 = vunpack.c.h.b16 %v1031
      %v3407 = vunpack.c.l.b16 %v1032
      %v3408 = vunpack.c.h.b16 %v1032
      %v3409 = vunpack.c.l.b16 %v1033
      %v3410 = vunpack.c.h.b16 %v1033
      %v3411 = vunpack.c.l.b16 %v1034
      %v3412 = vunpack.c.h.b16 %v1034
      %v3413 = vunpack.c.l.b16 %v1035
      %v3414 = vunpack.c.h.b16 %v1035
      %v3415 = vunpack.c.l.b16 %v1036
      %v3416 = vunpack.c.h.b16 %v1036
      %v3417 = vunpack.c.l.b16 %v1037
      %v3418 = vunpack.c.h.b16 %v1037
      %v3419 = vunpack.c.l.b16 %v1038
      %v3420 = vunpack.c.h.b16 %v1038
      %v3421 = vunpack.c.l.b16 %v1039
      %v3422 = vunpack.c.h.b16 %v1039
      %v3423 = vunpack.c.l.b16 %v1040
      %v3424 = vunpack.c.h.b16 %v1040
      %v3425 = vunpack.c.l.b16 %v1041
      %v3426 = vunpack.c.l.b16 %v1042
      %v3427 = vunpack.c.h.b16 %v1042
      %v3428 = vunpack.c.l.b16 %v1043
      %v3429 = vunpack.c.h.b16 %v1043
      %v3430 = vunpack.c.l.b16 %v1044
      %v3431 = vunpack.c.h.b16 %v1044
      %v3432 = vunpack.c.l.b16 %v1045
      %v3433 = vunpack.c.h.b16 %v1045
      %v3434 = vunpack.c.l.b16 %v1046
      %v3435 = vunpack.c.h.b16 %v1046
      %v3436 = vunpack.c.l.b16 %v1047
      %v3437 = vunpack.c.h.b16 %v1047
      %v3438 = vunpack.c.l.b16 %v1048
      %v3439 = vunpack.c.h.b16 %v1048
      %v3440 = vunpack.c.l.b16 %v1049
      %v3441 = vunpack.c.h.b16 %v1049
      %v3442 = vunpack.c.l.b16 %v1050
      %v3443 = vunpack.c.h.b16 %v1050
      %v3444 = vunpack.c.l.b16 %v1051
      %v3445 = vunpack.c.h.b16 %v1051
      %v3446 = vunpack.c.l.b16 %v1052
      %v3447 = vunpack.c.h.b16 %v1052
      %v3448 = vunpack.c.l.b16 %v1053
      %v3449 = vunpack.c.h.b16 %v1053
      %v3450 = vunpack.c.l.b16 %v1054
      %v3451 = vunpack.c.l.b16 %v1055
      %v3452 = vunpack.c.h.b16 %v1055
      %v3453 = vunpack.c.l.b16 %v1056
      %v3454 = vunpack.c.h.b16 %v1056
      %v3455 = vunpack.c.l.b16 %v1057
      %v3456 = vunpack.c.h.b16 %v1057
      %v3457 = vunpack.c.l.b16 %v1058
      %v3458 = vunpack.c.h.b16 %v1058
      %v3459 = vunpack.c.l.b16 %v1059
      %v3460 = vunpack.c.h.b16 %v1059
      %v3461 = vunpack.c.l.b16 %v1060
      %v3462 = vunpack.c.h.b16 %v1060
      %v3463 = vunpack.c.l.b16 %v1061
      %v3464 = vunpack.c.h.b16 %v1061
      %v3465 = vunpack.c.l.b16 %v1062
      %v3466 = vunpack.c.h.b16 %v1062
      %v3467 = vunpack.c.l.b16 %v1063
      %v3468 = vunpack.c.h.b16 %v1063
      %v3469 = vunpack.c.l.b16 %v1064
      %v3470 = vunpack.c.h.b16 %v1064
      %v3471 = vunpack.c.l.b16 %v1065
      %v3472 = vunpack.c.h.b16 %v1065
      %v3473 = vunpack.c.l.b16 %v1066
      %v3474 = vunpack.c.h.b16 %v1066
      %v3475 = vunpack.c.l.b16 %v1067
      %v3476 = vunpack.c.l.b16 %v1068
      %v3477 = vunpack.c.h.b16 %v1068
      %v3478 = vunpack.c.l.b16 %v1069
      %v3479 = vunpack.c.h.b16 %v1069
      %v3480 = vunpack.c.l.b16 %v1070
      %v3481 = vunpack.c.h.b16 %v1070
      %v3482 = vunpack.c.l.b16 %v1071
      %v3483 = vunpack.c.h.b16 %v1071
      %v3484 = vunpack.c.l.b16 %v1072
      %v3485 = vunpack.c.h.b16 %v1072
      %v3486 = vunpack.c.l.b16 %v1073
      %v3487 = vunpack.c.h.b16 %v1073
      %v3488 = vunpack.c.l.b16 %v1074
      %v3489 = vunpack.c.h.b16 %v1074
      %v3490 = vunpack.c.l.b16 %v1075
      %v3491 = vunpack.c.h.b16 %v1075
      %v3492 = vunpack.c.l.b16 %v1076
      %v3493 = vunpack.c.h.b16 %v1076
      %v3494 = vunpack.c.l.b16 %v1077
      %v3495 = vunpack.c.h.b16 %v1077
      %v3496 = vunpack.c.l.b16 %v1078
      %v3497 = vunpack.c.h.b16 %v1078
      %v3498 = vunpack.c.l.b16 %v1079
      %v3499 = vunpack.c.h.b16 %v1079
      %v3500 = vunpack.c.l.b16 %v1080
      %v3501 = vunpack.c.l.b16 %v1081
      %v3502 = vunpack.c.h.b16 %v1081
      %v3503 = vunpack.c.l.b16 %v1082
      %v3504 = vunpack.c.h.b16 %v1082
      %v3505 = vunpack.c.l.b16 %v1083
      %v3506 = vunpack.c.h.b16 %v1083
      %v3507 = vunpack.c.l.b16 %v1084
      %v3508 = vunpack.c.h.b16 %v1084
      %v3509 = vunpack.c.l.b16 %v1085
      %v3510 = vunpack.c.h.b16 %v1085
      %v3511 = vunpack.c.l.b16 %v1086
      %v3512 = vunpack.c.h.b16 %v1086
      %v3513 = vunpack.c.l.b16 %v1087
      %v3514 = vunpack.c.h.b16 %v1087
      %v3515 = vunpack.c.l.b16 %v1088
      %v3516 = vunpack.c.h.b16 %v1088
      %v3517 = vunpack.c.l.b16 %v1089
      %v3518 = vunpack.c.h.b16 %v1089
      %v3519 = vunpack.c.l.b16 %v1090
      %v3520 = vunpack.c.h.b16 %v1090
      %v3521 = vunpack.c.l.b16 %v1091
      %v3522 = vunpack.c.h.b16 %v1091
      %v3523 = vunpack.c.l.b16 %v1092
      %v3524 = vunpack.c.h.b16 %v1092
      %v3525 = vunpack.c.l.b16 %v1093
      %v3526 = vunpack.c.l.b16 %v1094
      %v3527 = vunpack.c.h.b16 %v1094
      %v3528 = vunpack.c.l.b16 %v1095
      %v3529 = vunpack.c.h.b16 %v1095
      %v3530 = vunpack.c.l.b16 %v1096
      %v3531 = vunpack.c.h.b16 %v1096
      %v3532 = vunpack.c.l.b16 %v1097
      %v3533 = vunpack.c.h.b16 %v1097
      %v3534 = vunpack.c.l.b16 %v1098
      %v3535 = vunpack.c.h.b16 %v1098
      %v3536 = vunpack.c.l.b16 %v1099
      %v3537 = vunpack.c.h.b16 %v1099
      %v3538 = vunpack.c.l.b16 %v1100
      %v3539 = vunpack.c.h.b16 %v1100
      %v3540 = vunpack.c.l.b16 %v1101
      %v3541 = vunpack.c.h.b16 %v1101
      %v3542 = vunpack.c.l.b16 %v1102
      %v3543 = vunpack.c.h.b16 %v1102
      %v3544 = vunpack.c.l.b16 %v1103
      %v3545 = vunpack.c.h.b16 %v1103
      %v3546 = vunpack.c.l.b16 %v1104
      %v3547 = vunpack.c.h.b16 %v1104
      %v3548 = vunpack.c.l.b16 %v1105
      %v3549 = vunpack.c.h.b16 %v1105
      %v3550 = vunpack.c.l.b16 %v1106
      %v3551 = vunpack.c.l.b16 %v1107
      %v3552 = vunpack.c.h.b16 %v1107
      %v3553 = vunpack.c.l.b16 %v1108
      %v3554 = vunpack.c.h.b16 %v1108
      %v3555 = vunpack.c.l.b16 %v1109
      %v3556 = vunpack.c.h.b16 %v1109
      %v3557 = vunpack.c.l.b16 %v1110
      %v3558 = vunpack.c.h.b16 %v1110
      %v3559 = vunpack.c.l.b16 %v1111
      %v3560 = vunpack.c.h.b16 %v1111
      %v3561 = vunpack.c.l.b16 %v1112
      %v3562 = vunpack.c.h.b16 %v1112
      %v3563 = vunpack.c.l.b16 %v1113
      %v3564 = vunpack.c.h.b16 %v1113
      %v3565 = vunpack.c.l.b16 %v1114
      %v3566 = vunpack.c.h.b16 %v1114
      %v3567 = vunpack.c.l.b16 %v1115
      %v3568 = vunpack.c.h.b16 %v1115
      %v3569 = vunpack.c.l.b16 %v1116
      %v3570 = vunpack.c.h.b16 %v1116
      %v3571 = vunpack.c.l.b16 %v1117
      %v3572 = vunpack.c.h.b16 %v1117
      %v3573 = vunpack.c.l.b16 %v1118
      %v3574 = vunpack.c.h.b16 %v1118
      %v3575 = vunpack.c.l.b16 %v1119
      %v3576 = vunpack.c.l.b16 %v1120
      %v3577 = vunpack.c.h.b16 %v1120
      %v3578 = vunpack.c.l.b16 %v1121
      %v3579 = vunpack.c.h.b16 %v1121
      %v3580 = vunpack.c.l.b16 %v1122
      %v3581 = vunpack.c.h.b16 %v1122
      %v3582 = vunpack.c.l.b16 %v1123
      %v3583 = vunpack.c.h.b16 %v1123
      %v3584 = vunpack.c.l.b16 %v1124
      %v3585 = vunpack.c.h.b16 %v1124
      %v3586 = vunpack.c.l.b16 %v1125
      %v3587 = vunpack.c.h.b16 %v1125
      %v3588 = vunpack.c.l.b16 %v1126
      %v3589 = vunpack.c.h.b16 %v1126
      %v3590 = vunpack.c.l.b16 %v1127
      %v3591 = vunpack.c.h.b16 %v1127
      %v3592 = vunpack.c.l.b16 %v1128
      %v3593 = vunpack.c.h.b16 %v1128
      %v3594 = vunpack.c.l.b16 %v1129
      %v3595 = vunpack.c.h.b16 %v1129
      %v3596 = vunpack.c.l.b16 %v1130
      %v3597 = vunpack.c.h.b16 %v1130
      %v3598 = vunpack.c.l.b16 %v1131
      %v3599 = vunpack.c.h.b16 %v1131
      %v3600 = vunpack.c.l.b16 %v1132
      %v3601 = vunpack.c.l.b16 %v1133
      %v3602 = vunpack.c.h.b16 %v1133
      %v3603 = vunpack.c.l.b16 %v1134
      %v3604 = vunpack.c.h.b16 %v1134
      %v3605 = vunpack.c.l.b16 %v1135
      %v3606 = vunpack.c.h.b16 %v1135
      %v3607 = vunpack.c.l.b16 %v1136
      %v3608 = vunpack.c.h.b16 %v1136
      %v3609 = vunpack.c.l.b16 %v1137
      %v3610 = vunpack.c.h.b16 %v1137
      %v3611 = vunpack.c.l.b16 %v1138
      %v3612 = vunpack.c.h.b16 %v1138
      %v3613 = vunpack.c.l.b16 %v1139
      %v3614 = vunpack.c.h.b16 %v1139
      %v3615 = vunpack.c.l.b16 %v1140
      %v3616 = vunpack.c.h.b16 %v1140
      %v3617 = vunpack.c.l.b16 %v1141
      %v3618 = vunpack.c.h.b16 %v1141
      %v3619 = vunpack.c.l.b16 %v1142
      %v3620 = vunpack.c.h.b16 %v1142
      %v3621 = vunpack.c.l.b16 %v1143
      %v3622 = vunpack.c.h.b16 %v1143
      %v3623 = vunpack.c.l.b16 %v1144
      %v3624 = vunpack.c.h.b16 %v1144
      %v3625 = vunpack.c.l.b16 %v1145
      %v3626 = vunpack.c.l.b16 %v1146
      %v3627 = vunpack.c.h.b16 %v1146
      %v3628 = vunpack.c.l.b16 %v1147
      %v3629 = vunpack.c.h.b16 %v1147
      %v3630 = vunpack.c.l.b16 %v1148
      %v3631 = vunpack.c.h.b16 %v1148
      %v3632 = vunpack.c.l.b16 %v1149
      %v3633 = vunpack.c.h.b16 %v1149
      %v3634 = vunpack.c.l.b16 %v1150
      %v3635 = vunpack.c.h.b16 %v1150
      %v3636 = vunpack.c.l.b16 %v1151
      %v3637 = vunpack.c.h.b16 %v1151
      %v3638 = vunpack.c.l.b16 %v1152
      %v3639 = vunpack.c.h.b16 %v1152
      %v3640 = vunpack.c.l.b16 %v1153
      %v3641 = vunpack.c.h.b16 %v1153
      %v3642 = vunpack.c.l.b16 %v1154
      %v3643 = vunpack.c.h.b16 %v1154
      %v3644 = vunpack.c.l.b16 %v1155
      %v3645 = vunpack.c.h.b16 %v1155
      %v3646 = vunpack.c.l.b16 %v1156
      %v3647 = vunpack.c.h.b16 %v1156
      %v3648 = vunpack.c.l.b16 %v1157
      %v3649 = vunpack.c.h.b16 %v1157
      %v3650 = vunpack.c.l.b16 %v1158
      %v3651 = vunpack.c.l.b16 %v1159
      %v3652 = vunpack.c.h.b16 %v1159
      %v3653 = vunpack.c.l.b16 %v1160
      %v3654 = vunpack.c.h.b16 %v1160
      %v3655 = vunpack.c.l.b16 %v1161
      %v3656 = vunpack.c.h.b16 %v1161
      %v3657 = vunpack.c.l.b16 %v1162
      %v3658 = vunpack.c.h.b16 %v1162
      %v3659 = vunpack.c.l.b16 %v1163
      %v3660 = vunpack.c.h.b16 %v1163
      %v3661 = vunpack.c.l.b16 %v1164
      %v3662 = vunpack.c.h.b16 %v1164
      %v3663 = vunpack.c.l.b16 %v1165
      %v3664 = vunpack.c.h.b16 %v1165
      %v3665 = vunpack.c.l.b16 %v1166
      %v3666 = vunpack.c.h.b16 %v1166
      %v3667 = vunpack.c.l.b16 %v1167
      %v3668 = vunpack.c.h.b16 %v1167
      %v3669 = vunpack.c.l.b16 %v1168
      %v3670 = vunpack.c.h.b16 %v1168
      %v3671 = vunpack.c.l.b16 %v1169
      %v3672 = vunpack.c.h.b16 %v1169
      %v3673 = vunpack.c.l.b16 %v1170
      %v3674 = vunpack.c.h.b16 %v1170
      %v3675 = vunpack.c.l.b16 %v1171
      %v3676 = vunpack.c.l.b16 %v1172
      %v3677 = vunpack.c.h.b16 %v1172
      %v3678 = vunpack.c.l.b16 %v1173
      %v3679 = vunpack.c.h.b16 %v1173
      %v3680 = vunpack.c.l.b16 %v1174
      %v3681 = vunpack.c.h.b16 %v1174
      %v3682 = vunpack.c.l.b16 %v1175
      %v3683 = vunpack.c.h.b16 %v1175
      %v3684 = vunpack.c.l.b16 %v1176
      %v3685 = vunpack.c.h.b16 %v1176
      %v3686 = vunpack.c.l.b16 %v1177
      %v3687 = vunpack.c.h.b16 %v1177
      %v3688 = vunpack.c.l.b16 %v1178
      %v3689 = vunpack.c.h.b16 %v1178
      %v3690 = vunpack.c.l.b16 %v1179
      %v3691 = vunpack.c.h.b16 %v1179
      %v3692 = vunpack.c.l.b16 %v1180
      %v3693 = vunpack.c.h.b16 %v1180
      %v3694 = vunpack.c.l.b16 %v1181
      %v3695 = vunpack.c.h.b16 %v1181
      %v3696 = vunpack.c.l.b16 %v1182
      %v3697 = vunpack.c.h.b16 %v1182
      %v3698 = vunpack.c.l.b16 %v1183
      %v3699 = vunpack.c.h.b16 %v1183
      %v3700 = vunpack.c.l.b16 %v1184
      %v3701 = vunpack.c.l.b16 %v1185
      %v3702 = vunpack.c.h.b16 %v1185
      %v3703 = vunpack.c.l.b16 %v1186
      %v3704 = vunpack.c.h.b16 %v1186
      %v3705 = vunpack.c.l.b16 %v1187
      %v3706 = vunpack.c.h.b16 %v1187
      %v3707 = vunpack.c.l.b16 %v1188
      %v3708 = vunpack.c.h.b16 %v1188
      %v3709 = vunpack.c.l.b16 %v1189
      %v3710 = vunpack.c.h.b16 %v1189
      %v3711 = vunpack.c.l.b16 %v1190
      %v3712 = vunpack.c.h.b16 %v1190
      %v3713 = vunpack.c.l.b16 %v1191
      %v3714 = vunpack.c.h.b16 %v1191
      %v3715 = vunpack.c.l.b16 %v1192
      %v3716 = vunpack.c.h.b16 %v1192
      %v3717 = vunpack.c.l.b16 %v1193
      %v3718 = vunpack.c.h.b16 %v1193
      %v3719 = vunpack.c.l.b16 %v1194
      %v3720 = vunpack.c.h.b16 %v1194
      %v3721 = vunpack.c.l.b16 %v1195
      %v3722 = vunpack.c.h.b16 %v1195
      %v3723 = vunpack.c.l.b16 %v1196
      %v3724 = vunpack.c.h.b16 %v1196
      %v3725 = vunpack.c.l.b16 %v1197
      %v3726 = vunpack.c.l.b16 %v1198
      %v3727 = vunpack.c.h.b16 %v1198
      %v3728 = vunpack.c.l.b16 %v1199
      %v3729 = vunpack.c.h.b16 %v1199
      %v3730 = vunpack.c.l.b16 %v1200
      %v3731 = vunpack.c.h.b16 %v1200
      %v3732 = vunpack.c.l.b16 %v1201
      %v3733 = vunpack.c.h.b16 %v1201
      %v3734 = vunpack.c.l.b16 %v1202
      %v3735 = vunpack.c.h.b16 %v1202
      %v3736 = vunpack.c.l.b16 %v1203
      %v3737 = vunpack.c.h.b16 %v1203
      %v3738 = vunpack.c.l.b16 %v1204
      %v3739 = vunpack.c.h.b16 %v1204
      %v3740 = vunpack.c.l.b16 %v1205
      %v3741 = vunpack.c.h.b16 %v1205
      %v3742 = vunpack.c.l.b16 %v1206
      %v3743 = vunpack.c.h.b16 %v1206
      %v3744 = vunpack.c.l.b16 %v1207
      %v3745 = vunpack.c.h.b16 %v1207
      %v3746 = vunpack.c.l.b16 %v1208
      %v3747 = vunpack.c.h.b16 %v1208
      %v3748 = vunpack.c.l.b16 %v1209
      %v3749 = vunpack.c.h.b16 %v1209
      %v3750 = vunpack.c.l.b16 %v1210
      %v3751 = vunpack.c.l.b16 %v1211
      %v3752 = vunpack.c.h.b16 %v1211
      %v3753 = vunpack.c.l.b16 %v1212
      %v3754 = vunpack.c.h.b16 %v1212
      %v3755 = vunpack.c.l.b16 %v1213
      %v3756 = vunpack.c.h.b16 %v1213
      %v3757 = vunpack.c.l.b16 %v1214
      %v3758 = vunpack.c.h.b16 %v1214
      %v3759 = vunpack.c.l.b16 %v1215
      %v3760 = vunpack.c.h.b16 %v1215
      %v3761 = vunpack.c.l.b16 %v1216
      %v3762 = vunpack.c.h.b16 %v1216
      %v3763 = vunpack.c.l.b16 %v1217
      %v3764 = vunpack.c.h.b16 %v1217
      %v3765 = vunpack.c.l.b16 %v1218
      %v3766 = vunpack.c.h.b16 %v1218
      %v3767 = vunpack.c.l.b16 %v1219
      %v3768 = vunpack.c.h.b16 %v1219
      %v3769 = vunpack.c.l.b16 %v1220
      %v3770 = vunpack.c.h.b16 %v1220
      %v3771 = vunpack.c.l.b16 %v1221
      %v3772 = vunpack.c.h.b16 %v1221
      %v3773 = vunpack.c.l.b16 %v1222
      %v3774 = vunpack.c.h.b16 %v1222
      %v3775 = vunpack.c.l.b16 %v1223
      %v3776 = vunpack.c.l.b16 %v1224
      %v3777 = vunpack.c.h.b16 %v1224
      %v3778 = vunpack.c.l.b16 %v1225
      %v3779 = vunpack.c.h.b16 %v1225
      %v3780 = vunpack.c.l.b16 %v1226
      %v3781 = vunpack.c.h.b16 %v1226
      %v3782 = vunpack.c.l.b16 %v1227
      %v3783 = vunpack.c.h.b16 %v1227
      %v3784 = vunpack.c.l.b16 %v1228
      %v3785 = vunpack.c.h.b16 %v1228
      %v3786 = vunpack.c.l.b16 %v1229
      %v3787 = vunpack.c.h.b16 %v1229
      %v3788 = vunpack.c.l.b16 %v1230
      %v3789 = vunpack.c.h.b16 %v1230
      %v3790 = vunpack.c.l.b16 %v1231
      %v3791 = vunpack.c.h.b16 %v1231
      %v3792 = vunpack.c.l.b16 %v1232
      %v3793 = vunpack.c.h.b16 %v1232
      %v3794 = vunpack.c.l.b16 %v1233
      %v3795 = vunpack.c.h.b16 %v1233
      %v3796 = vunpack.c.l.b16 %v1234
      %v3797 = vunpack.c.h.b16 %v1234
      %v3798 = vunpack.c.l.b16 %v1235
      %v3799 = vunpack.c.h.b16 %v1235
      %v3800 = vunpack.c.l.b16 %v1236
      %v3801 = vunpack.c.l.b16 %v1237
      %v3802 = vunpack.c.h.b16 %v1237
      %v3803 = vunpack.c.l.b16 %v1238
      %v3804 = vunpack.c.h.b16 %v1238
      %v3805 = vunpack.c.l.b16 %v1239
      %v3806 = vunpack.c.h.b16 %v1239
      %v3807 = vunpack.c.l.b16 %v1240
      %v3808 = vunpack.c.h.b16 %v1240
      %v3809 = vunpack.c.l.b16 %v1241
      %v3810 = vunpack.c.h.b16 %v1241
      %v3811 = vunpack.c.l.b16 %v1242
      %v3812 = vunpack.c.h.b16 %v1242
      %v3813 = vunpack.c.l.b16 %v1243
      %v3814 = vunpack.c.h.b16 %v1243
      %v3815 = vunpack.c.l.b16 %v1244
      %v3816 = vunpack.c.h.b16 %v1244
      %v3817 = vunpack.c.l.b16 %v1245
      %v3818 = vunpack.c.h.b16 %v1245
      %v3819 = vunpack.c.l.b16 %v1246
      %v3820 = vunpack.c.h.b16 %v1246
      %v3821 = vunpack.c.l.b16 %v1247
      %v3822 = vunpack.c.h.b16 %v1247
      %v3823 = vunpack.c.l.b16 %v1248
      %v3824 = vunpack.c.h.b16 %v1248
      %v3825 = vunpack.c.l.b16 %v1249
      %v3826 = vunpack.c.l.b16 %v1250
      %v3827 = vunpack.c.h.b16 %v1250
      %v3828 = vunpack.c.l.b16 %v1251
      %v3829 = vunpack.c.h.b16 %v1251
      %v3830 = vunpack.c.l.b16 %v1252
      %v3831 = vunpack.c.h.b16 %v1252
      %v3832 = vunpack.c.l.b16 %v1253
      %v3833 = vunpack.c.h.b16 %v1253
      %v3834 = vunpack.c.l.b16 %v1254
      %v3835 = vunpack.c.h.b16 %v1254
      %v3836 = vunpack.c.l.b16 %v1255
      %v3837 = vunpack.c.h.b16 %v1255
      %v3838 = vunpack.c.l.b16 %v1256
      %v3839 = vunpack.c.h.b16 %v1256
      %v3840 = vunpack.c.l.b16 %v1257
      %v3841 = vunpack.c.h.b16 %v1257
      %v3842 = vunpack.c.l.b16 %v1258
      %v3843 = vunpack.c.h.b16 %v1258
      %v3844 = vunpack.c.l.b16 %v1259
      %v3845 = vunpack.c.h.b16 %v1259
      %v3846 = vunpack.c.l.b16 %v1260
      %v3847 = vunpack.c.h.b16 %v1260
      %v3848 = vunpack.c.l.b16 %v1261
      %v3849 = vunpack.c.h.b16 %v1261
      %v3850 = vunpack.c.l.b16 %v1262
      %v3851 = vunpack.c.l.b16 %v1263
      %v3852 = vunpack.c.h.b16 %v1263
      %v3853 = vunpack.c.l.b16 %v1264
      %v3854 = vunpack.c.h.b16 %v1264
      %v3855 = vunpack.c.l.b16 %v1265
      %v3856 = vunpack.c.h.b16 %v1265
      %v3857 = vunpack.c.l.b16 %v1266
      %v3858 = vunpack.c.h.b16 %v1266
      %v3859 = vunpack.c.l.b16 %v1267
      %v3860 = vunpack.c.h.b16 %v1267
      %v3861 = vunpack.c.l.b16 %v1268
      %v3862 = vunpack.c.h.b16 %v1268
      %v3863 = vunpack.c.l.b16 %v1269
      %v3864 = vunpack.c.h.b16 %v1269
      %v3865 = vunpack.c.l.b16 %v1270
      %v3866 = vunpack.c.h.b16 %v1270
      %v3867 = vunpack.c.l.b16 %v1271
      %v3868 = vunpack.c.h.b16 %v1271
      %v3869 = vunpack.c.l.b16 %v1272
      %v3870 = vunpack.c.h.b16 %v1272
      %v3871 = vunpack.c.l.b16 %v1273
      %v3872 = vunpack.c.h.b16 %v1273
      %v3873 = vunpack.c.l.b16 %v1274
      %v3874 = vunpack.c.h.b16 %v1274
      %v3875 = vunpack.c.l.b16 %v1275
      %v3876 = vunpack.c.l.b16 %v1276
      %v3877 = vunpack.c.h.b16 %v1276
      %v3878 = vunpack.c.l.b16 %v1277
      %v3879 = vunpack.c.h.b16 %v1277
      %v3880 = vunpack.c.l.b16 %v1278
      %v3881 = vunpack.c.h.b16 %v1278
      %v3882 = vunpack.c.l.b16 %v1279
      %v3883 = vunpack.c.h.b16 %v1279
      %v3884 = vunpack.c.l.b16 %v1280
      %v3885 = vunpack.c.h.b16 %v1280
      %v3886 = vunpack.c.l.b16 %v1281
      %v3887 = vunpack.c.h.b16 %v1281
      %v3888 = vunpack.c.l.b16 %v1282
      %v3889 = vunpack.c.h.b16 %v1282
      %v3890 = vunpack.c.l.b16 %v1283
      %v3891 = vunpack.c.h.b16 %v1283
      %v3892 = vunpack.c.l.b16 %v1284
      %v3893 = vunpack.c.h.b16 %v1284
      %v3894 = vunpack.c.l.b16 %v1285
      %v3895 = vunpack.c.h.b16 %v1285
      %v3896 = vunpack.c.l.b16 %v1286
      %v3897 = vunpack.c.h.b16 %v1286
      %v3898 = vunpack.c.l.b16 %v1287
      %v3899 = vunpack.c.h.b16 %v1287
      %v3900 = vunpack.c.l.b16 %v1288
      %v3901 = vunpack.c.l.b16 %v1289
      %v3902 = vunpack.c.h.b16 %v1289
      %v3903 = vunpack.c.l.b16 %v1290
      %v3904 = vunpack.c.h.b16 %v1290
      %v3905 = vunpack.c.l.b16 %v1291
      %v3906 = vunpack.c.h.b16 %v1291
      %v3907 = vunpack.c.l.b16 %v1292
      %v3908 = vunpack.c.h.b16 %v1292
      %v3909 = vunpack.c.l.b16 %v1293
      %v3910 = vunpack.c.h.b16 %v1293
      %v3911 = vunpack.c.l.b16 %v1294
      %v3912 = vunpack.c.h.b16 %v1294
      %v3913 = vunpack.c.l.b16 %v1295
      %v3914 = vunpack.c.h.b16 %v1295
      %v3915 = vunpack.c.l.b16 %v1296
      %v3916 = vunpack.c.h.b16 %v1296
      %v3917 = vunpack.c.l.b16 %v1297
      %v3918 = vunpack.c.h.b16 %v1297
      %v3919 = vunpack.c.l.b16 %v1298
      %v3920 = vunpack.c.h.b16 %v1298
      %v3921 = vunpack.c.l.b16 %v1299
      %v3922 = vunpack.c.h.b16 %v1299
      %v3923 = vunpack.c.l.b16 %v1300
      %v3924 = vunpack.c.h.b16 %v1300
      %v3925 = vunpack.c.l.b16 %v1301
      %v3926 = vunpack.c.l.b16 %v1302
      %v3927 = vunpack.c.h.b16 %v1302
      %v3928 = vunpack.c.l.b16 %v1303
      %v3929 = vunpack.c.h.b16 %v1303
      %v3930 = vunpack.c.l.b16 %v1304
      %v3931 = vunpack.c.h.b16 %v1304
      %v3932 = vunpack.c.l.b16 %v1305
      %v3933 = vunpack.c.h.b16 %v1305
      %v3934 = vunpack.c.l.b16 %v1306
      %v3935 = vunpack.c.h.b16 %v1306
      %v3936 = vunpack.c.l.b16 %v1307
      %v3937 = vunpack.c.h.b16 %v1307
      %v3938 = vunpack.c.l.b16 %v1308
      %v3939 = vunpack.c.h.b16 %v1308
      %v3940 = vunpack.c.l.b16 %v1309
      %v3941 = vunpack.c.h.b16 %v1309
      %v3942 = vunpack.c.l.b16 %v1310
      %v3943 = vunpack.c.h.b16 %v1310
      %v3944 = vunpack.c.l.b16 %v1311
      %v3945 = vunpack.c.h.b16 %v1311
      %v3946 = vunpack.c.l.b16 %v1312
      %v3947 = vunpack.c.h.b16 %v1312
      %v3948 = vunpack.c.l.b16 %v1313
      %v3949 = vunpack.c.h.b16 %v1313
      %v3950 = vunpack.c.l.b16 %v1314
      %v3951 = vunpack.c.l.b16 %v1315
      %v3952 = vunpack.c.h.b16 %v1315
      %v3953 = vunpack.c.l.b16 %v1316
      %v3954 = vunpack.c.h.b16 %v1316
      %v3955 = vunpack.c.l.b16 %v1317
      %v3956 = vunpack.c.h.b16 %v1317
      %v3957 = vunpack.c.l.b16 %v1318
      %v3958 = vunpack.c.h.b16 %v1318
      %v3959 = vunpack.c.l.b16 %v1319
      %v3960 = vunpack.c.h.b16 %v1319
      %v3961 = vunpack.c.l.b16 %v1320
      %v3962 = vunpack.c.h.b16 %v1320
      %v3963 = vunpack.c.l.b16 %v1321
      %v3964 = vunpack.c.h.b16 %v1321
      %v3965 = vunpack.c.l.b16 %v1322
      %v3966 = vunpack.c.h.b16 %v1322
      %v3967 = vunpack.c.l.b16 %v1323
      %v3968 = vunpack.c.h.b16 %v1323
      %v3969 = vunpack.c.l.b16 %v1324
      %v3970 = vunpack.c.h.b16 %v1324
      %v3971 = vunpack.c.l.b16 %v1325
      %v3972 = vunpack.c.h.b16 %v1325
      %v3973 = vunpack.c.l.b16 %v1326
      %v3974 = vunpack.c.h.b16 %v1326
      %v3975 = vunpack.c.l.b16 %v1327
      %v3976 = vunpack.c.l.b16 %v1328
      %v3977 = vunpack.c.h.b16 %v1328
      %v3978 = vunpack.c.l.b16 %v1329
      %v3979 = vunpack.c.h.b16 %v1329
      %v3980 = vunpack.c.l.b16 %v1330
      %v3981 = vunpack.c.h.b16 %v1330
      %v3982 = vunpack.c.l.b16 %v1331
      %v3983 = vunpack.c.h.b16 %v1331
      %v3984 = vunpack.c.l.b16 %v1332
      %v3985 = vunpack.c.h.b16 %v1332
      %v3986 = vunpack.c.l.b16 %v1333
      %v3987 = vunpack.c.h.b16 %v1333
      %v3988 = vunpack.c.l.b16 %v1334
      %v3989 = vunpack.c.h.b16 %v1334
      %v3990 = vunpack.c.l.b16 %v1335
      %v3991 = vunpack.c.h.b16 %v1335
      %v3992 = vunpack.c.l.b16 %v1336
      %v3993 = vunpack.c.h.b16 %v1336
      %v3994 = vunpack.c.l.b16 %v1337
      %v3995 = vunpack.c.h.b16 %v1337
      %v3996 = vunpack.c.l.b16 %v1338
      %v3997 = vunpack.c.h.b16 %v1338
      %v3998 = vunpack.c.l.b16 %v1339
      %v3999 = vunpack.c.h.b16 %v1339
      %v4000 = vunpack.c.l.b16 %v1340
      %v4001 = vunpack.c.l.b16 %v1341
      %v4002 = vunpack.c.h.b16 %v1341
      %v4003 = vunpack.c.l.b16 %v1342
      %v4004 = vunpack.c.h.b16 %v1342
      %v4005 = vunpack.c.l.b16 %v1343
      %v4006 = vunpack.c.h.b16 %v1343
      %v4007 = vunpack.c.l.b16 %v1344
      %v4008 = vunpack.c.h.b16 %v1344
      %v4009 = vunpack.c.l.b16 %v1345
      %v4010 = vunpack.c.h.b16 %v1345
      %v4011 = vunpack.c.l.b16 %v1346
      %v4012 = vunpack.c.h.b16 %v1346
      %v4013 = vunpack.c.l.b16 %v1347
      %v4014 = vunpack.c.h.b16 %v1347
      %v4015 = vunpack.c.l.b16 %v1348
      %v4016 = vunpack.c.h.b16 %v1348
      %v4017 = vunpack.c.l.b16 %v1349
      %v4018 = vunpack.c.h.b16 %v1349
      %v4019 = vunpack.c.l.b16 %v1350
      %v4020 = vunpack.c.h.b16 %v1350
      %v4021 = vunpack.c.l.b16 %v1351
      %v4022 = vunpack.c.h.b16 %v1351
      %v4023 = vunpack.c.l.b16 %v1352
      %v4024 = vunpack.c.h.b16 %v1352
      %v4025 = vunpack.c.l.b16 %v1353
      %v4026 = vunpack.c.l.b16 %v1354
      %v4027 = vunpack.c.h.b16 %v1354
      %v4028 = vunpack.c.l.b16 %v1355
      %v4029 = vunpack.c.h.b16 %v1355
      %v4030 = vunpack.c.l.b16 %v1356
      %v4031 = vunpack.c.h.b16 %v1356
      %v4032 = vunpack.c.l.b16 %v1357
      %v4033 = vunpack.c.h.b16 %v1357
      %v4034 = vunpack.c.l.b16 %v1358
      %v4035 = vunpack.c.h.b16 %v1358
      %v4036 = vunpack.c.l.b16 %v1359
      %v4037 = vunpack.c.h.b16 %v1359
      %v4038 = vunpack.c.l.b16 %v1360
      %v4039 = vunpack.c.h.b16 %v1360
      %v4040 = vunpack.c.l.b16 %v1361
      %v4041 = vunpack.c.h.b16 %v1361
      %v4042 = vunpack.c.l.b16 %v1362
      %v4043 = vunpack.c.h.b16 %v1362
      %v4044 = vunpack.c.l.b16 %v1363
      %v4045 = vunpack.c.h.b16 %v1363
      %v4046 = vunpack.c.l.b16 %v1364
      %v4047 = vunpack.c.h.b16 %v1364
      %v4048 = vunpack.c.l.b16 %v1365
      %v4049 = vunpack.c.h.b16 %v1365
      %v4050 = vunpack.c.l.b16 %v1366
      %v4051 = vunpack.c.l.b16 %v1367
      %v4052 = vunpack.c.h.b16 %v1367
      %v4053 = vunpack.c.l.b16 %v1368
      %v4054 = vunpack.c.h.b16 %v1368
      %v4055 = vunpack.c.l.b16 %v1369
      %v4056 = vunpack.c.h.b16 %v1369
      %v4057 = vunpack.c.l.b16 %v1370
      %v4058 = vunpack.c.h.b16 %v1370
      %v4059 = vunpack.c.l.b16 %v1371
      %v4060 = vunpack.c.h.b16 %v1371
      %v4061 = vunpack.c.l.b16 %v1372
      %v4062 = vunpack.c.h.b16 %v1372
      %v4063 = vunpack.c.l.b16 %v1373
      %v4064 = vunpack.c.h.b16 %v1373
      %v4065 = vunpack.c.l.b16 %v1374
      %v4066 = vunpack.c.h.b16 %v1374
      %v4067 = vunpack.c.l.b16 %v1375
      %v4068 = vunpack.c.h.b16 %v1375
      %v4069 = vunpack.c.l.b16 %v1376
      %v4070 = vunpack.c.h.b16 %v1376
      %v4071 = vunpack.c.l.b16 %v1377
      %v4072 = vunpack.c.h.b16 %v1377
      %v4073 = vunpack.c.l.b16 %v1378
      %v4074 = vunpack.c.h.b16 %v1378
      %v4075 = vunpack.c.l.b16 %v1379
      %v4076 = vunpack.c.l.b16 %v1380
      %v4077 = vunpack.c.h.b16 %v1380
      %v4078 = vunpack.c.l.b16 %v1381
      %v4079 = vunpack.c.h.b16 %v1381
      %v4080 = vunpack.c.l.b16 %v1382
      %v4081 = vunpack.c.h.b16 %v1382
      %v4082 = vunpack.c.l.b16 %v1383
      %v4083 = vunpack.c.h.b16 %v1383
      %v4084 = vunpack.c.l.b16 %v1384
      %v4085 = vunpack.c.h.b16 %v1384
      %v4086 = vunpack.c.l.b16 %v1385
      %v4087 = vunpack.c.h.b16 %v1385
      %v4088 = vunpack.c.l.b16 %v1386
      %v4089 = vunpack.c.h.b16 %v1386
      %v4090 = vunpack.c.l.b16 %v1387
      %v4091 = vunpack.c.h.b16 %v1387
      %v4092 = vunpack.c.l.b16 %v1388
      %v4093 = vunpack.c.h.b16 %v1388
      %v4094 = vunpack.c.l.b16 %v1389
      %v4095 = vunpack.c.h.b16 %v1389
      %v4096 = vunpack.c.l.b16 %v1390
      %v4097 = vunpack.c.h.b16 %v1390
      %v4098 = vunpack.c.l.b16 %v1391
      %v4099 = vunpack.c.h.b16 %v1391
      %v4100 = vunpack.c.l.b16 %v1392
      %v4101 = vunpack.c.l.b16 %v1393
      %v4102 = vunpack.c.h.b16 %v1393
      %v4103 = vunpack.c.l.b16 %v1394
      %v4104 = vunpack.c.h.b16 %v1394
      %v4105 = vunpack.c.l.b16 %v1395
      %v4106 = vunpack.c.h.b16 %v1395
      %v4107 = vunpack.c.l.b16 %v1396
      %v4108 = vunpack.c.h.b16 %v1396
      %v4109 = vunpack.c.l.b16 %v1397
      %v4110 = vunpack.c.h.b16 %v1397
      %v4111 = vunpack.c.l.b16 %v1398
      %v4112 = vunpack.c.h.b16 %v1398
      %v4113 = vunpack.c.l.b16 %v1399
      %v4114 = vunpack.c.h.b16 %v1399
      %v4115 = vunpack.c.l.b16 %v1400
      %v4116 = vunpack.c.h.b16 %v1400
      %v4117 = vunpack.c.l.b16 %v1401
      %v4118 = vunpack.c.h.b16 %v1401
      %v4119 = vunpack.c.l.b16 %v1402
      %v4120 = vunpack.c.h.b16 %v1402
      %v4121 = vunpack.c.l.b16 %v1403
      %v4122 = vunpack.c.h.b16 %v1403
      %v4123 = vunpack.c.l.b16 %v1404
      %v4124 = vunpack.c.h.b16 %v1404
      %v4125 = vunpack.c.l.b16 %v1405
      %v4126 = vunpack.c.l.b16 %v1406
      %v4127 = vunpack.c.h.b16 %v1406
      %v4128 = vunpack.c.l.b16 %v1407
      %v4129 = vunpack.c.h.b16 %v1407
      %v4130 = vunpack.c.l.b16 %v1408
      %v4131 = vunpack.c.h.b16 %v1408
      %v4132 = vunpack.c.l.b16 %v1409
      %v4133 = vunpack.c.h.b16 %v1409
      %v4134 = vunpack.c.l.b16 %v1410
      %v4135 = vunpack.c.h.b16 %v1410
      %v4136 = vunpack.c.l.b16 %v1411
      %v4137 = vunpack.c.h.b16 %v1411
      %v4138 = vunpack.c.l.b16 %v1412
      %v4139 = vunpack.c.h.b16 %v1412
      %v4140 = vunpack.c.l.b16 %v1413
      %v4141 = vunpack.c.h.b16 %v1413
      %v4142 = vunpack.c.l.b16 %v1414
      %v4143 = vunpack.c.h.b16 %v1414
      %v4144 = vunpack.c.l.b16 %v1415
      %v4145 = vunpack.c.h.b16 %v1415
      %v4146 = vunpack.c.l.b16 %v1416
      %v4147 = vunpack.c.h.b16 %v1416
      %v4148 = vunpack.c.l.b16 %v1417
      %v4149 = vunpack.c.h.b16 %v1417
      %v4150 = vunpack.c.l.b16 %v1418
      %v4151 = vunpack.c.l.b16 %v1419
      %v4152 = vunpack.c.h.b16 %v1419
      %v4153 = vunpack.c.l.b16 %v1420
      %v4154 = vunpack.c.h.b16 %v1420
      %v4155 = vunpack.c.l.b16 %v1421
      %v4156 = vunpack.c.h.b16 %v1421
      %v4157 = vunpack.c.l.b16 %v1422
      %v4158 = vunpack.c.h.b16 %v1422
      %v4159 = vunpack.c.l.b16 %v1423
      %v4160 = vunpack.c.h.b16 %v1423
      %v4161 = vunpack.c.l.b16 %v1424
      %v4162 = vunpack.c.h.b16 %v1424
      %v4163 = vunpack.c.l.b16 %v1425
      %v4164 = vunpack.c.h.b16 %v1425
      %v4165 = vunpack.c.l.b16 %v1426
      %v4166 = vunpack.c.h.b16 %v1426
      %v4167 = vunpack.c.l.b16 %v1427
      %v4168 = vunpack.c.h.b16 %v1427
      %v4169 = vunpack.c.l.b16 %v1428
      %v4170 = vunpack.c.h.b16 %v1428
      %v4171 = vunpack.c.l.b16 %v1429
      %v4172 = vunpack.c.h.b16 %v1429
      %v4173 = vunpack.c.l.b16 %v1430
      %v4174 = vunpack.c.h.b16 %v1430
      %v4175 = vunpack.c.l.b16 %v1431
      %v4176 = vunpack.c.l.b16 %v1432
      %v4177 = vunpack.c.h.b16 %v1432
      %v4178 = vunpack.c.l.b16 %v1433
      %v4179 = vunpack.c.h.b16 %v1433
      %v4180 = vunpack.c.l.b16 %v1434
      %v4181 = vunpack.c.h.b16 %v1434
      %v4182 = vunpack.c.l.b16 %v1435
      %v4183 = vunpack.c.h.b16 %v1435
      %v4184 = vunpack.c.l.b16 %v1436
      %v4185 = vunpack.c.h.b16 %v1436
      %v4186 = vunpack.c.l.b16 %v1437
      %v4187 = vunpack.c.h.b16 %v1437
      %v4188 = vunpack.c.l.b16 %v1438
      %v4189 = vunpack.c.h.b16 %v1438
      %v4190 = vunpack.c.l.b16 %v1439
      %v4191 = vunpack.c.h.b16 %v1439
      %v4192 = vunpack.c.l.b16 %v1440
      %v4193 = vunpack.c.h.b16 %v1440
      %v4194 = vunpack.c.l.b16 %v1441
      %v4195 = vunpack.c.h.b16 %v1441
      %v4196 = vunpack.c.l.b16 %v1442
      %v4197 = vunpack.c.h.b16 %v1442
      %v4198 = vunpack.c.l.b16 %v1443
      %v4199 = vunpack.c.h.b16 %v1443
      %v4200 = vunpack.c.l.b16 %v1444
      %v4201 = vunpack.c.l.b16 %v1445
      %v4202 = vunpack.c.h.b16 %v1445
      %v4203 = vunpack.c.l.b16 %v1446
      %v4204 = vunpack.c.h.b16 %v1446
      %v4205 = vunpack.c.l.b16 %v1447
      %v4206 = vunpack.c.h.b16 %v1447
      %v4207 = vunpack.c.l.b16 %v1448
      %v4208 = vunpack.c.h.b16 %v1448
      %v4209 = vunpack.c.l.b16 %v1449
      %v4210 = vunpack.c.h.b16 %v1449
      %v4211 = vunpack.c.l.b16 %v1450
      %v4212 = vunpack.c.h.b16 %v1450
      %v4213 = vunpack.c.l.b16 %v1451
      %v4214 = vunpack.c.h.b16 %v1451
      %v4215 = vunpack.c.l.b16 %v1452
      %v4216 = vunpack.c.h.b16 %v1452
      %v4217 = vunpack.c.l.b16 %v1453
      %v4218 = vunpack.c.h.b16 %v1453
      %v4219 = vunpack.c.l.b16 %v1454
      %v4220 = vunpack.c.h.b16 %v1454
      %v4221 = vunpack.c.l.b16 %v1455
      %v4222 = vunpack.c.h.b16 %v1455
      %v4223 = vunpack.c.l.b16 %v1456
      %v4224 = vunpack.c.h.b16 %v1456
      %v4225 = vunpack.c.l.b16 %v1457
      %v4226 = vunpack.c.l.b16 %v1458
      %v4227 = vunpack.c.h.b16 %v1458
      %v4228 = vunpack.c.l.b16 %v1459
      %v4229 = vunpack.c.h.b16 %v1459
      %v4230 = vunpack.c.l.b16 %v1460
      %v4231 = vunpack.c.h.b16 %v1460
      %v4232 = vunpack.c.l.b16 %v1461
      %v4233 = vunpack.c.h.b16 %v1461
      %v4234 = vunpack.c.l.b16 %v1462
      %v4235 = vunpack.c.h.b16 %v1462
      %v4236 = vunpack.c.l.b16 %v1463
      %v4237 = vunpack.c.h.b16 %v1463
      %v4238 = vunpack.c.l.b16 %v1464
      %v4239 = vunpack.c.h.b16 %v1464
      %v4240 = vunpack.c.l.b16 %v1465
      %v4241 = vunpack.c.h.b16 %v1465
      %v4242 = vunpack.c.l.b16 %v1466
      %v4243 = vunpack.c.h.b16 %v1466
      %v4244 = vunpack.c.l.b16 %v1467
      %v4245 = vunpack.c.h.b16 %v1467
      %v4246 = vunpack.c.l.b16 %v1468
      %v4247 = vunpack.c.h.b16 %v1468
      %v4248 = vunpack.c.l.b16 %v1469
      %v4249 = vunpack.c.h.b16 %v1469
      %v4250 = vunpack.c.l.b16 %v1470
      %v4251 = vunpack.c.l.b16 %v1471
      %v4252 = vunpack.c.h.b16 %v1471
      %v4253 = vunpack.c.l.b16 %v1472
      %v4254 = vunpack.c.h.b16 %v1472
      %v4255 = vunpack.c.l.b16 %v1473
      %v4256 = vunpack.c.h.b16 %v1473
      %v4257 = vunpack.c.l.b16 %v1474
      %v4258 = vunpack.c.h.b16 %v1474
      %v4259 = vunpack.c.l.b16 %v1475
      %v4260 = vunpack.c.h.b16 %v1475
      %v4261 = vunpack.c.l.b16 %v1476
      %v4262 = vunpack.c.h.b16 %v1476
      %v4263 = vunpack.c.l.b16 %v1477
      %v4264 = vunpack.c.h.b16 %v1477
      %v4265 = vunpack.c.l.b16 %v1478
      %v4266 = vunpack.c.h.b16 %v1478
      %v4267 = vunpack.c.l.b16 %v1479
      %v4268 = vunpack.c.h.b16 %v1479
      %v4269 = vunpack.c.l.b16 %v1480
      %v4270 = vunpack.c.h.b16 %v1480
      %v4271 = vunpack.c.l.b16 %v1481
      %v4272 = vunpack.c.h.b16 %v1481
      %v4273 = vunpack.c.l.b16 %v1482
      %v4274 = vunpack.c.h.b16 %v1482
      %v4275 = vunpack.c.l.b16 %v1483
      %v4276 = vunpack.c.l.b16 %v1484
      %v4277 = vunpack.c.h.b16 %v1484
      %v4278 = vunpack.c.l.b16 %v1485
      %v4279 = vunpack.c.h.b16 %v1485
      %v4280 = vunpack.c.l.b16 %v1486
      %v4281 = vunpack.c.h.b16 %v1486
      %v4282 = vunpack.c.l.b16 %v1487
      %v4283 = vunpack.c.h.b16 %v1487
      %v4284 = vunpack.c.l.b16 %v1488
      %v4285 = vunpack.c.h.b16 %v1488
      %v4286 = vunpack.c.l.b16 %v1489
      %v4287 = vunpack.c.h.b16 %v1489
      %v4288 = vunpack.c.l.b16 %v1490
      %v4289 = vunpack.c.h.b16 %v1490
      %v4290 = vunpack.c.l.b16 %v1491
      %v4291 = vunpack.c.h.b16 %v1491
      %v4292 = vunpack.c.l.b16 %v1492
      %v4293 = vunpack.c.h.b16 %v1492
      %v4294 = vunpack.c.l.b16 %v1493
      %v4295 = vunpack.c.h.b16 %v1493
      %v4296 = vunpack.c.l.b16 %v1494
      %v4297 = vunpack.c.h.b16 %v1494
      %v4298 = vunpack.c.l.b16 %v1495
      %v4299 = vunpack.c.h.b16 %v1495
      %v4300 = vunpack.c.l.b16 %v1496
      %v4301 = vunpack.c.l.b16 %v1497
      %v4302 = vunpack.c.h.b16 %v1497
      %v4303 = vunpack.c.l.b16 %v1498
      %v4304 = vunpack.c.h.b16 %v1498
      %v4305 = vunpack.c.l.b16 %v1499
      %v4306 = vunpack.c.h.b16 %v1499
      %v4307 = vunpack.c.l.b16 %v1500
      %v4308 = vunpack.c.h.b16 %v1500
      %v4309 = vunpack.c.l.b16 %v1501
      %v4310 = vunpack.c.h.b16 %v1501
      %v4311 = vunpack.c.l.b16 %v1502
      %v4312 = vunpack.c.h.b16 %v1502
      %v4313 = vunpack.c.l.b16 %v1503
      %v4314 = vunpack.c.h.b16 %v1503
      %v4315 = vunpack.c.l.b16 %v1504
      %v4316 = vunpack.c.h.b16 %v1504
      %v4317 = vunpack.c.l.b16 %v1505
      %v4318 = vunpack.c.h.b16 %v1505
      %v4319 = vunpack.c.l.b16 %v1506
      %v4320 = vunpack.c.h.b16 %v1506
      %v4321 = vunpack.c.l.b16 %v1507
      %v4322 = vunpack.c.h.b16 %v1507
      %v4323 = vunpack.c.l.b16 %v1508
      %v4324 = vunpack.c.h.b16 %v1508
      %v4325 = vunpack.c.l.b16 %v1509
      %v4326 = vpack.c.b16 %v2751, %v2726
      %v4327 = vpack.c.b16 %v2752, %v2727
      %v4328 = vpack.c.b16 %v2753, %v2728
      %v4329 = vpack.c.b16 %v2754, %v2729
      %v4330 = vpack.c.b16 %v2755, %v2730
      %v4331 = vpack.c.b16 %v2756, %v2731
      %v4332 = vpack.c.b16 %v2757, %v2732
      %v4333 = vpack.c.b16 %v2758, %v2733
      %v4334 = vpack.c.b16 %v2759, %v2734
      %v4335 = vpack.c.b16 %v2760, %v2735
      %v4336 = vpack.c.b16 %v2761, %v2736
      %v4337 = vpack.c.b16 %v2762, %v2737
      %v4338 = vpack.c.b16 %v2763, %v2738
      %v4339 = vpack.c.b16 %v2764, %v2739
      %v4340 = vpack.c.b16 %v2765, %v2740
      %v4341 = vpack.c.b16 %v2766, %v2741
      %v4342 = vpack.c.b16 %v2767, %v2742
      %v4343 = vpack.c.b16 %v2768, %v2743
      %v4344 = vpack.c.b16 %v2769, %v2744
      %v4345 = vpack.c.b16 %v2770, %v2745
      %v4346 = vpack.c.b16 %v2771, %v2746
      %v4347 = vpack.c.b16 %v2772, %v2747
      %v4348 = vpack.c.b16 %v2773, %v2748
      %v4349 = vpack.c.b16 %v2774, %v2749
      %v4350 = vpack.c.b16 %v2775, %v2750
      %v4351 = vpack.c.b16 %v2801, %v2776
      %v4352 = vpack.c.b16 %v2802, %v2777
      %v4353 = vpack.c.b16 %v2803, %v2778
      %v4354 = vpack.c.b16 %v2804, %v2779
      %v4355 = vpack.c.b16 %v2805, %v2780
      %v4356 = vpack.c.b16 %v2806, %v2781
      %v4357 = vpack.c.b16 %v2807, %v2782
      %v4358 = vpack.c.b16 %v2808, %v2783
      %v4359 = vpack.c.b16 %v2809, %v2784
      %v4360 = vpack.c.b16 %v2810, %v2785
      %v4361 = vpack.c.b16 %v2811, %v2786
      %v4362 = vpack.c.b16 %v2812, %v2787
      %v4363 = vpack.c.b16 %v2813, %v2788
      %v4364 = vpack.c.b16 %v2814, %v2789
      %v4365 = vpack.c.b16 %v2815, %v2790
      %v4366 = vpack.c.b16 %v2816, %v2791
      %v4367 = vpack.c.b16 %v2817, %v2792
      %v4368 = vpack.c.b16 %v2818, %v2793
      %v4369 = vpack.c.b16 %v2819, %v2794
      %v4370 = vpack.c.b16 %v2820, %v2795
      %v4371 = vpack.c.b16 %v2821, %v2796
      %v4372 = vpack.c.b16 %v2822, %v2797
      %v4373 = vpack.c.b16 %v2823, %v2798
      %v4374 = vpack.c.b16 %v2824, %v2799
      %v4375 = vpack.c.b16 %v2825, %v2800
      %v4376 = vpack.c.b16 %v2851, %v2826
      %v4377 = vpack.c.b16 %v2852, %v2827
      %v4378 = vpack.c.b16 %v2853, %v2828
      %v4379 = vpack.c.b16 %v2854, %v2829
      %v4380 = vpack.c.b16 %v2855, %v2830
      %v4381 = vpack.c.b16 %v2856, %v2831
      %v4382 = vpack.c.b16 %v2857, %v2832
      %v4383 = vpack.c.b16 %v2858, %v2833
      %v4384 = vpack.c.b16 %v2859, %v2834
      %v4385 = vpack.c.b16 %v2860, %v2835
      %v4386 = vpack.c.b16 %v2861, %v2836
      %v4387 = vpack.c.b16 %v2862, %v2837
      %v4388 = vpack.c.b16 %v2863, %v2838
      %v4389 = vpack.c.b16 %v2864, %v2839
      %v4390 = vpack.c.b16 %v2865, %v2840
      %v4391 = vpack.c.b16 %v2866, %v2841
      %v4392 = vpack.c.b16 %v2867, %v2842
      %v4393 = vpack.c.b16 %v2868, %v2843
      %v4394 = vpack.c.b16 %v2869, %v2844
      %v4395 = vpack.c.b16 %v2870, %v2845
      %v4396 = vpack.c.b16 %v2871, %v2846
      %v4397 = vpack.c.b16 %v2872, %v2847
      %v4398 = vpack.c.b16 %v2873, %v2848
      %v4399 = vpack.c.b16 %v2874, %v2849
      %v4400 = vpack.c.b16 %v2875, %v2850
      %v4401 = vpack.c.b16 %v2901, %v2876
      %v4402 = vpack.c.b16 %v2902, %v2877
      %v4403 = vpack.c.b16 %v2903, %v2878
      %v4404 = vpack.c.b16 %v2904, %v2879
      %v4405 = vpack.c.b16 %v2905, %v2880
      %v4406 = vpack.c.b16 %v2906, %v2881
      %v4407 = vpack.c.b16 %v2907, %v2882
      %v4408 = vpack.c.b16 %v2908, %v2883
      %v4409 = vpack.c.b16 %v2909, %v2884
      %v4410 = vpack.c.b16 %v2910, %v2885
      %v4411 = vpack.c.b16 %v2911, %v2886
      %v4412 = vpack.c.b16 %v2912, %v2887
      %v4413 = vpack.c.b16 %v2913, %v2888
      %v4414 = vpack.c.b16 %v2914, %v2889
      %v4415 = vpack.c.b16 %v2915, %v2890
      %v4416 = vpack.c.b16 %v2916, %v2891
      %v4417 = vpack.c.b16 %v2917, %v2892
      %v4418 = vpack.c.b16 %v2918, %v2893
      %v4419 = vpack.c.b16 %v2919, %v2894
      %v4420 = vpack.c.b16 %v2920, %v2895
      %v4421 = vpack.c.b16 %v2921, %v2896
      %v4422 = vpack.c.b16 %v2922, %v2897
      %v4423 = vpack.c.b16 %v2923, %v2898
      %v4424 = vpack.c.b16 %v2924, %v2899
      %v4425 = vpack.c.b16 %v2925, %v2900
      %v4426 = vpack.c.b16 %v2951, %v2926
      %v4427 = vpack.c.b16 %v2952, %v2927
      %v4428 = vpack.c.b16 %v2953, %v2928
      %v4429 = vpack.c.b16 %v2954, %v2929
      %v4430 = vpack.c.b16 %v2955, %v2930
      %v4431 = vpack.c.b16 %v2956, %v2931
      %v4432 = vpack.c.b16 %v2957, %v2932
      %v4433 = vpack.c.b16 %v2958, %v2933
      %v4434 = vpack.c.b16 %v2959, %v2934
      %v4435 = vpack.c.b16 %v2960, %v2935
      %v4436 = vpack.c.b16 %v2961, %v2936
      %v4437 = vpack.c.b16 %v2962, %v2937
      %v4438 = vpack.c.b16 %v2963, %v2938
      %v4439 = vpack.c.b16 %v2964, %v2939
      %v4440 = vpack.c.b16 %v2965, %v2940
      %v4441 = vpack.c.b16 %v2966, %v2941
      %v4442 = vpack.c.b16 %v2967, %v2942
      %v4443 = vpack.c.b16 %v2968, %v2943
      %v4444 = vpack.c.b16 %v2969, %v2944
      %v4445 = vpack.c.b16 %v2970, %v2945
      %v4446 = vpack.c.b16 %v2971, %v2946
      %v4447 = vpack.c.b16 %v2972, %v2947
      %v4448 = vpack.c.b16 %v2973, %v2948
      %v4449 = vpack.c.b16 %v2974, %v2949
      %v4450 = vpack.c.b16 %v2975, %v2950
      %v4451 = vpack.c.b16 %v3001, %v2976
      %v4452 = vpack.c.b16 %v3002, %v2977
      %v4453 = vpack.c.b16 %v3003, %v2978
      %v4454 = vpack.c.b16 %v3004, %v2979
      %v4455 = vpack.c.b16 %v3005, %v2980
      %v4456 = vpack.c.b16 %v3006, %v2981
      %v4457 = vpack.c.b16 %v3007, %v2982
      %v4458 = vpack.c.b16 %v3008, %v2983
      %v4459 = vpack.c.b16 %v3009, %v2984
      %v4460 = vpack.c.b16 %v3010, %v2985
      %v4461 = vpack.c.b16 %v3011, %v2986
      %v4462 = vpack.c.b16 %v3012, %v2987
      %v4463 = vpack.c.b16 %v3013, %v2988
      %v4464 = vpack.c.b16 %v3014, %v2989
      %v4465 = vpack.c.b16 %v3015, %v2990
      %v4466 = vpack.c.b16 %v3016, %v2991
      %v4467 = vpack.c.b16 %v3017, %v2992
      %v4468 = vpack.c.b16 %v3018, %v2993
      %v4469 = vpack.c.b16 %v3019, %v2994
      %v4470 = vpack.c.b16 %v3020, %v2995
      %v4471 = vpack.c.b16 %v3021, %v2996
      %v4472 = vpack.c.b16 %v3022, %v2997
      %v4473 = vpack.c.b16 %v3023, %v2998
      %v4474 = vpack.c.b16 %v3024, %v2999
      %v4475 = vpack.c.b16 %v3025, %v3000
      %v4476 = vpack.c.b16 %v3051, %v3026
      %v4477 = vpack.c.b16 %v3052, %v3027
      %v4478 = vpack.c.b16 %v3053, %v3028
      %v4479 = vpack.c.b16 %v3054, %v3029
      %v4480 = vpack.c.b16 %v3055, %v3030
      %v4481 = vpack.c.b16 %v3056, %v3031
      %v4482 = vpack.c.b16 %v3057, %v3032
      %v4483 = vpack.c.b16 %v3058, %v3033
      %v4484 = vpack.c.b16 %v3059, %v3034
      %v4485 = vpack.c.b16 %v3060, %v3035
      %v4486 = vpack.c.b16 %v3061, %v3036
      %v4487 = vpack.c.b16 %v3062, %v3037
      %v4488 = vpack.c.b16 %v3063, %v3038
      %v4489 = vpack.c.b16 %v3064, %v3039
      %v4490 = vpack.c.b16 %v3065, %v3040
      %v4491 = vpack.c.b16 %v3066, %v3041
      %v4492 = vpack.c.b16 %v3067, %v3042
      %v4493 = vpack.c.b16 %v3068, %v3043
      %v4494 = vpack.c.b16 %v3069, %v3044
      %v4495 = vpack.c.b16 %v3070, %v3045
      %v4496 = vpack.c.b16 %v3071, %v3046
      %v4497 = vpack.c.b16 %v3072, %v3047
      %v4498 = vpack.c.b16 %v3073, %v3048
      %v4499 = vpack.c.b16 %v3074, %v3049
      %v4500 = vpack.c.b16 %v3075, %v3050
      %v4501 = vpack.c.b16 %v3101, %v3076
      %v4502 = vpack.c.b16 %v3102, %v3077
      %v4503 = vpack.c.b16 %v3103, %v3078
      %v4504 = vpack.c.b16 %v3104, %v3079
      %v4505 = vpack.c.b16 %v3105, %v3080
      %v4506 = vpack.c.b16 %v3106, %v3081
      %v4507 = vpack.c.b16 %v3107, %v3082
      %v4508 = vpack.c.b16 %v3108, %v3083
      %v4509 = vpack.c.b16 %v3109, %v3084
      %v4510 = vpack.c.b16 %v3110, %v3085
      %v4511 = vpack.c.b16 %v3111, %v3086
      %v4512 = vpack.c.b16 %v3112, %v3087
      %v4513 = vpack.c.b16 %v3113, %v3088
      %v4514 = vpack.c.b16 %v3114, %v3089
      %v4515 = vpack.c.b16 %v3115, %v3090
      %v4516 = vpack.c.b16 %v3116, %v3091
      %v4517 = vpack.c.b16 %v3117, %v3092
      %v4518 = vpack.c.b16 %v3118, %v3093
      %v4519 = vpack.c.b16 %v3119, %v3094
      %v4520 = vpack.c.b16 %v3120, %v3095
      %v4521 = vpack.c.b16 %v3121, %v3096
      %v4522 = vpack.c.b16 %v3122, %v3097
      %v4523 = vpack.c.b16 %v3123, %v3098
      %v4524 = vpack.c.b16 %v3124, %v3099
      %v4525 = vpack.c.b16 %v3125, %v3100
      %v4526 = vpack.c.b16 %v3151, %v3126
      %v4527 = vpack.c.b16 %v3152, %v3127
      %v4528 = vpack.c.b16 %v3153, %v3128
      %v4529 = vpack.c.b16 %v3154, %v3129
      %v4530 = vpack.c.b16 %v3155, %v3130
      %v4531 = vpack.c.b16 %v3156, %v3131
      %v4532 = vpack.c.b16 %v3157, %v3132
      %v4533 = vpack.c.b16 %v3158, %v3133
      %v4534 = vpack.c.b16 %v3159, %v3134
      %v4535 = vpack.c.b16 %v3160, %v3135
      %v4536 = vpack.c.b16 %v3161, %v3136
      %v4537 = vpack.c.b16 %v3162, %v3137
      %v4538 = vpack.c.b16 %v3163, %v3138
      %v4539 = vpack.c.b16 %v3164, %v3139
      %v4540 = vpack.c.b16 %v3165, %v3140
      %v4541 = vpack.c.b16 %v3166, %v3141
      %v4542 = vpack.c.b16 %v3167, %v3142
      %v4543 = vpack.c.b16 %v3168, %v3143
      %v4544 = vpack.c.b16 %v3169, %v3144
      %v4545 = vpack.c.b16 %v3170, %v3145
      %v4546 = vpack.c.b16 %v3171, %v3146
      %v4547 = vpack.c.b16 %v3172, %v3147
      %v4548 = vpack.c.b16 %v3173, %v3148
      %v4549 = vpack.c.b16 %v3174, %v3149
      %v4550 = vpack.c.b16 %v3175, %v3150
      %v4551 = vpack.c.b16 %v3201, %v3176
      %v4552 = vpack.c.b16 %v3202, %v3177
      %v4553 = vpack.c.b16 %v3203, %v3178
      %v4554 = vpack.c.b16 %v3204, %v3179
      %v4555 = vpack.c.b16 %v3205, %v3180
      %v4556 = vpack.c.b16 %v3206, %v3181
      %v4557 = vpack.c.b16 %v3207, %v3182
      %v4558 = vpack.c.b16 %v3208, %v3183
      %v4559 = vpack.c.b16 %v3209, %v3184
      %v4560 = vpack.c.b16 %v3210, %v3185
      %v4561 = vpack.c.b16 %v3211, %v3186
      %v4562 = vpack.c.b16 %v3212, %v3187
      %v4563 = vpack.c.b16 %v3213, %v3188
      %v4564 = vpack.c.b16 %v3214, %v3189
      %v4565 = vpack.c.b16 %v3215, %v3190
      %v4566 = vpack.c.b16 %v3216, %v3191
      %v4567 = vpack.c.b16 %v3217, %v3192
      %v4568 = vpack.c.b16 %v3218, %v3193
      %v4569 = vpack.c.b16 %v3219, %v3194
      %v4570 = vpack.c.b16 %v3220, %v3195
      %v4571 = vpack.c.b16 %v3221, %v3196
      %v4572 = vpack.c.b16 %v3222, %v3197
      %v4573 = vpack.c.b16 %v3223, %v3198
      %v4574 = vpack.c.b16 %v3224, %v3199
      %v4575 = vpack.c.b16 %v3225, %v3200
      %v4576 = vpack.c.b16 %v3251, %v3226
      %v4577 = vpack.c.b16 %v3252, %v3227
      %v4578 = vpack.c.b16 %v3253, %v3228
      %v4579 = vpack.c.b16 %v3254, %v3229
      %v4580 = vpack.c.b16 %v3255, %v3230
      %v4581 = vpack.c.b16 %v3256, %v3231
      %v4582 = vpack.c.b16 %v3257, %v3232
      %v4583 = vpack.c.b16 %v3258, %v3233
      %v4584 = vpack.c.b16 %v3259, %v3234
      %v4585 = vpack.c.b16 %v3260, %v3235
      %v4586 = vpack.c.b16 %v3261, %v3236
      %v4587 = vpack.c.b16 %v3262, %v3237
      %v4588 = vpack.c.b16 %v3263, %v3238
      %v4589 = vpack.c.b16 %v3264, %v3239
      %v4590 = vpack.c.b16 %v3265, %v3240
      %v4591 = vpack.c.b16 %v3266, %v3241
      %v4592 = vpack.c.b16 %v3267, %v3242
      %v4593 = vpack.c.b16 %v3268, %v3243
      %v4594 = vpack.c.b16 %v3269, %v3244
      %v4595 = vpack.c.b16 %v3270, %v3245
      %v4596 = vpack.c.b16 %v3271, %v3246
      %v4597 = vpack.c.b16 %v3272, %v3247
      %v4598 = vpack.c.b16 %v3273, %v3248
      %v4599 = vpack.c.b16 %v3274, %v3249
      %v4600 = vpack.c.b16 %v3275, %v3250
      %v4601 = vpack.c.b16 %v3301, %v3276
      %v4602 = vpack.c.b16 %v3302, %v3277
      %v4603 = vpack.c.b16 %v3303, %v3278
      %v4604 = vpack.c.b16 %v3304, %v3279
      %v4605 = vpack.c.b16 %v3305, %v3280
      %v4606 = vpack.c.b16 %v3306, %v3281
      %v4607 = vpack.c.b16 %v3307, %v3282
      %v4608 = vpack.c.b16 %v3308, %v3283
      %v4609 = vpack.c.b16 %v3309, %v3284
      %v4610 = vpack.c.b16 %v3310, %v3285
      %v4611 = vpack.c.b16 %v3311, %v3286
      %v4612 = vpack.c.b16 %v3312, %v3287
      %v4613 = vpack.c.b16 %v3313, %v3288
      %v4614 = vpack.c.b16 %v3314, %v3289
      %v4615 = vpack.c.b16 %v3315, %v3290
      %v4616 = vpack.c.b16 %v3316, %v3291
      %v4617 = vpack.c.b16 %v3317, %v3292
      %v4618 = vpack.c.b16 %v3318, %v3293
      %v4619 = vpack.c.b16 %v3319, %v3294
      %v4620 = vpack.c.b16 %v3320, %v3295
      %v4621 = vpack.c.b16 %v3321, %v3296
      %v4622 = vpack.c.b16 %v3322, %v3297
      %v4623 = vpack.c.b16 %v3323, %v3298
      %v4624 = vpack.c.b16 %v3324, %v3299
      %v4625 = vpack.c.b16 %v3325, %v3300
      %v4626 = vpack.c.b16 %v3351, %v3326
      %v4627 = vpack.c.b16 %v3352, %v3327
      %v4628 = vpack.c.b16 %v3353, %v3328
      %v4629 = vpack.c.b16 %v3354, %v3329
      %v4630 = vpack.c.b16 %v3355, %v3330
      %v4631 = vpack.c.b16 %v3356, %v3331
      %v4632 = vpack.c.b16 %v3357, %v3332
      %v4633 = vpack.c.b16 %v3358, %v3333
      %v4634 = vpack.c.b16 %v3359, %v3334
      %v4635 = vpack.c.b16 %v3360, %v3335
      %v4636 = vpack.c.b16 %v3361, %v3336
      %v4637 = vpack.c.b16 %v3362, %v3337
      %v4638 = vpack.c.b16 %v3363, %v3338
      %v4639 = vpack.c.b16 %v3364, %v3339
      %v4640 = vpack.c.b16 %v3365, %v3340
      %v4641 = vpack.c.b16 %v3366, %v3341
      %v4642 = vpack.c.b16 %v3367, %v3342
      %v4643 = vpack.c.b16 %v3368, %v3343
      %v4644 = vpack.c.b16 %v3369, %v3344
      %v4645 = vpack.c.b16 %v3370, %v3345
      %v4646 = vpack.c.b16 %v3371, %v3346
      %v4647 = vpack.c.b16 %v3372, %v3347
      %v4648 = vpack.c.b16 %v3373, %v3348
      %v4649 = vpack.c.b16 %v3374, %v3349
      %v4650 = vpack.c.b16 %v3375, %v3350
      %v4651 = vpack.c.b16 %v3401, %v3376
      %v4652 = vpack.c.b16 %v3402, %v3377
      %v4653 = vpack.c.b16 %v3403, %v3378
      %v4654 = vpack.c.b16 %v3404, %v3379
      %v4655 = vpack.c.b16 %v3405, %v3380
      %v4656 = vpack.c.b16 %v3406, %v3381
      %v4657 = vpack.c.b16 %v3407, %v3382
      %v4658 = vpack.c.b16 %v3408, %v3383
      %v4659 = vpack.c.b16 %v3409, %v3384
      %v4660 = vpack.c.b16 %v3410, %v3385
      %v4661 = vpack.c.b16 %v3411, %v3386
      %v4662 = vpack.c.b16 %v3412, %v3387
      %v4663 = vpack.c.b16 %v3413, %v3388
      %v4664 = vpack.c.b16 %v3414, %v3389
      %v4665 = vpack.c.b16 %v3415, %v3390
      %v4666 = vpack.c.b16 %v3416, %v3391
      %v4667 = vpack.c.b16 %v3417, %v3392
      %v4668 = vpack.c.b16 %v3418, %v3393
      %v4669 = vpack.c.b16 %v3419, %v3394
      %v4670 = vpack.c.b16 %v3420, %v3395
      %v4671 = vpack.c.b16 %v3421, %v3396
      %v4672 = vpack.c.b16 %v3422, %v3397
      %v4673 = vpack.c.b16 %v3423, %v3398
      %v4674 = vpack.c.b16 %v3424, %v3399
      %v4675 = vpack.c.b16 %v3425, %v3400
      %v4676 = vpack.c.b16 %v3451, %v3426
      %v4677 = vpack.c.b16 %v3452, %v3427
      %v4678 = vpack.c.b16 %v3453, %v3428
      %v4679 = vpack.c.b16 %v3454, %v3429
      %v4680 = vpack.c.b16 %v3455, %v3430
      %v4681 = vpack.c.b16 %v3456, %v3431
      %v4682 = vpack.c.b16 %v3457, %v3432
      %v4683 = vpack.c.b16 %v3458, %v3433
      %v4684 = vpack.c.b16 %v3459, %v3434
      %v4685 = vpack.c.b16 %v3460, %v3435
      %v4686 = vpack.c.b16 %v3461, %v3436
      %v4687 = vpack.c.b16 %v3462, %v3437
      %v4688 = vpack.c.b16 %v3463, %v3438
      %v4689 = vpack.c.b16 %v3464, %v3439
      %v4690 = vpack.c.b16 %v3465, %v3440
      %v4691 = vpack.c.b16 %v3466, %v3441
      %v4692 = vpack.c.b16 %v3467, %v3442
      %v4693 = vpack.c.b16 %v3468, %v3443
      %v4694 = vpack.c.b16 %v3469, %v3444
      %v4695 = vpack.c.b16 %v3470, %v3445
      %v4696 = vpack.c.b16 %v3471, %v3446
      %v4697 = vpack.c.b16 %v3472, %v3447
      %v4698 = vpack.c.b16 %v3473, %v3448
      %v4699 = vpack.c.b16 %v3474, %v3449
      %v4700 = vpack.c.b16 %v3475, %v3450
      %v4701 = vpack.c.b16 %v3501, %v3476
      %v4702 = vpack.c.b16 %v3502, %v3477
      %v4703 = vpack.c.b16 %v3503, %v3478
      %v4704 = vpack.c.b16 %v3504, %v3479
      %v4705 = vpack.c.b16 %v3505, %v3480
      %v4706 = vpack.c.b16 %v3506, %v3481
      %v4707 = vpack.c.b16 %v3507, %v3482
      %v4708 = vpack.c.b16 %v3508, %v3483
      %v4709 = vpack.c.b16 %v3509, %v3484
      %v4710 = vpack.c.b16 %v3510, %v3485
      %v4711 = vpack.c.b16 %v3511, %v3486
      %v4712 = vpack.c.b16 %v3512, %v3487
      %v4713 = vpack.c.b16 %v3513, %v3488
      %v4714 = vpack.c.b16 %v3514, %v3489
      %v4715 = vpack.c.b16 %v3515, %v3490
      %v4716 = vpack.c.b16 %v3516, %v3491
      %v4717 = vpack.c.b16 %v3517, %v3492
      %v4718 = vpack.c.b16 %v3518, %v3493
      %v4719 = vpack.c.b16 %v3519, %v3494
      %v4720 = vpack.c.b16 %v3520, %v3495
      %v4721 = vpack.c.b16 %v3521, %v3496
      %v4722 = vpack.c.b16 %v3522, %v3497
      %v4723 = vpack.c.b16 %v3523, %v3498
      %v4724 = vpack.c.b16 %v3524, %v3499
      %v4725 = vpack.c.b16 %v3525, %v3500
      %v4726 = vpack.c.b16 %v3551, %v3526
      %v4727 = vpack.c.b16 %v3552, %v3527
      %v4728 = vpack.c.b16 %v3553, %v3528
      %v4729 = vpack.c.b16 %v3554, %v3529
      %v4730 = vpack.c.b16 %v3555, %v3530
      %v4731 = vpack.c.b16 %v3556, %v3531
      %v4732 = vpack.c.b16 %v3557, %v3532
      %v4733 = vpack.c.b16 %v3558, %v3533
      %v4734 = vpack.c.b16 %v3559, %v3534
      %v4735 = vpack.c.b16 %v3560, %v3535
      %v4736 = vpack.c.b16 %v3561, %v3536
      %v4737 = vpack.c.b16 %v3562, %v3537
      %v4738 = vpack.c.b16 %v3563, %v3538
      %v4739 = vpack.c.b16 %v3564, %v3539
      %v4740 = vpack.c.b16 %v3565, %v3540
      %v4741 = vpack.c.b16 %v3566, %v3541
      %v4742 = vpack.c.b16 %v3567, %v3542
      %v4743 = vpack.c.b16 %v3568, %v3543
      %v4744 = vpack.c.b16 %v3569, %v3544
      %v4745 = vpack.c.b16 %v3570, %v3545
      %v4746 = vpack.c.b16 %v3571, %v3546
      %v4747 = vpack.c.b16 %v3572, %v3547
      %v4748 = vpack.c.b16 %v3573, %v3548
      %v4749 = vpack.c.b16 %v3574, %v3549
      %v4750 = vpack.c.b16 %v3575, %v3550
      %v4751 = vpack.c.b16 %v3601, %v3576
      %v4752 = vpack.c.b16 %v3602, %v3577
      %v4753 = vpack.c.b16 %v3603, %v3578
      %v4754 = vpack.c.b16 %v3604, %v3579
      %v4755 = vpack.c.b16 %v3605, %v3580
      %v4756 = vpack.c.b16 %v3606, %v3581
      %v4757 = vpack.c.b16 %v3607, %v3582
      %v4758 = vpack.c.b16 %v3608, %v3583
      %v4759 = vpack.c.b16 %v3609, %v3584
      %v4760 = vpack.c.b16 %v3610, %v3585
      %v4761 = vpack.c.b16 %v3611, %v3586
      %v4762 = vpack.c.b16 %v3612, %v3587
      %v4763 = vpack.c.b16 %v3613, %v3588
      %v4764 = vpack.c.b16 %v3614, %v3589
      %v4765 = vpack.c.b16 %v3615, %v3590
      %v4766 = vpack.c.b16 %v3616, %v3591
      %v4767 = vpack.c.b16 %v3617, %v3592
      %v4768 = vpack.c.b16 %v3618, %v3593
      %v4769 = vpack.c.b16 %v3619, %v3594
      %v4770 = vpack.c.b16 %v3620, %v3595
      %v4771 = vpack.c.b16 %v3621, %v3596
      %v4772 = vpack.c.b16 %v3622, %v3597
      %v4773 = vpack.c.b16 %v3623, %v3598
      %v4774 = vpack.c.b16 %v3624, %v3599
      %v4775 = vpack.c.b16 %v3625, %v3600
      %v4776 = vpack.c.b16 %v3651, %v3626
      %v4777 = vpack.c.b16 %v3652, %v3627
      %v4778 = vpack.c.b16 %v3653, %v3628
      %v4779 = vpack.c.b16 %v3654, %v3629
      %v4780 = vpack.c.b16 %v3655, %v3630
      %v4781 = vpack.c.b16 %v3656, %v3631
      %v4782 = vpack.c.b16 %v3657, %v3632
      %v4783 = vpack.c.b16 %v3658, %v3633
      %v4784 = vpack.c.b16 %v3659, %v3634
      %v4785 = vpack.c.b16 %v3660, %v3635
      %v4786 = vpack.c.b16 %v3661, %v3636
      %v4787 = vpack.c.b16 %v3662, %v3637
      %v4788 = vpack.c.b16 %v3663, %v3638
      %v4789 = vpack.c.b16 %v3664, %v3639
      %v4790 = vpack.c.b16 %v3665, %v3640
      %v4791 = vpack.c.b16 %v3666, %v3641
      %v4792 = vpack.c.b16 %v3667, %v3642
      %v4793 = vpack.c.b16 %v3668, %v3643
      %v4794 = vpack.c.b16 %v3669, %v3644
      %v4795 = vpack.c.b16 %v3670, %v3645
      %v4796 = vpack.c.b16 %v3671, %v3646
      %v4797 = vpack.c.b16 %v3672, %v3647
      %v4798 = vpack.c.b16 %v3673, %v3648
      %v4799 = vpack.c.b16 %v3674, %v3649
      %v4800 = vpack.c.b16 %v3675, %v3650
      %v4801 = vpack.c.b16 %v3701, %v3676
      %v4802 = vpack.c.b16 %v3702, %v3677
      %v4803 = vpack.c.b16 %v3703, %v3678
      %v4804 = vpack.c.b16 %v3704, %v3679
      %v4805 = vpack.c.b16 %v3705, %v3680
      %v4806 = vpack.c.b16 %v3706, %v3681
      %v4807 = vpack.c.b16 %v3707, %v3682
      %v4808 = vpack.c.b16 %v3708, %v3683
      %v4809 = vpack.c.b16 %v3709, %v3684
      %v4810 = vpack.c.b16 %v3710, %v3685
      %v4811 = vpack.c.b16 %v3711, %v3686
      %v4812 = vpack.c.b16 %v3712, %v3687
      %v4813 = vpack.c.b16 %v3713, %v3688
      %v4814 = vpack.c.b16 %v3714, %v3689
      %v4815 = vpack.c.b16 %v3715, %v3690
      %v4816 = vpack.c.b16 %v3716, %v3691
      %v4817 = vpack.c.b16 %v3717, %v3692
      %v4818 = vpack.c.b16 %v3718, %v3693
      %v4819 = vpack.c.b16 %v3719, %v3694
      %v4820 = vpack.c.b16 %v3720, %v3695
      %v4821 = vpack.c.b16 %v3721, %v3696
      %v4822 = vpack.c.b16 %v3722, %v3697
      %v4823 = vpack.c.b16 %v3723, %v3698
      %v4824 = vpack.c.b16 %v3724, %v3699
      %v4825 = vpack.c.b16 %v3725, %v3700
      %v4826 = vpack.c.b16 %v3751, %v3726
      %v4827 = vpack.c.b16 %v3752, %v3727
      %v4828 = vpack.c.b16 %v3753, %v3728
      %v4829 = vpack.c.b16 %v3754, %v3729
      %v4830 = vpack.c.b16 %v3755, %v3730
      %v4831 = vpack.c.b16 %v3756, %v3731
      %v4832 = vpack.c.b16 %v3757, %v3732
      %v4833 = vpack.c.b16 %v3758, %v3733
      %v4834 = vpack.c.b16 %v3759, %v3734
      %v4835 = vpack.c.b16 %v3760, %v3735
      %v4836 = vpack.c.b16 %v3761, %v3736
      %v4837 = vpack.c.b16 %v3762, %v3737
      %v4838 = vpack.c.b16 %v3763, %v3738
      %v4839 = vpack.c.b16 %v3764, %v3739
      %v4840 = vpack.c.b16 %v3765, %v3740
      %v4841 = vpack.c.b16 %v3766, %v3741
      %v4842 = vpack.c.b16 %v3767, %v3742
      %v4843 = vpack.c.b16 %v3768, %v3743
      %v4844 = vpack.c.b16 %v3769, %v3744
      %v4845 = vpack.c.b16 %v3770, %v3745
      %v4846 = vpack.c.b16 %v3771, %v3746
      %v4847 = vpack.c.b16 %v3772, %v3747
      %v4848 = vpack.c.b16 %v3773, %v3748
      %v4849 = vpack.c.b16 %v3774, %v3749
      %v4850 = vpack.c.b16 %v3775, %v3750
      %v4851 = vpack.c.b16 %v3801, %v3776
      %v4852 = vpack.c.b16 %v3802, %v3777
      %v4853 = vpack.c.b16 %v3803, %v3778
      %v4854 = vpack.c.b16 %v3804, %v3779
      %v4855 = vpack.c.b16 %v3805, %v3780
      %v4856 = vpack.c.b16 %v3806, %v3781
      %v4857 = vpack.c.b16 %v3807, %v3782
      %v4858 = vpack.c.b16 %v3808, %v3783
      %v4859 = vpack.c.b16 %v3809, %v3784
      %v4860 = vpack.c.b16 %v3810, %v3785
      %v4861 = vpack.c.b16 %v3811, %v3786
      %v4862 = vpack.c.b16 %v3812, %v3787
      %v4863 = vpack.c.b16 %v3813, %v3788
      %v4864 = vpack.c.b16 %v3814, %v3789
      %v4865 = vpack.c.b16 %v3815, %v3790
      %v4866 = vpack.c.b16 %v3816, %v3791
      %v4867 = vpack.c.b16 %v3817, %v3792
      %v4868 = vpack.c.b16 %v3818, %v3793
      %v4869 = vpack.c.b16 %v3819, %v3794
      %v4870 = vpack.c.b16 %v3820, %v3795
      %v4871 = vpack.c.b16 %v3821, %v3796
      %v4872 = vpack.c.b16 %v3822, %v3797
      %v4873 = vpack.c.b16 %v3823, %v3798
      %v4874 = vpack.c.b16 %v3824, %v3799
      %v4875 = vpack.c.b16 %v3825, %v3800
      %v4876 = vpack.c.b16 %v3851, %v3826
      %v4877 = vpack.c.b16 %v3852, %v3827
      %v4878 = vpack.c.b16 %v3853, %v3828
      %v4879 = vpack.c.b16 %v3854, %v3829
      %v4880 = vpack.c.b16 %v3855, %v3830
      %v4881 = vpack.c.b16 %v3856, %v3831
      %v4882 = vpack.c.b16 %v3857, %v3832
      %v4883 = vpack.c.b16 %v3858, %v3833
      %v4884 = vpack.c.b16 %v3859, %v3834
      %v4885 = vpack.c.b16 %v3860, %v3835
      %v4886 = vpack.c.b16 %v3861, %v3836
      %v4887 = vpack.c.b16 %v3862, %v3837
      %v4888 = vpack.c.b16 %v3863, %v3838
      %v4889 = vpack.c.b16 %v3864, %v3839
      %v4890 = vpack.c.b16 %v3865, %v3840
      %v4891 = vpack.c.b16 %v3866, %v3841
      %v4892 = vpack.c.b16 %v3867, %v3842
      %v4893 = vpack.c.b16 %v3868, %v3843
      %v4894 = vpack.c.b16 %v3869, %v3844
      %v4895 = vpack.c.b16 %v3870, %v3845
      %v4896 = vpack.c.b16 %v3871, %v3846
      %v4897 = vpack.c.b16 %v3872, %v3847
      %v4898 = vpack.c.b16 %v3873, %v3848
      %v4899 = vpack.c.b16 %v3874, %v3849
      %v4900 = vpack.c.b16 %v3875, %v3850
      %v4901 = vpack.c.b16 %v3901, %v3876
      %v4902 = vpack.c.b16 %v3902, %v3877
      %v4903 = vpack.c.b16 %v3903, %v3878
      %v4904 = vpack.c.b16 %v3904, %v3879
      %v4905 = vpack.c.b16 %v3905, %v3880
      %v4906 = vpack.c.b16 %v3906, %v3881
      %v4907 = vpack.c.b16 %v3907, %v3882
      %v4908 = vpack.c.b16 %v3908, %v3883
      %v4909 = vpack.c.b16 %v3909, %v3884
      %v4910 = vpack.c.b16 %v3910, %v3885
      %v4911 = vpack.c.b16 %v3911, %v3886
      %v4912 = vpack.c.b16 %v3912, %v3887
      %v4913 = vpack.c.b16 %v3913, %v3888
      %v4914 = vpack.c.b16 %v3914, %v3889
      %v4915 = vpack.c.b16 %v3915, %v3890
      %v4916 = vpack.c.b16 %v3916, %v3891
      %v4917 = vpack.c.b16 %v3917, %v3892
      %v4918 = vpack.c.b16 %v3918, %v3893
      %v4919 = vpack.c.b16 %v3919, %v3894
      %v4920 = vpack.c.b16 %v3920, %v3895
      %v4921 = vpack.c.b16 %v3921, %v3896
      %v4922 = vpack.c.b16 %v3922, %v3897
      %v4923 = vpack.c.b16 %v3923, %v3898
      %v4924 = vpack.c.b16 %v3924, %v3899
      %v4925 = vpack.c.b16 %v3925, %v3900
      %v4926 = vpack.c.b16 %v3951, %v3926
      %v4927 = vpack.c.b16 %v3952, %v3927
      %v4928 = vpack.c.b16 %v3953, %v3928
      %v4929 = vpack.c.b16 %v3954, %v3929
      %v4930 = vpack.c.b16 %v3955, %v3930
      %v4931 = vpack.c.b16 %v3956, %v3931
      %v4932 = vpack.c.b16 %v3957, %v3932
      %v4933 = vpack.c.b16 %v3958, %v3933
      %v4934 = vpack.c.b16 %v3959, %v3934
      %v4935 = vpack.c.b16 %v3960, %v3935
      %v4936 = vpack.c.b16 %v3961, %v3936
      %v4937 = vpack.c.b16 %v3962, %v3937
      %v4938 = vpack.c.b16 %v3963, %v3938
      %v4939 = vpack.c.b16 %v3964, %v3939
      %v4940 = vpack.c.b16 %v3965, %v3940
      %v4941 = vpack.c.b16 %v3966, %v3941
      %v4942 = vpack.c.b16 %v3967, %v3942
      %v4943 = vpack.c.b16 %v3968, %v3943
      %v4944 = vpack.c.b16 %v3969, %v3944
      %v4945 = vpack.c.b16 %v3970, %v3945
      %v4946 = vpack.c.b16 %v3971, %v3946
      %v4947 = vpack.c.b16 %v3972, %v3947
      %v4948 = vpack.c.b16 %v3973, %v3948
      %v4949 = vpack.c.b16 %v3974, %v3949
      %v4950 = vpack.c.b16 %v3975, %v3950
      %v4951 = vpack.c.b16 %v4001, %v3976
      %v4952 = vpack.c.b16 %v4002, %v3977
      %v4953 = vpack.c.b16 %v4003, %v3978
      %v4954 = vpack.c.b16 %v4004, %v3979
      %v4955 = vpack.c.b16 %v4005, %v3980
      %v4956 = vpack.c.b16 %v4006, %v3981
      %v4957 = vpack.c.b16 %v4007, %v3982
      %v4958 = vpack.c.b16 %v4008, %v3983
      %v4959 = vpack.c.b16 %v4009, %v3984
      %v4960 = vpack.c.b16 %v4010, %v3985
      %v4961 = vpack.c.b16 %v4011, %v3986
      %v4962 = vpack.c.b16 %v4012, %v3987
      %v4963 = vpack.c.b16 %v4013, %v3988
      %v4964 = vpack.c.b16 %v4014, %v3989
      %v4965 = vpack.c.b16 %v4015, %v3990
      %v4966 = vpack.c.b16 %v4016, %v3991
      %v4967 = vpack.c.b16 %v4017, %v3992
      %v4968 = vpack.c.b16 %v4018, %v3993
      %v4969 = vpack.c.b16 %v4019, %v3994
      %v4970 = vpack.c.b16 %v4020, %v3995
      %v4971 = vpack.c.b16 %v4021, %v3996
      %v4972 = vpack.c.b16 %v4022, %v3997
      %v4973 = vpack.c.b16 %v4023, %v3998
      %v4974 = vpack.c.b16 %v4024, %v3999
      %v4975 = vpack.c.b16 %v4025, %v4000
      %v4976 = vpack.c.b16 %v4051, %v4026
      %v4977 = vpack.c.b16 %v4052, %v4027
      %v4978 = vpack.c.b16 %v4053, %v4028
      %v4979 = vpack.c.b16 %v4054, %v4029
      %v4980 = vpack.c.b16 %v4055, %v4030
      %v4981 = vpack.c.b16 %v4056, %v4031
      %v4982 = vpack.c.b16 %v4057, %v4032
      %v4983 = vpack.c.b16 %v4058, %v4033
      %v4984 = vpack.c.b16 %v4059, %v4034
      %v4985 = vpack.c.b16 %v4060, %v4035
      %v4986 = vpack.c.b16 %v4061, %v4036
      %v4987 = vpack.c.b16 %v4062, %v4037
      %v4988 = vpack.c.b16 %v4063, %v4038
      %v4989 = vpack.c.b16 %v4064, %v4039
      %v4990 = vpack.c.b16 %v4065, %v4040
      %v4991 = vpack.c.b16 %v4066, %v4041
      %v4992 = vpack.c.b16 %v4067, %v4042
      %v4993 = vpack.c.b16 %v4068, %v4043
      %v4994 = vpack.c.b16 %v4069, %v4044
      %v4995 = vpack.c.b16 %v4070, %v4045
      %v4996 = vpack.c.b16 %v4071, %v4046
      %v4997 = vpack.c.b16 %v4072, %v4047
      %v4998 = vpack.c.b16 %v4073, %v4048
      %v4999 = vpack.c.b16 %v4074, %v4049
      %v5000 = vpack.c.b16 %v4075, %v4050
      %v5001 = vpack.c.b16 %v4101, %v4076
      %v5002 = vpack.c.b16 %v4102, %v4077
      %v5003 = vpack.c.b16 %v4103, %v4078
      %v5004 = vpack.c.b16 %v4104, %v4079
      %v5005 = vpack.c.b16 %v4105, %v4080
      %v5006 = vpack.c.b16 %v4106, %v4081
      %v5007 = vpack.c.b16 %v4107, %v4082
      %v5008 = vpack.c.b16 %v4108, %v4083
      %v5009 = vpack.c.b16 %v4109, %v4084
      %v5010 = vpack.c.b16 %v4110, %v4085
      %v5011 = vpack.c.b16 %v4111, %v4086
      %v5012 = vpack.c.b16 %v4112, %v4087
      %v5013 = vpack.c.b16 %v4113, %v4088
      %v5014 = vpack.c.b16 %v4114, %v4089
      %v5015 = vpack.c.b16 %v4115, %v4090
      %v5016 = vpack.c.b16 %v4116, %v4091
      %v5017 = vpack.c.b16 %v4117, %v4092
      %v5018 = vpack.c.b16 %v4118, %v4093
      %v5019 = vpack.c.b16 %v4119, %v4094
      %v5020 = vpack.c.b16 %v4120, %v4095
      %v5021 = vpack.c.b16 %v4121, %v4096
      %v5022 = vpack.c.b16 %v4122, %v4097
      %v5023 = vpack.c.b16 %v4123, %v4098
      %v5024 = vpack.c.b16 %v4124, %v4099
      %v5025 = vpack.c.b16 %v4125, %v4100
      %v5026 = vpack.c.b16 %v4151, %v4126
      %v5027 = vpack.c.b16 %v4152, %v4127
      %v5028 = vpack.c.b16 %v4153, %v4128
      %v5029 = vpack.c.b16 %v4154, %v4129
      %v5030 = vpack.c.b16 %v4155, %v4130
      %v5031 = vpack.c.b16 %v4156, %v4131
      %v5032 = vpack.c.b16 %v4157, %v4132
      %v5033 = vpack.c.b16 %v4158, %v4133
      %v5034 = vpack.c.b16 %v4159, %v4134
      %v5035 = vpack.c.b16 %v4160, %v4135
      %v5036 = vpack.c.b16 %v4161, %v4136
      %v5037 = vpack.c.b16 %v4162, %v4137
      %v5038 = vpack.c.b16 %v4163, %v4138
      %v5039 = vpack.c.b16 %v4164, %v4139
      %v5040 = vpack.c.b16 %v4165, %v4140
      %v5041 = vpack.c.b16 %v4166, %v4141
      %v5042 = vpack.c.b16 %v4167, %v4142
      %v5043 = vpack.c.b16 %v4168, %v4143
      %v5044 = vpack.c.b16 %v4169, %v4144
      %v5045 = vpack.c.b16 %v4170, %v4145
      %v5046 = vpack.c.b16 %v4171, %v4146
      %v5047 = vpack.c.b16 %v4172, %v4147
      %v5048 = vpack.c.b16 %v4173, %v4148
      %v5049 = vpack.c.b16 %v4174, %v4149
      %v5050 = vpack.c.b16 %v4175, %v4150
      %v5051 = vpack.c.b16 %v4201, %v4176
      %v5052 = vpack.c.b16 %v4202, %v4177
      %v5053 = vpack.c.b16 %v4203, %v4178
      %v5054 = vpack.c.b16 %v4204, %v4179
      %v5055 = vpack.c.b16 %v4205, %v4180
      %v5056 = vpack.c.b16 %v4206, %v4181
      %v5057 = vpack.c.b16 %v4207, %v4182
      %v5058 = vpack.c.b16 %v4208, %v4183
      %v5059 = vpack.c.b16 %v4209, %v4184
      %v5060 = vpack.c.b16 %v4210, %v4185
      %v5061 = vpack.c.b16 %v4211, %v4186
      %v5062 = vpack.c.b16 %v4212, %v4187
      %v5063 = vpack.c.b16 %v4213, %v4188
      %v5064 = vpack.c.b16 %v4214, %v4189
      %v5065 = vpack.c.b16 %v4215, %v4190
      %v5066 = vpack.c.b16 %v4216, %v4191
      %v5067 = vpack.c.b16 %v4217, %v4192
      %v5068 = vpack.c.b16 %v4218, %v4193
      %v5069 = vpack.c.b16 %v4219, %v4194
      %v5070 = vpack.c.b16 %v4220, %v4195
      %v5071 = vpack.c.b16 %v4221, %v4196
      %v5072 = vpack.c.b16 %v4222, %v4197
      %v5073 = vpack.c.b16 %v4223, %v4198
      %v5074 = vpack.c.b16 %v4224, %v4199
      %v5075 = vpack.c.b16 %v4225, %v4200
      %v5076 = vpack.c.b16 %v4251, %v4226
      %v5077 = vpack.c.b16 %v4252, %v4227
      %v5078 = vpack.c.b16 %v4253, %v4228
      %v5079 = vpack.c.b16 %v4254, %v4229
      %v5080 = vpack.c.b16 %v4255, %v4230
      %v5081 = vpack.c.b16 %v4256, %v4231
      %v5082 = vpack.c.b16 %v4257, %v4232
      %v5083 = vpack.c.b16 %v4258, %v4233
      %v5084 = vpack.c.b16 %v4259, %v4234
      %v5085 = vpack.c.b16 %v4260, %v4235
      %v5086 = vpack.c.b16 %v4261, %v4236
      %v5087 = vpack.c.b16 %v4262, %v4237
      %v5088 = vpack.c.b16 %v4263, %v4238
      %v5089 = vpack.c.b16 %v4264, %v4239
      %v5090 = vpack.c.b16 %v4265, %v4240
      %v5091 = vpack.c.b16 %v4266, %v4241
      %v5092 = vpack.c.b16 %v4267, %v4242
      %v5093 = vpack.c.b16 %v4268, %v4243
      %v5094 = vpack.c.b16 %v4269, %v4244
      %v5095 = vpack.c.b16 %v4270, %v4245
      %v5096 = vpack.c.b16 %v4271, %v4246
      %v5097 = vpack.c.b16 %v4272, %v4247
      %v5098 = vpack.c.b16 %v4273, %v4248
      %v5099 = vpack.c.b16 %v4274, %v4249
      %v5100 = vpack.c.b16 %v4275, %v4250
      %v5101 = vpack.c.b16 %v4301, %v4276
      %v5102 = vpack.c.b16 %v4302, %v4277
      %v5103 = vpack.c.b16 %v4303, %v4278
      %v5104 = vpack.c.b16 %v4304, %v4279
      %v5105 = vpack.c.b16 %v4305, %v4280
      %v5106 = vpack.c.b16 %v4306, %v4281
      %v5107 = vpack.c.b16 %v4307, %v4282
      %v5108 = vpack.c.b16 %v4308, %v4283
      %v5109 = vpack.c.b16 %v4309, %v4284
      %v5110 = vpack.c.b16 %v4310, %v4285
      %v5111 = vpack.c.b16 %v4311, %v4286
      %v5112 = vpack.c.b16 %v4312, %v4287
      %v5113 = vpack.c.b16 %v4313, %v4288
      %v5114 = vpack.c.b16 %v4314, %v4289
      %v5115 = vpack.c.b16 %v4315, %v4290
      %v5116 = vpack.c.b16 %v4316, %v4291
      %v5117 = vpack.c.b16 %v4317, %v4292
      %v5118 = vpack.c.b16 %v4318, %v4293
      %v5119 = vpack.c.b16 %v4319, %v4294
      %v5120 = vpack.c.b16 %v4320, %v4295
      %v5121 = vpack.c.b16 %v4321, %v4296
      %v5122 = vpack.c.b16 %v4322, %v4297
      %v5123 = vpack.c.b16 %v4323, %v4298
      %v5124 = vpack.c.b16 %v4324, %v4299
      %v5125 = vpack.c.b16 %v4325, %v4300
      %v6286 = vunpack.c.l.b16 %v286
      %v6287 = vunpack.c.l.b16 %v287
      %v6288 = vunpack.c.l.b16 %v288
      %v6289 = vunpack.c.l.b16 %v289
      %v6290 = vunpack.c.l.b16 %v290
      %v6291 = vunpack.c.l.b16 %v291
      %v6292 = vunpack.c.l.b16 %v292
      %v6293 = vunpack.c.l.b16 %v293
      %v6294 = vunpack.c.l.b16 %v294
      %v6295 = vunpack.c.l.b16 %v295
      %v6296 = vunpack.c.l.b16 %v296
      %v6297 = vunpack.c.l.b16 %v297
      %v6298 = vunpack.c.l.b16 %v298
      %v6299 = vunpack.c.l.b16 %v299
      %v6300 = vunpack.c.l.b16 %v300
      %v6301 = vunpack.c.l.b16 %v301
      %v6302 = vunpack.c.l.b16 %v302
      %v6303 = vunpack.c.l.b16 %v303
      %v6304 = vunpack.c.l.b16 %v304
      %v6305 = vunpack.c.l.b16 %v305
      %v6306 = vunpack.c.l.b16 %v306
      %v6307 = vunpack.c.l.b16 %v307
      %v6308 = vunpack.c.l.b16 %v308
      %v6309 = vunpack.c.l.b16 %v309
      %v6310 = vunpack.c.l.b16 %v310
      %v6311 = vunpack.c.l.b16 %v311
      %v6312 = vunpack.c.l.b16 %v312
      %v6313 = vunpack.c.l.b16 %v313
      %v6314 = vunpack.c.l.b16 %v314
      %v6315 = vunpack.c.l.b16 %v315
      %v6316 = vunpack.c.l.b16 %v316
      %v6317 = vunpack.c.l.b16 %v317
      %v6318 = vunpack.c.l.b16 %v318
      %v6319 = vunpack.c.l.b16 %v319
      %v6320 = vunpack.c.l.b16 %v320
      %v6321 = vunpack.c.l.b16 %v321
      %v6322 = vunpack.c.l.b16 %v322
      %v6323 = vunpack.c.l.b16 %v323
      %v6324 = vunpack.c.l.b16 %v324
      %v6325 = vunpack.c.l.b16 %v325
      %v6326 = vunpack.c.l.b16 %v326
      %v6327 = vunpack.c.l.b16 %v327
      %v6328 = vunpack.c.l.b16 %v328
      %v6329 = vunpack.c.l.b16 %v329
      %v6330 = vunpack.c.l.b16 %v330
      %v6331 = vunpack.c.l.b16 %v331
      %v6332 = vunpack.c.l.b16 %v332
      %v6333 = vunpack.c.l.b16 %v333
      %v6334 = vunpack.c.l.b16 %v334
      %v6335 = vunpack.c.l.b16 %v335
      %v6336 = vunpack.c.l.b16 %v336
      %v6337 = vunpack.c.l.b16 %v337
      %v6338 = vunpack.c.l.b16 %v338
      %v6339 = vunpack.c.l.b16 %v339
      %v6340 = vunpack.c.l.b16 %v340
      %v6341 = vunpack.c.l.b16 %v341
      %v6342 = vunpack.c.l.b16 %v342
      %v6343 = vunpack.c.l.b16 %v343
      %v6344 = vunpack.c.l.b16 %v344
      %v6345 = vunpack.c.l.b16 %v345
      %v6346 = vunpack.c.l.b16 %v346
      %v6347 = vunpack.c.l.b16 %v347
      %v6348 = vunpack.c.l.b16 %v348
      %v6349 = vunpack.c.l.b16 %v349
      %v6350 = vunpack.c.l.b16 %v350
      %v6351 = vunpack.c.l.b16 %v351
      %v6352 = vunpack.c.l.b16 %v352
      %v6353 = vunpack.c.l.b16 %v353
      %v6354 = vunpack.c.l.b16 %v354
      %v6355 = vunpack.c.l.b16 %v355
      %v6356 = vunpack.c.l.b16 %v356
      %v6357 = vunpack.c.l.b16 %v357
      %v6358 = vunpack.c.l.b16 %v358
      %v6359 = vunpack.c.l.b16 %v359
      %v6360 = vunpack.c.l.b16 %v360
      %v6361 = vunpack.c.l.b16 %v361
      %v6362 = vunpack.c.l.b16 %v362
      %v6363 = vunpack.c.l.b16 %v363
      %v6364 = vunpack.c.l.b16 %v364
      %v6365 = vunpack.c.l.b16 %v365
      %v6366 = vunpack.c.l.b16 %v366
      %v6367 = vunpack.c.l.b16 %v367
      %v6368 = vunpack.c.l.b16 %v368
      %v6369 = vunpack.c.l.b16 %v369
      %v6370 = vunpack.c.l.b16 %v370
      %v6371 = vunpack.c.l.b16 %v371
      %v6372 = vunpack.c.l.b16 %v372
      %v6373 = vunpack.c.l.b16 %v373
      %v6374 = vunpack.c.l.b16 %v374
      %v6375 = vunpack.c.l.b16 %v375
      %v6376 = vunpack.c.l.b16 %v376
      %v6377 = vunpack.c.l.b16 %v377
      %v6378 = vunpack.c.l.b16 %v378
      %v6379 = vunpack.c.l.b16 %v379
      %v6380 = vunpack.c.l.b16 %v380
      %v6381 = vunpack.c.l.b16 %v381
      %v6382 = vunpack.c.l.b16 %v382
      %v6383 = vunpack.c.l.b16 %v383
      %v6384 = vunpack.c.l.b16 %v384
      %v6385 = vunpack.c.l.b16 %v385
      %v6386 = vunpack.c.l.b16 %v386
      %v6387 = vunpack.c.l.b16 %v387
      %v6388 = vunpack.c.l.b16 %v388
      %v6389 = vunpack.c.l.b16 %v389
      %v6390 = vunpack.c.l.b16 %v390
      %v6391 = vunpack.c.l.b16 %v391
      %v6392 = vunpack.c.l.b16 %v392
      %v6393 = vunpack.c.l.b16 %v393
      %v6394 = vunpack.c.l.b16 %v394
      %v6395 = vunpack.c.l.b16 %v395
      %v6396 = vunpack.c.l.b16 %v396
      %v6397 = vunpack.c.l.b16 %v397
      %v6398 = vunpack.c.l.b16 %v398
      %v6399 = vunpack.c.l.b16 %v399
      %v6400 = vunpack.c.l.b16 %v400
      %v6401 = vunpack.c.l.b16 %v401
      %v6402 = vunpack.c.l.b16 %v402
      %v6403 = vunpack.c.l.b16 %v403
      %v6404 = vunpack.c.l.b16 %v404
      %v6405 = vunpack.c.l.b16 %v405
      %v6406 = vunpack.c.l.b16 %v406
      %v6407 = vunpack.c.l.b16 %v407
      %v6408 = vunpack.c.l.b16 %v408
      %v6409 = vunpack.c.l.b16 %v409
      %v6410 = vunpack.c.l.b16 %v410
      %v6411 = vunpack.c.l.b16 %v411
      %v6412 = vunpack.c.l.b16 %v412
      %v6413 = vunpack.c.l.b16 %v413
      %v6414 = vunpack.c.l.b16 %v414
      %v6415 = vunpack.c.l.b16 %v415
      %v6416 = vunpack.c.l.b16 %v416
      %v6417 = vunpack.c.l.b16 %v417
      %v6418 = vunpack.c.l.b16 %v418
      %v6419 = vunpack.c.l.b16 %v419
      %v6420 = vunpack.c.l.b16 %v420
      %v6421 = vunpack.c.l.b16 %v421
      %v6422 = vunpack.c.l.b16 %v422
      %v6423 = vunpack.c.l.b16 %v423
      %v6424 = vunpack.c.l.b16 %v424
      %v6425 = vunpack.c.l.b16 %v425
      %v6426 = vunpack.c.l.b16 %v426
      %v6427 = vunpack.c.l.b16 %v427
      %v6428 = vunpack.c.l.b16 %v428
      %v6429 = vunpack.c.l.b16 %v429
      %v6430 = vunpack.c.l.b16 %v430
      %v6431 = vunpack.c.l.b16 %v431
      %v6432 = vunpack.c.l.b16 %v432
      %v6433 = vunpack.c.l.b16 %v433
      %v6434 = vunpack.c.l.b16 %v434
      %v6435 = vunpack.c.l.b16 %v435
      %v6436 = vunpack.c.l.b16 %v436
      %v6437 = vunpack.c.l.b16 %v437
      %v6438 = vunpack.c.l.b16 %v438
      %v6439 = vunpack.c.l.b16 %v439
      %v6440 = vunpack.c.l.b16 %v440
      %v6441 = vunpack.c.l.b16 %v441
      %v6442 = vunpack.c.l.b16 %v442
      %v6443 = vunpack.c.l.b16 %v443
      %v6444 = vunpack.c.l.b16 %v444
      %v6445 = vunpack.c.l.b16 %v445
      %v6446 = vunpack.c.l.b16 %v446
      %v6447 = vunpack.c.l.b16 %v447
      %v6448 = vunpack.c.l.b16 %v448
      %v6449 = vunpack.c.l.b16 %v449
      %v6450 = vunpack.c.l.b16 %v450
      %v6451 = vunpack.c.l.b16 %v451
      %v6452 = vunpack.c.l.b16 %v452
      %v6453 = vunpack.c.l.b16 %v453
      %v6454 = vunpack.c.l.b16 %v454
      %v6455 = vunpack.c.l.b16 %v455
      %v6456 = vunpack.c.l.b16 %v456
      %v6457 = vunpack.c.l.b16 %v457
      %v6458 = vunpack.c.l.b16 %v458
      %v6459 = vunpack.c.l.b16 %v459
      %v6460 = vunpack.c.l.b16 %v460
      %v6461 = vunpack.c.l.b16 %v461
      %v6462 = vunpack.c.l.b16 %v462
      %v6463 = vunpack.c.l.b16 %v463
      %v6464 = vunpack.c.l.b16 %v464
      %v6465 = vunpack.c.l.b16 %v465
      %v6466 = vunpack.c.l.b16 %v466
      %v6467 = vunpack.c.l.b16 %v467
      %v6468 = vunpack.c.l.b16 %v468
      %v6469 = vunpack.c.l.b16 %v469
      %v6470 = vunpack.c.l.b16 %v470
      %v6471 = vunpack.c.l.b16 %v471
      %v6472 = vunpack.c.l.b16 %v472
      %v6473 = vunpack.c.l.b16 %v473
      %v6474 = vunpack.c.l.b16 %v474
      %v6475 = vunpack.c.l.b16 %v475
      %v6476 = vunpack.c.l.b16 %v476
      %v6477 = vunpack.c.l.b16 %v477
      %v6478 = vunpack.c.l.b16 %v478
      %v6479 = vunpack.c.l.b16 %v479
      %v6480 = vunpack.c.l.b16 %v480
      %v6481 = vunpack.c.l.b16 %v481
      %v6482 = vunpack.c.l.b16 %v482
      %v6483 = vunpack.c.l.b16 %v483
      %v6484 = vunpack.c.l.b16 %v484
      %v6485 = vunpack.c.l.b16 %v485
      %v6486 = vunpack.c.l.b16 %v486
      %v6487 = vunpack.c.l.b16 %v487
      %v6488 = vunpack.c.l.b16 %v488
      %v6489 = vunpack.c.l.b16 %v489
      %v6490 = vunpack.c.l.b16 %v490
      %v6491 = vunpack.c.l.b16 %v491
      %v6492 = vunpack.c.l.b16 %v492
      %v6493 = vunpack.c.l.b16 %v493
      %v6494 = vunpack.c.l.b16 %v494
      %v6495 = vunpack.c.l.b16 %v495
      %v6496 = vunpack.c.l.b16 %v496
      %v6497 = vunpack.c.l.b16 %v497
      %v6498 = vunpack.c.l.b16 %v498
      %v6499 = vunpack.c.l.b16 %v499
      %v6500 = vunpack.c.l.b16 %v500
      %v6501 = vunpack.c.l.b16 %v501
      %v6502 = vunpack.c.l.b16 %v502
      %v6503 = vunpack.c.l.b16 %v503
      %v6504 = vunpack.c.l.b16 %v504
      %v6505 = vunpack.c.l.b16 %v505
      %v6506 = vunpack.c.l.b16 %v506
      %v6507 = vunpack.c.l.b16 %v507
      %v6508 = vunpack.c.l.b16 %v508
      %v6509 = vunpack.c.l.b16 %v509
      %v6510 = vunpack.c.l.b16 %v510
      %v6511 = vunpack.c.l.b16 %v511
      %v6512 = vunpack.c.l.b16 %v512
      %v6513 = vunpack.c.l.b16 %v513
      %v6514 = vunpack.c.l.b16 %v514
      %v6515 = vunpack.c.l.b16 %v515
      %v6516 = vunpack.c.l.b16 %v516
      %v6517 = vunpack.c.l.b16 %v517
      %v6518 = vunpack.c.l.b16 %v518
      %v6519 = vunpack.c.l.b16 %v519
      %v6520 = vunpack.c.l.b16 %v520
      %v6521 = vunpack.c.l.b16 %v521
      %v6522 = vunpack.c.l.b16 %v522
      %v6523 = vunpack.c.l.b16 %v523
      %v6524 = vunpack.c.l.b16 %v524
      %v6525 = vunpack.c.l.b16 %v525
      %v6526 = vunpack.c.l.b16 %v526
      %v6527 = vunpack.c.l.b16 %v527
      %v6528 = vunpack.c.l.b16 %v528
      %v6529 = vunpack.c.l.b16 %v529
      %v6530 = vunpack.c.l.b16 %v530
      %v6531 = vunpack.c.l.b16 %v531
      %v6532 = vunpack.c.l.b16 %v532
      %v6533 = vunpack.c.l.b16 %v533
      %v6534 = vunpack.c.l.b16 %v534
      %v6535 = vunpack.c.l.b16 %v535
      %v6536 = vunpack.c.l.b16 %v536
      %v6537 = vunpack.c.l.b16 %v537
      %v6538 = vunpack.c.l.b16 %v538
      %v6539 = vunpack.c.l.b16 %v539
      %v6540 = vunpack.c.l.b16 %v540
      %v6541 = vunpack.c.l.b16 %v541
      %v6542 = vunpack.c.l.b16 %v542
      %v6543 = vunpack.c.l.b16 %v543
      %v6544 = vunpack.c.l.b16 %v544
      %v6545 = vunpack.c.l.b16 %v545
      %v6546 = vunpack.c.l.b16 %v546
      %v6547 = vunpack.c.l.b16 %v547
      %v6548 = vunpack.c.l.b16 %v548
      %v6549 = vunpack.c.l.b16 %v549
      %v6550 = vunpack.c.l.b16 %v550
      %v6551 = vunpack.c.l.b16 %v551
      %v6552 = vunpack.c.l.b16 %v552
      %v6553 = vunpack.c.l.b16 %v553
      %v6554 = vunpack.c.l.b16 %v554
      %v6555 = vunpack.c.l.b16 %v555
      %v6556 = vunpack.c.l.b16 %v556
      %v6557 = vunpack.c.l.b16 %v557
      %v6558 = vunpack.c.l.b16 %v558
      %v6559 = vunpack.c.l.b16 %v559
      %v6560 = vunpack.c.l.b16 %v560
      %v6561 = vunpack.c.l.b16 %v561
      %v6562 = vunpack.c.l.b16 %v562
      %v6563 = vunpack.c.l.b16 %v563
      %v6564 = vunpack.c.l.b16 %v564
      %v6565 = vunpack.c.l.b16 %v565
      %v6566 = vunpack.c.l.b16 %v566
      %v6567 = vunpack.c.l.b16 %v567
      %v6568 = vunpack.c.l.b16 %v568
      %v6569 = vunpack.c.l.b16 %v569
      %v6570 = vunpack.c.l.b16 %v570
      %v6571 = vunpack.c.l.b16 %v571
      %v6572 = vunpack.c.l.b16 %v572
      %v6573 = vunpack.c.l.b16 %v573
      %v6574 = vunpack.c.l.b16 %v574
      %v6575 = vunpack.c.l.b16 %v575
      %v6576 = vunpack.c.l.b16 %v576
      %v6577 = vunpack.c.l.b16 %v577
      %v6578 = vunpack.c.l.b16 %v578
      %v6579 = vunpack.c.l.b16 %v579
      %v6580 = vunpack.c.l.b16 %v580
      %v6581 = vunpack.c.l.b16 %v581
      %v6582 = vunpack.c.l.b16 %v582
      %v6583 = vunpack.c.l.b16 %v583
      %v6584 = vunpack.c.l.b16 %v584
      %v6585 = vunpack.c.l.b16 %v585
      %v6586 = vunpack.c.l.b16 %v586
      %v6587 = vunpack.c.l.b16 %v587
      %v6588 = vunpack.c.l.b16 %v588
      %v6589 = vunpack.c.l.b16 %v589
      %v6590 = vunpack.c.l.b16 %v590
      %v6591 = vunpack.c.l.b16 %v591
      %v6592 = vunpack.c.l.b16 %v592
      %v6593 = vunpack.c.l.b16 %v593
      %v6594 = vunpack.c.l.b16 %v594
      %v6595 = vunpack.c.l.b16 %v595
      %v6596 = vunpack.c.l.b16 %v596
      %v6597 = vunpack.c.l.b16 %v597
      %v6598 = vunpack.c.l.b16 %v598
      %v6599 = vunpack.c.l.b16 %v599
      %v6600 = vunpack.c.l.b16 %v600
      %v6601 = vunpack.c.l.b16 %v601
      %v6602 = vunpack.c.l.b16 %v602
      %v6603 = vunpack.c.l.b16 %v603
      %v6604 = vunpack.c.l.b16 %v604
      %v6605 = vunpack.c.l.b16 %v605
      %v6606 = vunpack.c.l.b16 %v606
      %v6607 = vunpack.c.l.b16 %v607
      %v6608 = vunpack.c.l.b16 %v608
      %v6609 = vunpack.c.l.b16 %v609
      %v6610 = vunpack.c.l.b16 %v610
      %v6611 = vunpack.c.l.b16 %v611
      %v6612 = vunpack.c.l.b16 %v612
      %v6613 = vunpack.c.l.b16 %v613
      %v6614 = vunpack.c.l.b16 %v614
      %v6615 = vunpack.c.l.b16 %v615
      %v6616 = vunpack.c.l.b16 %v616
      %v6617 = vunpack.c.l.b16 %v617
      %v6618 = vunpack.c.l.b16 %v618
      %v6619 = vunpack.c.l.b16 %v619
      %v6620 = vunpack.c.l.b16 %v620
      %v6621 = vunpack.c.l.b16 %v621
      %v6622 = vunpack.c.l.b16 %v622
      %v6623 = vunpack.c.l.b16 %v623
      %v6624 = vunpack.c.l.b16 %v624
      %v6625 = vunpack.c.l.b16 %v625
      %v6626 = vunpack.c.l.b16 %v626
      %v6627 = vunpack.c.l.b16 %v627
      %v6628 = vunpack.c.l.b16 %v628
      %v6629 = vunpack.c.l.b16 %v629
      %v6630 = vunpack.c.l.b16 %v630
      %v6631 = vunpack.c.l.b16 %v631
      %v6632 = vunpack.c.l.b16 %v632
      %v6633 = vunpack.c.l.b16 %v633
      %v6634 = vunpack.c.l.b16 %v634
      %v6635 = vunpack.c.l.b16 %v635
      %v6636 = vunpack.c.l.b16 %v636
      %v6637 = vunpack.c.l.b16 %v637
      %v6638 = vunpack.c.l.b16 %v638
      %v6639 = vunpack.c.l.b16 %v639
      %v6640 = vunpack.c.l.b16 %v640
      %v6641 = vunpack.c.l.b16 %v641
      %v6642 = vunpack.c.l.b16 %v642
      %v6643 = vunpack.c.l.b16 %v643
      %v6644 = vunpack.c.l.b16 %v644
      %v6645 = vunpack.c.l.b16 %v645
      %v6646 = vunpack.c.l.b16 %v646
      %v6647 = vunpack.c.l.b16 %v647
      %v6648 = vunpack.c.l.b16 %v648
      %v6649 = vunpack.c.l.b16 %v649
      %v6650 = vunpack.c.l.b16 %v650
      %v6651 = vunpack.c.l.b16 %v651
      %v6652 = vunpack.c.l.b16 %v652
      %v6653 = vunpack.c.l.b16 %v653
      %v6654 = vunpack.c.l.b16 %v654
      %v6655 = vunpack.c.l.b16 %v655
      %v6656 = vunpack.c.l.b16 %v656
      %v6657 = vunpack.c.l.b16 %v657
      %v6658 = vunpack.c.l.b16 %v658
      %v6659 = vunpack.c.l.b16 %v659
      %v6660 = vunpack.c.l.b16 %v660
      %v6661 = vunpack.c.l.b16 %v661
      %v6662 = vunpack.c.l.b16 %v662
      %v6663 = vunpack.c.l.b16 %v663
      %v6664 = vunpack.c.l.b16 %v664
      %v6665 = vunpack.c.l.b16 %v665
      %v6666 = vunpack.c.l.b16 %v666
      %v6667 = vunpack.c.l.b16 %v667
      %v6668 = vunpack.c.l.b16 %v668
      %v6669 = vunpack.c.l.b16 %v669
      %v6670 = vunpack.c.l.b16 %v670
      %v6671 = vunpack.c.l.b16 %v671
      %v6672 = vunpack.c.l.b16 %v672
      %v6673 = vunpack.c.l.b16 %v673
      %v6674 = vunpack.c.l.b16 %v674
      %v6675 = vunpack.c.l.b16 %v675
      %v6676 = vunpack.c.l.b16 %v676
      %v6677 = vunpack.c.l.b16 %v677
      %v6678 = vpack.c.b16 %v6287, %v6286
      %v6679 = vpack.c.b16 %v6289, %v6288
      %v6680 = vpack.c.b16 %v6291, %v6290
      %v6681 = vpack.c.b16 %v6293, %v6292
      %v6682 = vpack.c.b16 %v6295, %v6294
      %v6683 = vpack.c.b16 %v6297, %v6296
      %v6684 = vpack.c.b16 %v6299, %v6298
      %v6685 = vpack.c.b16 %v6301, %v6300
      %v6686 = vpack.c.b16 %v6303, %v6302
      %v6687 = vpack.c.b16 %v6305, %v6304
      %v6688 = vpack.c.b16 %v6307, %v6306
      %v6689 = vpack.c.b16 %v6309, %v6308
      %v6690 = vpack.c.b16 %v6311, %v6310
      %v6691 = vpack.c.b16 %v6313, %v6312
      %v6692 = vpack.c.b16 %v6315, %v6314
      %v6693 = vpack.c.b16 %v6317, %v6316
      %v6694 = vpack.c.b16 %v6319, %v6318
      %v6695 = vpack.c.b16 %v6321, %v6320
      %v6696 = vpack.c.b16 %v6323, %v6322
      %v6697 = vpack.c.b16 %v6325, %v6324
      %v6698 = vpack.c.b16 %v6327, %v6326
      %v6699 = vpack.c.b16 %v6329, %v6328
      %v6700 = vpack.c.b16 %v6331, %v6330
      %v6701 = vpack.c.b16 %v6333, %v6332
      %v6702 = vpack.c.b16 %v6335, %v6334
      %v6703 = vpack.c.b16 %v6337, %v6336
      %v6704 = vpack.c.b16 %v6339, %v6338
      %v6705 = vpack.c.b16 %v6341, %v6340
      %v6706 = vpack.c.b16 %v6343, %v6342
      %v6707 = vpack.c.b16 %v6345, %v6344
      %v6708 = vpack.c.b16 %v6347, %v6346
      %v6709 = vpack.c.b16 %v6349, %v6348
      %v6710 = vpack.c.b16 %v6351, %v6350
      %v6711 = vpack.c.b16 %v6353, %v6352
      %v6712 = vpack.c.b16 %v6355, %v6354
      %v6713 = vpack.c.b16 %v6357, %v6356
      %v6714 = vpack.c.b16 %v6359, %v6358
      %v6715 = vpack.c.b16 %v6361, %v6360
      %v6716 = vpack.c.b16 %v6363, %v6362
      %v6717 = vpack.c.b16 %v6365, %v6364
      %v6718 = vpack.c.b16 %v6367, %v6366
      %v6719 = vpack.c.b16 %v6369, %v6368
      %v6720 = vpack.c.b16 %v6371, %v6370
      %v6721 = vpack.c.b16 %v6373, %v6372
      %v6722 = vpack.c.b16 %v6375, %v6374
      %v6723 = vpack.c.b16 %v6377, %v6376
      %v6724 = vpack.c.b16 %v6379, %v6378
      %v6725 = vpack.c.b16 %v6381, %v6380
      %v6726 = vpack.c.b16 %v6383, %v6382
      %v6727 = vpack.c.b16 %v6385, %v6384
      %v6728 = vpack.c.b16 %v6387, %v6386
      %v6729 = vpack.c.b16 %v6389, %v6388
      %v6730 = vpack.c.b16 %v6391, %v6390
      %v6731 = vpack.c.b16 %v6393, %v6392
      %v6732 = vpack.c.b16 %v6395, %v6394
      %v6733 = vpack.c.b16 %v6397, %v6396
      %v6734 = vpack.c.b16 %v6399, %v6398
      %v6735 = vpack.c.b16 %v6401, %v6400
      %v6736 = vpack.c.b16 %v6403, %v6402
      %v6737 = vpack.c.b16 %v6405, %v6404
      %v6738 = vpack.c.b16 %v6407, %v6406
      %v6739 = vpack.c.b16 %v6409, %v6408
      %v6740 = vpack.c.b16 %v6411, %v6410
      %v6741 = vpack.c.b16 %v6413, %v6412
      %v6742 = vpack.c.b16 %v6415, %v6414
      %v6743 = vpack.c.b16 %v6417, %v6416
      %v6744 = vpack.c.b16 %v6419, %v6418
      %v6745 = vpack.c.b16 %v6421, %v6420
      %v6746 = vpack.c.b16 %v6423, %v6422
      %v6747 = vpack.c.b16 %v6425, %v6424
      %v6748 = vpack.c.b16 %v6427, %v6426
      %v6749 = vpack.c.b16 %v6429, %v6428
      %v6750 = vpack.c.b16 %v6431, %v6430
      %v6751 = vpack.c.b16 %v6433, %v6432
      %v6752 = vpack.c.b16 %v6435, %v6434
      %v6753 = vpack.c.b16 %v6437, %v6436
      %v6754 = vpack.c.b16 %v6439, %v6438
      %v6755 = vpack.c.b16 %v6441, %v6440
      %v6756 = vpack.c.b16 %v6443, %v6442
      %v6757 = vpack.c.b16 %v6445, %v6444
      %v6758 = vpack.c.b16 %v6447, %v6446
      %v6759 = vpack.c.b16 %v6449, %v6448
      %v6760 = vpack.c.b16 %v6451, %v6450
      %v6761 = vpack.c.b16 %v6453, %v6452
      %v6762 = vpack.c.b16 %v6455, %v6454
      %v6763 = vpack.c.b16 %v6457, %v6456
      %v6764 = vpack.c.b16 %v6459, %v6458
      %v6765 = vpack.c.b16 %v6461, %v6460
      %v6766 = vpack.c.b16 %v6463, %v6462
      %v6767 = vpack.c.b16 %v6465, %v6464
      %v6768 = vpack.c.b16 %v6467, %v6466
      %v6769 = vpack.c.b16 %v6469, %v6468
      %v6770 = vpack.c.b16 %v6471, %v6470
      %v6771 = vpack.c.b16 %v6473, %v6472
      %v6772 = vpack.c.b16 %v6475, %v6474
      %v6773 = vpack.c.b16 %v6477, %v6476
      %v6774 = vpack.c.b16 %v6479, %v6478
      %v6775 = vpack.c.b16 %v6481, %v6480
      %v6776 = vpack.c.b16 %v6483, %v6482
      %v6777 = vpack.c.b16 %v6485, %v6484
      %v6778 = vpack.c.b16 %v6487, %v6486
      %v6779 = vpack.c.b16 %v6489, %v6488
      %v6780 = vpack.c.b16 %v6491, %v6490
      %v6781 = vpack.c.b16 %v6493, %v6492
      %v6782 = vpack.c.b16 %v6495, %v6494
      %v6783 = vpack.c.b16 %v6497, %v6496
      %v6784 = vpack.c.b16 %v6499, %v6498
      %v6785 = vpack.c.b16 %v6501, %v6500
      %v6786 = vpack.c.b16 %v6503, %v6502
      %v6787 = vpack.c.b16 %v6505, %v6504
      %v6788 = vpack.c.b16 %v6507, %v6506
      %v6789 = vpack.c.b16 %v6509, %v6508
      %v6790 = vpack.c.b16 %v6511, %v6510
      %v6791 = vpack.c.b16 %v6513, %v6512
      %v6792 = vpack.c.b16 %v6515, %v6514
      %v6793 = vpack.c.b16 %v6517, %v6516
      %v6794 = vpack.c.b16 %v6519, %v6518
      %v6795 = vpack.c.b16 %v6521, %v6520
      %v6796 = vpack.c.b16 %v6523, %v6522
      %v6797 = vpack.c.b16 %v6525, %v6524
      %v6798 = vpack.c.b16 %v6527, %v6526
      %v6799 = vpack.c.b16 %v6529, %v6528
      %v6800 = vpack.c.b16 %v6531, %v6530
      %v6801 = vpack.c.b16 %v6533, %v6532
      %v6802 = vpack.c.b16 %v6535, %v6534
      %v6803 = vpack.c.b16 %v6537, %v6536
      %v6804 = vpack.c.b16 %v6539, %v6538
      %v6805 = vpack.c.b16 %v6541, %v6540
      %v6806 = vpack.c.b16 %v6543, %v6542
      %v6807 = vpack.c.b16 %v6545, %v6544
      %v6808 = vpack.c.b16 %v6547, %v6546
      %v6809 = vpack.c.b16 %v6549, %v6548
      %v6810 = vpack.c.b16 %v6551, %v6550
      %v6811 = vpack.c.b16 %v6553, %v6552
      %v6812 = vpack.c.b16 %v6555, %v6554
      %v6813 = vpack.c.b16 %v6557, %v6556
      %v6814 = vpack.c.b16 %v6559, %v6558
      %v6815 = vpack.c.b16 %v6561, %v6560
      %v6816 = vpack.c.b16 %v6563, %v6562
      %v6817 = vpack.c.b16 %v6565, %v6564
      %v6818 = vpack.c.b16 %v6567, %v6566
      %v6819 = vpack.c.b16 %v6569, %v6568
      %v6820 = vpack.c.b16 %v6571, %v6570
      %v6821 = vpack.c.b16 %v6573, %v6572
      %v6822 = vpack.c.b16 %v6575, %v6574
      %v6823 = vpack.c.b16 %v6577, %v6576
      %v6824 = vpack.c.b16 %v6579, %v6578
      %v6825 = vpack.c.b16 %v6581, %v6580
      %v6826 = vpack.c.b16 %v6583, %v6582
      %v6827 = vpack.c.b16 %v6585, %v6584
      %v6828 = vpack.c.b16 %v6587, %v6586
      %v6829 = vpack.c.b16 %v6589, %v6588
      %v6830 = vpack.c.b16 %v6591, %v6590
      %v6831 = vpack.c.b16 %v6593, %v6592
      %v6832 = vpack.c.b16 %v6595, %v6594
      %v6833 = vpack.c.b16 %v6597, %v6596
      %v6834 = vpack.c.b16 %v6599, %v6598
      %v6835 = vpack.c.b16 %v6601, %v6600
      %v6836 = vpack.c.b16 %v6603, %v6602
      %v6837 = vpack.c.b16 %v6605, %v6604
      %v6838 = vpack.c.b16 %v6607, %v6606
      %v6839 = vpack.c.b16 %v6609, %v6608
      %v6840 = vpack.c.b16 %v6611, %v6610
      %v6841 = vpack.c.b16 %v6613, %v6612
      %v6842 = vpack.c.b16 %v6615, %v6614
      %v6843 = vpack.c.b16 %v6617, %v6616
      %v6844 = vpack.c.b16 %v6619, %v6618
      %v6845 = vpack.c.b16 %v6621, %v6620
      %v6846 = vpack.c.b16 %v6623, %v6622
      %v6847 = vpack.c.b16 %v6625, %v6624
      %v6848 = vpack.c.b16 %v6627, %v6626
      %v6849 = vpack.c.b16 %v6629, %v6628
      %v6850 = vpack.c.b16 %v6631, %v6630
      %v6851 = vpack.c.b16 %v6633, %v6632
      %v6852 = vpack.c.b16 %v6635, %v6634
      %v6853 = vpack.c.b16 %v6637, %v6636
      %v6854 = vpack.c.b16 %v6639, %v6638
      %v6855 = vpack.c.b16 %v6641, %v6640
      %v6856 = vpack.c.b16 %v6643, %v6642
      %v6857 = vpack.c.b16 %v6645, %v6644
      %v6858 = vpack.c.b16 %v6647, %v6646
      %v6859 = vpack.c.b16 %v6649, %v6648
      %v6860 = vpack.c.b16 %v6651, %v6650
      %v6861 = vpack.c.b16 %v6653, %v6652
      %v6862 = vpack.c.b16 %v6655, %v6654
      %v6863 = vpack.c.b16 %v6657, %v6656
      %v6864 = vpack.c.b16 %v6659, %v6658
      %v6865 = vpack.c.b16 %v6661, %v6660
      %v6866 = vpack.c.b16 %v6663, %v6662
      %v6867 = vpack.c.b16 %v6665, %v6664
      %v6868 = vpack.c.b16 %v6667, %v6666
      %v6869 = vpack.c.b16 %v6669, %v6668
      %v6870 = vpack.c.b16 %v6671, %v6670
      %v6871 = vpack.c.b16 %v6673, %v6672
      %v6872 = vpack.c.b16 %v6675, %v6674
      %v6873 = vpack.c.b16 %v6677, %v6676
      %vm7070 = vcmask 523264
      %v7072 = vsel %vm7070, %v4350, 0
      %v7075 = vsel %vm7070, %v4375, 0
      %v7078 = vsel %vm7070, %v4400, 0
      %v7081 = vsel %vm7070, %v4425, 0
      %v7084 = vsel %vm7070, %v4450, 0
      %v7087 = vsel %vm7070, %v4475, 0
      %v7090 = vsel %vm7070, %v4500, 0
      %v7093 = vsel %vm7070, %v4525, 0
      %v7096 = vsel %vm7070, %v4550, 0
      %v7099 = vsel %vm7070, %v4575, 0
      %v7102 = vsel %vm7070, %v4600, 0
      %v7105 = vsel %vm7070, %v4625, 0
      %v7108 = vsel %vm7070, %v4650, 0
      %v7111 = vsel %vm7070, %v4675, 0
      %v7114 = vsel %vm7070, %v4700, 0
      %v7117 = vsel %vm7070, %v4725, 0
      %v7120 = vsel %vm7070, %v4750, 0
      %v7123 = vsel %vm7070, %v4775, 0
      %v7126 = vsel %vm7070, %v4800, 0
      %v7129 = vsel %vm7070, %v4825, 0
      %v7132 = vsel %vm7070, %v4850, 0
      %v7135 = vsel %vm7070, %v4875, 0
      %v7138 = vsel %vm7070, %v4900, 0
      %v7141 = vsel %vm7070, %v4925, 0
      %v7144 = vsel %vm7070, %v4950, 0
      %v7147 = vsel %vm7070, %v4975, 0
      %v7150 = vsel %vm7070, %v5000, 0
      %v7153 = vsel %vm7070, %v5025, 0
      %v7156 = vsel %vm7070, %v5050, 0
      %v7159 = vsel %vm7070, %v5075, 0
      %v7162 = vsel %vm7070, %v5100, 0
      %v7165 = vsel %vm7070, %v5125, 0
      %7167 = vmatpush.bf16.msra.mxu0 %v6685
      %7168 = vmatpush.bf16.msra.mxu0 %v6684
      %7169 = vmatpush.bf16.msra.mxu0 %v6683
      %7170 = vmatpush.bf16.msra.mxu0 %v6682
      %7171 = vmatpush.bf16.msra.mxu0 %v6681
      %7172 = vmatpush.bf16.msra.mxu0 %v6680
      %7173 = vmatpush.bf16.msra.mxu0 %v6679
      %7174 = vmatpush.bf16.msra.mxu0 %v6678
      %7175 = vmatmul.bf16.gmra.mxu0 %v4326
      %v7176 = vpop.f32.mrf.mxu0
      %v7177 = vadd.f32 %v1577, %v7176
      %v7178 = vpop.f32.mrf.mxu0
      %v7179 = vadd.f32 %v1582, %v7178
      %7180 = vmatmul.bf16.gmra.mxu0 %v4351
      %v7181 = vpop.f32.mrf.mxu0
      %v7182 = vadd.f32 %v1587, %v7181
      %v7183 = vpop.f32.mrf.mxu0
      %v7184 = vadd.f32 %v1592, %v7183
      %7185 = vmatmul.bf16.gmra.mxu0 %v4376
      %v7186 = vpop.f32.mrf.mxu0
      %v7187 = vadd.f32 %v1597, %v7186
      %v7188 = vpop.f32.mrf.mxu0
      %v7189 = vadd.f32 %v1602, %v7188
      %7190 = vmatmul.bf16.gmra.mxu0 %v4401
      %v7191 = vpop.f32.mrf.mxu0
      %v7192 = vadd.f32 %v1607, %v7191
      %v7193 = vpop.f32.mrf.mxu0
      %v7194 = vadd.f32 %v1612, %v7193
      %7195 = vmatmul.bf16.gmra.mxu0 %v4426
      %v7196 = vpop.f32.mrf.mxu0
      %v7197 = vadd.f32 %v1617, %v7196
      %v7198 = vpop.f32.mrf.mxu0
      %v7199 = vadd.f32 %v1622, %v7198
      %7200 = vmatmul.bf16.gmra.mxu0 %v4451
      %v7201 = vpop.f32.mrf.mxu0
      %v7202 = vadd.f32 %v1627, %v7201
      %v7203 = vpop.f32.mrf.mxu0
      %v7204 = vadd.f32 %v1632, %v7203
      %7205 = vmatmul.bf16.gmra.mxu0 %v4476
      %v7206 = vpop.f32.mrf.mxu0
      %v7207 = vadd.f32 %v1637, %v7206
      %v7208 = vpop.f32.mrf.mxu0
      %v7209 = vadd.f32 %v1642, %v7208
      %7210 = vmatmul.bf16.gmra.mxu0 %v4501
      %v7211 = vpop.f32.mrf.mxu0
      %v7212 = vadd.f32 %v1647, %v7211
      %v7213 = vpop.f32.mrf.mxu0
      %v7214 = vadd.f32 %v1652, %v7213
      %7215 = vmatmul.bf16.gmra.mxu0 %v4526
      %v7216 = vpop.f32.mrf.mxu0
      %v7217 = vadd.f32 %v1657, %v7216
      %v7218 = vpop.f32.mrf.mxu0
      %v7219 = vadd.f32 %v1662, %v7218
      %7220 = vmatmul.bf16.gmra.mxu0 %v4551
      %v7221 = vpop.f32.mrf.mxu0
      %v7222 = vadd.f32 %v1667, %v7221
      %v7223 = vpop.f32.mrf.mxu0
      %v7224 = vadd.f32 %v1672, %v7223
      %7225 = vmatmul.bf16.gmra.mxu0 %v4576
      %v7226 = vpop.f32.mrf.mxu0
      %v7227 = vadd.f32 %v1677, %v7226
      %v7228 = vpop.f32.mrf.mxu0
      %v7229 = vadd.f32 %v1682, %v7228
      %7230 = vmatmul.bf16.gmra.mxu0 %v4601
      %v7231 = vpop.f32.mrf.mxu0
      %v7232 = vadd.f32 %v1687, %v7231
      %v7233 = vpop.f32.mrf.mxu0
      %v7234 = vadd.f32 %v1692, %v7233
      %7235 = vmatmul.bf16.gmra.mxu0 %v4626
      %v7236 = vpop.f32.mrf.mxu0
      %v7237 = vadd.f32 %v1697, %v7236
      %v7238 = vpop.f32.mrf.mxu0
      %v7239 = vadd.f32 %v1702, %v7238
      %7240 = vmatmul.bf16.gmra.mxu0 %v4651
      %v7241 = vpop.f32.mrf.mxu0
      %v7242 = vadd.f32 %v1707, %v7241
      %v7243 = vpop.f32.mrf.mxu0
      %v7244 = vadd.f32 %v1712, %v7243
      %7245 = vmatmul.bf16.gmra.mxu0 %v4676
      %v7246 = vpop.f32.mrf.mxu0
      %v7247 = vadd.f32 %v1717, %v7246
      %v7248 = vpop.f32.mrf.mxu0
      %v7249 = vadd.f32 %v1722, %v7248
      %7250 = vmatmul.bf16.gmra.mxu0 %v4701
      %v7251 = vpop.f32.mrf.mxu0
      %v7252 = vadd.f32 %v1727, %v7251
      %v7253 = vpop.f32.mrf.mxu0
      %v7254 = vadd.f32 %v1732, %v7253
      %7255 = vmatmul.bf16.gmra.mxu0 %v4726
      %v7256 = vpop.f32.mrf.mxu0
      %v7257 = vadd.f32 %v1737, %v7256
      %v7258 = vpop.f32.mrf.mxu0
      %v7259 = vadd.f32 %v1742, %v7258
      %7260 = vmatmul.bf16.gmra.mxu0 %v4751
      %v7261 = vpop.f32.mrf.mxu0
      %v7262 = vadd.f32 %v1747, %v7261
      %v7263 = vpop.f32.mrf.mxu0
      %v7264 = vadd.f32 %v1752, %v7263
      %7265 = vmatmul.bf16.gmra.mxu0 %v4776
      %v7266 = vpop.f32.mrf.mxu0
      %v7267 = vadd.f32 %v1757, %v7266
      %v7268 = vpop.f32.mrf.mxu0
      %v7269 = vadd.f32 %v1762, %v7268
      %7270 = vmatmul.bf16.gmra.mxu0 %v4801
      %v7271 = vpop.f32.mrf.mxu0
      %v7272 = vadd.f32 %v1767, %v7271
      %v7273 = vpop.f32.mrf.mxu0
      %v7274 = vadd.f32 %v1772, %v7273
      %7275 = vmatmul.bf16.gmra.mxu0 %v4826
      %v7276 = vpop.f32.mrf.mxu0
      %v7277 = vadd.f32 %v1777, %v7276
      %v7278 = vpop.f32.mrf.mxu0
      %v7279 = vadd.f32 %v1782, %v7278
      %7280 = vmatmul.bf16.gmra.mxu0 %v4851
      %v7281 = vpop.f32.mrf.mxu0
      %v7282 = vadd.f32 %v1787, %v7281
      %v7283 = vpop.f32.mrf.mxu0
      %v7284 = vadd.f32 %v1792, %v7283
      %7285 = vmatmul.bf16.gmra.mxu0 %v4876
      %v7286 = vpop.f32.mrf.mxu0
      %v7287 = vadd.f32 %v1797, %v7286
      %v7288 = vpop.f32.mrf.mxu0
      %v7289 = vadd.f32 %v1802, %v7288
      %7290 = vmatmul.bf16.gmra.mxu0 %v4901
      %v7291 = vpop.f32.mrf.mxu0
      %v7292 = vadd.f32 %v1807, %v7291
      %v7293 = vpop.f32.mrf.mxu0
      %v7294 = vadd.f32 %v1812, %v7293
      %7295 = vmatmul.bf16.gmra.mxu0 %v4926
      %v7296 = vpop.f32.mrf.mxu0
      %v7297 = vadd.f32 %v1817, %v7296
      %v7298 = vpop.f32.mrf.mxu0
      %v7299 = vadd.f32 %v1822, %v7298
      %7300 = vmatmul.bf16.gmra.mxu0 %v4951
      %v7301 = vpop.f32.mrf.mxu0
      %v7302 = vadd.f32 %v1827, %v7301
      %v7303 = vpop.f32.mrf.mxu0
      %v7304 = vadd.f32 %v1832, %v7303
      %7305 = vmatmul.bf16.gmra.mxu0 %v4976
      %v7306 = vpop.f32.mrf.mxu0
      %v7307 = vadd.f32 %v1837, %v7306
      %v7308 = vpop.f32.mrf.mxu0
      %v7309 = vadd.f32 %v1842, %v7308
      %7310 = vmatmul.bf16.gmra.mxu0 %v5001
      %v7311 = vpop.f32.mrf.mxu0
      %v7312 = vadd.f32 %v1847, %v7311
      %v7313 = vpop.f32.mrf.mxu0
      %v7314 = vadd.f32 %v1852, %v7313
      %7315 = vmatmul.bf16.gmra.mxu0 %v5026
      %v7316 = vpop.f32.mrf.mxu0
      %v7317 = vadd.f32 %v1857, %v7316
      %v7318 = vpop.f32.mrf.mxu0
      %v7319 = vadd.f32 %v1862, %v7318
      %7320 = vmatmul.bf16.gmra.mxu0 %v5051
      %v7321 = vpop.f32.mrf.mxu0
      %v7322 = vadd.f32 %v1867, %v7321
      %v7323 = vpop.f32.mrf.mxu0
      %v7324 = vadd.f32 %v1872, %v7323
      %7325 = vmatmul.bf16.gmra.mxu0 %v5076
      %v7326 = vpop.f32.mrf.mxu0
      %v7327 = vadd.f32 %v1877, %v7326
      %v7328 = vpop.f32.mrf.mxu0
      %v7329 = vadd.f32 %v1882, %v7328
      %7330 = vmatmul.bf16.gmra.mxu0 %v5101
      %v7331 = vpop.f32.mrf.mxu0
      %v7332 = vadd.f32 %v1887, %v7331
      %v7333 = vpop.f32.mrf.mxu0
      %v7334 = vadd.f32 %v1892, %v7333
      %7335 = vdwg.mxu0
      %7336 = vmatpush.bf16.msra.mxu0 %v6693
      %7337 = vmatpush.bf16.msra.mxu0 %v6692
      %7338 = vmatpush.bf16.msra.mxu0 %v6691
      %7339 = vmatpush.bf16.msra.mxu0 %v6690
      %7340 = vmatpush.bf16.msra.mxu0 %v6689
      %7341 = vmatpush.bf16.msra.mxu0 %v6688
      %7342 = vmatpush.bf16.msra.mxu0 %v6687
      %7343 = vmatpush.bf16.msra.mxu0 %v6686
      %7344 = vmatmul.bf16.gmra.mxu0 %v4327
      %v7345 = vpop.f32.mrf.mxu0
      %v7346 = vadd.f32 %v7177, %v7345
      %v7347 = vpop.f32.mrf.mxu0
      %v7348 = vadd.f32 %v7179, %v7347
      %7349 = vmatmul.bf16.gmra.mxu0 %v4352
      %v7350 = vpop.f32.mrf.mxu0
      %v7351 = vadd.f32 %v7182, %v7350
      %v7352 = vpop.f32.mrf.mxu0
      %v7353 = vadd.f32 %v7184, %v7352
      %7354 = vmatmul.bf16.gmra.mxu0 %v4377
      %v7355 = vpop.f32.mrf.mxu0
      %v7356 = vadd.f32 %v7187, %v7355
      %v7357 = vpop.f32.mrf.mxu0
      %v7358 = vadd.f32 %v7189, %v7357
      %7359 = vmatmul.bf16.gmra.mxu0 %v4402
      %v7360 = vpop.f32.mrf.mxu0
      %v7361 = vadd.f32 %v7192, %v7360
      %v7362 = vpop.f32.mrf.mxu0
      %v7363 = vadd.f32 %v7194, %v7362
      %7364 = vmatmul.bf16.gmra.mxu0 %v4427
      %v7365 = vpop.f32.mrf.mxu0
      %v7366 = vadd.f32 %v7197, %v7365
      %v7367 = vpop.f32.mrf.mxu0
      %v7368 = vadd.f32 %v7199, %v7367
      %7369 = vmatmul.bf16.gmra.mxu0 %v4452
      %v7370 = vpop.f32.mrf.mxu0
      %v7371 = vadd.f32 %v7202, %v7370
      %v7372 = vpop.f32.mrf.mxu0
      %v7373 = vadd.f32 %v7204, %v7372
      %7374 = vmatmul.bf16.gmra.mxu0 %v4477
      %v7375 = vpop.f32.mrf.mxu0
      %v7376 = vadd.f32 %v7207, %v7375
      %v7377 = vpop.f32.mrf.mxu0
      %v7378 = vadd.f32 %v7209, %v7377
      %7379 = vmatmul.bf16.gmra.mxu0 %v4502
      %v7380 = vpop.f32.mrf.mxu0
      %v7381 = vadd.f32 %v7212, %v7380
      %v7382 = vpop.f32.mrf.mxu0
      %v7383 = vadd.f32 %v7214, %v7382
      %7384 = vmatmul.bf16.gmra.mxu0 %v4527
      %v7385 = vpop.f32.mrf.mxu0
      %v7386 = vadd.f32 %v7217, %v7385
      %v7387 = vpop.f32.mrf.mxu0
      %v7388 = vadd.f32 %v7219, %v7387
      %7389 = vmatmul.bf16.gmra.mxu0 %v4552
      %v7390 = vpop.f32.mrf.mxu0
      %v7391 = vadd.f32 %v7222, %v7390
      %v7392 = vpop.f32.mrf.mxu0
      %v7393 = vadd.f32 %v7224, %v7392
      %7394 = vmatmul.bf16.gmra.mxu0 %v4577
      %v7395 = vpop.f32.mrf.mxu0
      %v7396 = vadd.f32 %v7227, %v7395
      %v7397 = vpop.f32.mrf.mxu0
      %v7398 = vadd.f32 %v7229, %v7397
      %7399 = vmatmul.bf16.gmra.mxu0 %v4602
      %v7400 = vpop.f32.mrf.mxu0
      %v7401 = vadd.f32 %v7232, %v7400
      %v7402 = vpop.f32.mrf.mxu0
      %v7403 = vadd.f32 %v7234, %v7402
      %7404 = vmatmul.bf16.gmra.mxu0 %v4627
      %v7405 = vpop.f32.mrf.mxu0
      %v7406 = vadd.f32 %v7237, %v7405
      %v7407 = vpop.f32.mrf.mxu0
      %v7408 = vadd.f32 %v7239, %v7407
      %7409 = vmatmul.bf16.gmra.mxu0 %v4652
      %v7410 = vpop.f32.mrf.mxu0
      %v7411 = vadd.f32 %v7242, %v7410
      %v7412 = vpop.f32.mrf.mxu0
      %v7413 = vadd.f32 %v7244, %v7412
      %7414 = vmatmul.bf16.gmra.mxu0 %v4677
      %v7415 = vpop.f32.mrf.mxu0
      %v7416 = vadd.f32 %v7247, %v7415
      %v7417 = vpop.f32.mrf.mxu0
      %v7418 = vadd.f32 %v7249, %v7417
      %7419 = vmatmul.bf16.gmra.mxu0 %v4702
      %v7420 = vpop.f32.mrf.mxu0
      %v7421 = vadd.f32 %v7252, %v7420
      %v7422 = vpop.f32.mrf.mxu0
      %v7423 = vadd.f32 %v7254, %v7422
      %7424 = vmatmul.bf16.gmra.mxu0 %v4727
      %v7425 = vpop.f32.mrf.mxu0
      %v7426 = vadd.f32 %v7257, %v7425
      %v7427 = vpop.f32.mrf.mxu0
      %v7428 = vadd.f32 %v7259, %v7427
      %7429 = vmatmul.bf16.gmra.mxu0 %v4752
      %v7430 = vpop.f32.mrf.mxu0
      %v7431 = vadd.f32 %v7262, %v7430
      %v7432 = vpop.f32.mrf.mxu0
      %v7433 = vadd.f32 %v7264, %v7432
      %7434 = vmatmul.bf16.gmra.mxu0 %v4777
      %v7435 = vpop.f32.mrf.mxu0
      %v7436 = vadd.f32 %v7267, %v7435
      %v7437 = vpop.f32.mrf.mxu0
      %v7438 = vadd.f32 %v7269, %v7437
      %7439 = vmatmul.bf16.gmra.mxu0 %v4802
      %v7440 = vpop.f32.mrf.mxu0
      %v7441 = vadd.f32 %v7272, %v7440
      %v7442 = vpop.f32.mrf.mxu0
      %v7443 = vadd.f32 %v7274, %v7442
      %7444 = vmatmul.bf16.gmra.mxu0 %v4827
      %v7445 = vpop.f32.mrf.mxu0
      %v7446 = vadd.f32 %v7277, %v7445
      %v7447 = vpop.f32.mrf.mxu0
      %v7448 = vadd.f32 %v7279, %v7447
      %7449 = vmatmul.bf16.gmra.mxu0 %v4852
      %v7450 = vpop.f32.mrf.mxu0
      %v7451 = vadd.f32 %v7282, %v7450
      %v7452 = vpop.f32.mrf.mxu0
      %v7453 = vadd.f32 %v7284, %v7452
      %7454 = vmatmul.bf16.gmra.mxu0 %v4877
      %v7455 = vpop.f32.mrf.mxu0
      %v7456 = vadd.f32 %v7287, %v7455
      %v7457 = vpop.f32.mrf.mxu0
      %v7458 = vadd.f32 %v7289, %v7457
      %7459 = vmatmul.bf16.gmra.mxu0 %v4902
      %v7460 = vpop.f32.mrf.mxu0
      %v7461 = vadd.f32 %v7292, %v7460
      %v7462 = vpop.f32.mrf.mxu0
      %v7463 = vadd.f32 %v7294, %v7462
      %7464 = vmatmul.bf16.gmra.mxu0 %v4927
      %v7465 = vpop.f32.mrf.mxu0
      %v7466 = vadd.f32 %v7297, %v7465
      %v7467 = vpop.f32.mrf.mxu0
      %v7468 = vadd.f32 %v7299, %v7467
      %7469 = vmatmul.bf16.gmra.mxu0 %v4952
      %v7470 = vpop.f32.mrf.mxu0
      %v7471 = vadd.f32 %v7302, %v7470
      %v7472 = vpop.f32.mrf.mxu0
      %v7473 = vadd.f32 %v7304, %v7472
      %7474 = vmatmul.bf16.gmra.mxu0 %v4977
      %v7475 = vpop.f32.mrf.mxu0
      %v7476 = vadd.f32 %v7307, %v7475
      %v7477 = vpop.f32.mrf.mxu0
      %v7478 = vadd.f32 %v7309, %v7477
      %7479 = vmatmul.bf16.gmra.mxu0 %v5002
      %v7480 = vpop.f32.mrf.mxu0
      %v7481 = vadd.f32 %v7312, %v7480
      %v7482 = vpop.f32.mrf.mxu0
      %v7483 = vadd.f32 %v7314, %v7482
      %7484 = vmatmul.bf16.gmra.mxu0 %v5027
      %v7485 = vpop.f32.mrf.mxu0
      %v7486 = vadd.f32 %v7317, %v7485
      %v7487 = vpop.f32.mrf.mxu0
      %v7488 = vadd.f32 %v7319, %v7487
      %7489 = vmatmul.bf16.gmra.mxu0 %v5052
      %v7490 = vpop.f32.mrf.mxu0
      %v7491 = vadd.f32 %v7322, %v7490
      %v7492 = vpop.f32.mrf.mxu0
      %v7493 = vadd.f32 %v7324, %v7492
      %7494 = vmatmul.bf16.gmra.mxu0 %v5077
      %v7495 = vpop.f32.mrf.mxu0
      %v7496 = vadd.f32 %v7327, %v7495
      %v7497 = vpop.f32.mrf.mxu0
      %v7498 = vadd.f32 %v7329, %v7497
      %7499 = vmatmul.bf16.gmra.mxu0 %v5102
      %v7500 = vpop.f32.mrf.mxu0
      %v7501 = vadd.f32 %v7332, %v7500
      %v7502 = vpop.f32.mrf.mxu0
      %v7503 = vadd.f32 %v7334, %v7502
      %7504 = vdwg.mxu0
      %7505 = vmatpush.bf16.msra.mxu0 %v6701
      %7506 = vmatpush.bf16.msra.mxu0 %v6700
      %7507 = vmatpush.bf16.msra.mxu0 %v6699
      %7508 = vmatpush.bf16.msra.mxu0 %v6698
      %7509 = vmatpush.bf16.msra.mxu0 %v6697
      %7510 = vmatpush.bf16.msra.mxu0 %v6696
      %7511 = vmatpush.bf16.msra.mxu0 %v6695
      %7512 = vmatpush.bf16.msra.mxu0 %v6694
      %7513 = vmatmul.bf16.gmra.mxu0 %v4328
      %v7514 = vpop.f32.mrf.mxu0
      %v7515 = vadd.f32 %v7346, %v7514
      %v7516 = vpop.f32.mrf.mxu0
      %v7517 = vadd.f32 %v7348, %v7516
      %7518 = vmatmul.bf16.gmra.mxu0 %v4353
      %v7519 = vpop.f32.mrf.mxu0
      %v7520 = vadd.f32 %v7351, %v7519
      %v7521 = vpop.f32.mrf.mxu0
      %v7522 = vadd.f32 %v7353, %v7521
      %7523 = vmatmul.bf16.gmra.mxu0 %v4378
      %v7524 = vpop.f32.mrf.mxu0
      %v7525 = vadd.f32 %v7356, %v7524
      %v7526 = vpop.f32.mrf.mxu0
      %v7527 = vadd.f32 %v7358, %v7526
      %7528 = vmatmul.bf16.gmra.mxu0 %v4403
      %v7529 = vpop.f32.mrf.mxu0
      %v7530 = vadd.f32 %v7361, %v7529
      %v7531 = vpop.f32.mrf.mxu0
      %v7532 = vadd.f32 %v7363, %v7531
      %7533 = vmatmul.bf16.gmra.mxu0 %v4428
      %v7534 = vpop.f32.mrf.mxu0
      %v7535 = vadd.f32 %v7366, %v7534
      %v7536 = vpop.f32.mrf.mxu0
      %v7537 = vadd.f32 %v7368, %v7536
      %7538 = vmatmul.bf16.gmra.mxu0 %v4453
      %v7539 = vpop.f32.mrf.mxu0
      %v7540 = vadd.f32 %v7371, %v7539
      %v7541 = vpop.f32.mrf.mxu0
      %v7542 = vadd.f32 %v7373, %v7541
      %7543 = vmatmul.bf16.gmra.mxu0 %v4478
      %v7544 = vpop.f32.mrf.mxu0
      %v7545 = vadd.f32 %v7376, %v7544
      %v7546 = vpop.f32.mrf.mxu0
      %v7547 = vadd.f32 %v7378, %v7546
      %7548 = vmatmul.bf16.gmra.mxu0 %v4503
      %v7549 = vpop.f32.mrf.mxu0
      %v7550 = vadd.f32 %v7381, %v7549
      %v7551 = vpop.f32.mrf.mxu0
      %v7552 = vadd.f32 %v7383, %v7551
      %7553 = vmatmul.bf16.gmra.mxu0 %v4528
      %v7554 = vpop.f32.mrf.mxu0
      %v7555 = vadd.f32 %v7386, %v7554
      %v7556 = vpop.f32.mrf.mxu0
      %v7557 = vadd.f32 %v7388, %v7556
      %7558 = vmatmul.bf16.gmra.mxu0 %v4553
      %v7559 = vpop.f32.mrf.mxu0
      %v7560 = vadd.f32 %v7391, %v7559
      %v7561 = vpop.f32.mrf.mxu0
      %v7562 = vadd.f32 %v7393, %v7561
      %7563 = vmatmul.bf16.gmra.mxu0 %v4578
      %v7564 = vpop.f32.mrf.mxu0
      %v7565 = vadd.f32 %v7396, %v7564
      %v7566 = vpop.f32.mrf.mxu0
      %v7567 = vadd.f32 %v7398, %v7566
      %7568 = vmatmul.bf16.gmra.mxu0 %v4603
      %v7569 = vpop.f32.mrf.mxu0
      %v7570 = vadd.f32 %v7401, %v7569
      %v7571 = vpop.f32.mrf.mxu0
      %v7572 = vadd.f32 %v7403, %v7571
      %7573 = vmatmul.bf16.gmra.mxu0 %v4628
      %v7574 = vpop.f32.mrf.mxu0
      %v7575 = vadd.f32 %v7406, %v7574
      %v7576 = vpop.f32.mrf.mxu0
      %v7577 = vadd.f32 %v7408, %v7576
      %7578 = vmatmul.bf16.gmra.mxu0 %v4653
      %v7579 = vpop.f32.mrf.mxu0
      %v7580 = vadd.f32 %v7411, %v7579
      %v7581 = vpop.f32.mrf.mxu0
      %v7582 = vadd.f32 %v7413, %v7581
      %7583 = vmatmul.bf16.gmra.mxu0 %v4678
      %v7584 = vpop.f32.mrf.mxu0
      %v7585 = vadd.f32 %v7416, %v7584
      %v7586 = vpop.f32.mrf.mxu0
      %v7587 = vadd.f32 %v7418, %v7586
      %7588 = vmatmul.bf16.gmra.mxu0 %v4703
      %v7589 = vpop.f32.mrf.mxu0
      %v7590 = vadd.f32 %v7421, %v7589
      %v7591 = vpop.f32.mrf.mxu0
      %v7592 = vadd.f32 %v7423, %v7591
      %7593 = vmatmul.bf16.gmra.mxu0 %v4728
      %v7594 = vpop.f32.mrf.mxu0
      %v7595 = vadd.f32 %v7426, %v7594
      %v7596 = vpop.f32.mrf.mxu0
      %v7597 = vadd.f32 %v7428, %v7596
      %7598 = vmatmul.bf16.gmra.mxu0 %v4753
      %v7599 = vpop.f32.mrf.mxu0
      %v7600 = vadd.f32 %v7431, %v7599
      %v7601 = vpop.f32.mrf.mxu0
      %v7602 = vadd.f32 %v7433, %v7601
      %7603 = vmatmul.bf16.gmra.mxu0 %v4778
      %v7604 = vpop.f32.mrf.mxu0
      %v7605 = vadd.f32 %v7436, %v7604
      %v7606 = vpop.f32.mrf.mxu0
      %v7607 = vadd.f32 %v7438, %v7606
      %7608 = vmatmul.bf16.gmra.mxu0 %v4803
      %v7609 = vpop.f32.mrf.mxu0
      %v7610 = vadd.f32 %v7441, %v7609
      %v7611 = vpop.f32.mrf.mxu0
      %v7612 = vadd.f32 %v7443, %v7611
      %7613 = vmatmul.bf16.gmra.mxu0 %v4828
      %v7614 = vpop.f32.mrf.mxu0
      %v7615 = vadd.f32 %v7446, %v7614
      %v7616 = vpop.f32.mrf.mxu0
      %v7617 = vadd.f32 %v7448, %v7616
      %7618 = vmatmul.bf16.gmra.mxu0 %v4853
      %v7619 = vpop.f32.mrf.mxu0
      %v7620 = vadd.f32 %v7451, %v7619
      %v7621 = vpop.f32.mrf.mxu0
      %v7622 = vadd.f32 %v7453, %v7621
      %7623 = vmatmul.bf16.gmra.mxu0 %v4878
      %v7624 = vpop.f32.mrf.mxu0
      %v7625 = vadd.f32 %v7456, %v7624
      %v7626 = vpop.f32.mrf.mxu0
      %v7627 = vadd.f32 %v7458, %v7626
      %7628 = vmatmul.bf16.gmra.mxu0 %v4903
      %v7629 = vpop.f32.mrf.mxu0
      %v7630 = vadd.f32 %v7461, %v7629
      %v7631 = vpop.f32.mrf.mxu0
      %v7632 = vadd.f32 %v7463, %v7631
      %7633 = vmatmul.bf16.gmra.mxu0 %v4928
      %v7634 = vpop.f32.mrf.mxu0
      %v7635 = vadd.f32 %v7466, %v7634
      %v7636 = vpop.f32.mrf.mxu0
      %v7637 = vadd.f32 %v7468, %v7636
      %7638 = vmatmul.bf16.gmra.mxu0 %v4953
      %v7639 = vpop.f32.mrf.mxu0
      %v7640 = vadd.f32 %v7471, %v7639
      %v7641 = vpop.f32.mrf.mxu0
      %v7642 = vadd.f32 %v7473, %v7641
      %7643 = vmatmul.bf16.gmra.mxu0 %v4978
      %v7644 = vpop.f32.mrf.mxu0
      %v7645 = vadd.f32 %v7476, %v7644
      %v7646 = vpop.f32.mrf.mxu0
      %v7647 = vadd.f32 %v7478, %v7646
      %7648 = vmatmul.bf16.gmra.mxu0 %v5003
      %v7649 = vpop.f32.mrf.mxu0
      %v7650 = vadd.f32 %v7481, %v7649
      %v7651 = vpop.f32.mrf.mxu0
      %v7652 = vadd.f32 %v7483, %v7651
      %7653 = vmatmul.bf16.gmra.mxu0 %v5028
      %v7654 = vpop.f32.mrf.mxu0
      %v7655 = vadd.f32 %v7486, %v7654
      %v7656 = vpop.f32.mrf.mxu0
      %v7657 = vadd.f32 %v7488, %v7656
      %7658 = vmatmul.bf16.gmra.mxu0 %v5053
      %v7659 = vpop.f32.mrf.mxu0
      %v7660 = vadd.f32 %v7491, %v7659
      %v7661 = vpop.f32.mrf.mxu0
      %v7662 = vadd.f32 %v7493, %v7661
      %7663 = vmatmul.bf16.gmra.mxu0 %v5078
      %v7664 = vpop.f32.mrf.mxu0
      %v7665 = vadd.f32 %v7496, %v7664
      %v7666 = vpop.f32.mrf.mxu0
      %v7667 = vadd.f32 %v7498, %v7666
      %7668 = vmatmul.bf16.gmra.mxu0 %v5103
      %v7669 = vpop.f32.mrf.mxu0
      %v7670 = vadd.f32 %v7501, %v7669
      %v7671 = vpop.f32.mrf.mxu0
      %v7672 = vadd.f32 %v7503, %v7671
      %7673 = vdwg.mxu0
      %7674 = vmatpush.bf16.msra.mxu0 %v6709
      %7675 = vmatpush.bf16.msra.mxu0 %v6708
      %7676 = vmatpush.bf16.msra.mxu0 %v6707
      %7677 = vmatpush.bf16.msra.mxu0 %v6706
      %7678 = vmatpush.bf16.msra.mxu0 %v6705
      %7679 = vmatpush.bf16.msra.mxu0 %v6704
      %7680 = vmatpush.bf16.msra.mxu0 %v6703
      %7681 = vmatpush.bf16.msra.mxu0 %v6702
      %7682 = vmatmul.bf16.gmra.mxu0 %v4329
      %v7683 = vpop.f32.mrf.mxu0
      %v7684 = vadd.f32 %v7515, %v7683
      %v7685 = vpop.f32.mrf.mxu0
      %v7686 = vadd.f32 %v7517, %v7685
      %7687 = vmatmul.bf16.gmra.mxu0 %v4354
      %v7688 = vpop.f32.mrf.mxu0
      %v7689 = vadd.f32 %v7520, %v7688
      %v7690 = vpop.f32.mrf.mxu0
      %v7691 = vadd.f32 %v7522, %v7690
      %7692 = vmatmul.bf16.gmra.mxu0 %v4379
      %v7693 = vpop.f32.mrf.mxu0
      %v7694 = vadd.f32 %v7525, %v7693
      %v7695 = vpop.f32.mrf.mxu0
      %v7696 = vadd.f32 %v7527, %v7695
      %7697 = vmatmul.bf16.gmra.mxu0 %v4404
      %v7698 = vpop.f32.mrf.mxu0
      %v7699 = vadd.f32 %v7530, %v7698
      %v7700 = vpop.f32.mrf.mxu0
      %v7701 = vadd.f32 %v7532, %v7700
      %7702 = vmatmul.bf16.gmra.mxu0 %v4429
      %v7703 = vpop.f32.mrf.mxu0
      %v7704 = vadd.f32 %v7535, %v7703
      %v7705 = vpop.f32.mrf.mxu0
      %v7706 = vadd.f32 %v7537, %v7705
      %7707 = vmatmul.bf16.gmra.mxu0 %v4454
      %v7708 = vpop.f32.mrf.mxu0
      %v7709 = vadd.f32 %v7540, %v7708
      %v7710 = vpop.f32.mrf.mxu0
      %v7711 = vadd.f32 %v7542, %v7710
      %7712 = vmatmul.bf16.gmra.mxu0 %v4479
      %v7713 = vpop.f32.mrf.mxu0
      %v7714 = vadd.f32 %v7545, %v7713
      %v7715 = vpop.f32.mrf.mxu0
      %v7716 = vadd.f32 %v7547, %v7715
      %7717 = vmatmul.bf16.gmra.mxu0 %v4504
      %v7718 = vpop.f32.mrf.mxu0
      %v7719 = vadd.f32 %v7550, %v7718
      %v7720 = vpop.f32.mrf.mxu0
      %v7721 = vadd.f32 %v7552, %v7720
      %7722 = vmatmul.bf16.gmra.mxu0 %v4529
      %v7723 = vpop.f32.mrf.mxu0
      %v7724 = vadd.f32 %v7555, %v7723
      %v7725 = vpop.f32.mrf.mxu0
      %v7726 = vadd.f32 %v7557, %v7725
      %7727 = vmatmul.bf16.gmra.mxu0 %v4554
      %v7728 = vpop.f32.mrf.mxu0
      %v7729 = vadd.f32 %v7560, %v7728
      %v7730 = vpop.f32.mrf.mxu0
      %v7731 = vadd.f32 %v7562, %v7730
      %7732 = vmatmul.bf16.gmra.mxu0 %v4579
      %v7733 = vpop.f32.mrf.mxu0
      %v7734 = vadd.f32 %v7565, %v7733
      %v7735 = vpop.f32.mrf.mxu0
      %v7736 = vadd.f32 %v7567, %v7735
      %7737 = vmatmul.bf16.gmra.mxu0 %v4604
      %v7738 = vpop.f32.mrf.mxu0
      %v7739 = vadd.f32 %v7570, %v7738
      %v7740 = vpop.f32.mrf.mxu0
      %v7741 = vadd.f32 %v7572, %v7740
      %7742 = vmatmul.bf16.gmra.mxu0 %v4629
      %v7743 = vpop.f32.mrf.mxu0
      %v7744 = vadd.f32 %v7575, %v7743
      %v7745 = vpop.f32.mrf.mxu0
      %v7746 = vadd.f32 %v7577, %v7745
      %7747 = vmatmul.bf16.gmra.mxu0 %v4654
      %v7748 = vpop.f32.mrf.mxu0
      %v7749 = vadd.f32 %v7580, %v7748
      %v7750 = vpop.f32.mrf.mxu0
      %v7751 = vadd.f32 %v7582, %v7750
      %7752 = vmatmul.bf16.gmra.mxu0 %v4679
      %v7753 = vpop.f32.mrf.mxu0
      %v7754 = vadd.f32 %v7585, %v7753
      %v7755 = vpop.f32.mrf.mxu0
      %v7756 = vadd.f32 %v7587, %v7755
      %7757 = vmatmul.bf16.gmra.mxu0 %v4704
      %v7758 = vpop.f32.mrf.mxu0
      %v7759 = vadd.f32 %v7590, %v7758
      %v7760 = vpop.f32.mrf.mxu0
      %v7761 = vadd.f32 %v7592, %v7760
      %7762 = vmatmul.bf16.gmra.mxu0 %v4729
      %v7763 = vpop.f32.mrf.mxu0
      %v7764 = vadd.f32 %v7595, %v7763
      %v7765 = vpop.f32.mrf.mxu0
      %v7766 = vadd.f32 %v7597, %v7765
      %7767 = vmatmul.bf16.gmra.mxu0 %v4754
      %v7768 = vpop.f32.mrf.mxu0
      %v7769 = vadd.f32 %v7600, %v7768
      %v7770 = vpop.f32.mrf.mxu0
      %v7771 = vadd.f32 %v7602, %v7770
      %7772 = vmatmul.bf16.gmra.mxu0 %v4779
      %v7773 = vpop.f32.mrf.mxu0
      %v7774 = vadd.f32 %v7605, %v7773
      %v7775 = vpop.f32.mrf.mxu0
      %v7776 = vadd.f32 %v7607, %v7775
      %7777 = vmatmul.bf16.gmra.mxu0 %v4804
      %v7778 = vpop.f32.mrf.mxu0
      %v7779 = vadd.f32 %v7610, %v7778
      %v7780 = vpop.f32.mrf.mxu0
      %v7781 = vadd.f32 %v7612, %v7780
      %7782 = vmatmul.bf16.gmra.mxu0 %v4829
      %v7783 = vpop.f32.mrf.mxu0
      %v7784 = vadd.f32 %v7615, %v7783
      %v7785 = vpop.f32.mrf.mxu0
      %v7786 = vadd.f32 %v7617, %v7785
      %7787 = vmatmul.bf16.gmra.mxu0 %v4854
      %v7788 = vpop.f32.mrf.mxu0
      %v7789 = vadd.f32 %v7620, %v7788
      %v7790 = vpop.f32.mrf.mxu0
      %v7791 = vadd.f32 %v7622, %v7790
      %7792 = vmatmul.bf16.gmra.mxu0 %v4879
      %v7793 = vpop.f32.mrf.mxu0
      %v7794 = vadd.f32 %v7625, %v7793
      %v7795 = vpop.f32.mrf.mxu0
      %v7796 = vadd.f32 %v7627, %v7795
      %7797 = vmatmul.bf16.gmra.mxu0 %v4904
      %v7798 = vpop.f32.mrf.mxu0
      %v7799 = vadd.f32 %v7630, %v7798
      %v7800 = vpop.f32.mrf.mxu0
      %v7801 = vadd.f32 %v7632, %v7800
      %7802 = vmatmul.bf16.gmra.mxu0 %v4929
      %v7803 = vpop.f32.mrf.mxu0
      %v7804 = vadd.f32 %v7635, %v7803
      %v7805 = vpop.f32.mrf.mxu0
      %v7806 = vadd.f32 %v7637, %v7805
      %7807 = vmatmul.bf16.gmra.mxu0 %v4954
      %v7808 = vpop.f32.mrf.mxu0
      %v7809 = vadd.f32 %v7640, %v7808
      %v7810 = vpop.f32.mrf.mxu0
      %v7811 = vadd.f32 %v7642, %v7810
      %7812 = vmatmul.bf16.gmra.mxu0 %v4979
      %v7813 = vpop.f32.mrf.mxu0
      %v7814 = vadd.f32 %v7645, %v7813
      %v7815 = vpop.f32.mrf.mxu0
      %v7816 = vadd.f32 %v7647, %v7815
      %7817 = vmatmul.bf16.gmra.mxu0 %v5004
      %v7818 = vpop.f32.mrf.mxu0
      %v7819 = vadd.f32 %v7650, %v7818
      %v7820 = vpop.f32.mrf.mxu0
      %v7821 = vadd.f32 %v7652, %v7820
      %7822 = vmatmul.bf16.gmra.mxu0 %v5029
      %v7823 = vpop.f32.mrf.mxu0
      %v7824 = vadd.f32 %v7655, %v7823
      %v7825 = vpop.f32.mrf.mxu0
      %v7826 = vadd.f32 %v7657, %v7825
      %7827 = vmatmul.bf16.gmra.mxu0 %v5054
      %v7828 = vpop.f32.mrf.mxu0
      %v7829 = vadd.f32 %v7660, %v7828
      %v7830 = vpop.f32.mrf.mxu0
      %v7831 = vadd.f32 %v7662, %v7830
      %7832 = vmatmul.bf16.gmra.mxu0 %v5079
      %v7833 = vpop.f32.mrf.mxu0
      %v7834 = vadd.f32 %v7665, %v7833
      %v7835 = vpop.f32.mrf.mxu0
      %v7836 = vadd.f32 %v7667, %v7835
      %7837 = vmatmul.bf16.gmra.mxu0 %v5104
      %v7838 = vpop.f32.mrf.mxu0
      %v7839 = vadd.f32 %v7670, %v7838
      %v7840 = vpop.f32.mrf.mxu0
      %v7841 = vadd.f32 %v7672, %v7840
      %7842 = vdwg.mxu0
      %7843 = vmatpush.bf16.msra.mxu0 %v6717
      %7844 = vmatpush.bf16.msra.mxu0 %v6716
      %7845 = vmatpush.bf16.msra.mxu0 %v6715
      %7846 = vmatpush.bf16.msra.mxu0 %v6714
      %7847 = vmatpush.bf16.msra.mxu0 %v6713
      %7848 = vmatpush.bf16.msra.mxu0 %v6712
      %7849 = vmatpush.bf16.msra.mxu0 %v6711
      %7850 = vmatpush.bf16.msra.mxu0 %v6710
      %7851 = vmatmul.bf16.gmra.mxu0 %v4330
      %v7852 = vpop.f32.mrf.mxu0
      %v7853 = vadd.f32 %v7684, %v7852
      %v7854 = vpop.f32.mrf.mxu0
      %v7855 = vadd.f32 %v7686, %v7854
      %7856 = vmatmul.bf16.gmra.mxu0 %v4355
      %v7857 = vpop.f32.mrf.mxu0
      %v7858 = vadd.f32 %v7689, %v7857
      %v7859 = vpop.f32.mrf.mxu0
      %v7860 = vadd.f32 %v7691, %v7859
      %7861 = vmatmul.bf16.gmra.mxu0 %v4380
      %v7862 = vpop.f32.mrf.mxu0
      %v7863 = vadd.f32 %v7694, %v7862
      %v7864 = vpop.f32.mrf.mxu0
      %v7865 = vadd.f32 %v7696, %v7864
      %7866 = vmatmul.bf16.gmra.mxu0 %v4405
      %v7867 = vpop.f32.mrf.mxu0
      %v7868 = vadd.f32 %v7699, %v7867
      %v7869 = vpop.f32.mrf.mxu0
      %v7870 = vadd.f32 %v7701, %v7869
      %7871 = vmatmul.bf16.gmra.mxu0 %v4430
      %v7872 = vpop.f32.mrf.mxu0
      %v7873 = vadd.f32 %v7704, %v7872
      %v7874 = vpop.f32.mrf.mxu0
      %v7875 = vadd.f32 %v7706, %v7874
      %7876 = vmatmul.bf16.gmra.mxu0 %v4455
      %v7877 = vpop.f32.mrf.mxu0
      %v7878 = vadd.f32 %v7709, %v7877
      %v7879 = vpop.f32.mrf.mxu0
      %v7880 = vadd.f32 %v7711, %v7879
      %7881 = vmatmul.bf16.gmra.mxu0 %v4480
      %v7882 = vpop.f32.mrf.mxu0
      %v7883 = vadd.f32 %v7714, %v7882
      %v7884 = vpop.f32.mrf.mxu0
      %v7885 = vadd.f32 %v7716, %v7884
      %7886 = vmatmul.bf16.gmra.mxu0 %v4505
      %v7887 = vpop.f32.mrf.mxu0
      %v7888 = vadd.f32 %v7719, %v7887
      %v7889 = vpop.f32.mrf.mxu0
      %v7890 = vadd.f32 %v7721, %v7889
      %7891 = vmatmul.bf16.gmra.mxu0 %v4530
      %v7892 = vpop.f32.mrf.mxu0
      %v7893 = vadd.f32 %v7724, %v7892
      %v7894 = vpop.f32.mrf.mxu0
      %v7895 = vadd.f32 %v7726, %v7894
      %7896 = vmatmul.bf16.gmra.mxu0 %v4555
      %v7897 = vpop.f32.mrf.mxu0
      %v7898 = vadd.f32 %v7729, %v7897
      %v7899 = vpop.f32.mrf.mxu0
      %v7900 = vadd.f32 %v7731, %v7899
      %7901 = vmatmul.bf16.gmra.mxu0 %v4580
      %v7902 = vpop.f32.mrf.mxu0
      %v7903 = vadd.f32 %v7734, %v7902
      %v7904 = vpop.f32.mrf.mxu0
      %v7905 = vadd.f32 %v7736, %v7904
      %7906 = vmatmul.bf16.gmra.mxu0 %v4605
      %v7907 = vpop.f32.mrf.mxu0
      %v7908 = vadd.f32 %v7739, %v7907
      %v7909 = vpop.f32.mrf.mxu0
      %v7910 = vadd.f32 %v7741, %v7909
      %7911 = vmatmul.bf16.gmra.mxu0 %v4630
      %v7912 = vpop.f32.mrf.mxu0
      %v7913 = vadd.f32 %v7744, %v7912
      %v7914 = vpop.f32.mrf.mxu0
      %v7915 = vadd.f32 %v7746, %v7914
      %7916 = vmatmul.bf16.gmra.mxu0 %v4655
      %v7917 = vpop.f32.mrf.mxu0
      %v7918 = vadd.f32 %v7749, %v7917
      %v7919 = vpop.f32.mrf.mxu0
      %v7920 = vadd.f32 %v7751, %v7919
      %7921 = vmatmul.bf16.gmra.mxu0 %v4680
      %v7922 = vpop.f32.mrf.mxu0
      %v7923 = vadd.f32 %v7754, %v7922
      %v7924 = vpop.f32.mrf.mxu0
      %v7925 = vadd.f32 %v7756, %v7924
      %7926 = vmatmul.bf16.gmra.mxu0 %v4705
      %v7927 = vpop.f32.mrf.mxu0
      %v7928 = vadd.f32 %v7759, %v7927
      %v7929 = vpop.f32.mrf.mxu0
      %v7930 = vadd.f32 %v7761, %v7929
      %7931 = vmatmul.bf16.gmra.mxu0 %v4730
      %v7932 = vpop.f32.mrf.mxu0
      %v7933 = vadd.f32 %v7764, %v7932
      %v7934 = vpop.f32.mrf.mxu0
      %v7935 = vadd.f32 %v7766, %v7934
      %7936 = vmatmul.bf16.gmra.mxu0 %v4755
      %v7937 = vpop.f32.mrf.mxu0
      %v7938 = vadd.f32 %v7769, %v7937
      %v7939 = vpop.f32.mrf.mxu0
      %v7940 = vadd.f32 %v7771, %v7939
      %7941 = vmatmul.bf16.gmra.mxu0 %v4780
      %v7942 = vpop.f32.mrf.mxu0
      %v7943 = vadd.f32 %v7774, %v7942
      %v7944 = vpop.f32.mrf.mxu0
      %v7945 = vadd.f32 %v7776, %v7944
      %7946 = vmatmul.bf16.gmra.mxu0 %v4805
      %v7947 = vpop.f32.mrf.mxu0
      %v7948 = vadd.f32 %v7779, %v7947
      %v7949 = vpop.f32.mrf.mxu0
      %v7950 = vadd.f32 %v7781, %v7949
      %7951 = vmatmul.bf16.gmra.mxu0 %v4830
      %v7952 = vpop.f32.mrf.mxu0
      %v7953 = vadd.f32 %v7784, %v7952
      %v7954 = vpop.f32.mrf.mxu0
      %v7955 = vadd.f32 %v7786, %v7954
      %7956 = vmatmul.bf16.gmra.mxu0 %v4855
      %v7957 = vpop.f32.mrf.mxu0
      %v7958 = vadd.f32 %v7789, %v7957
      %v7959 = vpop.f32.mrf.mxu0
      %v7960 = vadd.f32 %v7791, %v7959
      %7961 = vmatmul.bf16.gmra.mxu0 %v4880
      %v7962 = vpop.f32.mrf.mxu0
      %v7963 = vadd.f32 %v7794, %v7962
      %v7964 = vpop.f32.mrf.mxu0
      %v7965 = vadd.f32 %v7796, %v7964
      %7966 = vmatmul.bf16.gmra.mxu0 %v4905
      %v7967 = vpop.f32.mrf.mxu0
      %v7968 = vadd.f32 %v7799, %v7967
      %v7969 = vpop.f32.mrf.mxu0
      %v7970 = vadd.f32 %v7801, %v7969
      %7971 = vmatmul.bf16.gmra.mxu0 %v4930
      %v7972 = vpop.f32.mrf.mxu0
      %v7973 = vadd.f32 %v7804, %v7972
      %v7974 = vpop.f32.mrf.mxu0
      %v7975 = vadd.f32 %v7806, %v7974
      %7976 = vmatmul.bf16.gmra.mxu0 %v4955
      %v7977 = vpop.f32.mrf.mxu0
      %v7978 = vadd.f32 %v7809, %v7977
      %v7979 = vpop.f32.mrf.mxu0
      %v7980 = vadd.f32 %v7811, %v7979
      %7981 = vmatmul.bf16.gmra.mxu0 %v4980
      %v7982 = vpop.f32.mrf.mxu0
      %v7983 = vadd.f32 %v7814, %v7982
      %v7984 = vpop.f32.mrf.mxu0
      %v7985 = vadd.f32 %v7816, %v7984
      %7986 = vmatmul.bf16.gmra.mxu0 %v5005
      %v7987 = vpop.f32.mrf.mxu0
      %v7988 = vadd.f32 %v7819, %v7987
      %v7989 = vpop.f32.mrf.mxu0
      %v7990 = vadd.f32 %v7821, %v7989
      %7991 = vmatmul.bf16.gmra.mxu0 %v5030
      %v7992 = vpop.f32.mrf.mxu0
      %v7993 = vadd.f32 %v7824, %v7992
      %v7994 = vpop.f32.mrf.mxu0
      %v7995 = vadd.f32 %v7826, %v7994
      %7996 = vmatmul.bf16.gmra.mxu0 %v5055
      %v7997 = vpop.f32.mrf.mxu0
      %v7998 = vadd.f32 %v7829, %v7997
      %v7999 = vpop.f32.mrf.mxu0
      %v8000 = vadd.f32 %v7831, %v7999
      %8001 = vmatmul.bf16.gmra.mxu0 %v5080
      %v8002 = vpop.f32.mrf.mxu0
      %v8003 = vadd.f32 %v7834, %v8002
      %v8004 = vpop.f32.mrf.mxu0
      %v8005 = vadd.f32 %v7836, %v8004
      %8006 = vmatmul.bf16.gmra.mxu0 %v5105
      %v8007 = vpop.f32.mrf.mxu0
      %v8008 = vadd.f32 %v7839, %v8007
      %v8009 = vpop.f32.mrf.mxu0
      %v8010 = vadd.f32 %v7841, %v8009
      %8011 = vdwg.mxu0
      %8012 = vmatpush.bf16.msra.mxu0 %v6725
      %8013 = vmatpush.bf16.msra.mxu0 %v6724
      %8014 = vmatpush.bf16.msra.mxu0 %v6723
      %8015 = vmatpush.bf16.msra.mxu0 %v6722
      %8016 = vmatpush.bf16.msra.mxu0 %v6721
      %8017 = vmatpush.bf16.msra.mxu0 %v6720
      %8018 = vmatpush.bf16.msra.mxu0 %v6719
      %8019 = vmatpush.bf16.msra.mxu0 %v6718
      %8020 = vmatmul.bf16.gmra.mxu0 %v4331
      %v8021 = vpop.f32.mrf.mxu0
      %v8022 = vadd.f32 %v7853, %v8021
      %v8023 = vpop.f32.mrf.mxu0
      %v8024 = vadd.f32 %v7855, %v8023
      %8025 = vmatmul.bf16.gmra.mxu0 %v4356
      %v8026 = vpop.f32.mrf.mxu0
      %v8027 = vadd.f32 %v7858, %v8026
      %v8028 = vpop.f32.mrf.mxu0
      %v8029 = vadd.f32 %v7860, %v8028
      %8030 = vmatmul.bf16.gmra.mxu0 %v4381
      %v8031 = vpop.f32.mrf.mxu0
      %v8032 = vadd.f32 %v7863, %v8031
      %v8033 = vpop.f32.mrf.mxu0
      %v8034 = vadd.f32 %v7865, %v8033
      %8035 = vmatmul.bf16.gmra.mxu0 %v4406
      %v8036 = vpop.f32.mrf.mxu0
      %v8037 = vadd.f32 %v7868, %v8036
      %v8038 = vpop.f32.mrf.mxu0
      %v8039 = vadd.f32 %v7870, %v8038
      %8040 = vmatmul.bf16.gmra.mxu0 %v4431
      %v8041 = vpop.f32.mrf.mxu0
      %v8042 = vadd.f32 %v7873, %v8041
      %v8043 = vpop.f32.mrf.mxu0
      %v8044 = vadd.f32 %v7875, %v8043
      %8045 = vmatmul.bf16.gmra.mxu0 %v4456
      %v8046 = vpop.f32.mrf.mxu0
      %v8047 = vadd.f32 %v7878, %v8046
      %v8048 = vpop.f32.mrf.mxu0
      %v8049 = vadd.f32 %v7880, %v8048
      %8050 = vmatmul.bf16.gmra.mxu0 %v4481
      %v8051 = vpop.f32.mrf.mxu0
      %v8052 = vadd.f32 %v7883, %v8051
      %v8053 = vpop.f32.mrf.mxu0
      %v8054 = vadd.f32 %v7885, %v8053
      %8055 = vmatmul.bf16.gmra.mxu0 %v4506
      %v8056 = vpop.f32.mrf.mxu0
      %v8057 = vadd.f32 %v7888, %v8056
      %v8058 = vpop.f32.mrf.mxu0
      %v8059 = vadd.f32 %v7890, %v8058
      %8060 = vmatmul.bf16.gmra.mxu0 %v4531
      %v8061 = vpop.f32.mrf.mxu0
      %v8062 = vadd.f32 %v7893, %v8061
      %v8063 = vpop.f32.mrf.mxu0
      %v8064 = vadd.f32 %v7895, %v8063
      %8065 = vmatmul.bf16.gmra.mxu0 %v4556
      %v8066 = vpop.f32.mrf.mxu0
      %v8067 = vadd.f32 %v7898, %v8066
      %v8068 = vpop.f32.mrf.mxu0
      %v8069 = vadd.f32 %v7900, %v8068
      %8070 = vmatmul.bf16.gmra.mxu0 %v4581
      %v8071 = vpop.f32.mrf.mxu0
      %v8072 = vadd.f32 %v7903, %v8071
      %v8073 = vpop.f32.mrf.mxu0
      %v8074 = vadd.f32 %v7905, %v8073
      %8075 = vmatmul.bf16.gmra.mxu0 %v4606
      %v8076 = vpop.f32.mrf.mxu0
      %v8077 = vadd.f32 %v7908, %v8076
      %v8078 = vpop.f32.mrf.mxu0
      %v8079 = vadd.f32 %v7910, %v8078
      %8080 = vmatmul.bf16.gmra.mxu0 %v4631
      %v8081 = vpop.f32.mrf.mxu0
      %v8082 = vadd.f32 %v7913, %v8081
      %v8083 = vpop.f32.mrf.mxu0
      %v8084 = vadd.f32 %v7915, %v8083
      %8085 = vmatmul.bf16.gmra.mxu0 %v4656
      %v8086 = vpop.f32.mrf.mxu0
      %v8087 = vadd.f32 %v7918, %v8086
      %v8088 = vpop.f32.mrf.mxu0
      %v8089 = vadd.f32 %v7920, %v8088
      %8090 = vmatmul.bf16.gmra.mxu0 %v4681
      %v8091 = vpop.f32.mrf.mxu0
      %v8092 = vadd.f32 %v7923, %v8091
      %v8093 = vpop.f32.mrf.mxu0
      %v8094 = vadd.f32 %v7925, %v8093
      %8095 = vmatmul.bf16.gmra.mxu0 %v4706
      %v8096 = vpop.f32.mrf.mxu0
      %v8097 = vadd.f32 %v7928, %v8096
      %v8098 = vpop.f32.mrf.mxu0
      %v8099 = vadd.f32 %v7930, %v8098
      %8100 = vmatmul.bf16.gmra.mxu0 %v4731
      %v8101 = vpop.f32.mrf.mxu0
      %v8102 = vadd.f32 %v7933, %v8101
      %v8103 = vpop.f32.mrf.mxu0
      %v8104 = vadd.f32 %v7935, %v8103
      %8105 = vmatmul.bf16.gmra.mxu0 %v4756
      %v8106 = vpop.f32.mrf.mxu0
      %v8107 = vadd.f32 %v7938, %v8106
      %v8108 = vpop.f32.mrf.mxu0
      %v8109 = vadd.f32 %v7940, %v8108
      %8110 = vmatmul.bf16.gmra.mxu0 %v4781
      %v8111 = vpop.f32.mrf.mxu0
      %v8112 = vadd.f32 %v7943, %v8111
      %v8113 = vpop.f32.mrf.mxu0
      %v8114 = vadd.f32 %v7945, %v8113
      %8115 = vmatmul.bf16.gmra.mxu0 %v4806
      %v8116 = vpop.f32.mrf.mxu0
      %v8117 = vadd.f32 %v7948, %v8116
      %v8118 = vpop.f32.mrf.mxu0
      %v8119 = vadd.f32 %v7950, %v8118
      %8120 = vmatmul.bf16.gmra.mxu0 %v4831
      %v8121 = vpop.f32.mrf.mxu0
      %v8122 = vadd.f32 %v7953, %v8121
      %v8123 = vpop.f32.mrf.mxu0
      %v8124 = vadd.f32 %v7955, %v8123
      %8125 = vmatmul.bf16.gmra.mxu0 %v4856
      %v8126 = vpop.f32.mrf.mxu0
      %v8127 = vadd.f32 %v7958, %v8126
      %v8128 = vpop.f32.mrf.mxu0
      %v8129 = vadd.f32 %v7960, %v8128
      %8130 = vmatmul.bf16.gmra.mxu0 %v4881
      %v8131 = vpop.f32.mrf.mxu0
      %v8132 = vadd.f32 %v7963, %v8131
      %v8133 = vpop.f32.mrf.mxu0
      %v8134 = vadd.f32 %v7965, %v8133
      %8135 = vmatmul.bf16.gmra.mxu0 %v4906
      %v8136 = vpop.f32.mrf.mxu0
      %v8137 = vadd.f32 %v7968, %v8136
      %v8138 = vpop.f32.mrf.mxu0
      %v8139 = vadd.f32 %v7970, %v8138
      %8140 = vmatmul.bf16.gmra.mxu0 %v4931
      %v8141 = vpop.f32.mrf.mxu0
      %v8142 = vadd.f32 %v7973, %v8141
      %v8143 = vpop.f32.mrf.mxu0
      %v8144 = vadd.f32 %v7975, %v8143
      %8145 = vmatmul.bf16.gmra.mxu0 %v4956
      %v8146 = vpop.f32.mrf.mxu0
      %v8147 = vadd.f32 %v7978, %v8146
      %v8148 = vpop.f32.mrf.mxu0
      %v8149 = vadd.f32 %v7980, %v8148
      %8150 = vmatmul.bf16.gmra.mxu0 %v4981
      %v8151 = vpop.f32.mrf.mxu0
      %v8152 = vadd.f32 %v7983, %v8151
      %v8153 = vpop.f32.mrf.mxu0
      %v8154 = vadd.f32 %v7985, %v8153
      %8155 = vmatmul.bf16.gmra.mxu0 %v5006
      %v8156 = vpop.f32.mrf.mxu0
      %v8157 = vadd.f32 %v7988, %v8156
      %v8158 = vpop.f32.mrf.mxu0
      %v8159 = vadd.f32 %v7990, %v8158
      %8160 = vmatmul.bf16.gmra.mxu0 %v5031
      %v8161 = vpop.f32.mrf.mxu0
      %v8162 = vadd.f32 %v7993, %v8161
      %v8163 = vpop.f32.mrf.mxu0
      %v8164 = vadd.f32 %v7995, %v8163
      %8165 = vmatmul.bf16.gmra.mxu0 %v5056
      %v8166 = vpop.f32.mrf.mxu0
      %v8167 = vadd.f32 %v7998, %v8166
      %v8168 = vpop.f32.mrf.mxu0
      %v8169 = vadd.f32 %v8000, %v8168
      %8170 = vmatmul.bf16.gmra.mxu0 %v5081
      %v8171 = vpop.f32.mrf.mxu0
      %v8172 = vadd.f32 %v8003, %v8171
      %v8173 = vpop.f32.mrf.mxu0
      %v8174 = vadd.f32 %v8005, %v8173
      %8175 = vmatmul.bf16.gmra.mxu0 %v5106
      %v8176 = vpop.f32.mrf.mxu0
      %v8177 = vadd.f32 %v8008, %v8176
      %v8178 = vpop.f32.mrf.mxu0
      %v8179 = vadd.f32 %v8010, %v8178
      %8180 = vdwg.mxu0
      %8181 = vmatpush.bf16.msra.mxu0 %v6733
      %8182 = vmatpush.bf16.msra.mxu0 %v6732
      %8183 = vmatpush.bf16.msra.mxu0 %v6731
      %8184 = vmatpush.bf16.msra.mxu0 %v6730
      %8185 = vmatpush.bf16.msra.mxu0 %v6729
      %8186 = vmatpush.bf16.msra.mxu0 %v6728
      %8187 = vmatpush.bf16.msra.mxu0 %v6727
      %8188 = vmatpush.bf16.msra.mxu0 %v6726
      %8189 = vmatmul.bf16.gmra.mxu0 %v4332
      %v8190 = vpop.f32.mrf.mxu0
      %v8191 = vadd.f32 %v8022, %v8190
      %v8192 = vpop.f32.mrf.mxu0
      %v8193 = vadd.f32 %v8024, %v8192
      %8194 = vmatmul.bf16.gmra.mxu0 %v4357
      %v8195 = vpop.f32.mrf.mxu0
      %v8196 = vadd.f32 %v8027, %v8195
      %v8197 = vpop.f32.mrf.mxu0
      %v8198 = vadd.f32 %v8029, %v8197
      %8199 = vmatmul.bf16.gmra.mxu0 %v4382
      %v8200 = vpop.f32.mrf.mxu0
      %v8201 = vadd.f32 %v8032, %v8200
      %v8202 = vpop.f32.mrf.mxu0
      %v8203 = vadd.f32 %v8034, %v8202
      %8204 = vmatmul.bf16.gmra.mxu0 %v4407
      %v8205 = vpop.f32.mrf.mxu0
      %v8206 = vadd.f32 %v8037, %v8205
      %v8207 = vpop.f32.mrf.mxu0
      %v8208 = vadd.f32 %v8039, %v8207
      %8209 = vmatmul.bf16.gmra.mxu0 %v4432
      %v8210 = vpop.f32.mrf.mxu0
      %v8211 = vadd.f32 %v8042, %v8210
      %v8212 = vpop.f32.mrf.mxu0
      %v8213 = vadd.f32 %v8044, %v8212
      %8214 = vmatmul.bf16.gmra.mxu0 %v4457
      %v8215 = vpop.f32.mrf.mxu0
      %v8216 = vadd.f32 %v8047, %v8215
      %v8217 = vpop.f32.mrf.mxu0
      %v8218 = vadd.f32 %v8049, %v8217
      %8219 = vmatmul.bf16.gmra.mxu0 %v4482
      %v8220 = vpop.f32.mrf.mxu0
      %v8221 = vadd.f32 %v8052, %v8220
      %v8222 = vpop.f32.mrf.mxu0
      %v8223 = vadd.f32 %v8054, %v8222
      %8224 = vmatmul.bf16.gmra.mxu0 %v4507
      %v8225 = vpop.f32.mrf.mxu0
      %v8226 = vadd.f32 %v8057, %v8225
      %v8227 = vpop.f32.mrf.mxu0
      %v8228 = vadd.f32 %v8059, %v8227
      %8229 = vmatmul.bf16.gmra.mxu0 %v4532
      %v8230 = vpop.f32.mrf.mxu0
      %v8231 = vadd.f32 %v8062, %v8230
      %v8232 = vpop.f32.mrf.mxu0
      %v8233 = vadd.f32 %v8064, %v8232
      %8234 = vmatmul.bf16.gmra.mxu0 %v4557
      %v8235 = vpop.f32.mrf.mxu0
      %v8236 = vadd.f32 %v8067, %v8235
      %v8237 = vpop.f32.mrf.mxu0
      %v8238 = vadd.f32 %v8069, %v8237
      %8239 = vmatmul.bf16.gmra.mxu0 %v4582
      %v8240 = vpop.f32.mrf.mxu0
      %v8241 = vadd.f32 %v8072, %v8240
      %v8242 = vpop.f32.mrf.mxu0
      %v8243 = vadd.f32 %v8074, %v8242
      %8244 = vmatmul.bf16.gmra.mxu0 %v4607
      %v8245 = vpop.f32.mrf.mxu0
      %v8246 = vadd.f32 %v8077, %v8245
      %v8247 = vpop.f32.mrf.mxu0
      %v8248 = vadd.f32 %v8079, %v8247
      %8249 = vmatmul.bf16.gmra.mxu0 %v4632
      %v8250 = vpop.f32.mrf.mxu0
      %v8251 = vadd.f32 %v8082, %v8250
      %v8252 = vpop.f32.mrf.mxu0
      %v8253 = vadd.f32 %v8084, %v8252
      %8254 = vmatmul.bf16.gmra.mxu0 %v4657
      %v8255 = vpop.f32.mrf.mxu0
      %v8256 = vadd.f32 %v8087, %v8255
      %v8257 = vpop.f32.mrf.mxu0
      %v8258 = vadd.f32 %v8089, %v8257
      %8259 = vmatmul.bf16.gmra.mxu0 %v4682
      %v8260 = vpop.f32.mrf.mxu0
      %v8261 = vadd.f32 %v8092, %v8260
      %v8262 = vpop.f32.mrf.mxu0
      %v8263 = vadd.f32 %v8094, %v8262
      %8264 = vmatmul.bf16.gmra.mxu0 %v4707
      %v8265 = vpop.f32.mrf.mxu0
      %v8266 = vadd.f32 %v8097, %v8265
      %v8267 = vpop.f32.mrf.mxu0
      %v8268 = vadd.f32 %v8099, %v8267
      %8269 = vmatmul.bf16.gmra.mxu0 %v4732
      %v8270 = vpop.f32.mrf.mxu0
      %v8271 = vadd.f32 %v8102, %v8270
      %v8272 = vpop.f32.mrf.mxu0
      %v8273 = vadd.f32 %v8104, %v8272
      %8274 = vmatmul.bf16.gmra.mxu0 %v4757
      %v8275 = vpop.f32.mrf.mxu0
      %v8276 = vadd.f32 %v8107, %v8275
      %v8277 = vpop.f32.mrf.mxu0
      %v8278 = vadd.f32 %v8109, %v8277
      %8279 = vmatmul.bf16.gmra.mxu0 %v4782
      %v8280 = vpop.f32.mrf.mxu0
      %v8281 = vadd.f32 %v8112, %v8280
      %v8282 = vpop.f32.mrf.mxu0
      %v8283 = vadd.f32 %v8114, %v8282
      %8284 = vmatmul.bf16.gmra.mxu0 %v4807
      %v8285 = vpop.f32.mrf.mxu0
      %v8286 = vadd.f32 %v8117, %v8285
      %v8287 = vpop.f32.mrf.mxu0
      %v8288 = vadd.f32 %v8119, %v8287
      %8289 = vmatmul.bf16.gmra.mxu0 %v4832
      %v8290 = vpop.f32.mrf.mxu0
      %v8291 = vadd.f32 %v8122, %v8290
      %v8292 = vpop.f32.mrf.mxu0
      %v8293 = vadd.f32 %v8124, %v8292
      %8294 = vmatmul.bf16.gmra.mxu0 %v4857
      %v8295 = vpop.f32.mrf.mxu0
      %v8296 = vadd.f32 %v8127, %v8295
      %v8297 = vpop.f32.mrf.mxu0
      %v8298 = vadd.f32 %v8129, %v8297
      %8299 = vmatmul.bf16.gmra.mxu0 %v4882
      %v8300 = vpop.f32.mrf.mxu0
      %v8301 = vadd.f32 %v8132, %v8300
      %v8302 = vpop.f32.mrf.mxu0
      %v8303 = vadd.f32 %v8134, %v8302
      %8304 = vmatmul.bf16.gmra.mxu0 %v4907
      %v8305 = vpop.f32.mrf.mxu0
      %v8306 = vadd.f32 %v8137, %v8305
      %v8307 = vpop.f32.mrf.mxu0
      %v8308 = vadd.f32 %v8139, %v8307
      %8309 = vmatmul.bf16.gmra.mxu0 %v4932
      %v8310 = vpop.f32.mrf.mxu0
      %v8311 = vadd.f32 %v8142, %v8310
      %v8312 = vpop.f32.mrf.mxu0
      %v8313 = vadd.f32 %v8144, %v8312
      %8314 = vmatmul.bf16.gmra.mxu0 %v4957
      %v8315 = vpop.f32.mrf.mxu0
      %v8316 = vadd.f32 %v8147, %v8315
      %v8317 = vpop.f32.mrf.mxu0
      %v8318 = vadd.f32 %v8149, %v8317
      %8319 = vmatmul.bf16.gmra.mxu0 %v4982
      %v8320 = vpop.f32.mrf.mxu0
      %v8321 = vadd.f32 %v8152, %v8320
      %v8322 = vpop.f32.mrf.mxu0
      %v8323 = vadd.f32 %v8154, %v8322
      %8324 = vmatmul.bf16.gmra.mxu0 %v5007
      %v8325 = vpop.f32.mrf.mxu0
      %v8326 = vadd.f32 %v8157, %v8325
      %v8327 = vpop.f32.mrf.mxu0
      %v8328 = vadd.f32 %v8159, %v8327
      %8329 = vmatmul.bf16.gmra.mxu0 %v5032
      %v8330 = vpop.f32.mrf.mxu0
      %v8331 = vadd.f32 %v8162, %v8330
      %v8332 = vpop.f32.mrf.mxu0
      %v8333 = vadd.f32 %v8164, %v8332
      %8334 = vmatmul.bf16.gmra.mxu0 %v5057
      %v8335 = vpop.f32.mrf.mxu0
      %v8336 = vadd.f32 %v8167, %v8335
      %v8337 = vpop.f32.mrf.mxu0
      %v8338 = vadd.f32 %v8169, %v8337
      %8339 = vmatmul.bf16.gmra.mxu0 %v5082
      %v8340 = vpop.f32.mrf.mxu0
      %v8341 = vadd.f32 %v8172, %v8340
      %v8342 = vpop.f32.mrf.mxu0
      %v8343 = vadd.f32 %v8174, %v8342
      %8344 = vmatmul.bf16.gmra.mxu0 %v5107
      %v8345 = vpop.f32.mrf.mxu0
      %v8346 = vadd.f32 %v8177, %v8345
      %v8347 = vpop.f32.mrf.mxu0
      %v8348 = vadd.f32 %v8179, %v8347
      %8349 = vdwg.mxu0
      %8350 = vmatpush.bf16.msra.mxu0 %v6741
      %8351 = vmatpush.bf16.msra.mxu0 %v6740
      %8352 = vmatpush.bf16.msra.mxu0 %v6739
      %8353 = vmatpush.bf16.msra.mxu0 %v6738
      %8354 = vmatpush.bf16.msra.mxu0 %v6737
      %8355 = vmatpush.bf16.msra.mxu0 %v6736
      %8356 = vmatpush.bf16.msra.mxu0 %v6735
      %8357 = vmatpush.bf16.msra.mxu0 %v6734
      %8358 = vmatmul.bf16.gmra.mxu0 %v4333
      %v8359 = vpop.f32.mrf.mxu0
      %v8360 = vadd.f32 %v8191, %v8359
      %v8361 = vpop.f32.mrf.mxu0
      %v8362 = vadd.f32 %v8193, %v8361
      %8363 = vmatmul.bf16.gmra.mxu0 %v4358
      %v8364 = vpop.f32.mrf.mxu0
      %v8365 = vadd.f32 %v8196, %v8364
      %v8366 = vpop.f32.mrf.mxu0
      %v8367 = vadd.f32 %v8198, %v8366
      %8368 = vmatmul.bf16.gmra.mxu0 %v4383
      %v8369 = vpop.f32.mrf.mxu0
      %v8370 = vadd.f32 %v8201, %v8369
      %v8371 = vpop.f32.mrf.mxu0
      %v8372 = vadd.f32 %v8203, %v8371
      %8373 = vmatmul.bf16.gmra.mxu0 %v4408
      %v8374 = vpop.f32.mrf.mxu0
      %v8375 = vadd.f32 %v8206, %v8374
      %v8376 = vpop.f32.mrf.mxu0
      %v8377 = vadd.f32 %v8208, %v8376
      %8378 = vmatmul.bf16.gmra.mxu0 %v4433
      %v8379 = vpop.f32.mrf.mxu0
      %v8380 = vadd.f32 %v8211, %v8379
      %v8381 = vpop.f32.mrf.mxu0
      %v8382 = vadd.f32 %v8213, %v8381
      %8383 = vmatmul.bf16.gmra.mxu0 %v4458
      %v8384 = vpop.f32.mrf.mxu0
      %v8385 = vadd.f32 %v8216, %v8384
      %v8386 = vpop.f32.mrf.mxu0
      %v8387 = vadd.f32 %v8218, %v8386
      %8388 = vmatmul.bf16.gmra.mxu0 %v4483
      %v8389 = vpop.f32.mrf.mxu0
      %v8390 = vadd.f32 %v8221, %v8389
      %v8391 = vpop.f32.mrf.mxu0
      %v8392 = vadd.f32 %v8223, %v8391
      %8393 = vmatmul.bf16.gmra.mxu0 %v4508
      %v8394 = vpop.f32.mrf.mxu0
      %v8395 = vadd.f32 %v8226, %v8394
      %v8396 = vpop.f32.mrf.mxu0
      %v8397 = vadd.f32 %v8228, %v8396
      %8398 = vmatmul.bf16.gmra.mxu0 %v4533
      %v8399 = vpop.f32.mrf.mxu0
      %v8400 = vadd.f32 %v8231, %v8399
      %v8401 = vpop.f32.mrf.mxu0
      %v8402 = vadd.f32 %v8233, %v8401
      %8403 = vmatmul.bf16.gmra.mxu0 %v4558
      %v8404 = vpop.f32.mrf.mxu0
      %v8405 = vadd.f32 %v8236, %v8404
      %v8406 = vpop.f32.mrf.mxu0
      %v8407 = vadd.f32 %v8238, %v8406
      %8408 = vmatmul.bf16.gmra.mxu0 %v4583
      %v8409 = vpop.f32.mrf.mxu0
      %v8410 = vadd.f32 %v8241, %v8409
      %v8411 = vpop.f32.mrf.mxu0
      %v8412 = vadd.f32 %v8243, %v8411
      %8413 = vmatmul.bf16.gmra.mxu0 %v4608
      %v8414 = vpop.f32.mrf.mxu0
      %v8415 = vadd.f32 %v8246, %v8414
      %v8416 = vpop.f32.mrf.mxu0
      %v8417 = vadd.f32 %v8248, %v8416
      %8418 = vmatmul.bf16.gmra.mxu0 %v4633
      %v8419 = vpop.f32.mrf.mxu0
      %v8420 = vadd.f32 %v8251, %v8419
      %v8421 = vpop.f32.mrf.mxu0
      %v8422 = vadd.f32 %v8253, %v8421
      %8423 = vmatmul.bf16.gmra.mxu0 %v4658
      %v8424 = vpop.f32.mrf.mxu0
      %v8425 = vadd.f32 %v8256, %v8424
      %v8426 = vpop.f32.mrf.mxu0
      %v8427 = vadd.f32 %v8258, %v8426
      %8428 = vmatmul.bf16.gmra.mxu0 %v4683
      %v8429 = vpop.f32.mrf.mxu0
      %v8430 = vadd.f32 %v8261, %v8429
      %v8431 = vpop.f32.mrf.mxu0
      %v8432 = vadd.f32 %v8263, %v8431
      %8433 = vmatmul.bf16.gmra.mxu0 %v4708
      %v8434 = vpop.f32.mrf.mxu0
      %v8435 = vadd.f32 %v8266, %v8434
      %v8436 = vpop.f32.mrf.mxu0
      %v8437 = vadd.f32 %v8268, %v8436
      %8438 = vmatmul.bf16.gmra.mxu0 %v4733
      %v8439 = vpop.f32.mrf.mxu0
      %v8440 = vadd.f32 %v8271, %v8439
      %v8441 = vpop.f32.mrf.mxu0
      %v8442 = vadd.f32 %v8273, %v8441
      %8443 = vmatmul.bf16.gmra.mxu0 %v4758
      %v8444 = vpop.f32.mrf.mxu0
      %v8445 = vadd.f32 %v8276, %v8444
      %v8446 = vpop.f32.mrf.mxu0
      %v8447 = vadd.f32 %v8278, %v8446
      %8448 = vmatmul.bf16.gmra.mxu0 %v4783
      %v8449 = vpop.f32.mrf.mxu0
      %v8450 = vadd.f32 %v8281, %v8449
      %v8451 = vpop.f32.mrf.mxu0
      %v8452 = vadd.f32 %v8283, %v8451
      %8453 = vmatmul.bf16.gmra.mxu0 %v4808
      %v8454 = vpop.f32.mrf.mxu0
      %v8455 = vadd.f32 %v8286, %v8454
      %v8456 = vpop.f32.mrf.mxu0
      %v8457 = vadd.f32 %v8288, %v8456
      %8458 = vmatmul.bf16.gmra.mxu0 %v4833
      %v8459 = vpop.f32.mrf.mxu0
      %v8460 = vadd.f32 %v8291, %v8459
      %v8461 = vpop.f32.mrf.mxu0
      %v8462 = vadd.f32 %v8293, %v8461
      %8463 = vmatmul.bf16.gmra.mxu0 %v4858
      %v8464 = vpop.f32.mrf.mxu0
      %v8465 = vadd.f32 %v8296, %v8464
      %v8466 = vpop.f32.mrf.mxu0
      %v8467 = vadd.f32 %v8298, %v8466
      %8468 = vmatmul.bf16.gmra.mxu0 %v4883
      %v8469 = vpop.f32.mrf.mxu0
      %v8470 = vadd.f32 %v8301, %v8469
      %v8471 = vpop.f32.mrf.mxu0
      %v8472 = vadd.f32 %v8303, %v8471
      %8473 = vmatmul.bf16.gmra.mxu0 %v4908
      %v8474 = vpop.f32.mrf.mxu0
      %v8475 = vadd.f32 %v8306, %v8474
      %v8476 = vpop.f32.mrf.mxu0
      %v8477 = vadd.f32 %v8308, %v8476
      %8478 = vmatmul.bf16.gmra.mxu0 %v4933
      %v8479 = vpop.f32.mrf.mxu0
      %v8480 = vadd.f32 %v8311, %v8479
      %v8481 = vpop.f32.mrf.mxu0
      %v8482 = vadd.f32 %v8313, %v8481
      %8483 = vmatmul.bf16.gmra.mxu0 %v4958
      %v8484 = vpop.f32.mrf.mxu0
      %v8485 = vadd.f32 %v8316, %v8484
      %v8486 = vpop.f32.mrf.mxu0
      %v8487 = vadd.f32 %v8318, %v8486
      %8488 = vmatmul.bf16.gmra.mxu0 %v4983
      %v8489 = vpop.f32.mrf.mxu0
      %v8490 = vadd.f32 %v8321, %v8489
      %v8491 = vpop.f32.mrf.mxu0
      %v8492 = vadd.f32 %v8323, %v8491
      %8493 = vmatmul.bf16.gmra.mxu0 %v5008
      %v8494 = vpop.f32.mrf.mxu0
      %v8495 = vadd.f32 %v8326, %v8494
      %v8496 = vpop.f32.mrf.mxu0
      %v8497 = vadd.f32 %v8328, %v8496
      %8498 = vmatmul.bf16.gmra.mxu0 %v5033
      %v8499 = vpop.f32.mrf.mxu0
      %v8500 = vadd.f32 %v8331, %v8499
      %v8501 = vpop.f32.mrf.mxu0
      %v8502 = vadd.f32 %v8333, %v8501
      %8503 = vmatmul.bf16.gmra.mxu0 %v5058
      %v8504 = vpop.f32.mrf.mxu0
      %v8505 = vadd.f32 %v8336, %v8504
      %v8506 = vpop.f32.mrf.mxu0
      %v8507 = vadd.f32 %v8338, %v8506
      %8508 = vmatmul.bf16.gmra.mxu0 %v5083
      %v8509 = vpop.f32.mrf.mxu0
      %v8510 = vadd.f32 %v8341, %v8509
      %v8511 = vpop.f32.mrf.mxu0
      %v8512 = vadd.f32 %v8343, %v8511
      %8513 = vmatmul.bf16.gmra.mxu0 %v5108
      %v8514 = vpop.f32.mrf.mxu0
      %v8515 = vadd.f32 %v8346, %v8514
      %v8516 = vpop.f32.mrf.mxu0
      %v8517 = vadd.f32 %v8348, %v8516
      %8518 = vdwg.mxu0
      %8519 = vmatpush.bf16.msra.mxu0 %v6749
      %8520 = vmatpush.bf16.msra.mxu0 %v6748
      %8521 = vmatpush.bf16.msra.mxu0 %v6747
      %8522 = vmatpush.bf16.msra.mxu0 %v6746
      %8523 = vmatpush.bf16.msra.mxu0 %v6745
      %8524 = vmatpush.bf16.msra.mxu0 %v6744
      %8525 = vmatpush.bf16.msra.mxu0 %v6743
      %8526 = vmatpush.bf16.msra.mxu0 %v6742
      %8527 = vmatmul.bf16.gmra.mxu0 %v4334
      %v8528 = vpop.f32.mrf.mxu0
      %v8529 = vadd.f32 %v8360, %v8528
      %v8530 = vpop.f32.mrf.mxu0
      %v8531 = vadd.f32 %v8362, %v8530
      %8532 = vmatmul.bf16.gmra.mxu0 %v4359
      %v8533 = vpop.f32.mrf.mxu0
      %v8534 = vadd.f32 %v8365, %v8533
      %v8535 = vpop.f32.mrf.mxu0
      %v8536 = vadd.f32 %v8367, %v8535
      %8537 = vmatmul.bf16.gmra.mxu0 %v4384
      %v8538 = vpop.f32.mrf.mxu0
      %v8539 = vadd.f32 %v8370, %v8538
      %v8540 = vpop.f32.mrf.mxu0
      %v8541 = vadd.f32 %v8372, %v8540
      %8542 = vmatmul.bf16.gmra.mxu0 %v4409
      %v8543 = vpop.f32.mrf.mxu0
      %v8544 = vadd.f32 %v8375, %v8543
      %v8545 = vpop.f32.mrf.mxu0
      %v8546 = vadd.f32 %v8377, %v8545
      %8547 = vmatmul.bf16.gmra.mxu0 %v4434
      %v8548 = vpop.f32.mrf.mxu0
      %v8549 = vadd.f32 %v8380, %v8548
      %v8550 = vpop.f32.mrf.mxu0
      %v8551 = vadd.f32 %v8382, %v8550
      %8552 = vmatmul.bf16.gmra.mxu0 %v4459
      %v8553 = vpop.f32.mrf.mxu0
      %v8554 = vadd.f32 %v8385, %v8553
      %v8555 = vpop.f32.mrf.mxu0
      %v8556 = vadd.f32 %v8387, %v8555
      %8557 = vmatmul.bf16.gmra.mxu0 %v4484
      %v8558 = vpop.f32.mrf.mxu0
      %v8559 = vadd.f32 %v8390, %v8558
      %v8560 = vpop.f32.mrf.mxu0
      %v8561 = vadd.f32 %v8392, %v8560
      %8562 = vmatmul.bf16.gmra.mxu0 %v4509
      %v8563 = vpop.f32.mrf.mxu0
      %v8564 = vadd.f32 %v8395, %v8563
      %v8565 = vpop.f32.mrf.mxu0
      %v8566 = vadd.f32 %v8397, %v8565
      %8567 = vmatmul.bf16.gmra.mxu0 %v4534
      %v8568 = vpop.f32.mrf.mxu0
      %v8569 = vadd.f32 %v8400, %v8568
      %v8570 = vpop.f32.mrf.mxu0
      %v8571 = vadd.f32 %v8402, %v8570
      %8572 = vmatmul.bf16.gmra.mxu0 %v4559
      %v8573 = vpop.f32.mrf.mxu0
      %v8574 = vadd.f32 %v8405, %v8573
      %v8575 = vpop.f32.mrf.mxu0
      %v8576 = vadd.f32 %v8407, %v8575
      %8577 = vmatmul.bf16.gmra.mxu0 %v4584
      %v8578 = vpop.f32.mrf.mxu0
      %v8579 = vadd.f32 %v8410, %v8578
      %v8580 = vpop.f32.mrf.mxu0
      %v8581 = vadd.f32 %v8412, %v8580
      %8582 = vmatmul.bf16.gmra.mxu0 %v4609
      %v8583 = vpop.f32.mrf.mxu0
      %v8584 = vadd.f32 %v8415, %v8583
      %v8585 = vpop.f32.mrf.mxu0
      %v8586 = vadd.f32 %v8417, %v8585
      %8587 = vmatmul.bf16.gmra.mxu0 %v4634
      %v8588 = vpop.f32.mrf.mxu0
      %v8589 = vadd.f32 %v8420, %v8588
      %v8590 = vpop.f32.mrf.mxu0
      %v8591 = vadd.f32 %v8422, %v8590
      %8592 = vmatmul.bf16.gmra.mxu0 %v4659
      %v8593 = vpop.f32.mrf.mxu0
      %v8594 = vadd.f32 %v8425, %v8593
      %v8595 = vpop.f32.mrf.mxu0
      %v8596 = vadd.f32 %v8427, %v8595
      %8597 = vmatmul.bf16.gmra.mxu0 %v4684
      %v8598 = vpop.f32.mrf.mxu0
      %v8599 = vadd.f32 %v8430, %v8598
      %v8600 = vpop.f32.mrf.mxu0
      %v8601 = vadd.f32 %v8432, %v8600
      %8602 = vmatmul.bf16.gmra.mxu0 %v4709
      %v8603 = vpop.f32.mrf.mxu0
      %v8604 = vadd.f32 %v8435, %v8603
      %v8605 = vpop.f32.mrf.mxu0
      %v8606 = vadd.f32 %v8437, %v8605
      %8607 = vmatmul.bf16.gmra.mxu0 %v4734
      %v8608 = vpop.f32.mrf.mxu0
      %v8609 = vadd.f32 %v8440, %v8608
      %v8610 = vpop.f32.mrf.mxu0
      %v8611 = vadd.f32 %v8442, %v8610
      %8612 = vmatmul.bf16.gmra.mxu0 %v4759
      %v8613 = vpop.f32.mrf.mxu0
      %v8614 = vadd.f32 %v8445, %v8613
      %v8615 = vpop.f32.mrf.mxu0
      %v8616 = vadd.f32 %v8447, %v8615
      %8617 = vmatmul.bf16.gmra.mxu0 %v4784
      %v8618 = vpop.f32.mrf.mxu0
      %v8619 = vadd.f32 %v8450, %v8618
      %v8620 = vpop.f32.mrf.mxu0
      %v8621 = vadd.f32 %v8452, %v8620
      %8622 = vmatmul.bf16.gmra.mxu0 %v4809
      %v8623 = vpop.f32.mrf.mxu0
      %v8624 = vadd.f32 %v8455, %v8623
      %v8625 = vpop.f32.mrf.mxu0
      %v8626 = vadd.f32 %v8457, %v8625
      %8627 = vmatmul.bf16.gmra.mxu0 %v4834
      %v8628 = vpop.f32.mrf.mxu0
      %v8629 = vadd.f32 %v8460, %v8628
      %v8630 = vpop.f32.mrf.mxu0
      %v8631 = vadd.f32 %v8462, %v8630
      %8632 = vmatmul.bf16.gmra.mxu0 %v4859
      %v8633 = vpop.f32.mrf.mxu0
      %v8634 = vadd.f32 %v8465, %v8633
      %v8635 = vpop.f32.mrf.mxu0
      %v8636 = vadd.f32 %v8467, %v8635
      %8637 = vmatmul.bf16.gmra.mxu0 %v4884
      %v8638 = vpop.f32.mrf.mxu0
      %v8639 = vadd.f32 %v8470, %v8638
      %v8640 = vpop.f32.mrf.mxu0
      %v8641 = vadd.f32 %v8472, %v8640
      %8642 = vmatmul.bf16.gmra.mxu0 %v4909
      %v8643 = vpop.f32.mrf.mxu0
      %v8644 = vadd.f32 %v8475, %v8643
      %v8645 = vpop.f32.mrf.mxu0
      %v8646 = vadd.f32 %v8477, %v8645
      %8647 = vmatmul.bf16.gmra.mxu0 %v4934
      %v8648 = vpop.f32.mrf.mxu0
      %v8649 = vadd.f32 %v8480, %v8648
      %v8650 = vpop.f32.mrf.mxu0
      %v8651 = vadd.f32 %v8482, %v8650
      %8652 = vmatmul.bf16.gmra.mxu0 %v4959
      %v8653 = vpop.f32.mrf.mxu0
      %v8654 = vadd.f32 %v8485, %v8653
      %v8655 = vpop.f32.mrf.mxu0
      %v8656 = vadd.f32 %v8487, %v8655
      %8657 = vmatmul.bf16.gmra.mxu0 %v4984
      %v8658 = vpop.f32.mrf.mxu0
      %v8659 = vadd.f32 %v8490, %v8658
      %v8660 = vpop.f32.mrf.mxu0
      %v8661 = vadd.f32 %v8492, %v8660
      %8662 = vmatmul.bf16.gmra.mxu0 %v5009
      %v8663 = vpop.f32.mrf.mxu0
      %v8664 = vadd.f32 %v8495, %v8663
      %v8665 = vpop.f32.mrf.mxu0
      %v8666 = vadd.f32 %v8497, %v8665
      %8667 = vmatmul.bf16.gmra.mxu0 %v5034
      %v8668 = vpop.f32.mrf.mxu0
      %v8669 = vadd.f32 %v8500, %v8668
      %v8670 = vpop.f32.mrf.mxu0
      %v8671 = vadd.f32 %v8502, %v8670
      %8672 = vmatmul.bf16.gmra.mxu0 %v5059
      %v8673 = vpop.f32.mrf.mxu0
      %v8674 = vadd.f32 %v8505, %v8673
      %v8675 = vpop.f32.mrf.mxu0
      %v8676 = vadd.f32 %v8507, %v8675
      %8677 = vmatmul.bf16.gmra.mxu0 %v5084
      %v8678 = vpop.f32.mrf.mxu0
      %v8679 = vadd.f32 %v8510, %v8678
      %v8680 = vpop.f32.mrf.mxu0
      %v8681 = vadd.f32 %v8512, %v8680
      %8682 = vmatmul.bf16.gmra.mxu0 %v5109
      %v8683 = vpop.f32.mrf.mxu0
      %v8684 = vadd.f32 %v8515, %v8683
      %v8685 = vpop.f32.mrf.mxu0
      %v8686 = vadd.f32 %v8517, %v8685
      %8687 = vdwg.mxu0
      %8688 = vmatpush.bf16.msra.mxu0 %v6757
      %8689 = vmatpush.bf16.msra.mxu0 %v6756
      %8690 = vmatpush.bf16.msra.mxu0 %v6755
      %8691 = vmatpush.bf16.msra.mxu0 %v6754
      %8692 = vmatpush.bf16.msra.mxu0 %v6753
      %8693 = vmatpush.bf16.msra.mxu0 %v6752
      %8694 = vmatpush.bf16.msra.mxu0 %v6751
      %8695 = vmatpush.bf16.msra.mxu0 %v6750
      %8696 = vmatmul.bf16.gmra.mxu0 %v4335
      %v8697 = vpop.f32.mrf.mxu0
      %v8698 = vadd.f32 %v8529, %v8697
      %v8699 = vpop.f32.mrf.mxu0
      %v8700 = vadd.f32 %v8531, %v8699
      %8701 = vmatmul.bf16.gmra.mxu0 %v4360
      %v8702 = vpop.f32.mrf.mxu0
      %v8703 = vadd.f32 %v8534, %v8702
      %v8704 = vpop.f32.mrf.mxu0
      %v8705 = vadd.f32 %v8536, %v8704
      %8706 = vmatmul.bf16.gmra.mxu0 %v4385
      %v8707 = vpop.f32.mrf.mxu0
      %v8708 = vadd.f32 %v8539, %v8707
      %v8709 = vpop.f32.mrf.mxu0
      %v8710 = vadd.f32 %v8541, %v8709
      %8711 = vmatmul.bf16.gmra.mxu0 %v4410
      %v8712 = vpop.f32.mrf.mxu0
      %v8713 = vadd.f32 %v8544, %v8712
      %v8714 = vpop.f32.mrf.mxu0
      %v8715 = vadd.f32 %v8546, %v8714
      %8716 = vmatmul.bf16.gmra.mxu0 %v4435
      %v8717 = vpop.f32.mrf.mxu0
      %v8718 = vadd.f32 %v8549, %v8717
      %v8719 = vpop.f32.mrf.mxu0
      %v8720 = vadd.f32 %v8551, %v8719
      %8721 = vmatmul.bf16.gmra.mxu0 %v4460
      %v8722 = vpop.f32.mrf.mxu0
      %v8723 = vadd.f32 %v8554, %v8722
      %v8724 = vpop.f32.mrf.mxu0
      %v8725 = vadd.f32 %v8556, %v8724
      %8726 = vmatmul.bf16.gmra.mxu0 %v4485
      %v8727 = vpop.f32.mrf.mxu0
      %v8728 = vadd.f32 %v8559, %v8727
      %v8729 = vpop.f32.mrf.mxu0
      %v8730 = vadd.f32 %v8561, %v8729
      %8731 = vmatmul.bf16.gmra.mxu0 %v4510
      %v8732 = vpop.f32.mrf.mxu0
      %v8733 = vadd.f32 %v8564, %v8732
      %v8734 = vpop.f32.mrf.mxu0
      %v8735 = vadd.f32 %v8566, %v8734
      %8736 = vmatmul.bf16.gmra.mxu0 %v4535
      %v8737 = vpop.f32.mrf.mxu0
      %v8738 = vadd.f32 %v8569, %v8737
      %v8739 = vpop.f32.mrf.mxu0
      %v8740 = vadd.f32 %v8571, %v8739
      %8741 = vmatmul.bf16.gmra.mxu0 %v4560
      %v8742 = vpop.f32.mrf.mxu0
      %v8743 = vadd.f32 %v8574, %v8742
      %v8744 = vpop.f32.mrf.mxu0
      %v8745 = vadd.f32 %v8576, %v8744
      %8746 = vmatmul.bf16.gmra.mxu0 %v4585
      %v8747 = vpop.f32.mrf.mxu0
      %v8748 = vadd.f32 %v8579, %v8747
      %v8749 = vpop.f32.mrf.mxu0
      %v8750 = vadd.f32 %v8581, %v8749
      %8751 = vmatmul.bf16.gmra.mxu0 %v4610
      %v8752 = vpop.f32.mrf.mxu0
      %v8753 = vadd.f32 %v8584, %v8752
      %v8754 = vpop.f32.mrf.mxu0
      %v8755 = vadd.f32 %v8586, %v8754
      %8756 = vmatmul.bf16.gmra.mxu0 %v4635
      %v8757 = vpop.f32.mrf.mxu0
      %v8758 = vadd.f32 %v8589, %v8757
      %v8759 = vpop.f32.mrf.mxu0
      %v8760 = vadd.f32 %v8591, %v8759
      %8761 = vmatmul.bf16.gmra.mxu0 %v4660
      %v8762 = vpop.f32.mrf.mxu0
      %v8763 = vadd.f32 %v8594, %v8762
      %v8764 = vpop.f32.mrf.mxu0
      %v8765 = vadd.f32 %v8596, %v8764
      %8766 = vmatmul.bf16.gmra.mxu0 %v4685
      %v8767 = vpop.f32.mrf.mxu0
      %v8768 = vadd.f32 %v8599, %v8767
      %v8769 = vpop.f32.mrf.mxu0
      %v8770 = vadd.f32 %v8601, %v8769
      %8771 = vmatmul.bf16.gmra.mxu0 %v4710
      %v8772 = vpop.f32.mrf.mxu0
      %v8773 = vadd.f32 %v8604, %v8772
      %v8774 = vpop.f32.mrf.mxu0
      %v8775 = vadd.f32 %v8606, %v8774
      %8776 = vmatmul.bf16.gmra.mxu0 %v4735
      %v8777 = vpop.f32.mrf.mxu0
      %v8778 = vadd.f32 %v8609, %v8777
      %v8779 = vpop.f32.mrf.mxu0
      %v8780 = vadd.f32 %v8611, %v8779
      %8781 = vmatmul.bf16.gmra.mxu0 %v4760
      %v8782 = vpop.f32.mrf.mxu0
      %v8783 = vadd.f32 %v8614, %v8782
      %v8784 = vpop.f32.mrf.mxu0
      %v8785 = vadd.f32 %v8616, %v8784
      %8786 = vmatmul.bf16.gmra.mxu0 %v4785
      %v8787 = vpop.f32.mrf.mxu0
      %v8788 = vadd.f32 %v8619, %v8787
      %v8789 = vpop.f32.mrf.mxu0
      %v8790 = vadd.f32 %v8621, %v8789
      %8791 = vmatmul.bf16.gmra.mxu0 %v4810
      %v8792 = vpop.f32.mrf.mxu0
      %v8793 = vadd.f32 %v8624, %v8792
      %v8794 = vpop.f32.mrf.mxu0
      %v8795 = vadd.f32 %v8626, %v8794
      %8796 = vmatmul.bf16.gmra.mxu0 %v4835
      %v8797 = vpop.f32.mrf.mxu0
      %v8798 = vadd.f32 %v8629, %v8797
      %v8799 = vpop.f32.mrf.mxu0
      %v8800 = vadd.f32 %v8631, %v8799
      %8801 = vmatmul.bf16.gmra.mxu0 %v4860
      %v8802 = vpop.f32.mrf.mxu0
      %v8803 = vadd.f32 %v8634, %v8802
      %v8804 = vpop.f32.mrf.mxu0
      %v8805 = vadd.f32 %v8636, %v8804
      %8806 = vmatmul.bf16.gmra.mxu0 %v4885
      %v8807 = vpop.f32.mrf.mxu0
      %v8808 = vadd.f32 %v8639, %v8807
      %v8809 = vpop.f32.mrf.mxu0
      %v8810 = vadd.f32 %v8641, %v8809
      %8811 = vmatmul.bf16.gmra.mxu0 %v4910
      %v8812 = vpop.f32.mrf.mxu0
      %v8813 = vadd.f32 %v8644, %v8812
      %v8814 = vpop.f32.mrf.mxu0
      %v8815 = vadd.f32 %v8646, %v8814
      %8816 = vmatmul.bf16.gmra.mxu0 %v4935
      %v8817 = vpop.f32.mrf.mxu0
      %v8818 = vadd.f32 %v8649, %v8817
      %v8819 = vpop.f32.mrf.mxu0
      %v8820 = vadd.f32 %v8651, %v8819
      %8821 = vmatmul.bf16.gmra.mxu0 %v4960
      %v8822 = vpop.f32.mrf.mxu0
      %v8823 = vadd.f32 %v8654, %v8822
      %v8824 = vpop.f32.mrf.mxu0
      %v8825 = vadd.f32 %v8656, %v8824
      %8826 = vmatmul.bf16.gmra.mxu0 %v4985
      %v8827 = vpop.f32.mrf.mxu0
      %v8828 = vadd.f32 %v8659, %v8827
      %v8829 = vpop.f32.mrf.mxu0
      %v8830 = vadd.f32 %v8661, %v8829
      %8831 = vmatmul.bf16.gmra.mxu0 %v5010
      %v8832 = vpop.f32.mrf.mxu0
      %v8833 = vadd.f32 %v8664, %v8832
      %v8834 = vpop.f32.mrf.mxu0
      %v8835 = vadd.f32 %v8666, %v8834
      %8836 = vmatmul.bf16.gmra.mxu0 %v5035
      %v8837 = vpop.f32.mrf.mxu0
      %v8838 = vadd.f32 %v8669, %v8837
      %v8839 = vpop.f32.mrf.mxu0
      %v8840 = vadd.f32 %v8671, %v8839
      %8841 = vmatmul.bf16.gmra.mxu0 %v5060
      %v8842 = vpop.f32.mrf.mxu0
      %v8843 = vadd.f32 %v8674, %v8842
      %v8844 = vpop.f32.mrf.mxu0
      %v8845 = vadd.f32 %v8676, %v8844
      %8846 = vmatmul.bf16.gmra.mxu0 %v5085
      %v8847 = vpop.f32.mrf.mxu0
      %v8848 = vadd.f32 %v8679, %v8847
      %v8849 = vpop.f32.mrf.mxu0
      %v8850 = vadd.f32 %v8681, %v8849
      %8851 = vmatmul.bf16.gmra.mxu0 %v5110
      %v8852 = vpop.f32.mrf.mxu0
      %v8853 = vadd.f32 %v8684, %v8852
      %v8854 = vpop.f32.mrf.mxu0
      %v8855 = vadd.f32 %v8686, %v8854
      %8856 = vdwg.mxu0
      %8857 = vmatpush.bf16.msra.mxu0 %v6765
      %8858 = vmatpush.bf16.msra.mxu0 %v6764
      %8859 = vmatpush.bf16.msra.mxu0 %v6763
      %8860 = vmatpush.bf16.msra.mxu0 %v6762
      %8861 = vmatpush.bf16.msra.mxu0 %v6761
      %8862 = vmatpush.bf16.msra.mxu0 %v6760
      %8863 = vmatpush.bf16.msra.mxu0 %v6759
      %8864 = vmatpush.bf16.msra.mxu0 %v6758
      %8865 = vmatmul.bf16.gmra.mxu0 %v4336
      %v8866 = vpop.f32.mrf.mxu0
      %v8867 = vadd.f32 %v8698, %v8866
      %v8868 = vpop.f32.mrf.mxu0
      %v8869 = vadd.f32 %v8700, %v8868
      %8870 = vmatmul.bf16.gmra.mxu0 %v4361
      %v8871 = vpop.f32.mrf.mxu0
      %v8872 = vadd.f32 %v8703, %v8871
      %v8873 = vpop.f32.mrf.mxu0
      %v8874 = vadd.f32 %v8705, %v8873
      %8875 = vmatmul.bf16.gmra.mxu0 %v4386
      %v8876 = vpop.f32.mrf.mxu0
      %v8877 = vadd.f32 %v8708, %v8876
      %v8878 = vpop.f32.mrf.mxu0
      %v8879 = vadd.f32 %v8710, %v8878
      %8880 = vmatmul.bf16.gmra.mxu0 %v4411
      %v8881 = vpop.f32.mrf.mxu0
      %v8882 = vadd.f32 %v8713, %v8881
      %v8883 = vpop.f32.mrf.mxu0
      %v8884 = vadd.f32 %v8715, %v8883
      %8885 = vmatmul.bf16.gmra.mxu0 %v4436
      %v8886 = vpop.f32.mrf.mxu0
      %v8887 = vadd.f32 %v8718, %v8886
      %v8888 = vpop.f32.mrf.mxu0
      %v8889 = vadd.f32 %v8720, %v8888
      %8890 = vmatmul.bf16.gmra.mxu0 %v4461
      %v8891 = vpop.f32.mrf.mxu0
      %v8892 = vadd.f32 %v8723, %v8891
      %v8893 = vpop.f32.mrf.mxu0
      %v8894 = vadd.f32 %v8725, %v8893
      %8895 = vmatmul.bf16.gmra.mxu0 %v4486
      %v8896 = vpop.f32.mrf.mxu0
      %v8897 = vadd.f32 %v8728, %v8896
      %v8898 = vpop.f32.mrf.mxu0
      %v8899 = vadd.f32 %v8730, %v8898
      %8900 = vmatmul.bf16.gmra.mxu0 %v4511
      %v8901 = vpop.f32.mrf.mxu0
      %v8902 = vadd.f32 %v8733, %v8901
      %v8903 = vpop.f32.mrf.mxu0
      %v8904 = vadd.f32 %v8735, %v8903
      %8905 = vmatmul.bf16.gmra.mxu0 %v4536
      %v8906 = vpop.f32.mrf.mxu0
      %v8907 = vadd.f32 %v8738, %v8906
      %v8908 = vpop.f32.mrf.mxu0
      %v8909 = vadd.f32 %v8740, %v8908
      %8910 = vmatmul.bf16.gmra.mxu0 %v4561
      %v8911 = vpop.f32.mrf.mxu0
      %v8912 = vadd.f32 %v8743, %v8911
      %v8913 = vpop.f32.mrf.mxu0
      %v8914 = vadd.f32 %v8745, %v8913
      %8915 = vmatmul.bf16.gmra.mxu0 %v4586
      %v8916 = vpop.f32.mrf.mxu0
      %v8917 = vadd.f32 %v8748, %v8916
      %v8918 = vpop.f32.mrf.mxu0
      %v8919 = vadd.f32 %v8750, %v8918
      %8920 = vmatmul.bf16.gmra.mxu0 %v4611
      %v8921 = vpop.f32.mrf.mxu0
      %v8922 = vadd.f32 %v8753, %v8921
      %v8923 = vpop.f32.mrf.mxu0
      %v8924 = vadd.f32 %v8755, %v8923
      %8925 = vmatmul.bf16.gmra.mxu0 %v4636
      %v8926 = vpop.f32.mrf.mxu0
      %v8927 = vadd.f32 %v8758, %v8926
      %v8928 = vpop.f32.mrf.mxu0
      %v8929 = vadd.f32 %v8760, %v8928
      %8930 = vmatmul.bf16.gmra.mxu0 %v4661
      %v8931 = vpop.f32.mrf.mxu0
      %v8932 = vadd.f32 %v8763, %v8931
      %v8933 = vpop.f32.mrf.mxu0
      %v8934 = vadd.f32 %v8765, %v8933
      %8935 = vmatmul.bf16.gmra.mxu0 %v4686
      %v8936 = vpop.f32.mrf.mxu0
      %v8937 = vadd.f32 %v8768, %v8936
      %v8938 = vpop.f32.mrf.mxu0
      %v8939 = vadd.f32 %v8770, %v8938
      %8940 = vmatmul.bf16.gmra.mxu0 %v4711
      %v8941 = vpop.f32.mrf.mxu0
      %v8942 = vadd.f32 %v8773, %v8941
      %v8943 = vpop.f32.mrf.mxu0
      %v8944 = vadd.f32 %v8775, %v8943
      %8945 = vmatmul.bf16.gmra.mxu0 %v4736
      %v8946 = vpop.f32.mrf.mxu0
      %v8947 = vadd.f32 %v8778, %v8946
      %v8948 = vpop.f32.mrf.mxu0
      %v8949 = vadd.f32 %v8780, %v8948
      %8950 = vmatmul.bf16.gmra.mxu0 %v4761
      %v8951 = vpop.f32.mrf.mxu0
      %v8952 = vadd.f32 %v8783, %v8951
      %v8953 = vpop.f32.mrf.mxu0
      %v8954 = vadd.f32 %v8785, %v8953
      %8955 = vmatmul.bf16.gmra.mxu0 %v4786
      %v8956 = vpop.f32.mrf.mxu0
      %v8957 = vadd.f32 %v8788, %v8956
      %v8958 = vpop.f32.mrf.mxu0
      %v8959 = vadd.f32 %v8790, %v8958
      %8960 = vmatmul.bf16.gmra.mxu0 %v4811
      %v8961 = vpop.f32.mrf.mxu0
      %v8962 = vadd.f32 %v8793, %v8961
      %v8963 = vpop.f32.mrf.mxu0
      %v8964 = vadd.f32 %v8795, %v8963
      %8965 = vmatmul.bf16.gmra.mxu0 %v4836
      %v8966 = vpop.f32.mrf.mxu0
      %v8967 = vadd.f32 %v8798, %v8966
      %v8968 = vpop.f32.mrf.mxu0
      %v8969 = vadd.f32 %v8800, %v8968
      %8970 = vmatmul.bf16.gmra.mxu0 %v4861
      %v8971 = vpop.f32.mrf.mxu0
      %v8972 = vadd.f32 %v8803, %v8971
      %v8973 = vpop.f32.mrf.mxu0
      %v8974 = vadd.f32 %v8805, %v8973
      %8975 = vmatmul.bf16.gmra.mxu0 %v4886
      %v8976 = vpop.f32.mrf.mxu0
      %v8977 = vadd.f32 %v8808, %v8976
      %v8978 = vpop.f32.mrf.mxu0
      %v8979 = vadd.f32 %v8810, %v8978
      %8980 = vmatmul.bf16.gmra.mxu0 %v4911
      %v8981 = vpop.f32.mrf.mxu0
      %v8982 = vadd.f32 %v8813, %v8981
      %v8983 = vpop.f32.mrf.mxu0
      %v8984 = vadd.f32 %v8815, %v8983
      %8985 = vmatmul.bf16.gmra.mxu0 %v4936
      %v8986 = vpop.f32.mrf.mxu0
      %v8987 = vadd.f32 %v8818, %v8986
      %v8988 = vpop.f32.mrf.mxu0
      %v8989 = vadd.f32 %v8820, %v8988
      %8990 = vmatmul.bf16.gmra.mxu0 %v4961
      %v8991 = vpop.f32.mrf.mxu0
      %v8992 = vadd.f32 %v8823, %v8991
      %v8993 = vpop.f32.mrf.mxu0
      %v8994 = vadd.f32 %v8825, %v8993
      %8995 = vmatmul.bf16.gmra.mxu0 %v4986
      %v8996 = vpop.f32.mrf.mxu0
      %v8997 = vadd.f32 %v8828, %v8996
      %v8998 = vpop.f32.mrf.mxu0
      %v8999 = vadd.f32 %v8830, %v8998
      %9000 = vmatmul.bf16.gmra.mxu0 %v5011
      %v9001 = vpop.f32.mrf.mxu0
      %v9002 = vadd.f32 %v8833, %v9001
      %v9003 = vpop.f32.mrf.mxu0
      %v9004 = vadd.f32 %v8835, %v9003
      %9005 = vmatmul.bf16.gmra.mxu0 %v5036
      %v9006 = vpop.f32.mrf.mxu0
      %v9007 = vadd.f32 %v8838, %v9006
      %v9008 = vpop.f32.mrf.mxu0
      %v9009 = vadd.f32 %v8840, %v9008
      %9010 = vmatmul.bf16.gmra.mxu0 %v5061
      %v9011 = vpop.f32.mrf.mxu0
      %v9012 = vadd.f32 %v8843, %v9011
      %v9013 = vpop.f32.mrf.mxu0
      %v9014 = vadd.f32 %v8845, %v9013
      %9015 = vmatmul.bf16.gmra.mxu0 %v5086
      %v9016 = vpop.f32.mrf.mxu0
      %v9017 = vadd.f32 %v8848, %v9016
      %v9018 = vpop.f32.mrf.mxu0
      %v9019 = vadd.f32 %v8850, %v9018
      %9020 = vmatmul.bf16.gmra.mxu0 %v5111
      %v9021 = vpop.f32.mrf.mxu0
      %v9022 = vadd.f32 %v8853, %v9021
      %v9023 = vpop.f32.mrf.mxu0
      %v9024 = vadd.f32 %v8855, %v9023
      %9025 = vdwg.mxu0
      %9026 = vmatpush.bf16.msra.mxu0 %v6773
      %9027 = vmatpush.bf16.msra.mxu0 %v6772
      %9028 = vmatpush.bf16.msra.mxu0 %v6771
      %9029 = vmatpush.bf16.msra.mxu0 %v6770
      %9030 = vmatpush.bf16.msra.mxu0 %v6769
      %9031 = vmatpush.bf16.msra.mxu0 %v6768
      %9032 = vmatpush.bf16.msra.mxu0 %v6767
      %9033 = vmatpush.bf16.msra.mxu0 %v6766
      %9034 = vmatmul.bf16.gmra.mxu0 %v4337
      %v9035 = vpop.f32.mrf.mxu0
      %v9036 = vadd.f32 %v8867, %v9035
      %v9037 = vpop.f32.mrf.mxu0
      %v9038 = vadd.f32 %v8869, %v9037
      %9039 = vmatmul.bf16.gmra.mxu0 %v4362
      %v9040 = vpop.f32.mrf.mxu0
      %v9041 = vadd.f32 %v8872, %v9040
      %v9042 = vpop.f32.mrf.mxu0
      %v9043 = vadd.f32 %v8874, %v9042
      %9044 = vmatmul.bf16.gmra.mxu0 %v4387
      %v9045 = vpop.f32.mrf.mxu0
      %v9046 = vadd.f32 %v8877, %v9045
      %v9047 = vpop.f32.mrf.mxu0
      %v9048 = vadd.f32 %v8879, %v9047
      %9049 = vmatmul.bf16.gmra.mxu0 %v4412
      %v9050 = vpop.f32.mrf.mxu0
      %v9051 = vadd.f32 %v8882, %v9050
      %v9052 = vpop.f32.mrf.mxu0
      %v9053 = vadd.f32 %v8884, %v9052
      %9054 = vmatmul.bf16.gmra.mxu0 %v4437
      %v9055 = vpop.f32.mrf.mxu0
      %v9056 = vadd.f32 %v8887, %v9055
      %v9057 = vpop.f32.mrf.mxu0
      %v9058 = vadd.f32 %v8889, %v9057
      %9059 = vmatmul.bf16.gmra.mxu0 %v4462
      %v9060 = vpop.f32.mrf.mxu0
      %v9061 = vadd.f32 %v8892, %v9060
      %v9062 = vpop.f32.mrf.mxu0
      %v9063 = vadd.f32 %v8894, %v9062
      %9064 = vmatmul.bf16.gmra.mxu0 %v4487
      %v9065 = vpop.f32.mrf.mxu0
      %v9066 = vadd.f32 %v8897, %v9065
      %v9067 = vpop.f32.mrf.mxu0
      %v9068 = vadd.f32 %v8899, %v9067
      %9069 = vmatmul.bf16.gmra.mxu0 %v4512
      %v9070 = vpop.f32.mrf.mxu0
      %v9071 = vadd.f32 %v8902, %v9070
      %v9072 = vpop.f32.mrf.mxu0
      %v9073 = vadd.f32 %v8904, %v9072
      %9074 = vmatmul.bf16.gmra.mxu0 %v4537
      %v9075 = vpop.f32.mrf.mxu0
      %v9076 = vadd.f32 %v8907, %v9075
      %v9077 = vpop.f32.mrf.mxu0
      %v9078 = vadd.f32 %v8909, %v9077
      %9079 = vmatmul.bf16.gmra.mxu0 %v4562
      %v9080 = vpop.f32.mrf.mxu0
      %v9081 = vadd.f32 %v8912, %v9080
      %v9082 = vpop.f32.mrf.mxu0
      %v9083 = vadd.f32 %v8914, %v9082
      %9084 = vmatmul.bf16.gmra.mxu0 %v4587
      %v9085 = vpop.f32.mrf.mxu0
      %v9086 = vadd.f32 %v8917, %v9085
      %v9087 = vpop.f32.mrf.mxu0
      %v9088 = vadd.f32 %v8919, %v9087
      %9089 = vmatmul.bf16.gmra.mxu0 %v4612
      %v9090 = vpop.f32.mrf.mxu0
      %v9091 = vadd.f32 %v8922, %v9090
      %v9092 = vpop.f32.mrf.mxu0
      %v9093 = vadd.f32 %v8924, %v9092
      %9094 = vmatmul.bf16.gmra.mxu0 %v4637
      %v9095 = vpop.f32.mrf.mxu0
      %v9096 = vadd.f32 %v8927, %v9095
      %v9097 = vpop.f32.mrf.mxu0
      %v9098 = vadd.f32 %v8929, %v9097
      %9099 = vmatmul.bf16.gmra.mxu0 %v4662
      %v9100 = vpop.f32.mrf.mxu0
      %v9101 = vadd.f32 %v8932, %v9100
      %v9102 = vpop.f32.mrf.mxu0
      %v9103 = vadd.f32 %v8934, %v9102
      %9104 = vmatmul.bf16.gmra.mxu0 %v4687
      %v9105 = vpop.f32.mrf.mxu0
      %v9106 = vadd.f32 %v8937, %v9105
      %v9107 = vpop.f32.mrf.mxu0
      %v9108 = vadd.f32 %v8939, %v9107
      %9109 = vmatmul.bf16.gmra.mxu0 %v4712
      %v9110 = vpop.f32.mrf.mxu0
      %v9111 = vadd.f32 %v8942, %v9110
      %v9112 = vpop.f32.mrf.mxu0
      %v9113 = vadd.f32 %v8944, %v9112
      %9114 = vmatmul.bf16.gmra.mxu0 %v4737
      %v9115 = vpop.f32.mrf.mxu0
      %v9116 = vadd.f32 %v8947, %v9115
      %v9117 = vpop.f32.mrf.mxu0
      %v9118 = vadd.f32 %v8949, %v9117
      %9119 = vmatmul.bf16.gmra.mxu0 %v4762
      %v9120 = vpop.f32.mrf.mxu0
      %v9121 = vadd.f32 %v8952, %v9120
      %v9122 = vpop.f32.mrf.mxu0
      %v9123 = vadd.f32 %v8954, %v9122
      %9124 = vmatmul.bf16.gmra.mxu0 %v4787
      %v9125 = vpop.f32.mrf.mxu0
      %v9126 = vadd.f32 %v8957, %v9125
      %v9127 = vpop.f32.mrf.mxu0
      %v9128 = vadd.f32 %v8959, %v9127
      %9129 = vmatmul.bf16.gmra.mxu0 %v4812
      %v9130 = vpop.f32.mrf.mxu0
      %v9131 = vadd.f32 %v8962, %v9130
      %v9132 = vpop.f32.mrf.mxu0
      %v9133 = vadd.f32 %v8964, %v9132
      %9134 = vmatmul.bf16.gmra.mxu0 %v4837
      %v9135 = vpop.f32.mrf.mxu0
      %v9136 = vadd.f32 %v8967, %v9135
      %v9137 = vpop.f32.mrf.mxu0
      %v9138 = vadd.f32 %v8969, %v9137
      %9139 = vmatmul.bf16.gmra.mxu0 %v4862
      %v9140 = vpop.f32.mrf.mxu0
      %v9141 = vadd.f32 %v8972, %v9140
      %v9142 = vpop.f32.mrf.mxu0
      %v9143 = vadd.f32 %v8974, %v9142
      %9144 = vmatmul.bf16.gmra.mxu0 %v4887
      %v9145 = vpop.f32.mrf.mxu0
      %v9146 = vadd.f32 %v8977, %v9145
      %v9147 = vpop.f32.mrf.mxu0
      %v9148 = vadd.f32 %v8979, %v9147
      %9149 = vmatmul.bf16.gmra.mxu0 %v4912
      %v9150 = vpop.f32.mrf.mxu0
      %v9151 = vadd.f32 %v8982, %v9150
      %v9152 = vpop.f32.mrf.mxu0
      %v9153 = vadd.f32 %v8984, %v9152
      %9154 = vmatmul.bf16.gmra.mxu0 %v4937
      %v9155 = vpop.f32.mrf.mxu0
      %v9156 = vadd.f32 %v8987, %v9155
      %v9157 = vpop.f32.mrf.mxu0
      %v9158 = vadd.f32 %v8989, %v9157
      %9159 = vmatmul.bf16.gmra.mxu0 %v4962
      %v9160 = vpop.f32.mrf.mxu0
      %v9161 = vadd.f32 %v8992, %v9160
      %v9162 = vpop.f32.mrf.mxu0
      %v9163 = vadd.f32 %v8994, %v9162
      %9164 = vmatmul.bf16.gmra.mxu0 %v4987
      %v9165 = vpop.f32.mrf.mxu0
      %v9166 = vadd.f32 %v8997, %v9165
      %v9167 = vpop.f32.mrf.mxu0
      %v9168 = vadd.f32 %v8999, %v9167
      %9169 = vmatmul.bf16.gmra.mxu0 %v5012
      %v9170 = vpop.f32.mrf.mxu0
      %v9171 = vadd.f32 %v9002, %v9170
      %v9172 = vpop.f32.mrf.mxu0
      %v9173 = vadd.f32 %v9004, %v9172
      %9174 = vmatmul.bf16.gmra.mxu0 %v5037
      %v9175 = vpop.f32.mrf.mxu0
      %v9176 = vadd.f32 %v9007, %v9175
      %v9177 = vpop.f32.mrf.mxu0
      %v9178 = vadd.f32 %v9009, %v9177
      %9179 = vmatmul.bf16.gmra.mxu0 %v5062
      %v9180 = vpop.f32.mrf.mxu0
      %v9181 = vadd.f32 %v9012, %v9180
      %v9182 = vpop.f32.mrf.mxu0
      %v9183 = vadd.f32 %v9014, %v9182
      %9184 = vmatmul.bf16.gmra.mxu0 %v5087
      %v9185 = vpop.f32.mrf.mxu0
      %v9186 = vadd.f32 %v9017, %v9185
      %v9187 = vpop.f32.mrf.mxu0
      %v9188 = vadd.f32 %v9019, %v9187
      %9189 = vmatmul.bf16.gmra.mxu0 %v5112
      %v9190 = vpop.f32.mrf.mxu0
      %v9191 = vadd.f32 %v9022, %v9190
      %v9192 = vpop.f32.mrf.mxu0
      %v9193 = vadd.f32 %v9024, %v9192
      %9194 = vdwg.mxu0
      %9195 = vmatpush.bf16.msra.mxu0 %v6781
      %9196 = vmatpush.bf16.msra.mxu0 %v6780
      %9197 = vmatpush.bf16.msra.mxu0 %v6779
      %9198 = vmatpush.bf16.msra.mxu0 %v6778
      %9199 = vmatpush.bf16.msra.mxu0 %v6777
      %9200 = vmatpush.bf16.msra.mxu0 %v6776
      %9201 = vmatpush.bf16.msra.mxu0 %v6775
      %9202 = vmatpush.bf16.msra.mxu0 %v6774
      %9203 = vmatmul.bf16.gmra.mxu0 %v4338
      %v9204 = vpop.f32.mrf.mxu0
      %v9205 = vadd.f32 %v9036, %v9204
      %v9206 = vpop.f32.mrf.mxu0
      %v9207 = vadd.f32 %v9038, %v9206
      %9208 = vmatmul.bf16.gmra.mxu0 %v4363
      %v9209 = vpop.f32.mrf.mxu0
      %v9210 = vadd.f32 %v9041, %v9209
      %v9211 = vpop.f32.mrf.mxu0
      %v9212 = vadd.f32 %v9043, %v9211
      %9213 = vmatmul.bf16.gmra.mxu0 %v4388
      %v9214 = vpop.f32.mrf.mxu0
      %v9215 = vadd.f32 %v9046, %v9214
      %v9216 = vpop.f32.mrf.mxu0
      %v9217 = vadd.f32 %v9048, %v9216
      %9218 = vmatmul.bf16.gmra.mxu0 %v4413
      %v9219 = vpop.f32.mrf.mxu0
      %v9220 = vadd.f32 %v9051, %v9219
      %v9221 = vpop.f32.mrf.mxu0
      %v9222 = vadd.f32 %v9053, %v9221
      %9223 = vmatmul.bf16.gmra.mxu0 %v4438
      %v9224 = vpop.f32.mrf.mxu0
      %v9225 = vadd.f32 %v9056, %v9224
      %v9226 = vpop.f32.mrf.mxu0
      %v9227 = vadd.f32 %v9058, %v9226
      %9228 = vmatmul.bf16.gmra.mxu0 %v4463
      %v9229 = vpop.f32.mrf.mxu0
      %v9230 = vadd.f32 %v9061, %v9229
      %v9231 = vpop.f32.mrf.mxu0
      %v9232 = vadd.f32 %v9063, %v9231
      %9233 = vmatmul.bf16.gmra.mxu0 %v4488
      %v9234 = vpop.f32.mrf.mxu0
      %v9235 = vadd.f32 %v9066, %v9234
      %v9236 = vpop.f32.mrf.mxu0
      %v9237 = vadd.f32 %v9068, %v9236
      %9238 = vmatmul.bf16.gmra.mxu0 %v4513
      %v9239 = vpop.f32.mrf.mxu0
      %v9240 = vadd.f32 %v9071, %v9239
      %v9241 = vpop.f32.mrf.mxu0
      %v9242 = vadd.f32 %v9073, %v9241
      %9243 = vmatmul.bf16.gmra.mxu0 %v4538
      %v9244 = vpop.f32.mrf.mxu0
      %v9245 = vadd.f32 %v9076, %v9244
      %v9246 = vpop.f32.mrf.mxu0
      %v9247 = vadd.f32 %v9078, %v9246
      %9248 = vmatmul.bf16.gmra.mxu0 %v4563
      %v9249 = vpop.f32.mrf.mxu0
      %v9250 = vadd.f32 %v9081, %v9249
      %v9251 = vpop.f32.mrf.mxu0
      %v9252 = vadd.f32 %v9083, %v9251
      %9253 = vmatmul.bf16.gmra.mxu0 %v4588
      %v9254 = vpop.f32.mrf.mxu0
      %v9255 = vadd.f32 %v9086, %v9254
      %v9256 = vpop.f32.mrf.mxu0
      %v9257 = vadd.f32 %v9088, %v9256
      %9258 = vmatmul.bf16.gmra.mxu0 %v4613
      %v9259 = vpop.f32.mrf.mxu0
      %v9260 = vadd.f32 %v9091, %v9259
      %v9261 = vpop.f32.mrf.mxu0
      %v9262 = vadd.f32 %v9093, %v9261
      %9263 = vmatmul.bf16.gmra.mxu0 %v4638
      %v9264 = vpop.f32.mrf.mxu0
      %v9265 = vadd.f32 %v9096, %v9264
      %v9266 = vpop.f32.mrf.mxu0
      %v9267 = vadd.f32 %v9098, %v9266
      %9268 = vmatmul.bf16.gmra.mxu0 %v4663
      %v9269 = vpop.f32.mrf.mxu0
      %v9270 = vadd.f32 %v9101, %v9269
      %v9271 = vpop.f32.mrf.mxu0
      %v9272 = vadd.f32 %v9103, %v9271
      %9273 = vmatmul.bf16.gmra.mxu0 %v4688
      %v9274 = vpop.f32.mrf.mxu0
      %v9275 = vadd.f32 %v9106, %v9274
      %v9276 = vpop.f32.mrf.mxu0
      %v9277 = vadd.f32 %v9108, %v9276
      %9278 = vmatmul.bf16.gmra.mxu0 %v4713
      %v9279 = vpop.f32.mrf.mxu0
      %v9280 = vadd.f32 %v9111, %v9279
      %v9281 = vpop.f32.mrf.mxu0
      %v9282 = vadd.f32 %v9113, %v9281
      %9283 = vmatmul.bf16.gmra.mxu0 %v4738
      %v9284 = vpop.f32.mrf.mxu0
      %v9285 = vadd.f32 %v9116, %v9284
      %v9286 = vpop.f32.mrf.mxu0
      %v9287 = vadd.f32 %v9118, %v9286
      %9288 = vmatmul.bf16.gmra.mxu0 %v4763
      %v9289 = vpop.f32.mrf.mxu0
      %v9290 = vadd.f32 %v9121, %v9289
      %v9291 = vpop.f32.mrf.mxu0
      %v9292 = vadd.f32 %v9123, %v9291
      %9293 = vmatmul.bf16.gmra.mxu0 %v4788
      %v9294 = vpop.f32.mrf.mxu0
      %v9295 = vadd.f32 %v9126, %v9294
      %v9296 = vpop.f32.mrf.mxu0
      %v9297 = vadd.f32 %v9128, %v9296
      %9298 = vmatmul.bf16.gmra.mxu0 %v4813
      %v9299 = vpop.f32.mrf.mxu0
      %v9300 = vadd.f32 %v9131, %v9299
      %v9301 = vpop.f32.mrf.mxu0
      %v9302 = vadd.f32 %v9133, %v9301
      %9303 = vmatmul.bf16.gmra.mxu0 %v4838
      %v9304 = vpop.f32.mrf.mxu0
      %v9305 = vadd.f32 %v9136, %v9304
      %v9306 = vpop.f32.mrf.mxu0
      %v9307 = vadd.f32 %v9138, %v9306
      %9308 = vmatmul.bf16.gmra.mxu0 %v4863
      %v9309 = vpop.f32.mrf.mxu0
      %v9310 = vadd.f32 %v9141, %v9309
      %v9311 = vpop.f32.mrf.mxu0
      %v9312 = vadd.f32 %v9143, %v9311
      %9313 = vmatmul.bf16.gmra.mxu0 %v4888
      %v9314 = vpop.f32.mrf.mxu0
      %v9315 = vadd.f32 %v9146, %v9314
      %v9316 = vpop.f32.mrf.mxu0
      %v9317 = vadd.f32 %v9148, %v9316
      %9318 = vmatmul.bf16.gmra.mxu0 %v4913
      %v9319 = vpop.f32.mrf.mxu0
      %v9320 = vadd.f32 %v9151, %v9319
      %v9321 = vpop.f32.mrf.mxu0
      %v9322 = vadd.f32 %v9153, %v9321
      %9323 = vmatmul.bf16.gmra.mxu0 %v4938
      %v9324 = vpop.f32.mrf.mxu0
      %v9325 = vadd.f32 %v9156, %v9324
      %v9326 = vpop.f32.mrf.mxu0
      %v9327 = vadd.f32 %v9158, %v9326
      %9328 = vmatmul.bf16.gmra.mxu0 %v4963
      %v9329 = vpop.f32.mrf.mxu0
      %v9330 = vadd.f32 %v9161, %v9329
      %v9331 = vpop.f32.mrf.mxu0
      %v9332 = vadd.f32 %v9163, %v9331
      %9333 = vmatmul.bf16.gmra.mxu0 %v4988
      %v9334 = vpop.f32.mrf.mxu0
      %v9335 = vadd.f32 %v9166, %v9334
      %v9336 = vpop.f32.mrf.mxu0
      %v9337 = vadd.f32 %v9168, %v9336
      %9338 = vmatmul.bf16.gmra.mxu0 %v5013
      %v9339 = vpop.f32.mrf.mxu0
      %v9340 = vadd.f32 %v9171, %v9339
      %v9341 = vpop.f32.mrf.mxu0
      %v9342 = vadd.f32 %v9173, %v9341
      %9343 = vmatmul.bf16.gmra.mxu0 %v5038
      %v9344 = vpop.f32.mrf.mxu0
      %v9345 = vadd.f32 %v9176, %v9344
      %v9346 = vpop.f32.mrf.mxu0
      %v9347 = vadd.f32 %v9178, %v9346
      %9348 = vmatmul.bf16.gmra.mxu0 %v5063
      %v9349 = vpop.f32.mrf.mxu0
      %v9350 = vadd.f32 %v9181, %v9349
      %v9351 = vpop.f32.mrf.mxu0
      %v9352 = vadd.f32 %v9183, %v9351
      %9353 = vmatmul.bf16.gmra.mxu0 %v5088
      %v9354 = vpop.f32.mrf.mxu0
      %v9355 = vadd.f32 %v9186, %v9354
      %v9356 = vpop.f32.mrf.mxu0
      %v9357 = vadd.f32 %v9188, %v9356
      %9358 = vmatmul.bf16.gmra.mxu0 %v5113
      %v9359 = vpop.f32.mrf.mxu0
      %v9360 = vadd.f32 %v9191, %v9359
      %v9361 = vpop.f32.mrf.mxu0
      %v9362 = vadd.f32 %v9193, %v9361
      %9363 = vdwg.mxu0
      %9364 = vmatpush.bf16.msra.mxu0 %v6789
      %9365 = vmatpush.bf16.msra.mxu0 %v6788
      %9366 = vmatpush.bf16.msra.mxu0 %v6787
      %9367 = vmatpush.bf16.msra.mxu0 %v6786
      %9368 = vmatpush.bf16.msra.mxu0 %v6785
      %9369 = vmatpush.bf16.msra.mxu0 %v6784
      %9370 = vmatpush.bf16.msra.mxu0 %v6783
      %9371 = vmatpush.bf16.msra.mxu0 %v6782
      %9372 = vmatmul.bf16.gmra.mxu0 %v4339
      %v9373 = vpop.f32.mrf.mxu0
      %v9374 = vadd.f32 %v9205, %v9373
      %v9375 = vpop.f32.mrf.mxu0
      %v9376 = vadd.f32 %v9207, %v9375
      %9377 = vmatmul.bf16.gmra.mxu0 %v4364
      %v9378 = vpop.f32.mrf.mxu0
      %v9379 = vadd.f32 %v9210, %v9378
      %v9380 = vpop.f32.mrf.mxu0
      %v9381 = vadd.f32 %v9212, %v9380
      %9382 = vmatmul.bf16.gmra.mxu0 %v4389
      %v9383 = vpop.f32.mrf.mxu0
      %v9384 = vadd.f32 %v9215, %v9383
      %v9385 = vpop.f32.mrf.mxu0
      %v9386 = vadd.f32 %v9217, %v9385
      %9387 = vmatmul.bf16.gmra.mxu0 %v4414
      %v9388 = vpop.f32.mrf.mxu0
      %v9389 = vadd.f32 %v9220, %v9388
      %v9390 = vpop.f32.mrf.mxu0
      %v9391 = vadd.f32 %v9222, %v9390
      %9392 = vmatmul.bf16.gmra.mxu0 %v4439
      %v9393 = vpop.f32.mrf.mxu0
      %v9394 = vadd.f32 %v9225, %v9393
      %v9395 = vpop.f32.mrf.mxu0
      %v9396 = vadd.f32 %v9227, %v9395
      %9397 = vmatmul.bf16.gmra.mxu0 %v4464
      %v9398 = vpop.f32.mrf.mxu0
      %v9399 = vadd.f32 %v9230, %v9398
      %v9400 = vpop.f32.mrf.mxu0
      %v9401 = vadd.f32 %v9232, %v9400
      %9402 = vmatmul.bf16.gmra.mxu0 %v4489
      %v9403 = vpop.f32.mrf.mxu0
      %v9404 = vadd.f32 %v9235, %v9403
      %v9405 = vpop.f32.mrf.mxu0
      %v9406 = vadd.f32 %v9237, %v9405
      %9407 = vmatmul.bf16.gmra.mxu0 %v4514
      %v9408 = vpop.f32.mrf.mxu0
      %v9409 = vadd.f32 %v9240, %v9408
      %v9410 = vpop.f32.mrf.mxu0
      %v9411 = vadd.f32 %v9242, %v9410
      %9412 = vmatmul.bf16.gmra.mxu0 %v4539
      %v9413 = vpop.f32.mrf.mxu0
      %v9414 = vadd.f32 %v9245, %v9413
      %v9415 = vpop.f32.mrf.mxu0
      %v9416 = vadd.f32 %v9247, %v9415
      %9417 = vmatmul.bf16.gmra.mxu0 %v4564
      %v9418 = vpop.f32.mrf.mxu0
      %v9419 = vadd.f32 %v9250, %v9418
      %v9420 = vpop.f32.mrf.mxu0
      %v9421 = vadd.f32 %v9252, %v9420
      %9422 = vmatmul.bf16.gmra.mxu0 %v4589
      %v9423 = vpop.f32.mrf.mxu0
      %v9424 = vadd.f32 %v9255, %v9423
      %v9425 = vpop.f32.mrf.mxu0
      %v9426 = vadd.f32 %v9257, %v9425
      %9427 = vmatmul.bf16.gmra.mxu0 %v4614
      %v9428 = vpop.f32.mrf.mxu0
      %v9429 = vadd.f32 %v9260, %v9428
      %v9430 = vpop.f32.mrf.mxu0
      %v9431 = vadd.f32 %v9262, %v9430
      %9432 = vmatmul.bf16.gmra.mxu0 %v4639
      %v9433 = vpop.f32.mrf.mxu0
      %v9434 = vadd.f32 %v9265, %v9433
      %v9435 = vpop.f32.mrf.mxu0
      %v9436 = vadd.f32 %v9267, %v9435
      %9437 = vmatmul.bf16.gmra.mxu0 %v4664
      %v9438 = vpop.f32.mrf.mxu0
      %v9439 = vadd.f32 %v9270, %v9438
      %v9440 = vpop.f32.mrf.mxu0
      %v9441 = vadd.f32 %v9272, %v9440
      %9442 = vmatmul.bf16.gmra.mxu0 %v4689
      %v9443 = vpop.f32.mrf.mxu0
      %v9444 = vadd.f32 %v9275, %v9443
      %v9445 = vpop.f32.mrf.mxu0
      %v9446 = vadd.f32 %v9277, %v9445
      %9447 = vmatmul.bf16.gmra.mxu0 %v4714
      %v9448 = vpop.f32.mrf.mxu0
      %v9449 = vadd.f32 %v9280, %v9448
      %v9450 = vpop.f32.mrf.mxu0
      %v9451 = vadd.f32 %v9282, %v9450
      %9452 = vmatmul.bf16.gmra.mxu0 %v4739
      %v9453 = vpop.f32.mrf.mxu0
      %v9454 = vadd.f32 %v9285, %v9453
      %v9455 = vpop.f32.mrf.mxu0
      %v9456 = vadd.f32 %v9287, %v9455
      %9457 = vmatmul.bf16.gmra.mxu0 %v4764
      %v9458 = vpop.f32.mrf.mxu0
      %v9459 = vadd.f32 %v9290, %v9458
      %v9460 = vpop.f32.mrf.mxu0
      %v9461 = vadd.f32 %v9292, %v9460
      %9462 = vmatmul.bf16.gmra.mxu0 %v4789
      %v9463 = vpop.f32.mrf.mxu0
      %v9464 = vadd.f32 %v9295, %v9463
      %v9465 = vpop.f32.mrf.mxu0
      %v9466 = vadd.f32 %v9297, %v9465
      %9467 = vmatmul.bf16.gmra.mxu0 %v4814
      %v9468 = vpop.f32.mrf.mxu0
      %v9469 = vadd.f32 %v9300, %v9468
      %v9470 = vpop.f32.mrf.mxu0
      %v9471 = vadd.f32 %v9302, %v9470
      %9472 = vmatmul.bf16.gmra.mxu0 %v4839
      %v9473 = vpop.f32.mrf.mxu0
      %v9474 = vadd.f32 %v9305, %v9473
      %v9475 = vpop.f32.mrf.mxu0
      %v9476 = vadd.f32 %v9307, %v9475
      %9477 = vmatmul.bf16.gmra.mxu0 %v4864
      %v9478 = vpop.f32.mrf.mxu0
      %v9479 = vadd.f32 %v9310, %v9478
      %v9480 = vpop.f32.mrf.mxu0
      %v9481 = vadd.f32 %v9312, %v9480
      %9482 = vmatmul.bf16.gmra.mxu0 %v4889
      %v9483 = vpop.f32.mrf.mxu0
      %v9484 = vadd.f32 %v9315, %v9483
      %v9485 = vpop.f32.mrf.mxu0
      %v9486 = vadd.f32 %v9317, %v9485
      %9487 = vmatmul.bf16.gmra.mxu0 %v4914
      %v9488 = vpop.f32.mrf.mxu0
      %v9489 = vadd.f32 %v9320, %v9488
      %v9490 = vpop.f32.mrf.mxu0
      %v9491 = vadd.f32 %v9322, %v9490
      %9492 = vmatmul.bf16.gmra.mxu0 %v4939
      %v9493 = vpop.f32.mrf.mxu0
      %v9494 = vadd.f32 %v9325, %v9493
      %v9495 = vpop.f32.mrf.mxu0
      %v9496 = vadd.f32 %v9327, %v9495
      %9497 = vmatmul.bf16.gmra.mxu0 %v4964
      %v9498 = vpop.f32.mrf.mxu0
      %v9499 = vadd.f32 %v9330, %v9498
      %v9500 = vpop.f32.mrf.mxu0
      %v9501 = vadd.f32 %v9332, %v9500
      %9502 = vmatmul.bf16.gmra.mxu0 %v4989
      %v9503 = vpop.f32.mrf.mxu0
      %v9504 = vadd.f32 %v9335, %v9503
      %v9505 = vpop.f32.mrf.mxu0
      %v9506 = vadd.f32 %v9337, %v9505
      %9507 = vmatmul.bf16.gmra.mxu0 %v5014
      %v9508 = vpop.f32.mrf.mxu0
      %v9509 = vadd.f32 %v9340, %v9508
      %v9510 = vpop.f32.mrf.mxu0
      %v9511 = vadd.f32 %v9342, %v9510
      %9512 = vmatmul.bf16.gmra.mxu0 %v5039
      %v9513 = vpop.f32.mrf.mxu0
      %v9514 = vadd.f32 %v9345, %v9513
      %v9515 = vpop.f32.mrf.mxu0
      %v9516 = vadd.f32 %v9347, %v9515
      %9517 = vmatmul.bf16.gmra.mxu0 %v5064
      %v9518 = vpop.f32.mrf.mxu0
      %v9519 = vadd.f32 %v9350, %v9518
      %v9520 = vpop.f32.mrf.mxu0
      %v9521 = vadd.f32 %v9352, %v9520
      %9522 = vmatmul.bf16.gmra.mxu0 %v5089
      %v9523 = vpop.f32.mrf.mxu0
      %v9524 = vadd.f32 %v9355, %v9523
      %v9525 = vpop.f32.mrf.mxu0
      %v9526 = vadd.f32 %v9357, %v9525
      %9527 = vmatmul.bf16.gmra.mxu0 %v5114
      %v9528 = vpop.f32.mrf.mxu0
      %v9529 = vadd.f32 %v9360, %v9528
      %v9530 = vpop.f32.mrf.mxu0
      %v9531 = vadd.f32 %v9362, %v9530
      %9532 = vdwg.mxu0
      %9533 = vmatpush.bf16.msra.mxu0 %v6797
      %9534 = vmatpush.bf16.msra.mxu0 %v6796
      %9535 = vmatpush.bf16.msra.mxu0 %v6795
      %9536 = vmatpush.bf16.msra.mxu0 %v6794
      %9537 = vmatpush.bf16.msra.mxu0 %v6793
      %9538 = vmatpush.bf16.msra.mxu0 %v6792
      %9539 = vmatpush.bf16.msra.mxu0 %v6791
      %9540 = vmatpush.bf16.msra.mxu0 %v6790
      %9541 = vmatmul.bf16.gmra.mxu0 %v4340
      %v9542 = vpop.f32.mrf.mxu0
      %v9543 = vadd.f32 %v9374, %v9542
      %v9544 = vpop.f32.mrf.mxu0
      %v9545 = vadd.f32 %v9376, %v9544
      %9546 = vmatmul.bf16.gmra.mxu0 %v4365
      %v9547 = vpop.f32.mrf.mxu0
      %v9548 = vadd.f32 %v9379, %v9547
      %v9549 = vpop.f32.mrf.mxu0
      %v9550 = vadd.f32 %v9381, %v9549
      %9551 = vmatmul.bf16.gmra.mxu0 %v4390
      %v9552 = vpop.f32.mrf.mxu0
      %v9553 = vadd.f32 %v9384, %v9552
      %v9554 = vpop.f32.mrf.mxu0
      %v9555 = vadd.f32 %v9386, %v9554
      %9556 = vmatmul.bf16.gmra.mxu0 %v4415
      %v9557 = vpop.f32.mrf.mxu0
      %v9558 = vadd.f32 %v9389, %v9557
      %v9559 = vpop.f32.mrf.mxu0
      %v9560 = vadd.f32 %v9391, %v9559
      %9561 = vmatmul.bf16.gmra.mxu0 %v4440
      %v9562 = vpop.f32.mrf.mxu0
      %v9563 = vadd.f32 %v9394, %v9562
      %v9564 = vpop.f32.mrf.mxu0
      %v9565 = vadd.f32 %v9396, %v9564
      %9566 = vmatmul.bf16.gmra.mxu0 %v4465
      %v9567 = vpop.f32.mrf.mxu0
      %v9568 = vadd.f32 %v9399, %v9567
      %v9569 = vpop.f32.mrf.mxu0
      %v9570 = vadd.f32 %v9401, %v9569
      %9571 = vmatmul.bf16.gmra.mxu0 %v4490
      %v9572 = vpop.f32.mrf.mxu0
      %v9573 = vadd.f32 %v9404, %v9572
      %v9574 = vpop.f32.mrf.mxu0
      %v9575 = vadd.f32 %v9406, %v9574
      %9576 = vmatmul.bf16.gmra.mxu0 %v4515
      %v9577 = vpop.f32.mrf.mxu0
      %v9578 = vadd.f32 %v9409, %v9577
      %v9579 = vpop.f32.mrf.mxu0
      %v9580 = vadd.f32 %v9411, %v9579
      %9581 = vmatmul.bf16.gmra.mxu0 %v4540
      %v9582 = vpop.f32.mrf.mxu0
      %v9583 = vadd.f32 %v9414, %v9582
      %v9584 = vpop.f32.mrf.mxu0
      %v9585 = vadd.f32 %v9416, %v9584
      %9586 = vmatmul.bf16.gmra.mxu0 %v4565
      %v9587 = vpop.f32.mrf.mxu0
      %v9588 = vadd.f32 %v9419, %v9587
      %v9589 = vpop.f32.mrf.mxu0
      %v9590 = vadd.f32 %v9421, %v9589
      %9591 = vmatmul.bf16.gmra.mxu0 %v4590
      %v9592 = vpop.f32.mrf.mxu0
      %v9593 = vadd.f32 %v9424, %v9592
      %v9594 = vpop.f32.mrf.mxu0
      %v9595 = vadd.f32 %v9426, %v9594
      %9596 = vmatmul.bf16.gmra.mxu0 %v4615
      %v9597 = vpop.f32.mrf.mxu0
      %v9598 = vadd.f32 %v9429, %v9597
      %v9599 = vpop.f32.mrf.mxu0
      %v9600 = vadd.f32 %v9431, %v9599
      %9601 = vmatmul.bf16.gmra.mxu0 %v4640
      %v9602 = vpop.f32.mrf.mxu0
      %v9603 = vadd.f32 %v9434, %v9602
      %v9604 = vpop.f32.mrf.mxu0
      %v9605 = vadd.f32 %v9436, %v9604
      %9606 = vmatmul.bf16.gmra.mxu0 %v4665
      %v9607 = vpop.f32.mrf.mxu0
      %v9608 = vadd.f32 %v9439, %v9607
      %v9609 = vpop.f32.mrf.mxu0
      %v9610 = vadd.f32 %v9441, %v9609
      %9611 = vmatmul.bf16.gmra.mxu0 %v4690
      %v9612 = vpop.f32.mrf.mxu0
      %v9613 = vadd.f32 %v9444, %v9612
      %v9614 = vpop.f32.mrf.mxu0
      %v9615 = vadd.f32 %v9446, %v9614
      %9616 = vmatmul.bf16.gmra.mxu0 %v4715
      %v9617 = vpop.f32.mrf.mxu0
      %v9618 = vadd.f32 %v9449, %v9617
      %v9619 = vpop.f32.mrf.mxu0
      %v9620 = vadd.f32 %v9451, %v9619
      %9621 = vmatmul.bf16.gmra.mxu0 %v4740
      %v9622 = vpop.f32.mrf.mxu0
      %v9623 = vadd.f32 %v9454, %v9622
      %v9624 = vpop.f32.mrf.mxu0
      %v9625 = vadd.f32 %v9456, %v9624
      %9626 = vmatmul.bf16.gmra.mxu0 %v4765
      %v9627 = vpop.f32.mrf.mxu0
      %v9628 = vadd.f32 %v9459, %v9627
      %v9629 = vpop.f32.mrf.mxu0
      %v9630 = vadd.f32 %v9461, %v9629
      %9631 = vmatmul.bf16.gmra.mxu0 %v4790
      %v9632 = vpop.f32.mrf.mxu0
      %v9633 = vadd.f32 %v9464, %v9632
      %v9634 = vpop.f32.mrf.mxu0
      %v9635 = vadd.f32 %v9466, %v9634
      %9636 = vmatmul.bf16.gmra.mxu0 %v4815
      %v9637 = vpop.f32.mrf.mxu0
      %v9638 = vadd.f32 %v9469, %v9637
      %v9639 = vpop.f32.mrf.mxu0
      %v9640 = vadd.f32 %v9471, %v9639
      %9641 = vmatmul.bf16.gmra.mxu0 %v4840
      %v9642 = vpop.f32.mrf.mxu0
      %v9643 = vadd.f32 %v9474, %v9642
      %v9644 = vpop.f32.mrf.mxu0
      %v9645 = vadd.f32 %v9476, %v9644
      %9646 = vmatmul.bf16.gmra.mxu0 %v4865
      %v9647 = vpop.f32.mrf.mxu0
      %v9648 = vadd.f32 %v9479, %v9647
      %v9649 = vpop.f32.mrf.mxu0
      %v9650 = vadd.f32 %v9481, %v9649
      %9651 = vmatmul.bf16.gmra.mxu0 %v4890
      %v9652 = vpop.f32.mrf.mxu0
      %v9653 = vadd.f32 %v9484, %v9652
      %v9654 = vpop.f32.mrf.mxu0
      %v9655 = vadd.f32 %v9486, %v9654
      %9656 = vmatmul.bf16.gmra.mxu0 %v4915
      %v9657 = vpop.f32.mrf.mxu0
      %v9658 = vadd.f32 %v9489, %v9657
      %v9659 = vpop.f32.mrf.mxu0
      %v9660 = vadd.f32 %v9491, %v9659
      %9661 = vmatmul.bf16.gmra.mxu0 %v4940
      %v9662 = vpop.f32.mrf.mxu0
      %v9663 = vadd.f32 %v9494, %v9662
      %v9664 = vpop.f32.mrf.mxu0
      %v9665 = vadd.f32 %v9496, %v9664
      %9666 = vmatmul.bf16.gmra.mxu0 %v4965
      %v9667 = vpop.f32.mrf.mxu0
      %v9668 = vadd.f32 %v9499, %v9667
      %v9669 = vpop.f32.mrf.mxu0
      %v9670 = vadd.f32 %v9501, %v9669
      %9671 = vmatmul.bf16.gmra.mxu0 %v4990
      %v9672 = vpop.f32.mrf.mxu0
      %v9673 = vadd.f32 %v9504, %v9672
      %v9674 = vpop.f32.mrf.mxu0
      %v9675 = vadd.f32 %v9506, %v9674
      %9676 = vmatmul.bf16.gmra.mxu0 %v5015
      %v9677 = vpop.f32.mrf.mxu0
      %v9678 = vadd.f32 %v9509, %v9677
      %v9679 = vpop.f32.mrf.mxu0
      %v9680 = vadd.f32 %v9511, %v9679
      %9681 = vmatmul.bf16.gmra.mxu0 %v5040
      %v9682 = vpop.f32.mrf.mxu0
      %v9683 = vadd.f32 %v9514, %v9682
      %v9684 = vpop.f32.mrf.mxu0
      %v9685 = vadd.f32 %v9516, %v9684
      %9686 = vmatmul.bf16.gmra.mxu0 %v5065
      %v9687 = vpop.f32.mrf.mxu0
      %v9688 = vadd.f32 %v9519, %v9687
      %v9689 = vpop.f32.mrf.mxu0
      %v9690 = vadd.f32 %v9521, %v9689
      %9691 = vmatmul.bf16.gmra.mxu0 %v5090
      %v9692 = vpop.f32.mrf.mxu0
      %v9693 = vadd.f32 %v9524, %v9692
      %v9694 = vpop.f32.mrf.mxu0
      %v9695 = vadd.f32 %v9526, %v9694
      %9696 = vmatmul.bf16.gmra.mxu0 %v5115
      %v9697 = vpop.f32.mrf.mxu0
      %v9698 = vadd.f32 %v9529, %v9697
      %v9699 = vpop.f32.mrf.mxu0
      %v9700 = vadd.f32 %v9531, %v9699
      %9701 = vdwg.mxu0
      %9702 = vmatpush.bf16.msra.mxu0 %v6805
      %9703 = vmatpush.bf16.msra.mxu0 %v6804
      %9704 = vmatpush.bf16.msra.mxu0 %v6803
      %9705 = vmatpush.bf16.msra.mxu0 %v6802
      %9706 = vmatpush.bf16.msra.mxu0 %v6801
      %9707 = vmatpush.bf16.msra.mxu0 %v6800
      %9708 = vmatpush.bf16.msra.mxu0 %v6799
      %9709 = vmatpush.bf16.msra.mxu0 %v6798
      %9710 = vmatmul.bf16.gmra.mxu0 %v4341
      %v9711 = vpop.f32.mrf.mxu0
      %v9712 = vadd.f32 %v9543, %v9711
      %v9713 = vpop.f32.mrf.mxu0
      %v9714 = vadd.f32 %v9545, %v9713
      %9715 = vmatmul.bf16.gmra.mxu0 %v4366
      %v9716 = vpop.f32.mrf.mxu0
      %v9717 = vadd.f32 %v9548, %v9716
      %v9718 = vpop.f32.mrf.mxu0
      %v9719 = vadd.f32 %v9550, %v9718
      %9720 = vmatmul.bf16.gmra.mxu0 %v4391
      %v9721 = vpop.f32.mrf.mxu0
      %v9722 = vadd.f32 %v9553, %v9721
      %v9723 = vpop.f32.mrf.mxu0
      %v9724 = vadd.f32 %v9555, %v9723
      %9725 = vmatmul.bf16.gmra.mxu0 %v4416
      %v9726 = vpop.f32.mrf.mxu0
      %v9727 = vadd.f32 %v9558, %v9726
      %v9728 = vpop.f32.mrf.mxu0
      %v9729 = vadd.f32 %v9560, %v9728
      %9730 = vmatmul.bf16.gmra.mxu0 %v4441
      %v9731 = vpop.f32.mrf.mxu0
      %v9732 = vadd.f32 %v9563, %v9731
      %v9733 = vpop.f32.mrf.mxu0
      %v9734 = vadd.f32 %v9565, %v9733
      %9735 = vmatmul.bf16.gmra.mxu0 %v4466
      %v9736 = vpop.f32.mrf.mxu0
      %v9737 = vadd.f32 %v9568, %v9736
      %v9738 = vpop.f32.mrf.mxu0
      %v9739 = vadd.f32 %v9570, %v9738
      %9740 = vmatmul.bf16.gmra.mxu0 %v4491
      %v9741 = vpop.f32.mrf.mxu0
      %v9742 = vadd.f32 %v9573, %v9741
      %v9743 = vpop.f32.mrf.mxu0
      %v9744 = vadd.f32 %v9575, %v9743
      %9745 = vmatmul.bf16.gmra.mxu0 %v4516
      %v9746 = vpop.f32.mrf.mxu0
      %v9747 = vadd.f32 %v9578, %v9746
      %v9748 = vpop.f32.mrf.mxu0
      %v9749 = vadd.f32 %v9580, %v9748
      %9750 = vmatmul.bf16.gmra.mxu0 %v4541
      %v9751 = vpop.f32.mrf.mxu0
      %v9752 = vadd.f32 %v9583, %v9751
      %v9753 = vpop.f32.mrf.mxu0
      %v9754 = vadd.f32 %v9585, %v9753
      %9755 = vmatmul.bf16.gmra.mxu0 %v4566
      %v9756 = vpop.f32.mrf.mxu0
      %v9757 = vadd.f32 %v9588, %v9756
      %v9758 = vpop.f32.mrf.mxu0
      %v9759 = vadd.f32 %v9590, %v9758
      %9760 = vmatmul.bf16.gmra.mxu0 %v4591
      %v9761 = vpop.f32.mrf.mxu0
      %v9762 = vadd.f32 %v9593, %v9761
      %v9763 = vpop.f32.mrf.mxu0
      %v9764 = vadd.f32 %v9595, %v9763
      %9765 = vmatmul.bf16.gmra.mxu0 %v4616
      %v9766 = vpop.f32.mrf.mxu0
      %v9767 = vadd.f32 %v9598, %v9766
      %v9768 = vpop.f32.mrf.mxu0
      %v9769 = vadd.f32 %v9600, %v9768
      %9770 = vmatmul.bf16.gmra.mxu0 %v4641
      %v9771 = vpop.f32.mrf.mxu0
      %v9772 = vadd.f32 %v9603, %v9771
      %v9773 = vpop.f32.mrf.mxu0
      %v9774 = vadd.f32 %v9605, %v9773
      %9775 = vmatmul.bf16.gmra.mxu0 %v4666
      %v9776 = vpop.f32.mrf.mxu0
      %v9777 = vadd.f32 %v9608, %v9776
      %v9778 = vpop.f32.mrf.mxu0
      %v9779 = vadd.f32 %v9610, %v9778
      %9780 = vmatmul.bf16.gmra.mxu0 %v4691
      %v9781 = vpop.f32.mrf.mxu0
      %v9782 = vadd.f32 %v9613, %v9781
      %v9783 = vpop.f32.mrf.mxu0
      %v9784 = vadd.f32 %v9615, %v9783
      %9785 = vmatmul.bf16.gmra.mxu0 %v4716
      %v9786 = vpop.f32.mrf.mxu0
      %v9787 = vadd.f32 %v9618, %v9786
      %v9788 = vpop.f32.mrf.mxu0
      %v9789 = vadd.f32 %v9620, %v9788
      %9790 = vmatmul.bf16.gmra.mxu0 %v4741
      %v9791 = vpop.f32.mrf.mxu0
      %v9792 = vadd.f32 %v9623, %v9791
      %v9793 = vpop.f32.mrf.mxu0
      %v9794 = vadd.f32 %v9625, %v9793
      %9795 = vmatmul.bf16.gmra.mxu0 %v4766
      %v9796 = vpop.f32.mrf.mxu0
      %v9797 = vadd.f32 %v9628, %v9796
      %v9798 = vpop.f32.mrf.mxu0
      %v9799 = vadd.f32 %v9630, %v9798
      %9800 = vmatmul.bf16.gmra.mxu0 %v4791
      %v9801 = vpop.f32.mrf.mxu0
      %v9802 = vadd.f32 %v9633, %v9801
      %v9803 = vpop.f32.mrf.mxu0
      %v9804 = vadd.f32 %v9635, %v9803
      %9805 = vmatmul.bf16.gmra.mxu0 %v4816
      %v9806 = vpop.f32.mrf.mxu0
      %v9807 = vadd.f32 %v9638, %v9806
      %v9808 = vpop.f32.mrf.mxu0
      %v9809 = vadd.f32 %v9640, %v9808
      %9810 = vmatmul.bf16.gmra.mxu0 %v4841
      %v9811 = vpop.f32.mrf.mxu0
      %v9812 = vadd.f32 %v9643, %v9811
      %v9813 = vpop.f32.mrf.mxu0
      %v9814 = vadd.f32 %v9645, %v9813
      %9815 = vmatmul.bf16.gmra.mxu0 %v4866
      %v9816 = vpop.f32.mrf.mxu0
      %v9817 = vadd.f32 %v9648, %v9816
      %v9818 = vpop.f32.mrf.mxu0
      %v9819 = vadd.f32 %v9650, %v9818
      %9820 = vmatmul.bf16.gmra.mxu0 %v4891
      %v9821 = vpop.f32.mrf.mxu0
      %v9822 = vadd.f32 %v9653, %v9821
      %v9823 = vpop.f32.mrf.mxu0
      %v9824 = vadd.f32 %v9655, %v9823
      %9825 = vmatmul.bf16.gmra.mxu0 %v4916
      %v9826 = vpop.f32.mrf.mxu0
      %v9827 = vadd.f32 %v9658, %v9826
      %v9828 = vpop.f32.mrf.mxu0
      %v9829 = vadd.f32 %v9660, %v9828
      %9830 = vmatmul.bf16.gmra.mxu0 %v4941
      %v9831 = vpop.f32.mrf.mxu0
      %v9832 = vadd.f32 %v9663, %v9831
      %v9833 = vpop.f32.mrf.mxu0
      %v9834 = vadd.f32 %v9665, %v9833
      %9835 = vmatmul.bf16.gmra.mxu0 %v4966
      %v9836 = vpop.f32.mrf.mxu0
      %v9837 = vadd.f32 %v9668, %v9836
      %v9838 = vpop.f32.mrf.mxu0
      %v9839 = vadd.f32 %v9670, %v9838
      %9840 = vmatmul.bf16.gmra.mxu0 %v4991
      %v9841 = vpop.f32.mrf.mxu0
      %v9842 = vadd.f32 %v9673, %v9841
      %v9843 = vpop.f32.mrf.mxu0
      %v9844 = vadd.f32 %v9675, %v9843
      %9845 = vmatmul.bf16.gmra.mxu0 %v5016
      %v9846 = vpop.f32.mrf.mxu0
      %v9847 = vadd.f32 %v9678, %v9846
      %v9848 = vpop.f32.mrf.mxu0
      %v9849 = vadd.f32 %v9680, %v9848
      %9850 = vmatmul.bf16.gmra.mxu0 %v5041
      %v9851 = vpop.f32.mrf.mxu0
      %v9852 = vadd.f32 %v9683, %v9851
      %v9853 = vpop.f32.mrf.mxu0
      %v9854 = vadd.f32 %v9685, %v9853
      %9855 = vmatmul.bf16.gmra.mxu0 %v5066
      %v9856 = vpop.f32.mrf.mxu0
      %v9857 = vadd.f32 %v9688, %v9856
      %v9858 = vpop.f32.mrf.mxu0
      %v9859 = vadd.f32 %v9690, %v9858
      %9860 = vmatmul.bf16.gmra.mxu0 %v5091
      %v9861 = vpop.f32.mrf.mxu0
      %v9862 = vadd.f32 %v9693, %v9861
      %v9863 = vpop.f32.mrf.mxu0
      %v9864 = vadd.f32 %v9695, %v9863
      %9865 = vmatmul.bf16.gmra.mxu0 %v5116
      %v9866 = vpop.f32.mrf.mxu0
      %v9867 = vadd.f32 %v9698, %v9866
      %v9868 = vpop.f32.mrf.mxu0
      %v9869 = vadd.f32 %v9700, %v9868
      %9870 = vdwg.mxu0
      %9871 = vmatpush.bf16.msra.mxu0 %v6813
      %9872 = vmatpush.bf16.msra.mxu0 %v6812
      %9873 = vmatpush.bf16.msra.mxu0 %v6811
      %9874 = vmatpush.bf16.msra.mxu0 %v6810
      %9875 = vmatpush.bf16.msra.mxu0 %v6809
      %9876 = vmatpush.bf16.msra.mxu0 %v6808
      %9877 = vmatpush.bf16.msra.mxu0 %v6807
      %9878 = vmatpush.bf16.msra.mxu0 %v6806
      %9879 = vmatmul.bf16.gmra.mxu0 %v4342
      %v9880 = vpop.f32.mrf.mxu0
      %v9881 = vadd.f32 %v9712, %v9880
      %v9882 = vpop.f32.mrf.mxu0
      %v9883 = vadd.f32 %v9714, %v9882
      %9884 = vmatmul.bf16.gmra.mxu0 %v4367
      %v9885 = vpop.f32.mrf.mxu0
      %v9886 = vadd.f32 %v9717, %v9885
      %v9887 = vpop.f32.mrf.mxu0
      %v9888 = vadd.f32 %v9719, %v9887
      %9889 = vmatmul.bf16.gmra.mxu0 %v4392
      %v9890 = vpop.f32.mrf.mxu0
      %v9891 = vadd.f32 %v9722, %v9890
      %v9892 = vpop.f32.mrf.mxu0
      %v9893 = vadd.f32 %v9724, %v9892
      %9894 = vmatmul.bf16.gmra.mxu0 %v4417
      %v9895 = vpop.f32.mrf.mxu0
      %v9896 = vadd.f32 %v9727, %v9895
      %v9897 = vpop.f32.mrf.mxu0
      %v9898 = vadd.f32 %v9729, %v9897
      %9899 = vmatmul.bf16.gmra.mxu0 %v4442
      %v9900 = vpop.f32.mrf.mxu0
      %v9901 = vadd.f32 %v9732, %v9900
      %v9902 = vpop.f32.mrf.mxu0
      %v9903 = vadd.f32 %v9734, %v9902
      %9904 = vmatmul.bf16.gmra.mxu0 %v4467
      %v9905 = vpop.f32.mrf.mxu0
      %v9906 = vadd.f32 %v9737, %v9905
      %v9907 = vpop.f32.mrf.mxu0
      %v9908 = vadd.f32 %v9739, %v9907
      %9909 = vmatmul.bf16.gmra.mxu0 %v4492
      %v9910 = vpop.f32.mrf.mxu0
      %v9911 = vadd.f32 %v9742, %v9910
      %v9912 = vpop.f32.mrf.mxu0
      %v9913 = vadd.f32 %v9744, %v9912
      %9914 = vmatmul.bf16.gmra.mxu0 %v4517
      %v9915 = vpop.f32.mrf.mxu0
      %v9916 = vadd.f32 %v9747, %v9915
      %v9917 = vpop.f32.mrf.mxu0
      %v9918 = vadd.f32 %v9749, %v9917
      %9919 = vmatmul.bf16.gmra.mxu0 %v4542
      %v9920 = vpop.f32.mrf.mxu0
      %v9921 = vadd.f32 %v9752, %v9920
      %v9922 = vpop.f32.mrf.mxu0
      %v9923 = vadd.f32 %v9754, %v9922
      %9924 = vmatmul.bf16.gmra.mxu0 %v4567
      %v9925 = vpop.f32.mrf.mxu0
      %v9926 = vadd.f32 %v9757, %v9925
      %v9927 = vpop.f32.mrf.mxu0
      %v9928 = vadd.f32 %v9759, %v9927
      %9929 = vmatmul.bf16.gmra.mxu0 %v4592
      %v9930 = vpop.f32.mrf.mxu0
      %v9931 = vadd.f32 %v9762, %v9930
      %v9932 = vpop.f32.mrf.mxu0
      %v9933 = vadd.f32 %v9764, %v9932
      %9934 = vmatmul.bf16.gmra.mxu0 %v4617
      %v9935 = vpop.f32.mrf.mxu0
      %v9936 = vadd.f32 %v9767, %v9935
      %v9937 = vpop.f32.mrf.mxu0
      %v9938 = vadd.f32 %v9769, %v9937
      %9939 = vmatmul.bf16.gmra.mxu0 %v4642
      %v9940 = vpop.f32.mrf.mxu0
      %v9941 = vadd.f32 %v9772, %v9940
      %v9942 = vpop.f32.mrf.mxu0
      %v9943 = vadd.f32 %v9774, %v9942
      %9944 = vmatmul.bf16.gmra.mxu0 %v4667
      %v9945 = vpop.f32.mrf.mxu0
      %v9946 = vadd.f32 %v9777, %v9945
      %v9947 = vpop.f32.mrf.mxu0
      %v9948 = vadd.f32 %v9779, %v9947
      %9949 = vmatmul.bf16.gmra.mxu0 %v4692
      %v9950 = vpop.f32.mrf.mxu0
      %v9951 = vadd.f32 %v9782, %v9950
      %v9952 = vpop.f32.mrf.mxu0
      %v9953 = vadd.f32 %v9784, %v9952
      %9954 = vmatmul.bf16.gmra.mxu0 %v4717
      %v9955 = vpop.f32.mrf.mxu0
      %v9956 = vadd.f32 %v9787, %v9955
      %v9957 = vpop.f32.mrf.mxu0
      %v9958 = vadd.f32 %v9789, %v9957
      %9959 = vmatmul.bf16.gmra.mxu0 %v4742
      %v9960 = vpop.f32.mrf.mxu0
      %v9961 = vadd.f32 %v9792, %v9960
      %v9962 = vpop.f32.mrf.mxu0
      %v9963 = vadd.f32 %v9794, %v9962
      %9964 = vmatmul.bf16.gmra.mxu0 %v4767
      %v9965 = vpop.f32.mrf.mxu0
      %v9966 = vadd.f32 %v9797, %v9965
      %v9967 = vpop.f32.mrf.mxu0
      %v9968 = vadd.f32 %v9799, %v9967
      %9969 = vmatmul.bf16.gmra.mxu0 %v4792
      %v9970 = vpop.f32.mrf.mxu0
      %v9971 = vadd.f32 %v9802, %v9970
      %v9972 = vpop.f32.mrf.mxu0
      %v9973 = vadd.f32 %v9804, %v9972
      %9974 = vmatmul.bf16.gmra.mxu0 %v4817
      %v9975 = vpop.f32.mrf.mxu0
      %v9976 = vadd.f32 %v9807, %v9975
      %v9977 = vpop.f32.mrf.mxu0
      %v9978 = vadd.f32 %v9809, %v9977
      %9979 = vmatmul.bf16.gmra.mxu0 %v4842
      %v9980 = vpop.f32.mrf.mxu0
      %v9981 = vadd.f32 %v9812, %v9980
      %v9982 = vpop.f32.mrf.mxu0
      %v9983 = vadd.f32 %v9814, %v9982
      %9984 = vmatmul.bf16.gmra.mxu0 %v4867
      %v9985 = vpop.f32.mrf.mxu0
      %v9986 = vadd.f32 %v9817, %v9985
      %v9987 = vpop.f32.mrf.mxu0
      %v9988 = vadd.f32 %v9819, %v9987
      %9989 = vmatmul.bf16.gmra.mxu0 %v4892
      %v9990 = vpop.f32.mrf.mxu0
      %v9991 = vadd.f32 %v9822, %v9990
      %v9992 = vpop.f32.mrf.mxu0
      %v9993 = vadd.f32 %v9824, %v9992
      %9994 = vmatmul.bf16.gmra.mxu0 %v4917
      %v9995 = vpop.f32.mrf.mxu0
      %v9996 = vadd.f32 %v9827, %v9995
      %v9997 = vpop.f32.mrf.mxu0
      %v9998 = vadd.f32 %v9829, %v9997
      %9999 = vmatmul.bf16.gmra.mxu0 %v4942
      %v10000 = vpop.f32.mrf.mxu0
      %v10001 = vadd.f32 %v9832, %v10000
      %v10002 = vpop.f32.mrf.mxu0
      %v10003 = vadd.f32 %v9834, %v10002
      %10004 = vmatmul.bf16.gmra.mxu0 %v4967
      %v10005 = vpop.f32.mrf.mxu0
      %v10006 = vadd.f32 %v9837, %v10005
      %v10007 = vpop.f32.mrf.mxu0
      %v10008 = vadd.f32 %v9839, %v10007
      %10009 = vmatmul.bf16.gmra.mxu0 %v4992
      %v10010 = vpop.f32.mrf.mxu0
      %v10011 = vadd.f32 %v9842, %v10010
      %v10012 = vpop.f32.mrf.mxu0
      %v10013 = vadd.f32 %v9844, %v10012
      %10014 = vmatmul.bf16.gmra.mxu0 %v5017
      %v10015 = vpop.f32.mrf.mxu0
      %v10016 = vadd.f32 %v9847, %v10015
      %v10017 = vpop.f32.mrf.mxu0
      %v10018 = vadd.f32 %v9849, %v10017
      %10019 = vmatmul.bf16.gmra.mxu0 %v5042
      %v10020 = vpop.f32.mrf.mxu0
      %v10021 = vadd.f32 %v9852, %v10020
      %v10022 = vpop.f32.mrf.mxu0
      %v10023 = vadd.f32 %v9854, %v10022
      %10024 = vmatmul.bf16.gmra.mxu0 %v5067
      %v10025 = vpop.f32.mrf.mxu0
      %v10026 = vadd.f32 %v9857, %v10025
      %v10027 = vpop.f32.mrf.mxu0
      %v10028 = vadd.f32 %v9859, %v10027
      %10029 = vmatmul.bf16.gmra.mxu0 %v5092
      %v10030 = vpop.f32.mrf.mxu0
      %v10031 = vadd.f32 %v9862, %v10030
      %v10032 = vpop.f32.mrf.mxu0
      %v10033 = vadd.f32 %v9864, %v10032
      %10034 = vmatmul.bf16.gmra.mxu0 %v5117
      %v10035 = vpop.f32.mrf.mxu0
      %v10036 = vadd.f32 %v9867, %v10035
      %v10037 = vpop.f32.mrf.mxu0
      %v10038 = vadd.f32 %v9869, %v10037
      %10039 = vdwg.mxu0
      %10040 = vmatpush.bf16.msra.mxu0 %v6821
      %10041 = vmatpush.bf16.msra.mxu0 %v6820
      %10042 = vmatpush.bf16.msra.mxu0 %v6819
      %10043 = vmatpush.bf16.msra.mxu0 %v6818
      %10044 = vmatpush.bf16.msra.mxu0 %v6817
      %10045 = vmatpush.bf16.msra.mxu0 %v6816
      %10046 = vmatpush.bf16.msra.mxu0 %v6815
      %10047 = vmatpush.bf16.msra.mxu0 %v6814
      %10048 = vmatmul.bf16.gmra.mxu0 %v4343
      %v10049 = vpop.f32.mrf.mxu0
      %v10050 = vadd.f32 %v9881, %v10049
      %v10051 = vpop.f32.mrf.mxu0
      %v10052 = vadd.f32 %v9883, %v10051
      %10053 = vmatmul.bf16.gmra.mxu0 %v4368
      %v10054 = vpop.f32.mrf.mxu0
      %v10055 = vadd.f32 %v9886, %v10054
      %v10056 = vpop.f32.mrf.mxu0
      %v10057 = vadd.f32 %v9888, %v10056
      %10058 = vmatmul.bf16.gmra.mxu0 %v4393
      %v10059 = vpop.f32.mrf.mxu0
      %v10060 = vadd.f32 %v9891, %v10059
      %v10061 = vpop.f32.mrf.mxu0
      %v10062 = vadd.f32 %v9893, %v10061
      %10063 = vmatmul.bf16.gmra.mxu0 %v4418
      %v10064 = vpop.f32.mrf.mxu0
      %v10065 = vadd.f32 %v9896, %v10064
      %v10066 = vpop.f32.mrf.mxu0
      %v10067 = vadd.f32 %v9898, %v10066
      %10068 = vmatmul.bf16.gmra.mxu0 %v4443
      %v10069 = vpop.f32.mrf.mxu0
      %v10070 = vadd.f32 %v9901, %v10069
      %v10071 = vpop.f32.mrf.mxu0
      %v10072 = vadd.f32 %v9903, %v10071
      %10073 = vmatmul.bf16.gmra.mxu0 %v4468
      %v10074 = vpop.f32.mrf.mxu0
      %v10075 = vadd.f32 %v9906, %v10074
      %v10076 = vpop.f32.mrf.mxu0
      %v10077 = vadd.f32 %v9908, %v10076
      %10078 = vmatmul.bf16.gmra.mxu0 %v4493
      %v10079 = vpop.f32.mrf.mxu0
      %v10080 = vadd.f32 %v9911, %v10079
      %v10081 = vpop.f32.mrf.mxu0
      %v10082 = vadd.f32 %v9913, %v10081
      %10083 = vmatmul.bf16.gmra.mxu0 %v4518
      %v10084 = vpop.f32.mrf.mxu0
      %v10085 = vadd.f32 %v9916, %v10084
      %v10086 = vpop.f32.mrf.mxu0
      %v10087 = vadd.f32 %v9918, %v10086
      %10088 = vmatmul.bf16.gmra.mxu0 %v4543
      %v10089 = vpop.f32.mrf.mxu0
      %v10090 = vadd.f32 %v9921, %v10089
      %v10091 = vpop.f32.mrf.mxu0
      %v10092 = vadd.f32 %v9923, %v10091
      %10093 = vmatmul.bf16.gmra.mxu0 %v4568
      %v10094 = vpop.f32.mrf.mxu0
      %v10095 = vadd.f32 %v9926, %v10094
      %v10096 = vpop.f32.mrf.mxu0
      %v10097 = vadd.f32 %v9928, %v10096
      %10098 = vmatmul.bf16.gmra.mxu0 %v4593
      %v10099 = vpop.f32.mrf.mxu0
      %v10100 = vadd.f32 %v9931, %v10099
      %v10101 = vpop.f32.mrf.mxu0
      %v10102 = vadd.f32 %v9933, %v10101
      %10103 = vmatmul.bf16.gmra.mxu0 %v4618
      %v10104 = vpop.f32.mrf.mxu0
      %v10105 = vadd.f32 %v9936, %v10104
      %v10106 = vpop.f32.mrf.mxu0
      %v10107 = vadd.f32 %v9938, %v10106
      %10108 = vmatmul.bf16.gmra.mxu0 %v4643
      %v10109 = vpop.f32.mrf.mxu0
      %v10110 = vadd.f32 %v9941, %v10109
      %v10111 = vpop.f32.mrf.mxu0
      %v10112 = vadd.f32 %v9943, %v10111
      %10113 = vmatmul.bf16.gmra.mxu0 %v4668
      %v10114 = vpop.f32.mrf.mxu0
      %v10115 = vadd.f32 %v9946, %v10114
      %v10116 = vpop.f32.mrf.mxu0
      %v10117 = vadd.f32 %v9948, %v10116
      %10118 = vmatmul.bf16.gmra.mxu0 %v4693
      %v10119 = vpop.f32.mrf.mxu0
      %v10120 = vadd.f32 %v9951, %v10119
      %v10121 = vpop.f32.mrf.mxu0
      %v10122 = vadd.f32 %v9953, %v10121
      %10123 = vmatmul.bf16.gmra.mxu0 %v4718
      %v10124 = vpop.f32.mrf.mxu0
      %v10125 = vadd.f32 %v9956, %v10124
      %v10126 = vpop.f32.mrf.mxu0
      %v10127 = vadd.f32 %v9958, %v10126
      %10128 = vmatmul.bf16.gmra.mxu0 %v4743
      %v10129 = vpop.f32.mrf.mxu0
      %v10130 = vadd.f32 %v9961, %v10129
      %v10131 = vpop.f32.mrf.mxu0
      %v10132 = vadd.f32 %v9963, %v10131
      %10133 = vmatmul.bf16.gmra.mxu0 %v4768
      %v10134 = vpop.f32.mrf.mxu0
      %v10135 = vadd.f32 %v9966, %v10134
      %v10136 = vpop.f32.mrf.mxu0
      %v10137 = vadd.f32 %v9968, %v10136
      %10138 = vmatmul.bf16.gmra.mxu0 %v4793
      %v10139 = vpop.f32.mrf.mxu0
      %v10140 = vadd.f32 %v9971, %v10139
      %v10141 = vpop.f32.mrf.mxu0
      %v10142 = vadd.f32 %v9973, %v10141
      %10143 = vmatmul.bf16.gmra.mxu0 %v4818
      %v10144 = vpop.f32.mrf.mxu0
      %v10145 = vadd.f32 %v9976, %v10144
      %v10146 = vpop.f32.mrf.mxu0
      %v10147 = vadd.f32 %v9978, %v10146
      %10148 = vmatmul.bf16.gmra.mxu0 %v4843
      %v10149 = vpop.f32.mrf.mxu0
      %v10150 = vadd.f32 %v9981, %v10149
      %v10151 = vpop.f32.mrf.mxu0
      %v10152 = vadd.f32 %v9983, %v10151
      %10153 = vmatmul.bf16.gmra.mxu0 %v4868
      %v10154 = vpop.f32.mrf.mxu0
      %v10155 = vadd.f32 %v9986, %v10154
      %v10156 = vpop.f32.mrf.mxu0
      %v10157 = vadd.f32 %v9988, %v10156
      %10158 = vmatmul.bf16.gmra.mxu0 %v4893
      %v10159 = vpop.f32.mrf.mxu0
      %v10160 = vadd.f32 %v9991, %v10159
      %v10161 = vpop.f32.mrf.mxu0
      %v10162 = vadd.f32 %v9993, %v10161
      %10163 = vmatmul.bf16.gmra.mxu0 %v4918
      %v10164 = vpop.f32.mrf.mxu0
      %v10165 = vadd.f32 %v9996, %v10164
      %v10166 = vpop.f32.mrf.mxu0
      %v10167 = vadd.f32 %v9998, %v10166
      %10168 = vmatmul.bf16.gmra.mxu0 %v4943
      %v10169 = vpop.f32.mrf.mxu0
      %v10170 = vadd.f32 %v10001, %v10169
      %v10171 = vpop.f32.mrf.mxu0
      %v10172 = vadd.f32 %v10003, %v10171
      %10173 = vmatmul.bf16.gmra.mxu0 %v4968
      %v10174 = vpop.f32.mrf.mxu0
      %v10175 = vadd.f32 %v10006, %v10174
      %v10176 = vpop.f32.mrf.mxu0
      %v10177 = vadd.f32 %v10008, %v10176
      %10178 = vmatmul.bf16.gmra.mxu0 %v4993
      %v10179 = vpop.f32.mrf.mxu0
      %v10180 = vadd.f32 %v10011, %v10179
      %v10181 = vpop.f32.mrf.mxu0
      %v10182 = vadd.f32 %v10013, %v10181
      %10183 = vmatmul.bf16.gmra.mxu0 %v5018
      %v10184 = vpop.f32.mrf.mxu0
      %v10185 = vadd.f32 %v10016, %v10184
      %v10186 = vpop.f32.mrf.mxu0
      %v10187 = vadd.f32 %v10018, %v10186
      %10188 = vmatmul.bf16.gmra.mxu0 %v5043
      %v10189 = vpop.f32.mrf.mxu0
      %v10190 = vadd.f32 %v10021, %v10189
      %v10191 = vpop.f32.mrf.mxu0
      %v10192 = vadd.f32 %v10023, %v10191
      %10193 = vmatmul.bf16.gmra.mxu0 %v5068
      %v10194 = vpop.f32.mrf.mxu0
      %v10195 = vadd.f32 %v10026, %v10194
      %v10196 = vpop.f32.mrf.mxu0
      %v10197 = vadd.f32 %v10028, %v10196
      %10198 = vmatmul.bf16.gmra.mxu0 %v5093
      %v10199 = vpop.f32.mrf.mxu0
      %v10200 = vadd.f32 %v10031, %v10199
      %v10201 = vpop.f32.mrf.mxu0
      %v10202 = vadd.f32 %v10033, %v10201
      %10203 = vmatmul.bf16.gmra.mxu0 %v5118
      %v10204 = vpop.f32.mrf.mxu0
      %v10205 = vadd.f32 %v10036, %v10204
      %v10206 = vpop.f32.mrf.mxu0
      %v10207 = vadd.f32 %v10038, %v10206
      %10208 = vdwg.mxu0
      %10209 = vmatpush.bf16.msra.mxu0 %v6829
      %10210 = vmatpush.bf16.msra.mxu0 %v6828
      %10211 = vmatpush.bf16.msra.mxu0 %v6827
      %10212 = vmatpush.bf16.msra.mxu0 %v6826
      %10213 = vmatpush.bf16.msra.mxu0 %v6825
      %10214 = vmatpush.bf16.msra.mxu0 %v6824
      %10215 = vmatpush.bf16.msra.mxu0 %v6823
      %10216 = vmatpush.bf16.msra.mxu0 %v6822
      %10217 = vmatmul.bf16.gmra.mxu0 %v4344
      %v10218 = vpop.f32.mrf.mxu0
      %v10219 = vadd.f32 %v10050, %v10218
      %v10220 = vpop.f32.mrf.mxu0
      %v10221 = vadd.f32 %v10052, %v10220
      %10222 = vmatmul.bf16.gmra.mxu0 %v4369
      %v10223 = vpop.f32.mrf.mxu0
      %v10224 = vadd.f32 %v10055, %v10223
      %v10225 = vpop.f32.mrf.mxu0
      %v10226 = vadd.f32 %v10057, %v10225
      %10227 = vmatmul.bf16.gmra.mxu0 %v4394
      %v10228 = vpop.f32.mrf.mxu0
      %v10229 = vadd.f32 %v10060, %v10228
      %v10230 = vpop.f32.mrf.mxu0
      %v10231 = vadd.f32 %v10062, %v10230
      %10232 = vmatmul.bf16.gmra.mxu0 %v4419
      %v10233 = vpop.f32.mrf.mxu0
      %v10234 = vadd.f32 %v10065, %v10233
      %v10235 = vpop.f32.mrf.mxu0
      %v10236 = vadd.f32 %v10067, %v10235
      %10237 = vmatmul.bf16.gmra.mxu0 %v4444
      %v10238 = vpop.f32.mrf.mxu0
      %v10239 = vadd.f32 %v10070, %v10238
      %v10240 = vpop.f32.mrf.mxu0
      %v10241 = vadd.f32 %v10072, %v10240
      %10242 = vmatmul.bf16.gmra.mxu0 %v4469
      %v10243 = vpop.f32.mrf.mxu0
      %v10244 = vadd.f32 %v10075, %v10243
      %v10245 = vpop.f32.mrf.mxu0
      %v10246 = vadd.f32 %v10077, %v10245
      %10247 = vmatmul.bf16.gmra.mxu0 %v4494
      %v10248 = vpop.f32.mrf.mxu0
      %v10249 = vadd.f32 %v10080, %v10248
      %v10250 = vpop.f32.mrf.mxu0
      %v10251 = vadd.f32 %v10082, %v10250
      %10252 = vmatmul.bf16.gmra.mxu0 %v4519
      %v10253 = vpop.f32.mrf.mxu0
      %v10254 = vadd.f32 %v10085, %v10253
      %v10255 = vpop.f32.mrf.mxu0
      %v10256 = vadd.f32 %v10087, %v10255
      %10257 = vmatmul.bf16.gmra.mxu0 %v4544
      %v10258 = vpop.f32.mrf.mxu0
      %v10259 = vadd.f32 %v10090, %v10258
      %v10260 = vpop.f32.mrf.mxu0
      %v10261 = vadd.f32 %v10092, %v10260
      %10262 = vmatmul.bf16.gmra.mxu0 %v4569
      %v10263 = vpop.f32.mrf.mxu0
      %v10264 = vadd.f32 %v10095, %v10263
      %v10265 = vpop.f32.mrf.mxu0
      %v10266 = vadd.f32 %v10097, %v10265
      %10267 = vmatmul.bf16.gmra.mxu0 %v4594
      %v10268 = vpop.f32.mrf.mxu0
      %v10269 = vadd.f32 %v10100, %v10268
      %v10270 = vpop.f32.mrf.mxu0
      %v10271 = vadd.f32 %v10102, %v10270
      %10272 = vmatmul.bf16.gmra.mxu0 %v4619
      %v10273 = vpop.f32.mrf.mxu0
      %v10274 = vadd.f32 %v10105, %v10273
      %v10275 = vpop.f32.mrf.mxu0
      %v10276 = vadd.f32 %v10107, %v10275
      %10277 = vmatmul.bf16.gmra.mxu0 %v4644
      %v10278 = vpop.f32.mrf.mxu0
      %v10279 = vadd.f32 %v10110, %v10278
      %v10280 = vpop.f32.mrf.mxu0
      %v10281 = vadd.f32 %v10112, %v10280
      %10282 = vmatmul.bf16.gmra.mxu0 %v4669
      %v10283 = vpop.f32.mrf.mxu0
      %v10284 = vadd.f32 %v10115, %v10283
      %v10285 = vpop.f32.mrf.mxu0
      %v10286 = vadd.f32 %v10117, %v10285
      %10287 = vmatmul.bf16.gmra.mxu0 %v4694
      %v10288 = vpop.f32.mrf.mxu0
      %v10289 = vadd.f32 %v10120, %v10288
      %v10290 = vpop.f32.mrf.mxu0
      %v10291 = vadd.f32 %v10122, %v10290
      %10292 = vmatmul.bf16.gmra.mxu0 %v4719
      %v10293 = vpop.f32.mrf.mxu0
      %v10294 = vadd.f32 %v10125, %v10293
      %v10295 = vpop.f32.mrf.mxu0
      %v10296 = vadd.f32 %v10127, %v10295
      %10297 = vmatmul.bf16.gmra.mxu0 %v4744
      %v10298 = vpop.f32.mrf.mxu0
      %v10299 = vadd.f32 %v10130, %v10298
      %v10300 = vpop.f32.mrf.mxu0
      %v10301 = vadd.f32 %v10132, %v10300
      %10302 = vmatmul.bf16.gmra.mxu0 %v4769
      %v10303 = vpop.f32.mrf.mxu0
      %v10304 = vadd.f32 %v10135, %v10303
      %v10305 = vpop.f32.mrf.mxu0
      %v10306 = vadd.f32 %v10137, %v10305
      %10307 = vmatmul.bf16.gmra.mxu0 %v4794
      %v10308 = vpop.f32.mrf.mxu0
      %v10309 = vadd.f32 %v10140, %v10308
      %v10310 = vpop.f32.mrf.mxu0
      %v10311 = vadd.f32 %v10142, %v10310
      %10312 = vmatmul.bf16.gmra.mxu0 %v4819
      %v10313 = vpop.f32.mrf.mxu0
      %v10314 = vadd.f32 %v10145, %v10313
      %v10315 = vpop.f32.mrf.mxu0
      %v10316 = vadd.f32 %v10147, %v10315
      %10317 = vmatmul.bf16.gmra.mxu0 %v4844
      %v10318 = vpop.f32.mrf.mxu0
      %v10319 = vadd.f32 %v10150, %v10318
      %v10320 = vpop.f32.mrf.mxu0
      %v10321 = vadd.f32 %v10152, %v10320
      %10322 = vmatmul.bf16.gmra.mxu0 %v4869
      %v10323 = vpop.f32.mrf.mxu0
      %v10324 = vadd.f32 %v10155, %v10323
      %v10325 = vpop.f32.mrf.mxu0
      %v10326 = vadd.f32 %v10157, %v10325
      %10327 = vmatmul.bf16.gmra.mxu0 %v4894
      %v10328 = vpop.f32.mrf.mxu0
      %v10329 = vadd.f32 %v10160, %v10328
      %v10330 = vpop.f32.mrf.mxu0
      %v10331 = vadd.f32 %v10162, %v10330
      %10332 = vmatmul.bf16.gmra.mxu0 %v4919
      %v10333 = vpop.f32.mrf.mxu0
      %v10334 = vadd.f32 %v10165, %v10333
      %v10335 = vpop.f32.mrf.mxu0
      %v10336 = vadd.f32 %v10167, %v10335
      %10337 = vmatmul.bf16.gmra.mxu0 %v4944
      %v10338 = vpop.f32.mrf.mxu0
      %v10339 = vadd.f32 %v10170, %v10338
      %v10340 = vpop.f32.mrf.mxu0
      %v10341 = vadd.f32 %v10172, %v10340
      %10342 = vmatmul.bf16.gmra.mxu0 %v4969
      %v10343 = vpop.f32.mrf.mxu0
      %v10344 = vadd.f32 %v10175, %v10343
      %v10345 = vpop.f32.mrf.mxu0
      %v10346 = vadd.f32 %v10177, %v10345
      %10347 = vmatmul.bf16.gmra.mxu0 %v4994
      %v10348 = vpop.f32.mrf.mxu0
      %v10349 = vadd.f32 %v10180, %v10348
      %v10350 = vpop.f32.mrf.mxu0
      %v10351 = vadd.f32 %v10182, %v10350
      %10352 = vmatmul.bf16.gmra.mxu0 %v5019
      %v10353 = vpop.f32.mrf.mxu0
      %v10354 = vadd.f32 %v10185, %v10353
      %v10355 = vpop.f32.mrf.mxu0
      %v10356 = vadd.f32 %v10187, %v10355
      %10357 = vmatmul.bf16.gmra.mxu0 %v5044
      %v10358 = vpop.f32.mrf.mxu0
      %v10359 = vadd.f32 %v10190, %v10358
      %v10360 = vpop.f32.mrf.mxu0
      %v10361 = vadd.f32 %v10192, %v10360
      %10362 = vmatmul.bf16.gmra.mxu0 %v5069
      %v10363 = vpop.f32.mrf.mxu0
      %v10364 = vadd.f32 %v10195, %v10363
      %v10365 = vpop.f32.mrf.mxu0
      %v10366 = vadd.f32 %v10197, %v10365
      %10367 = vmatmul.bf16.gmra.mxu0 %v5094
      %v10368 = vpop.f32.mrf.mxu0
      %v10369 = vadd.f32 %v10200, %v10368
      %v10370 = vpop.f32.mrf.mxu0
      %v10371 = vadd.f32 %v10202, %v10370
      %10372 = vmatmul.bf16.gmra.mxu0 %v5119
      %v10373 = vpop.f32.mrf.mxu0
      %v10374 = vadd.f32 %v10205, %v10373
      %v10375 = vpop.f32.mrf.mxu0
      %v10376 = vadd.f32 %v10207, %v10375
      %10377 = vdwg.mxu0
      %10378 = vmatpush.bf16.msra.mxu0 %v6837
      %10379 = vmatpush.bf16.msra.mxu0 %v6836
      %10380 = vmatpush.bf16.msra.mxu0 %v6835
      %10381 = vmatpush.bf16.msra.mxu0 %v6834
      %10382 = vmatpush.bf16.msra.mxu0 %v6833
      %10383 = vmatpush.bf16.msra.mxu0 %v6832
      %10384 = vmatpush.bf16.msra.mxu0 %v6831
      %10385 = vmatpush.bf16.msra.mxu0 %v6830
      %10386 = vmatmul.bf16.gmra.mxu0 %v4345
      %v10387 = vpop.f32.mrf.mxu0
      %v10388 = vadd.f32 %v10219, %v10387
      %v10389 = vpop.f32.mrf.mxu0
      %v10390 = vadd.f32 %v10221, %v10389
      %10391 = vmatmul.bf16.gmra.mxu0 %v4370
      %v10392 = vpop.f32.mrf.mxu0
      %v10393 = vadd.f32 %v10224, %v10392
      %v10394 = vpop.f32.mrf.mxu0
      %v10395 = vadd.f32 %v10226, %v10394
      %10396 = vmatmul.bf16.gmra.mxu0 %v4395
      %v10397 = vpop.f32.mrf.mxu0
      %v10398 = vadd.f32 %v10229, %v10397
      %v10399 = vpop.f32.mrf.mxu0
      %v10400 = vadd.f32 %v10231, %v10399
      %10401 = vmatmul.bf16.gmra.mxu0 %v4420
      %v10402 = vpop.f32.mrf.mxu0
      %v10403 = vadd.f32 %v10234, %v10402
      %v10404 = vpop.f32.mrf.mxu0
      %v10405 = vadd.f32 %v10236, %v10404
      %10406 = vmatmul.bf16.gmra.mxu0 %v4445
      %v10407 = vpop.f32.mrf.mxu0
      %v10408 = vadd.f32 %v10239, %v10407
      %v10409 = vpop.f32.mrf.mxu0
      %v10410 = vadd.f32 %v10241, %v10409
      %10411 = vmatmul.bf16.gmra.mxu0 %v4470
      %v10412 = vpop.f32.mrf.mxu0
      %v10413 = vadd.f32 %v10244, %v10412
      %v10414 = vpop.f32.mrf.mxu0
      %v10415 = vadd.f32 %v10246, %v10414
      %10416 = vmatmul.bf16.gmra.mxu0 %v4495
      %v10417 = vpop.f32.mrf.mxu0
      %v10418 = vadd.f32 %v10249, %v10417
      %v10419 = vpop.f32.mrf.mxu0
      %v10420 = vadd.f32 %v10251, %v10419
      %10421 = vmatmul.bf16.gmra.mxu0 %v4520
      %v10422 = vpop.f32.mrf.mxu0
      %v10423 = vadd.f32 %v10254, %v10422
      %v10424 = vpop.f32.mrf.mxu0
      %v10425 = vadd.f32 %v10256, %v10424
      %10426 = vmatmul.bf16.gmra.mxu0 %v4545
      %v10427 = vpop.f32.mrf.mxu0
      %v10428 = vadd.f32 %v10259, %v10427
      %v10429 = vpop.f32.mrf.mxu0
      %v10430 = vadd.f32 %v10261, %v10429
      %10431 = vmatmul.bf16.gmra.mxu0 %v4570
      %v10432 = vpop.f32.mrf.mxu0
      %v10433 = vadd.f32 %v10264, %v10432
      %v10434 = vpop.f32.mrf.mxu0
      %v10435 = vadd.f32 %v10266, %v10434
      %10436 = vmatmul.bf16.gmra.mxu0 %v4595
      %v10437 = vpop.f32.mrf.mxu0
      %v10438 = vadd.f32 %v10269, %v10437
      %v10439 = vpop.f32.mrf.mxu0
      %v10440 = vadd.f32 %v10271, %v10439
      %10441 = vmatmul.bf16.gmra.mxu0 %v4620
      %v10442 = vpop.f32.mrf.mxu0
      %v10443 = vadd.f32 %v10274, %v10442
      %v10444 = vpop.f32.mrf.mxu0
      %v10445 = vadd.f32 %v10276, %v10444
      %10446 = vmatmul.bf16.gmra.mxu0 %v4645
      %v10447 = vpop.f32.mrf.mxu0
      %v10448 = vadd.f32 %v10279, %v10447
      %v10449 = vpop.f32.mrf.mxu0
      %v10450 = vadd.f32 %v10281, %v10449
      %10451 = vmatmul.bf16.gmra.mxu0 %v4670
      %v10452 = vpop.f32.mrf.mxu0
      %v10453 = vadd.f32 %v10284, %v10452
      %v10454 = vpop.f32.mrf.mxu0
      %v10455 = vadd.f32 %v10286, %v10454
      %10456 = vmatmul.bf16.gmra.mxu0 %v4695
      %v10457 = vpop.f32.mrf.mxu0
      %v10458 = vadd.f32 %v10289, %v10457
      %v10459 = vpop.f32.mrf.mxu0
      %v10460 = vadd.f32 %v10291, %v10459
      %10461 = vmatmul.bf16.gmra.mxu0 %v4720
      %v10462 = vpop.f32.mrf.mxu0
      %v10463 = vadd.f32 %v10294, %v10462
      %v10464 = vpop.f32.mrf.mxu0
      %v10465 = vadd.f32 %v10296, %v10464
      %10466 = vmatmul.bf16.gmra.mxu0 %v4745
      %v10467 = vpop.f32.mrf.mxu0
      %v10468 = vadd.f32 %v10299, %v10467
      %v10469 = vpop.f32.mrf.mxu0
      %v10470 = vadd.f32 %v10301, %v10469
      %10471 = vmatmul.bf16.gmra.mxu0 %v4770
      %v10472 = vpop.f32.mrf.mxu0
      %v10473 = vadd.f32 %v10304, %v10472
      %v10474 = vpop.f32.mrf.mxu0
      %v10475 = vadd.f32 %v10306, %v10474
      %10476 = vmatmul.bf16.gmra.mxu0 %v4795
      %v10477 = vpop.f32.mrf.mxu0
      %v10478 = vadd.f32 %v10309, %v10477
      %v10479 = vpop.f32.mrf.mxu0
      %v10480 = vadd.f32 %v10311, %v10479
      %10481 = vmatmul.bf16.gmra.mxu0 %v4820
      %v10482 = vpop.f32.mrf.mxu0
      %v10483 = vadd.f32 %v10314, %v10482
      %v10484 = vpop.f32.mrf.mxu0
      %v10485 = vadd.f32 %v10316, %v10484
      %10486 = vmatmul.bf16.gmra.mxu0 %v4845
      %v10487 = vpop.f32.mrf.mxu0
      %v10488 = vadd.f32 %v10319, %v10487
      %v10489 = vpop.f32.mrf.mxu0
      %v10490 = vadd.f32 %v10321, %v10489
      %10491 = vmatmul.bf16.gmra.mxu0 %v4870
      %v10492 = vpop.f32.mrf.mxu0
      %v10493 = vadd.f32 %v10324, %v10492
      %v10494 = vpop.f32.mrf.mxu0
      %v10495 = vadd.f32 %v10326, %v10494
      %10496 = vmatmul.bf16.gmra.mxu0 %v4895
      %v10497 = vpop.f32.mrf.mxu0
      %v10498 = vadd.f32 %v10329, %v10497
      %v10499 = vpop.f32.mrf.mxu0
      %v10500 = vadd.f32 %v10331, %v10499
      %10501 = vmatmul.bf16.gmra.mxu0 %v4920
      %v10502 = vpop.f32.mrf.mxu0
      %v10503 = vadd.f32 %v10334, %v10502
      %v10504 = vpop.f32.mrf.mxu0
      %v10505 = vadd.f32 %v10336, %v10504
      %10506 = vmatmul.bf16.gmra.mxu0 %v4945
      %v10507 = vpop.f32.mrf.mxu0
      %v10508 = vadd.f32 %v10339, %v10507
      %v10509 = vpop.f32.mrf.mxu0
      %v10510 = vadd.f32 %v10341, %v10509
      %10511 = vmatmul.bf16.gmra.mxu0 %v4970
      %v10512 = vpop.f32.mrf.mxu0
      %v10513 = vadd.f32 %v10344, %v10512
      %v10514 = vpop.f32.mrf.mxu0
      %v10515 = vadd.f32 %v10346, %v10514
      %10516 = vmatmul.bf16.gmra.mxu0 %v4995
      %v10517 = vpop.f32.mrf.mxu0
      %v10518 = vadd.f32 %v10349, %v10517
      %v10519 = vpop.f32.mrf.mxu0
      %v10520 = vadd.f32 %v10351, %v10519
      %10521 = vmatmul.bf16.gmra.mxu0 %v5020
      %v10522 = vpop.f32.mrf.mxu0
      %v10523 = vadd.f32 %v10354, %v10522
      %v10524 = vpop.f32.mrf.mxu0
      %v10525 = vadd.f32 %v10356, %v10524
      %10526 = vmatmul.bf16.gmra.mxu0 %v5045
      %v10527 = vpop.f32.mrf.mxu0
      %v10528 = vadd.f32 %v10359, %v10527
      %v10529 = vpop.f32.mrf.mxu0
      %v10530 = vadd.f32 %v10361, %v10529
      %10531 = vmatmul.bf16.gmra.mxu0 %v5070
      %v10532 = vpop.f32.mrf.mxu0
      %v10533 = vadd.f32 %v10364, %v10532
      %v10534 = vpop.f32.mrf.mxu0
      %v10535 = vadd.f32 %v10366, %v10534
      %10536 = vmatmul.bf16.gmra.mxu0 %v5095
      %v10537 = vpop.f32.mrf.mxu0
      %v10538 = vadd.f32 %v10369, %v10537
      %v10539 = vpop.f32.mrf.mxu0
      %v10540 = vadd.f32 %v10371, %v10539
      %10541 = vmatmul.bf16.gmra.mxu0 %v5120
      %v10542 = vpop.f32.mrf.mxu0
      %v10543 = vadd.f32 %v10374, %v10542
      %v10544 = vpop.f32.mrf.mxu0
      %v10545 = vadd.f32 %v10376, %v10544
      %10546 = vdwg.mxu0
      %10547 = vmatpush.bf16.msra.mxu0 %v6845
      %10548 = vmatpush.bf16.msra.mxu0 %v6844
      %10549 = vmatpush.bf16.msra.mxu0 %v6843
      %10550 = vmatpush.bf16.msra.mxu0 %v6842
      %10551 = vmatpush.bf16.msra.mxu0 %v6841
      %10552 = vmatpush.bf16.msra.mxu0 %v6840
      %10553 = vmatpush.bf16.msra.mxu0 %v6839
      %10554 = vmatpush.bf16.msra.mxu0 %v6838
      %10555 = vmatmul.bf16.gmra.mxu0 %v4346
      %v10556 = vpop.f32.mrf.mxu0
      %v10557 = vadd.f32 %v10388, %v10556
      %v10558 = vpop.f32.mrf.mxu0
      %v10559 = vadd.f32 %v10390, %v10558
      %10560 = vmatmul.bf16.gmra.mxu0 %v4371
      %v10561 = vpop.f32.mrf.mxu0
      %v10562 = vadd.f32 %v10393, %v10561
      %v10563 = vpop.f32.mrf.mxu0
      %v10564 = vadd.f32 %v10395, %v10563
      %10565 = vmatmul.bf16.gmra.mxu0 %v4396
      %v10566 = vpop.f32.mrf.mxu0
      %v10567 = vadd.f32 %v10398, %v10566
      %v10568 = vpop.f32.mrf.mxu0
      %v10569 = vadd.f32 %v10400, %v10568
      %10570 = vmatmul.bf16.gmra.mxu0 %v4421
      %v10571 = vpop.f32.mrf.mxu0
      %v10572 = vadd.f32 %v10403, %v10571
      %v10573 = vpop.f32.mrf.mxu0
      %v10574 = vadd.f32 %v10405, %v10573
      %10575 = vmatmul.bf16.gmra.mxu0 %v4446
      %v10576 = vpop.f32.mrf.mxu0
      %v10577 = vadd.f32 %v10408, %v10576
      %v10578 = vpop.f32.mrf.mxu0
      %v10579 = vadd.f32 %v10410, %v10578
      %10580 = vmatmul.bf16.gmra.mxu0 %v4471
      %v10581 = vpop.f32.mrf.mxu0
      %v10582 = vadd.f32 %v10413, %v10581
      %v10583 = vpop.f32.mrf.mxu0
      %v10584 = vadd.f32 %v10415, %v10583
      %10585 = vmatmul.bf16.gmra.mxu0 %v4496
      %v10586 = vpop.f32.mrf.mxu0
      %v10587 = vadd.f32 %v10418, %v10586
      %v10588 = vpop.f32.mrf.mxu0
      %v10589 = vadd.f32 %v10420, %v10588
      %10590 = vmatmul.bf16.gmra.mxu0 %v4521
      %v10591 = vpop.f32.mrf.mxu0
      %v10592 = vadd.f32 %v10423, %v10591
      %v10593 = vpop.f32.mrf.mxu0
      %v10594 = vadd.f32 %v10425, %v10593
      %10595 = vmatmul.bf16.gmra.mxu0 %v4546
      %v10596 = vpop.f32.mrf.mxu0
      %v10597 = vadd.f32 %v10428, %v10596
      %v10598 = vpop.f32.mrf.mxu0
      %v10599 = vadd.f32 %v10430, %v10598
      %10600 = vmatmul.bf16.gmra.mxu0 %v4571
      %v10601 = vpop.f32.mrf.mxu0
      %v10602 = vadd.f32 %v10433, %v10601
      %v10603 = vpop.f32.mrf.mxu0
      %v10604 = vadd.f32 %v10435, %v10603
      %10605 = vmatmul.bf16.gmra.mxu0 %v4596
      %v10606 = vpop.f32.mrf.mxu0
      %v10607 = vadd.f32 %v10438, %v10606
      %v10608 = vpop.f32.mrf.mxu0
      %v10609 = vadd.f32 %v10440, %v10608
      %10610 = vmatmul.bf16.gmra.mxu0 %v4621
      %v10611 = vpop.f32.mrf.mxu0
      %v10612 = vadd.f32 %v10443, %v10611
      %v10613 = vpop.f32.mrf.mxu0
      %v10614 = vadd.f32 %v10445, %v10613
      %10615 = vmatmul.bf16.gmra.mxu0 %v4646
      %v10616 = vpop.f32.mrf.mxu0
      %v10617 = vadd.f32 %v10448, %v10616
      %v10618 = vpop.f32.mrf.mxu0
      %v10619 = vadd.f32 %v10450, %v10618
      %10620 = vmatmul.bf16.gmra.mxu0 %v4671
      %v10621 = vpop.f32.mrf.mxu0
      %v10622 = vadd.f32 %v10453, %v10621
      %v10623 = vpop.f32.mrf.mxu0
      %v10624 = vadd.f32 %v10455, %v10623
      %10625 = vmatmul.bf16.gmra.mxu0 %v4696
      %v10626 = vpop.f32.mrf.mxu0
      %v10627 = vadd.f32 %v10458, %v10626
      %v10628 = vpop.f32.mrf.mxu0
      %v10629 = vadd.f32 %v10460, %v10628
      %10630 = vmatmul.bf16.gmra.mxu0 %v4721
      %v10631 = vpop.f32.mrf.mxu0
      %v10632 = vadd.f32 %v10463, %v10631
      %v10633 = vpop.f32.mrf.mxu0
      %v10634 = vadd.f32 %v10465, %v10633
      %10635 = vmatmul.bf16.gmra.mxu0 %v4746
      %v10636 = vpop.f32.mrf.mxu0
      %v10637 = vadd.f32 %v10468, %v10636
      %v10638 = vpop.f32.mrf.mxu0
      %v10639 = vadd.f32 %v10470, %v10638
      %10640 = vmatmul.bf16.gmra.mxu0 %v4771
      %v10641 = vpop.f32.mrf.mxu0
      %v10642 = vadd.f32 %v10473, %v10641
      %v10643 = vpop.f32.mrf.mxu0
      %v10644 = vadd.f32 %v10475, %v10643
      %10645 = vmatmul.bf16.gmra.mxu0 %v4796
      %v10646 = vpop.f32.mrf.mxu0
      %v10647 = vadd.f32 %v10478, %v10646
      %v10648 = vpop.f32.mrf.mxu0
      %v10649 = vadd.f32 %v10480, %v10648
      %10650 = vmatmul.bf16.gmra.mxu0 %v4821
      %v10651 = vpop.f32.mrf.mxu0
      %v10652 = vadd.f32 %v10483, %v10651
      %v10653 = vpop.f32.mrf.mxu0
      %v10654 = vadd.f32 %v10485, %v10653
      %10655 = vmatmul.bf16.gmra.mxu0 %v4846
      %v10656 = vpop.f32.mrf.mxu0
      %v10657 = vadd.f32 %v10488, %v10656
      %v10658 = vpop.f32.mrf.mxu0
      %v10659 = vadd.f32 %v10490, %v10658
      %10660 = vmatmul.bf16.gmra.mxu0 %v4871
      %v10661 = vpop.f32.mrf.mxu0
      %v10662 = vadd.f32 %v10493, %v10661
      %v10663 = vpop.f32.mrf.mxu0
      %v10664 = vadd.f32 %v10495, %v10663
      %10665 = vmatmul.bf16.gmra.mxu0 %v4896
      %v10666 = vpop.f32.mrf.mxu0
      %v10667 = vadd.f32 %v10498, %v10666
      %v10668 = vpop.f32.mrf.mxu0
      %v10669 = vadd.f32 %v10500, %v10668
      %10670 = vmatmul.bf16.gmra.mxu0 %v4921
      %v10671 = vpop.f32.mrf.mxu0
      %v10672 = vadd.f32 %v10503, %v10671
      %v10673 = vpop.f32.mrf.mxu0
      %v10674 = vadd.f32 %v10505, %v10673
      %10675 = vmatmul.bf16.gmra.mxu0 %v4946
      %v10676 = vpop.f32.mrf.mxu0
      %v10677 = vadd.f32 %v10508, %v10676
      %v10678 = vpop.f32.mrf.mxu0
      %v10679 = vadd.f32 %v10510, %v10678
      %10680 = vmatmul.bf16.gmra.mxu0 %v4971
      %v10681 = vpop.f32.mrf.mxu0
      %v10682 = vadd.f32 %v10513, %v10681
      %v10683 = vpop.f32.mrf.mxu0
      %v10684 = vadd.f32 %v10515, %v10683
      %10685 = vmatmul.bf16.gmra.mxu0 %v4996
      %v10686 = vpop.f32.mrf.mxu0
      %v10687 = vadd.f32 %v10518, %v10686
      %v10688 = vpop.f32.mrf.mxu0
      %v10689 = vadd.f32 %v10520, %v10688
      %10690 = vmatmul.bf16.gmra.mxu0 %v5021
      %v10691 = vpop.f32.mrf.mxu0
      %v10692 = vadd.f32 %v10523, %v10691
      %v10693 = vpop.f32.mrf.mxu0
      %v10694 = vadd.f32 %v10525, %v10693
      %10695 = vmatmul.bf16.gmra.mxu0 %v5046
      %v10696 = vpop.f32.mrf.mxu0
      %v10697 = vadd.f32 %v10528, %v10696
      %v10698 = vpop.f32.mrf.mxu0
      %v10699 = vadd.f32 %v10530, %v10698
      %10700 = vmatmul.bf16.gmra.mxu0 %v5071
      %v10701 = vpop.f32.mrf.mxu0
      %v10702 = vadd.f32 %v10533, %v10701
      %v10703 = vpop.f32.mrf.mxu0
      %v10704 = vadd.f32 %v10535, %v10703
      %10705 = vmatmul.bf16.gmra.mxu0 %v5096
      %v10706 = vpop.f32.mrf.mxu0
      %v10707 = vadd.f32 %v10538, %v10706
      %v10708 = vpop.f32.mrf.mxu0
      %v10709 = vadd.f32 %v10540, %v10708
      %10710 = vmatmul.bf16.gmra.mxu0 %v5121
      %v10711 = vpop.f32.mrf.mxu0
      %v10712 = vadd.f32 %v10543, %v10711
      %v10713 = vpop.f32.mrf.mxu0
      %v10714 = vadd.f32 %v10545, %v10713
      %10715 = vdwg.mxu0
      %10716 = vmatpush.bf16.msra.mxu0 %v6853
      %10717 = vmatpush.bf16.msra.mxu0 %v6852
      %10718 = vmatpush.bf16.msra.mxu0 %v6851
      %10719 = vmatpush.bf16.msra.mxu0 %v6850
      %10720 = vmatpush.bf16.msra.mxu0 %v6849
      %10721 = vmatpush.bf16.msra.mxu0 %v6848
      %10722 = vmatpush.bf16.msra.mxu0 %v6847
      %10723 = vmatpush.bf16.msra.mxu0 %v6846
      %10724 = vmatmul.bf16.gmra.mxu0 %v4347
      %v10725 = vpop.f32.mrf.mxu0
      %v10726 = vadd.f32 %v10557, %v10725
      %v10727 = vpop.f32.mrf.mxu0
      %v10728 = vadd.f32 %v10559, %v10727
      %10729 = vmatmul.bf16.gmra.mxu0 %v4372
      %v10730 = vpop.f32.mrf.mxu0
      %v10731 = vadd.f32 %v10562, %v10730
      %v10732 = vpop.f32.mrf.mxu0
      %v10733 = vadd.f32 %v10564, %v10732
      %10734 = vmatmul.bf16.gmra.mxu0 %v4397
      %v10735 = vpop.f32.mrf.mxu0
      %v10736 = vadd.f32 %v10567, %v10735
      %v10737 = vpop.f32.mrf.mxu0
      %v10738 = vadd.f32 %v10569, %v10737
      %10739 = vmatmul.bf16.gmra.mxu0 %v4422
      %v10740 = vpop.f32.mrf.mxu0
      %v10741 = vadd.f32 %v10572, %v10740
      %v10742 = vpop.f32.mrf.mxu0
      %v10743 = vadd.f32 %v10574, %v10742
      %10744 = vmatmul.bf16.gmra.mxu0 %v4447
      %v10745 = vpop.f32.mrf.mxu0
      %v10746 = vadd.f32 %v10577, %v10745
      %v10747 = vpop.f32.mrf.mxu0
      %v10748 = vadd.f32 %v10579, %v10747
      %10749 = vmatmul.bf16.gmra.mxu0 %v4472
      %v10750 = vpop.f32.mrf.mxu0
      %v10751 = vadd.f32 %v10582, %v10750
      %v10752 = vpop.f32.mrf.mxu0
      %v10753 = vadd.f32 %v10584, %v10752
      %10754 = vmatmul.bf16.gmra.mxu0 %v4497
      %v10755 = vpop.f32.mrf.mxu0
      %v10756 = vadd.f32 %v10587, %v10755
      %v10757 = vpop.f32.mrf.mxu0
      %v10758 = vadd.f32 %v10589, %v10757
      %10759 = vmatmul.bf16.gmra.mxu0 %v4522
      %v10760 = vpop.f32.mrf.mxu0
      %v10761 = vadd.f32 %v10592, %v10760
      %v10762 = vpop.f32.mrf.mxu0
      %v10763 = vadd.f32 %v10594, %v10762
      %10764 = vmatmul.bf16.gmra.mxu0 %v4547
      %v10765 = vpop.f32.mrf.mxu0
      %v10766 = vadd.f32 %v10597, %v10765
      %v10767 = vpop.f32.mrf.mxu0
      %v10768 = vadd.f32 %v10599, %v10767
      %10769 = vmatmul.bf16.gmra.mxu0 %v4572
      %v10770 = vpop.f32.mrf.mxu0
      %v10771 = vadd.f32 %v10602, %v10770
      %v10772 = vpop.f32.mrf.mxu0
      %v10773 = vadd.f32 %v10604, %v10772
      %10774 = vmatmul.bf16.gmra.mxu0 %v4597
      %v10775 = vpop.f32.mrf.mxu0
      %v10776 = vadd.f32 %v10607, %v10775
      %v10777 = vpop.f32.mrf.mxu0
      %v10778 = vadd.f32 %v10609, %v10777
      %10779 = vmatmul.bf16.gmra.mxu0 %v4622
      %v10780 = vpop.f32.mrf.mxu0
      %v10781 = vadd.f32 %v10612, %v10780
      %v10782 = vpop.f32.mrf.mxu0
      %v10783 = vadd.f32 %v10614, %v10782
      %10784 = vmatmul.bf16.gmra.mxu0 %v4647
      %v10785 = vpop.f32.mrf.mxu0
      %v10786 = vadd.f32 %v10617, %v10785
      %v10787 = vpop.f32.mrf.mxu0
      %v10788 = vadd.f32 %v10619, %v10787
      %10789 = vmatmul.bf16.gmra.mxu0 %v4672
      %v10790 = vpop.f32.mrf.mxu0
      %v10791 = vadd.f32 %v10622, %v10790
      %v10792 = vpop.f32.mrf.mxu0
      %v10793 = vadd.f32 %v10624, %v10792
      %10794 = vmatmul.bf16.gmra.mxu0 %v4697
      %v10795 = vpop.f32.mrf.mxu0
      %v10796 = vadd.f32 %v10627, %v10795
      %v10797 = vpop.f32.mrf.mxu0
      %v10798 = vadd.f32 %v10629, %v10797
      %10799 = vmatmul.bf16.gmra.mxu0 %v4722
      %v10800 = vpop.f32.mrf.mxu0
      %v10801 = vadd.f32 %v10632, %v10800
      %v10802 = vpop.f32.mrf.mxu0
      %v10803 = vadd.f32 %v10634, %v10802
      %10804 = vmatmul.bf16.gmra.mxu0 %v4747
      %v10805 = vpop.f32.mrf.mxu0
      %v10806 = vadd.f32 %v10637, %v10805
      %v10807 = vpop.f32.mrf.mxu0
      %v10808 = vadd.f32 %v10639, %v10807
      %10809 = vmatmul.bf16.gmra.mxu0 %v4772
      %v10810 = vpop.f32.mrf.mxu0
      %v10811 = vadd.f32 %v10642, %v10810
      %v10812 = vpop.f32.mrf.mxu0
      %v10813 = vadd.f32 %v10644, %v10812
      %10814 = vmatmul.bf16.gmra.mxu0 %v4797
      %v10815 = vpop.f32.mrf.mxu0
      %v10816 = vadd.f32 %v10647, %v10815
      %v10817 = vpop.f32.mrf.mxu0
      %v10818 = vadd.f32 %v10649, %v10817
      %10819 = vmatmul.bf16.gmra.mxu0 %v4822
      %v10820 = vpop.f32.mrf.mxu0
      %v10821 = vadd.f32 %v10652, %v10820
      %v10822 = vpop.f32.mrf.mxu0
      %v10823 = vadd.f32 %v10654, %v10822
      %10824 = vmatmul.bf16.gmra.mxu0 %v4847
      %v10825 = vpop.f32.mrf.mxu0
      %v10826 = vadd.f32 %v10657, %v10825
      %v10827 = vpop.f32.mrf.mxu0
      %v10828 = vadd.f32 %v10659, %v10827
      %10829 = vmatmul.bf16.gmra.mxu0 %v4872
      %v10830 = vpop.f32.mrf.mxu0
      %v10831 = vadd.f32 %v10662, %v10830
      %v10832 = vpop.f32.mrf.mxu0
      %v10833 = vadd.f32 %v10664, %v10832
      %10834 = vmatmul.bf16.gmra.mxu0 %v4897
      %v10835 = vpop.f32.mrf.mxu0
      %v10836 = vadd.f32 %v10667, %v10835
      %v10837 = vpop.f32.mrf.mxu0
      %v10838 = vadd.f32 %v10669, %v10837
      %10839 = vmatmul.bf16.gmra.mxu0 %v4922
      %v10840 = vpop.f32.mrf.mxu0
      %v10841 = vadd.f32 %v10672, %v10840
      %v10842 = vpop.f32.mrf.mxu0
      %v10843 = vadd.f32 %v10674, %v10842
      %10844 = vmatmul.bf16.gmra.mxu0 %v4947
      %v10845 = vpop.f32.mrf.mxu0
      %v10846 = vadd.f32 %v10677, %v10845
      %v10847 = vpop.f32.mrf.mxu0
      %v10848 = vadd.f32 %v10679, %v10847
      %10849 = vmatmul.bf16.gmra.mxu0 %v4972
      %v10850 = vpop.f32.mrf.mxu0
      %v10851 = vadd.f32 %v10682, %v10850
      %v10852 = vpop.f32.mrf.mxu0
      %v10853 = vadd.f32 %v10684, %v10852
      %10854 = vmatmul.bf16.gmra.mxu0 %v4997
      %v10855 = vpop.f32.mrf.mxu0
      %v10856 = vadd.f32 %v10687, %v10855
      %v10857 = vpop.f32.mrf.mxu0
      %v10858 = vadd.f32 %v10689, %v10857
      %10859 = vmatmul.bf16.gmra.mxu0 %v5022
      %v10860 = vpop.f32.mrf.mxu0
      %v10861 = vadd.f32 %v10692, %v10860
      %v10862 = vpop.f32.mrf.mxu0
      %v10863 = vadd.f32 %v10694, %v10862
      %10864 = vmatmul.bf16.gmra.mxu0 %v5047
      %v10865 = vpop.f32.mrf.mxu0
      %v10866 = vadd.f32 %v10697, %v10865
      %v10867 = vpop.f32.mrf.mxu0
      %v10868 = vadd.f32 %v10699, %v10867
      %10869 = vmatmul.bf16.gmra.mxu0 %v5072
      %v10870 = vpop.f32.mrf.mxu0
      %v10871 = vadd.f32 %v10702, %v10870
      %v10872 = vpop.f32.mrf.mxu0
      %v10873 = vadd.f32 %v10704, %v10872
      %10874 = vmatmul.bf16.gmra.mxu0 %v5097
      %v10875 = vpop.f32.mrf.mxu0
      %v10876 = vadd.f32 %v10707, %v10875
      %v10877 = vpop.f32.mrf.mxu0
      %v10878 = vadd.f32 %v10709, %v10877
      %10879 = vmatmul.bf16.gmra.mxu0 %v5122
      %v10880 = vpop.f32.mrf.mxu0
      %v10881 = vadd.f32 %v10712, %v10880
      %v10882 = vpop.f32.mrf.mxu0
      %v10883 = vadd.f32 %v10714, %v10882
      %10884 = vdwg.mxu0
      %10885 = vmatpush.bf16.msra.mxu0 %v6861
      %10886 = vmatpush.bf16.msra.mxu0 %v6860
      %10887 = vmatpush.bf16.msra.mxu0 %v6859
      %10888 = vmatpush.bf16.msra.mxu0 %v6858
      %10889 = vmatpush.bf16.msra.mxu0 %v6857
      %10890 = vmatpush.bf16.msra.mxu0 %v6856
      %10891 = vmatpush.bf16.msra.mxu0 %v6855
      %10892 = vmatpush.bf16.msra.mxu0 %v6854
      %10893 = vmatmul.bf16.gmra.mxu0 %v4348
      %v10894 = vpop.f32.mrf.mxu0
      %v10895 = vadd.f32 %v10726, %v10894
      %v10896 = vpop.f32.mrf.mxu0
      %v10897 = vadd.f32 %v10728, %v10896
      %10898 = vmatmul.bf16.gmra.mxu0 %v4373
      %v10899 = vpop.f32.mrf.mxu0
      %v10900 = vadd.f32 %v10731, %v10899
      %v10901 = vpop.f32.mrf.mxu0
      %v10902 = vadd.f32 %v10733, %v10901
      %10903 = vmatmul.bf16.gmra.mxu0 %v4398
      %v10904 = vpop.f32.mrf.mxu0
      %v10905 = vadd.f32 %v10736, %v10904
      %v10906 = vpop.f32.mrf.mxu0
      %v10907 = vadd.f32 %v10738, %v10906
      %10908 = vmatmul.bf16.gmra.mxu0 %v4423
      %v10909 = vpop.f32.mrf.mxu0
      %v10910 = vadd.f32 %v10741, %v10909
      %v10911 = vpop.f32.mrf.mxu0
      %v10912 = vadd.f32 %v10743, %v10911
      %10913 = vmatmul.bf16.gmra.mxu0 %v4448
      %v10914 = vpop.f32.mrf.mxu0
      %v10915 = vadd.f32 %v10746, %v10914
      %v10916 = vpop.f32.mrf.mxu0
      %v10917 = vadd.f32 %v10748, %v10916
      %10918 = vmatmul.bf16.gmra.mxu0 %v4473
      %v10919 = vpop.f32.mrf.mxu0
      %v10920 = vadd.f32 %v10751, %v10919
      %v10921 = vpop.f32.mrf.mxu0
      %v10922 = vadd.f32 %v10753, %v10921
      %10923 = vmatmul.bf16.gmra.mxu0 %v4498
      %v10924 = vpop.f32.mrf.mxu0
      %v10925 = vadd.f32 %v10756, %v10924
      %v10926 = vpop.f32.mrf.mxu0
      %v10927 = vadd.f32 %v10758, %v10926
      %10928 = vmatmul.bf16.gmra.mxu0 %v4523
      %v10929 = vpop.f32.mrf.mxu0
      %v10930 = vadd.f32 %v10761, %v10929
      %v10931 = vpop.f32.mrf.mxu0
      %v10932 = vadd.f32 %v10763, %v10931
      %10933 = vmatmul.bf16.gmra.mxu0 %v4548
      %v10934 = vpop.f32.mrf.mxu0
      %v10935 = vadd.f32 %v10766, %v10934
      %v10936 = vpop.f32.mrf.mxu0
      %v10937 = vadd.f32 %v10768, %v10936
      %10938 = vmatmul.bf16.gmra.mxu0 %v4573
      %v10939 = vpop.f32.mrf.mxu0
      %v10940 = vadd.f32 %v10771, %v10939
      %v10941 = vpop.f32.mrf.mxu0
      %v10942 = vadd.f32 %v10773, %v10941
      %10943 = vmatmul.bf16.gmra.mxu0 %v4598
      %v10944 = vpop.f32.mrf.mxu0
      %v10945 = vadd.f32 %v10776, %v10944
      %v10946 = vpop.f32.mrf.mxu0
      %v10947 = vadd.f32 %v10778, %v10946
      %10948 = vmatmul.bf16.gmra.mxu0 %v4623
      %v10949 = vpop.f32.mrf.mxu0
      %v10950 = vadd.f32 %v10781, %v10949
      %v10951 = vpop.f32.mrf.mxu0
      %v10952 = vadd.f32 %v10783, %v10951
      %10953 = vmatmul.bf16.gmra.mxu0 %v4648
      %v10954 = vpop.f32.mrf.mxu0
      %v10955 = vadd.f32 %v10786, %v10954
      %v10956 = vpop.f32.mrf.mxu0
      %v10957 = vadd.f32 %v10788, %v10956
      %10958 = vmatmul.bf16.gmra.mxu0 %v4673
      %v10959 = vpop.f32.mrf.mxu0
      %v10960 = vadd.f32 %v10791, %v10959
      %v10961 = vpop.f32.mrf.mxu0
      %v10962 = vadd.f32 %v10793, %v10961
      %10963 = vmatmul.bf16.gmra.mxu0 %v4698
      %v10964 = vpop.f32.mrf.mxu0
      %v10965 = vadd.f32 %v10796, %v10964
      %v10966 = vpop.f32.mrf.mxu0
      %v10967 = vadd.f32 %v10798, %v10966
      %10968 = vmatmul.bf16.gmra.mxu0 %v4723
      %v10969 = vpop.f32.mrf.mxu0
      %v10970 = vadd.f32 %v10801, %v10969
      %v10971 = vpop.f32.mrf.mxu0
      %v10972 = vadd.f32 %v10803, %v10971
      %10973 = vmatmul.bf16.gmra.mxu0 %v4748
      %v10974 = vpop.f32.mrf.mxu0
      %v10975 = vadd.f32 %v10806, %v10974
      %v10976 = vpop.f32.mrf.mxu0
      %v10977 = vadd.f32 %v10808, %v10976
      %10978 = vmatmul.bf16.gmra.mxu0 %v4773
      %v10979 = vpop.f32.mrf.mxu0
      %v10980 = vadd.f32 %v10811, %v10979
      %v10981 = vpop.f32.mrf.mxu0
      %v10982 = vadd.f32 %v10813, %v10981
      %10983 = vmatmul.bf16.gmra.mxu0 %v4798
      %v10984 = vpop.f32.mrf.mxu0
      %v10985 = vadd.f32 %v10816, %v10984
      %v10986 = vpop.f32.mrf.mxu0
      %v10987 = vadd.f32 %v10818, %v10986
      %10988 = vmatmul.bf16.gmra.mxu0 %v4823
      %v10989 = vpop.f32.mrf.mxu0
      %v10990 = vadd.f32 %v10821, %v10989
      %v10991 = vpop.f32.mrf.mxu0
      %v10992 = vadd.f32 %v10823, %v10991
      %10993 = vmatmul.bf16.gmra.mxu0 %v4848
      %v10994 = vpop.f32.mrf.mxu0
      %v10995 = vadd.f32 %v10826, %v10994
      %v10996 = vpop.f32.mrf.mxu0
      %v10997 = vadd.f32 %v10828, %v10996
      %10998 = vmatmul.bf16.gmra.mxu0 %v4873
      %v10999 = vpop.f32.mrf.mxu0
      %v11000 = vadd.f32 %v10831, %v10999
      %v11001 = vpop.f32.mrf.mxu0
      %v11002 = vadd.f32 %v10833, %v11001
      %11003 = vmatmul.bf16.gmra.mxu0 %v4898
      %v11004 = vpop.f32.mrf.mxu0
      %v11005 = vadd.f32 %v10836, %v11004
      %v11006 = vpop.f32.mrf.mxu0
      %v11007 = vadd.f32 %v10838, %v11006
      %11008 = vmatmul.bf16.gmra.mxu0 %v4923
      %v11009 = vpop.f32.mrf.mxu0
      %v11010 = vadd.f32 %v10841, %v11009
      %v11011 = vpop.f32.mrf.mxu0
      %v11012 = vadd.f32 %v10843, %v11011
      %11013 = vmatmul.bf16.gmra.mxu0 %v4948
      %v11014 = vpop.f32.mrf.mxu0
      %v11015 = vadd.f32 %v10846, %v11014
      %v11016 = vpop.f32.mrf.mxu0
      %v11017 = vadd.f32 %v10848, %v11016
      %11018 = vmatmul.bf16.gmra.mxu0 %v4973
      %v11019 = vpop.f32.mrf.mxu0
      %v11020 = vadd.f32 %v10851, %v11019
      %v11021 = vpop.f32.mrf.mxu0
      %v11022 = vadd.f32 %v10853, %v11021
      %11023 = vmatmul.bf16.gmra.mxu0 %v4998
      %v11024 = vpop.f32.mrf.mxu0
      %v11025 = vadd.f32 %v10856, %v11024
      %v11026 = vpop.f32.mrf.mxu0
      %v11027 = vadd.f32 %v10858, %v11026
      %11028 = vmatmul.bf16.gmra.mxu0 %v5023
      %v11029 = vpop.f32.mrf.mxu0
      %v11030 = vadd.f32 %v10861, %v11029
      %v11031 = vpop.f32.mrf.mxu0
      %v11032 = vadd.f32 %v10863, %v11031
      %11033 = vmatmul.bf16.gmra.mxu0 %v5048
      %v11034 = vpop.f32.mrf.mxu0
      %v11035 = vadd.f32 %v10866, %v11034
      %v11036 = vpop.f32.mrf.mxu0
      %v11037 = vadd.f32 %v10868, %v11036
      %11038 = vmatmul.bf16.gmra.mxu0 %v5073
      %v11039 = vpop.f32.mrf.mxu0
      %v11040 = vadd.f32 %v10871, %v11039
      %v11041 = vpop.f32.mrf.mxu0
      %v11042 = vadd.f32 %v10873, %v11041
      %11043 = vmatmul.bf16.gmra.mxu0 %v5098
      %v11044 = vpop.f32.mrf.mxu0
      %v11045 = vadd.f32 %v10876, %v11044
      %v11046 = vpop.f32.mrf.mxu0
      %v11047 = vadd.f32 %v10878, %v11046
      %11048 = vmatmul.bf16.gmra.mxu0 %v5123
      %v11049 = vpop.f32.mrf.mxu0
      %v11050 = vadd.f32 %v10881, %v11049
      %v11051 = vpop.f32.mrf.mxu0
      %v11052 = vadd.f32 %v10883, %v11051
      %11053 = vdwg.mxu0
      %11054 = vmatpush.bf16.msra.mxu0 %v6869
      %11055 = vmatpush.bf16.msra.mxu0 %v6868
      %11056 = vmatpush.bf16.msra.mxu0 %v6867
      %11057 = vmatpush.bf16.msra.mxu0 %v6866
      %11058 = vmatpush.bf16.msra.mxu0 %v6865
      %11059 = vmatpush.bf16.msra.mxu0 %v6864
      %11060 = vmatpush.bf16.msra.mxu0 %v6863
      %11061 = vmatpush.bf16.msra.mxu0 %v6862
      %11062 = vmatmul.bf16.gmra.mxu0 %v4349
      %v11063 = vpop.f32.mrf.mxu0
      %v11064 = vadd.f32 %v10895, %v11063
      %v11065 = vpop.f32.mrf.mxu0
      %v11066 = vadd.f32 %v10897, %v11065
      %11067 = vmatmul.bf16.gmra.mxu0 %v4374
      %v11068 = vpop.f32.mrf.mxu0
      %v11069 = vadd.f32 %v10900, %v11068
      %v11070 = vpop.f32.mrf.mxu0
      %v11071 = vadd.f32 %v10902, %v11070
      %11072 = vmatmul.bf16.gmra.mxu0 %v4399
      %v11073 = vpop.f32.mrf.mxu0
      %v11074 = vadd.f32 %v10905, %v11073
      %v11075 = vpop.f32.mrf.mxu0
      %v11076 = vadd.f32 %v10907, %v11075
      %11077 = vmatmul.bf16.gmra.mxu0 %v4424
      %v11078 = vpop.f32.mrf.mxu0
      %v11079 = vadd.f32 %v10910, %v11078
      %v11080 = vpop.f32.mrf.mxu0
      %v11081 = vadd.f32 %v10912, %v11080
      %11082 = vmatmul.bf16.gmra.mxu0 %v4449
      %v11083 = vpop.f32.mrf.mxu0
      %v11084 = vadd.f32 %v10915, %v11083
      %v11085 = vpop.f32.mrf.mxu0
      %v11086 = vadd.f32 %v10917, %v11085
      %11087 = vmatmul.bf16.gmra.mxu0 %v4474
      %v11088 = vpop.f32.mrf.mxu0
      %v11089 = vadd.f32 %v10920, %v11088
      %v11090 = vpop.f32.mrf.mxu0
      %v11091 = vadd.f32 %v10922, %v11090
      %11092 = vmatmul.bf16.gmra.mxu0 %v4499
      %v11093 = vpop.f32.mrf.mxu0
      %v11094 = vadd.f32 %v10925, %v11093
      %v11095 = vpop.f32.mrf.mxu0
      %v11096 = vadd.f32 %v10927, %v11095
      %11097 = vmatmul.bf16.gmra.mxu0 %v4524
      %v11098 = vpop.f32.mrf.mxu0
      %v11099 = vadd.f32 %v10930, %v11098
      %v11100 = vpop.f32.mrf.mxu0
      %v11101 = vadd.f32 %v10932, %v11100
      %11102 = vmatmul.bf16.gmra.mxu0 %v4549
      %v11103 = vpop.f32.mrf.mxu0
      %v11104 = vadd.f32 %v10935, %v11103
      %v11105 = vpop.f32.mrf.mxu0
      %v11106 = vadd.f32 %v10937, %v11105
      %11107 = vmatmul.bf16.gmra.mxu0 %v4574
      %v11108 = vpop.f32.mrf.mxu0
      %v11109 = vadd.f32 %v10940, %v11108
      %v11110 = vpop.f32.mrf.mxu0
      %v11111 = vadd.f32 %v10942, %v11110
      %11112 = vmatmul.bf16.gmra.mxu0 %v4599
      %v11113 = vpop.f32.mrf.mxu0
      %v11114 = vadd.f32 %v10945, %v11113
      %v11115 = vpop.f32.mrf.mxu0
      %v11116 = vadd.f32 %v10947, %v11115
      %11117 = vmatmul.bf16.gmra.mxu0 %v4624
      %v11118 = vpop.f32.mrf.mxu0
      %v11119 = vadd.f32 %v10950, %v11118
      %v11120 = vpop.f32.mrf.mxu0
      %v11121 = vadd.f32 %v10952, %v11120
      %11122 = vmatmul.bf16.gmra.mxu0 %v4649
      %v11123 = vpop.f32.mrf.mxu0
      %v11124 = vadd.f32 %v10955, %v11123
      %v11125 = vpop.f32.mrf.mxu0
      %v11126 = vadd.f32 %v10957, %v11125
      %11127 = vmatmul.bf16.gmra.mxu0 %v4674
      %v11128 = vpop.f32.mrf.mxu0
      %v11129 = vadd.f32 %v10960, %v11128
      %v11130 = vpop.f32.mrf.mxu0
      %v11131 = vadd.f32 %v10962, %v11130
      %11132 = vmatmul.bf16.gmra.mxu0 %v4699
      %v11133 = vpop.f32.mrf.mxu0
      %v11134 = vadd.f32 %v10965, %v11133
      %v11135 = vpop.f32.mrf.mxu0
      %v11136 = vadd.f32 %v10967, %v11135
      %11137 = vmatmul.bf16.gmra.mxu0 %v4724
      %v11138 = vpop.f32.mrf.mxu0
      %v11139 = vadd.f32 %v10970, %v11138
      %v11140 = vpop.f32.mrf.mxu0
      %v11141 = vadd.f32 %v10972, %v11140
      %11142 = vmatmul.bf16.gmra.mxu0 %v4749
      %v11143 = vpop.f32.mrf.mxu0
      %v11144 = vadd.f32 %v10975, %v11143
      %v11145 = vpop.f32.mrf.mxu0
      %v11146 = vadd.f32 %v10977, %v11145
      %11147 = vmatmul.bf16.gmra.mxu0 %v4774
      %v11148 = vpop.f32.mrf.mxu0
      %v11149 = vadd.f32 %v10980, %v11148
      %v11150 = vpop.f32.mrf.mxu0
      %v11151 = vadd.f32 %v10982, %v11150
      %11152 = vmatmul.bf16.gmra.mxu0 %v4799
      %v11153 = vpop.f32.mrf.mxu0
      %v11154 = vadd.f32 %v10985, %v11153
      %v11155 = vpop.f32.mrf.mxu0
      %v11156 = vadd.f32 %v10987, %v11155
      %11157 = vmatmul.bf16.gmra.mxu0 %v4824
      %v11158 = vpop.f32.mrf.mxu0
      %v11159 = vadd.f32 %v10990, %v11158
      %v11160 = vpop.f32.mrf.mxu0
      %v11161 = vadd.f32 %v10992, %v11160
      %11162 = vmatmul.bf16.gmra.mxu0 %v4849
      %v11163 = vpop.f32.mrf.mxu0
      %v11164 = vadd.f32 %v10995, %v11163
      %v11165 = vpop.f32.mrf.mxu0
      %v11166 = vadd.f32 %v10997, %v11165
      %11167 = vmatmul.bf16.gmra.mxu0 %v4874
      %v11168 = vpop.f32.mrf.mxu0
      %v11169 = vadd.f32 %v11000, %v11168
      %v11170 = vpop.f32.mrf.mxu0
      %v11171 = vadd.f32 %v11002, %v11170
      %11172 = vmatmul.bf16.gmra.mxu0 %v4899
      %v11173 = vpop.f32.mrf.mxu0
      %v11174 = vadd.f32 %v11005, %v11173
      %v11175 = vpop.f32.mrf.mxu0
      %v11176 = vadd.f32 %v11007, %v11175
      %11177 = vmatmul.bf16.gmra.mxu0 %v4924
      %v11178 = vpop.f32.mrf.mxu0
      %v11179 = vadd.f32 %v11010, %v11178
      %v11180 = vpop.f32.mrf.mxu0
      %v11181 = vadd.f32 %v11012, %v11180
      %11182 = vmatmul.bf16.gmra.mxu0 %v4949
      %v11183 = vpop.f32.mrf.mxu0
      %v11184 = vadd.f32 %v11015, %v11183
      %v11185 = vpop.f32.mrf.mxu0
      %v11186 = vadd.f32 %v11017, %v11185
      %11187 = vmatmul.bf16.gmra.mxu0 %v4974
      %v11188 = vpop.f32.mrf.mxu0
      %v11189 = vadd.f32 %v11020, %v11188
      %v11190 = vpop.f32.mrf.mxu0
      %v11191 = vadd.f32 %v11022, %v11190
      %11192 = vmatmul.bf16.gmra.mxu0 %v4999
      %v11193 = vpop.f32.mrf.mxu0
      %v11194 = vadd.f32 %v11025, %v11193
      %v11195 = vpop.f32.mrf.mxu0
      %v11196 = vadd.f32 %v11027, %v11195
      %11197 = vmatmul.bf16.gmra.mxu0 %v5024
      %v11198 = vpop.f32.mrf.mxu0
      %v11199 = vadd.f32 %v11030, %v11198
      %v11200 = vpop.f32.mrf.mxu0
      %v11201 = vadd.f32 %v11032, %v11200
      %11202 = vmatmul.bf16.gmra.mxu0 %v5049
      %v11203 = vpop.f32.mrf.mxu0
      %v11204 = vadd.f32 %v11035, %v11203
      %v11205 = vpop.f32.mrf.mxu0
      %v11206 = vadd.f32 %v11037, %v11205
      %11207 = vmatmul.bf16.gmra.mxu0 %v5074
      %v11208 = vpop.f32.mrf.mxu0
      %v11209 = vadd.f32 %v11040, %v11208
      %v11210 = vpop.f32.mrf.mxu0
      %v11211 = vadd.f32 %v11042, %v11210
      %11212 = vmatmul.bf16.gmra.mxu0 %v5099
      %v11213 = vpop.f32.mrf.mxu0
      %v11214 = vadd.f32 %v11045, %v11213
      %v11215 = vpop.f32.mrf.mxu0
      %v11216 = vadd.f32 %v11047, %v11215
      %11217 = vmatmul.bf16.gmra.mxu0 %v5124
      %v11218 = vpop.f32.mrf.mxu0
      %v11219 = vadd.f32 %v11050, %v11218
      %v11220 = vpop.f32.mrf.mxu0
      %v11221 = vadd.f32 %v11052, %v11220
      %11222 = vdwg.mxu0
      %11223 = vmatpush.bf16.msra.mxu0 0
      %11224 = vmatpush.bf16.msra.mxu0 0
      %11225 = vmatpush.bf16.msra.mxu0 0
      %11226 = vmatpush.bf16.msra.mxu0 0
      %11227 = vmatpush.bf16.msra.mxu0 %v6873
      %11228 = vmatpush.bf16.msra.mxu0 %v6872
      %11229 = vmatpush.bf16.msra.mxu0 %v6871
      %11230 = vmatpush.bf16.msra.mxu0 %v6870
      %11231 = vmatmul.bf16.gmra.mxu0 %v7072
      %v11232 = vpop.f32.mrf.mxu0
      %v11233 = vadd.f32 %v11064, %v11232
      %v11234 = vpop.f32.mrf.mxu0
      %v11235 = vadd.f32 %v11066, %v11234
      %11236 = vmatmul.bf16.gmra.mxu0 %v7075
      %v11237 = vpop.f32.mrf.mxu0
      %v11238 = vadd.f32 %v11069, %v11237
      %v11239 = vpop.f32.mrf.mxu0
      %v11240 = vadd.f32 %v11071, %v11239
      %11241 = vmatmul.bf16.gmra.mxu0 %v7078
      %v11242 = vpop.f32.mrf.mxu0
      %v11243 = vadd.f32 %v11074, %v11242
      %v11244 = vpop.f32.mrf.mxu0
      %v11245 = vadd.f32 %v11076, %v11244
      %11246 = vmatmul.bf16.gmra.mxu0 %v7081
      %v11247 = vpop.f32.mrf.mxu0
      %v11248 = vadd.f32 %v11079, %v11247
      %v11249 = vpop.f32.mrf.mxu0
      %v11250 = vadd.f32 %v11081, %v11249
      %11251 = vmatmul.bf16.gmra.mxu0 %v7084
      %v11252 = vpop.f32.mrf.mxu0
      %v11253 = vadd.f32 %v11084, %v11252
      %v11254 = vpop.f32.mrf.mxu0
      %v11255 = vadd.f32 %v11086, %v11254
      %11256 = vmatmul.bf16.gmra.mxu0 %v7087
      %v11257 = vpop.f32.mrf.mxu0
      %v11258 = vadd.f32 %v11089, %v11257
      %v11259 = vpop.f32.mrf.mxu0
      %v11260 = vadd.f32 %v11091, %v11259
      %11261 = vmatmul.bf16.gmra.mxu0 %v7090
      %v11262 = vpop.f32.mrf.mxu0
      %v11263 = vadd.f32 %v11094, %v11262
      %v11264 = vpop.f32.mrf.mxu0
      %v11265 = vadd.f32 %v11096, %v11264
      %11266 = vmatmul.bf16.gmra.mxu0 %v7093
      %v11267 = vpop.f32.mrf.mxu0
      %v11268 = vadd.f32 %v11099, %v11267
      %v11269 = vpop.f32.mrf.mxu0
      %v11270 = vadd.f32 %v11101, %v11269
      %11271 = vmatmul.bf16.gmra.mxu0 %v7096
      %v11272 = vpop.f32.mrf.mxu0
      %v11273 = vadd.f32 %v11104, %v11272
      %v11274 = vpop.f32.mrf.mxu0
      %v11275 = vadd.f32 %v11106, %v11274
      %11276 = vmatmul.bf16.gmra.mxu0 %v7099
      %v11277 = vpop.f32.mrf.mxu0
      %v11278 = vadd.f32 %v11109, %v11277
      %v11279 = vpop.f32.mrf.mxu0
      %v11280 = vadd.f32 %v11111, %v11279
      %11281 = vmatmul.bf16.gmra.mxu0 %v7102
      %v11282 = vpop.f32.mrf.mxu0
      %v11283 = vadd.f32 %v11114, %v11282
      %v11284 = vpop.f32.mrf.mxu0
      %v11285 = vadd.f32 %v11116, %v11284
      %11286 = vmatmul.bf16.gmra.mxu0 %v7105
      %v11287 = vpop.f32.mrf.mxu0
      %v11288 = vadd.f32 %v11119, %v11287
      %v11289 = vpop.f32.mrf.mxu0
      %v11290 = vadd.f32 %v11121, %v11289
      %11291 = vmatmul.bf16.gmra.mxu0 %v7108
      %v11292 = vpop.f32.mrf.mxu0
      %v11293 = vadd.f32 %v11124, %v11292
      %v11294 = vpop.f32.mrf.mxu0
      %v11295 = vadd.f32 %v11126, %v11294
      %11296 = vmatmul.bf16.gmra.mxu0 %v7111
      %v11297 = vpop.f32.mrf.mxu0
      %v11298 = vadd.f32 %v11129, %v11297
      %v11299 = vpop.f32.mrf.mxu0
      %v11300 = vadd.f32 %v11131, %v11299
      %11301 = vmatmul.bf16.gmra.mxu0 %v7114
      %v11302 = vpop.f32.mrf.mxu0
      %v11303 = vadd.f32 %v11134, %v11302
      %v11304 = vpop.f32.mrf.mxu0
      %v11305 = vadd.f32 %v11136, %v11304
      %11306 = vmatmul.bf16.gmra.mxu0 %v7117
      %v11307 = vpop.f32.mrf.mxu0
      %v11308 = vadd.f32 %v11139, %v11307
      %v11309 = vpop.f32.mrf.mxu0
      %v11310 = vadd.f32 %v11141, %v11309
      %11311 = vmatmul.bf16.gmra.mxu0 %v7120
      %v11312 = vpop.f32.mrf.mxu0
      %v11313 = vadd.f32 %v11144, %v11312
      %v11314 = vpop.f32.mrf.mxu0
      %v11315 = vadd.f32 %v11146, %v11314
      %11316 = vmatmul.bf16.gmra.mxu0 %v7123
      %v11317 = vpop.f32.mrf.mxu0
      %v11318 = vadd.f32 %v11149, %v11317
      %v11319 = vpop.f32.mrf.mxu0
      %v11320 = vadd.f32 %v11151, %v11319
      %11321 = vmatmul.bf16.gmra.mxu0 %v7126
      %v11322 = vpop.f32.mrf.mxu0
      %v11323 = vadd.f32 %v11154, %v11322
      %v11324 = vpop.f32.mrf.mxu0
      %v11325 = vadd.f32 %v11156, %v11324
      %11326 = vmatmul.bf16.gmra.mxu0 %v7129
      %v11327 = vpop.f32.mrf.mxu0
      %v11328 = vadd.f32 %v11159, %v11327
      %v11329 = vpop.f32.mrf.mxu0
      %v11330 = vadd.f32 %v11161, %v11329
      %11331 = vmatmul.bf16.gmra.mxu0 %v7132
      %v11332 = vpop.f32.mrf.mxu0
      %v11333 = vadd.f32 %v11164, %v11332
      %v11334 = vpop.f32.mrf.mxu0
      %v11335 = vadd.f32 %v11166, %v11334
      %11336 = vmatmul.bf16.gmra.mxu0 %v7135
      %v11337 = vpop.f32.mrf.mxu0
      %v11338 = vadd.f32 %v11169, %v11337
      %v11339 = vpop.f32.mrf.mxu0
      %v11340 = vadd.f32 %v11171, %v11339
      %11341 = vmatmul.bf16.gmra.mxu0 %v7138
      %v11342 = vpop.f32.mrf.mxu0
      %v11343 = vadd.f32 %v11174, %v11342
      %v11344 = vpop.f32.mrf.mxu0
      %v11345 = vadd.f32 %v11176, %v11344
      %11346 = vmatmul.bf16.gmra.mxu0 %v7141
      %v11347 = vpop.f32.mrf.mxu0
      %v11348 = vadd.f32 %v11179, %v11347
      %v11349 = vpop.f32.mrf.mxu0
      %v11350 = vadd.f32 %v11181, %v11349
      %11351 = vmatmul.bf16.gmra.mxu0 %v7144
      %v11352 = vpop.f32.mrf.mxu0
      %v11353 = vadd.f32 %v11184, %v11352
      %v11354 = vpop.f32.mrf.mxu0
      %v11355 = vadd.f32 %v11186, %v11354
      %11356 = vmatmul.bf16.gmra.mxu0 %v7147
      %v11357 = vpop.f32.mrf.mxu0
      %v11358 = vadd.f32 %v11189, %v11357
      %v11359 = vpop.f32.mrf.mxu0
      %v11360 = vadd.f32 %v11191, %v11359
      %11361 = vmatmul.bf16.gmra.mxu0 %v7150
      %v11362 = vpop.f32.mrf.mxu0
      %v11363 = vadd.f32 %v11194, %v11362
      %v11364 = vpop.f32.mrf.mxu0
      %v11365 = vadd.f32 %v11196, %v11364
      %11366 = vmatmul.bf16.gmra.mxu0 %v7153
      %v11367 = vpop.f32.mrf.mxu0
      %v11368 = vadd.f32 %v11199, %v11367
      %v11369 = vpop.f32.mrf.mxu0
      %v11370 = vadd.f32 %v11201, %v11369
      %11371 = vmatmul.bf16.gmra.mxu0 %v7156
      %v11372 = vpop.f32.mrf.mxu0
      %v11373 = vadd.f32 %v11204, %v11372
      %v11374 = vpop.f32.mrf.mxu0
      %v11375 = vadd.f32 %v11206, %v11374
      %11376 = vmatmul.bf16.gmra.mxu0 %v7159
      %v11377 = vpop.f32.mrf.mxu0
      %v11378 = vadd.f32 %v11209, %v11377
      %v11379 = vpop.f32.mrf.mxu0
      %v11380 = vadd.f32 %v11211, %v11379
      %11381 = vmatmul.bf16.gmra.mxu0 %v7162
      %v11382 = vpop.f32.mrf.mxu0
      %v11383 = vadd.f32 %v11214, %v11382
      %v11384 = vpop.f32.mrf.mxu0
      %v11385 = vadd.f32 %v11216, %v11384
      %11386 = vmatmul.bf16.gmra.mxu0 %v7165
      %v11387 = vpop.f32.mrf.mxu0
      %v11388 = vadd.f32 %v11219, %v11387
      %v11389 = vpop.f32.mrf.mxu0
      %v11390 = vadd.f32 %v11221, %v11389
      %11391 = vdwg.mxu0
      %v11392 = vmax.f32 %v11233, 0.0
      %v11393 = vmax.f32 %v11235, 0.0
      %v11394 = vmax.f32 %v11238, 0.0
      %v11395 = vmax.f32 %v11240, 0.0
      %v11396 = vmax.f32 %v11243, 0.0
      %v11397 = vmax.f32 %v11245, 0.0
      %v11398 = vmax.f32 %v11248, 0.0
      %v11399 = vmax.f32 %v11250, 0.0
      %v11400 = vmax.f32 %v11253, 0.0
      %v11401 = vmax.f32 %v11255, 0.0
      %v11402 = vmax.f32 %v11258, 0.0
      %v11403 = vmax.f32 %v11260, 0.0
      %v11404 = vmax.f32 %v11263, 0.0
      %v11405 = vmax.f32 %v11265, 0.0
      %v11406 = vmax.f32 %v11268, 0.0
      %v11407 = vmax.f32 %v11270, 0.0
      %v11408 = vmax.f32 %v11273, 0.0
      %v11409 = vmax.f32 %v11275, 0.0
      %v11410 = vmax.f32 %v11278, 0.0
      %v11411 = vmax.f32 %v11280, 0.0
      %v11412 = vmax.f32 %v11283, 0.0
      %v11413 = vmax.f32 %v11285, 0.0
      %v11414 = vmax.f32 %v11288, 0.0
      %v11415 = vmax.f32 %v11290, 0.0
      %v11416 = vmax.f32 %v11293, 0.0
      %v11417 = vmax.f32 %v11295, 0.0
      %v11418 = vmax.f32 %v11298, 0.0
      %v11419 = vmax.f32 %v11300, 0.0
      %v11420 = vmax.f32 %v11303, 0.0
      %v11421 = vmax.f32 %v11305, 0.0
      %v11422 = vmax.f32 %v11308, 0.0
      %v11423 = vmax.f32 %v11310, 0.0
      %v11424 = vmax.f32 %v11313, 0.0
      %v11425 = vmax.f32 %v11315, 0.0
      %v11426 = vmax.f32 %v11318, 0.0
      %v11427 = vmax.f32 %v11320, 0.0
      %v11428 = vmax.f32 %v11323, 0.0
      %v11429 = vmax.f32 %v11325, 0.0
      %v11430 = vmax.f32 %v11328, 0.0
      %v11431 = vmax.f32 %v11330, 0.0
      %v11432 = vmax.f32 %v11333, 0.0
      %v11433 = vmax.f32 %v11335, 0.0
      %v11434 = vmax.f32 %v11338, 0.0
      %v11435 = vmax.f32 %v11340, 0.0
      %v11436 = vmax.f32 %v11343, 0.0
      %v11437 = vmax.f32 %v11345, 0.0
      %v11438 = vmax.f32 %v11348, 0.0
      %v11439 = vmax.f32 %v11350, 0.0
      %v11440 = vmax.f32 %v11353, 0.0
      %v11441 = vmax.f32 %v11355, 0.0
      %v11442 = vmax.f32 %v11358, 0.0
      %v11443 = vmax.f32 %v11360, 0.0
      %v11444 = vmax.f32 %v11363, 0.0
      %v11445 = vmax.f32 %v11365, 0.0
      %v11446 = vmax.f32 %v11368, 0.0
      %v11447 = vmax.f32 %v11370, 0.0
      %v11448 = vmax.f32 %v11373, 0.0
      %v11449 = vmax.f32 %v11375, 0.0
      %v11450 = vmax.f32 %v11378, 0.0
      %v11451 = vmax.f32 %v11380, 0.0
      %v11452 = vmax.f32 %v11383, 0.0
      %v11453 = vmax.f32 %v11385, 0.0
      %v11454 = vmax.f32 %v11388, 0.0
      %v11455 = vmax.f32 %v11390, 0.0
      %v11456 = vld [vmem:[%s274] sm:$0xff]
      %v11457 = vld [vmem:[%s274 + $0x8] sm:$0xff]
      %v11458 = vld [vmem:[%s274 + $0x10] sm:$0xff]
      %v11459 = vld [vmem:[%s274 + $0x18] sm:$0xff]
      %v11460 = vpack.c.bf16 %v11393, %v11392
      %v11461 = vpack.c.bf16 %v11395, %v11394
      %v11462 = vpack.c.bf16 %v11397, %v11396
      %v11463 = vpack.c.bf16 %v11399, %v11398
      %v11464 = vpack.c.bf16 %v11401, %v11400
      %v11465 = vpack.c.bf16 %v11403, %v11402
      %v11466 = vpack.c.bf16 %v11405, %v11404
      %v11467 = vpack.c.bf16 %v11407, %v11406
      %v11468 = vpack.c.bf16 %v11409, %v11408
      %v11469 = vpack.c.bf16 %v11411, %v11410
      %v11470 = vpack.c.bf16 %v11413, %v11412
      %v11471 = vpack.c.bf16 %v11415, %v11414
      %v11472 = vpack.c.bf16 %v11417, %v11416
      %v11473 = vpack.c.bf16 %v11419, %v11418
      %v11474 = vpack.c.bf16 %v11421, %v11420
      %v11475 = vpack.c.bf16 %v11423, %v11422
      %v11476 = vpack.c.bf16 %v11425, %v11424
      %v11477 = vpack.c.bf16 %v11427, %v11426
      %v11478 = vpack.c.bf16 %v11429, %v11428
      %v11479 = vpack.c.bf16 %v11431, %v11430
      %v11480 = vpack.c.bf16 %v11433, %v11432
      %v11481 = vpack.c.bf16 %v11435, %v11434
      %v11482 = vpack.c.bf16 %v11437, %v11436
      %v11483 = vpack.c.bf16 %v11439, %v11438
      %v11484 = vpack.c.bf16 %v11441, %v11440
      %v11485 = vpack.c.bf16 %v11443, %v11442
      %v11486 = vpack.c.bf16 %v11445, %v11444
      %v11487 = vpack.c.bf16 %v11447, %v11446
      %v11488 = vpack.c.bf16 %v11449, %v11448
      %v11489 = vpack.c.bf16 %v11451, %v11450
      %v11490 = vpack.c.bf16 %v11453, %v11452
      %v11491 = vpack.c.bf16 %v11455, %v11454
      %v11492 = vld [vmem:[%s279] sm:$0xff]
      %v11493 = vld [vmem:[%s279 + $0x8] sm:$0xff]
      %11495 = vset.pattern.permute.xlu0 0
      %11496 = vperm.xlu0 %11495, %v11492
      %v11497 = vpop.permute.xlu0 %11496
      %11500 = vset.pattern.permute.xlu0 0
      %11501 = vperm.xlu0 %11500, %v11493
      %v11502 = vpop.permute.xlu0 %11501
      %v11508 = vunpack.c.l.b16 %v11456
      %v11509 = vunpack.c.h.b16 %v11456
      %v11510 = vunpack.c.l.b16 %v11457
      %v11511 = vunpack.c.h.b16 %v11457
      %v11512 = vunpack.c.l.b16 %v11458
      %v11513 = vunpack.c.h.b16 %v11458
      %v11514 = vunpack.c.l.b16 %v11459
      %v11515 = vunpack.c.h.b16 %v11459
      %v11516 = vpack.c.b16 %v11512, %v11508
      %v11517 = vpack.c.b16 %v11513, %v11509
      %v11518 = vpack.c.b16 %v11514, %v11510
      %v11519 = vpack.c.b16 %v11515, %v11511
      %11524 = vmatpush.bf16.msra.mxu0 %v11467
      %11525 = vmatpush.bf16.msra.mxu0 %v11466
      %11526 = vmatpush.bf16.msra.mxu0 %v11465
      %11527 = vmatpush.bf16.msra.mxu0 %v11464
      %11528 = vmatpush.bf16.msra.mxu0 %v11463
      %11529 = vmatpush.bf16.msra.mxu0 %v11462
      %11530 = vmatpush.bf16.msra.mxu0 %v11461
      %11531 = vmatpush.bf16.msra.mxu0 %v11460
      %11532 = vmatmul.bf16.gmra.mxu0 %v11516
      %v11533 = vpop.f32.mrf.mxu0
      %v11534 = vadd.f32 %v11497, %v11533
      %v11535 = vpop.f32.mrf.mxu0
      %v11536 = vadd.f32 %v11502, %v11535
      %11537 = vdwg.mxu0
      %11538 = vmatpush.bf16.msra.mxu0 %v11475
      %11539 = vmatpush.bf16.msra.mxu0 %v11474
      %11540 = vmatpush.bf16.msra.mxu0 %v11473
      %11541 = vmatpush.bf16.msra.mxu0 %v11472
      %11542 = vmatpush.bf16.msra.mxu0 %v11471
      %11543 = vmatpush.bf16.msra.mxu0 %v11470
      %11544 = vmatpush.bf16.msra.mxu0 %v11469
      %11545 = vmatpush.bf16.msra.mxu0 %v11468
      %11546 = vmatmul.bf16.gmra.mxu0 %v11517
      %v11547 = vpop.f32.mrf.mxu0
      %v11548 = vadd.f32 %v11534, %v11547
      %v11549 = vpop.f32.mrf.mxu0
      %v11550 = vadd.f32 %v11536, %v11549
      %11551 = vdwg.mxu0
      %11552 = vmatpush.bf16.msra.mxu0 %v11483
      %11553 = vmatpush.bf16.msra.mxu0 %v11482
      %11554 = vmatpush.bf16.msra.mxu0 %v11481
      %11555 = vmatpush.bf16.msra.mxu0 %v11480
      %11556 = vmatpush.bf16.msra.mxu0 %v11479
      %11557 = vmatpush.bf16.msra.mxu0 %v11478
      %11558 = vmatpush.bf16.msra.mxu0 %v11477
      %11559 = vmatpush.bf16.msra.mxu0 %v11476
      %11560 = vmatmul.bf16.gmra.mxu0 %v11518
      %v11561 = vpop.f32.mrf.mxu0
      %v11562 = vadd.f32 %v11548, %v11561
      %v11563 = vpop.f32.mrf.mxu0
      %v11564 = vadd.f32 %v11550, %v11563
      %11565 = vdwg.mxu0
      %11566 = vmatpush.bf16.msra.mxu0 %v11491
      %11567 = vmatpush.bf16.msra.mxu0 %v11490
      %11568 = vmatpush.bf16.msra.mxu0 %v11489
      %11569 = vmatpush.bf16.msra.mxu0 %v11488
      %11570 = vmatpush.bf16.msra.mxu0 %v11487
      %11571 = vmatpush.bf16.msra.mxu0 %v11486
      %11572 = vmatpush.bf16.msra.mxu0 %v11485
      %11573 = vmatpush.bf16.msra.mxu0 %v11484
      %11574 = vmatmul.bf16.gmra.mxu0 %v11519
      %v11575 = vpop.f32.mrf.mxu0
      %v11576 = vadd.f32 %v11562, %v11575
      %v11577 = vpop.f32.mrf.mxu0
      %v11578 = vadd.f32 %v11564, %v11577
      %11579 = vdwg.mxu0
      %vm11580 = vcmask 15360
      %11581 = vst.msk [vmem:[%s284] sm:$0xff] %vm11580, %v11576
      %11582 = vst.msk [vmem:[%s284 + $0x8] sm:$0xff] %vm11580, %v11578
      %p11583 = scmp.lt.s32.totalorder %s16, 1
      %s11584 = scalar_select %p11583, %s16, 1
      %s11585 = smul.addr %s11584, 2
      %s11586 = smul.addr %s11585, 8
      %s11587 = scalar_lea.vmem %s5, %s11586
      // Predicated region
      $region41: #{atari_bootstrapped_dqn_forward.7} parent=39 // pred_check
        %p11588 = pneg %p159
      $region42: #{atari_bootstrapped_dqn_forward.7} parent=39 // pred_check_branch
        %11590 = sbr.rel (%p11588) target = $region44
      $region43: #{atari_bootstrapped_dqn_forward.7} parent=39 // pred_region
        _
      $region44: #{atari_bootstrapped_dqn_forward.7} parent=39 // pred_fallthru
        _
    $region40: #{atari_bootstrapped_dqn_forward.7} parent=5 // pred_fallthru
      _
    %p11591 = scmp.le.s32.totalorder 2, %s11
    // Predicated region
    $region45: #{atari_bootstrapped_dqn_forward.7} parent=5 // pred_check
      %p11592 = pneg %p11591
    $region46: #{atari_bootstrapped_dqn_forward.7} parent=5 // pred_check_branch
      %11594 = sbr.rel (%p11592) target = $region48
    $region47: #{atari_bootstrapped_dqn_forward.7} parent=5 // pred_region
      %s11595 = ssub.s32 %s11, 2
      // Predicated region
      $region49: #{atari_bootstrapped_dqn_forward.7} parent=47 // pred_check
        %p11596 = pneg %p165
      $region50: #{atari_bootstrapped_dqn_forward.7} parent=47 // pred_check_branch
        %11598 = sbr.rel (%p11596) target = $region52
      $region51: #{atari_bootstrapped_dqn_forward.7} parent=47 // pred_region
        %p11599 = scmp.lt.s32.totalorder %s17, 1
        %s11600 = scalar_select %p11599, %s17, 1
        %s11601 = smul.addr %s11600, 2
        %s11602 = smul.addr %s11601, 8
        %s11603 = scalar_lea.vmem %s5, %s11602
      $region52: #{atari_bootstrapped_dqn_forward.7} parent=47 // pred_fallthru
        _
    $region48: #{atari_bootstrapped_dqn_forward.7} parent=5 // pred_fallthru
      _
  $region6: #{atari_bootstrapped_dqn_forward.7} parent=0 // loop_footer
    %s15 = sadd.s32 1, %s11
  $region7: #{atari_bootstrapped_dqn_forward.7} parent=0 // loop_footer_branch
    %10 = sbr.rel target = $region3
  $region8: #{atari_bootstrapped_dqn_forward.7} parent=0 // loop_exit
    _

</llo_original>
